<compile_context>
chip_gen: v7x
topology: tpu7x:2x2x1
jax: 0.10.0
libtpu: 0.0.40
codegen_flags: <defaults>
</compile_context>

<pallas_src>
import jax
import jax.numpy as jnp
from jax.experimental import pallas as pl
from jax.experimental.pallas import tpu as pltpu


_K1, _K2 = 7, 5            # conv kernel widths
_C1, _C2 = 32, 128         # conv channel widths
_KC = 256                  # conv2 im2col contraction width, padded 160 -> 256


def _pick_batch_block(B, L):
    """Batch rows per grid step: VMEM-budget capped, 8-aligned, and split into
    >= 2 steps (when B is large enough) so both v7x TensorCores get work."""
    per_batch = 4 * 3 * ((L + _K2 - 1) * _C1 + L * _KC + L * _C2) + 8192
    cap = max(8, ((6 * 1024 * 1024) // per_batch) // 8 * 8)
    if B <= 8:
        return B                       # single tile; block dims == array dims
    return max(8, min(cap, ((pl.cdiv(B, 2) + 7) // 8) * 8))


# ----------------------------------------------------------------------------
# Fused forward pass (mirrors AdaptativeNet.forward)
# ----------------------------------------------------------------------------
def adaptative_net_forward(params, x, y, z):
    B, L = x.shape
    p1, p2 = _K1 // 2, _K2 // 2
    Lp = ((L + 2 * p2 + 7) // 8) * 8        # conv2-padded conv1 frame, 8-aligned
    Lpad = Lp + _K1 - 1                     # input length padded for both convs
    n_out_pad = params["fc4_w"].shape[1]

    # Interleave branches per batch so the in-kernel concat needs no transpose.
    seqs = jnp.stack([x, y, z], axis=1)                              # (B, 3, L)
    seqs = jnp.pad(seqs, ((0, 0), (0, 0), (p1 + p2, Lpad - L - p1 - p2)))

    rb = _pick_batch_block(B, L)
    grid = (pl.cdiv(B, rb),)

    weight_names = ("conv1_w", "conv1_b", "conv2_w", "conv2_b",
                    "pre_w", "pre_b", "fc1_w", "fc1_b", "fc2_w", "fc2_b",
                    "fc3_w", "fc3_b", "fc4_w", "fc4_b")
    weights = [params[n] for n in weight_names]

    def kernel(seq_ref, w1_ref, b1_ref, w2_ref, b2_ref,
               wp_ref, bp_ref, wa_ref, ba_ref, wb_ref, bb_ref,
               wc_ref, bc_ref, wd_ref, bd_ref, o_ref):
        nb = seq_ref.shape[0]
        R = nb * 3
        xr = seq_ref[...].reshape(R, Lpad)               # (R, Lpad), lane-dense

        # ---- conv1 on the MXU: im2col from lane-axis shifts -----------------
        cols = [xr[:, k:k + Lp] for k in range(_K1)]     # K1 lane slices
        cols.append(jnp.zeros_like(cols[0]))             # pad taps 7 -> 8
        im1 = jnp.stack(cols, axis=-1).reshape(R * Lp, _K1 + 1)
        h1 = jnp.dot(im1, w1_ref[...],
                     preferred_element_type=jnp.float32) + b1_ref[...]
        h1 = h1.reshape(R, Lp, _C1)
        # Zero the positions PyTorch's conv2 zero-padding sees (and the
        # 8-alignment padding beyond them).
        pos = jax.lax.broadcasted_iota(jnp.int32, (1, Lp, 1), 1)
        h1 = jnp.where((pos >= p2) & (pos < p2 + L), h1, 0.0)

        # ---- conv2 as ONE MXU matmul over a VMEM-only im2col slab -----------
        parts = [h1[:, k:k + L, :] for k in range(_K2)]            # (R, L, C1)
        parts.append(jnp.zeros((R, L, _KC - _K2 * _C1), jnp.float32))
        im2 = jnp.concatenate(parts, axis=-1).reshape(R * L, _KC)
        h2 = jnp.dot(im2, w2_ref[...],
                     preferred_element_type=jnp.float32) + b2_ref[...]
        h2 = jnp.maximum(h2, 0.0).reshape(R, L, _C2)

        # ---- global average pool over L + branch concat ----------------------
        pooled = (jnp.sum(h2, axis=1) * (1.0 / L)).reshape(nb, 3, _C2)
        feat = jnp.concatenate(
            [pooled[:, 0, :], pooled[:, 1, :], pooled[:, 2, :]], axis=-1)

        # ---- "pretrained" head + my_layers (bf16 weights, f32 accumulate) ----
        def lin(h, w_ref, b_ref, relu):
            o = jnp.dot(h.astype(w_ref.dtype), w_ref[...],
                        preferred_element_type=jnp.float32) + b_ref[...]
            return jnp.maximum(o, 0.0) if relu else o

        h = lin(feat, wp_ref, bp_ref, True)   # synthetic pretrained: Linear+ReLU
        h = lin(h, wa_ref, ba_ref, True)      # Dropout(0.5) = identity (eval)
        h = lin(h, wb_ref, bb_ref, True)      # Dropout(0.3) = identity (eval)
        h = lin(h, wc_ref, bc_ref, True)      # Dropout(0.3) = identity (eval)
        o_ref[...] = lin(h, wd_ref, bd_ref, False).astype(o_ref.dtype)

    in_specs = [pl.BlockSpec((rb, 3, Lpad), lambda i: (i, 0, 0))]
    for w in weights:
        # Grid-invariant blocks: Pallas fetches them once and keeps them in
        # VMEM (single-buffering via pipeline_mode is a further minor saving).
        in_specs.append(pl.BlockSpec(w.shape, lambda i, nd=w.ndim: (0,) * nd))

    logits_pad = pl.pallas_call(
        kernel,
        out_shape=jax.ShapeDtypeStruct((B, n_out_pad), jnp.float32),
        grid=grid,
        in_specs=in_specs,
        out_specs=pl.BlockSpec((rb, n_out_pad), lambda i: (i, 0)),
        compiler_params=pltpu.CompilerParams(
            dimension_semantics=("parallel",),
            vmem_limit_bytes=32 * 1024 * 1024),
    )(seqs, *weights)

    return logits_pad[:, :3]


# ----------------------------------------------------------------------------
# Parameters (deterministic synthetic init; MXU / lane-dense padded layouts)
# ----------------------------------------------------------------------------
def init_params(key):
    ks = jax.random.split(key, 14)
    f32 = jnp.float32

    def dense(k, real_shape, pad_shape, fan_in):
        w = jnp.zeros(pad_shape, f32)
        blk = jax.random.normal(k, real_shape, f32) * (float(fan_in) ** -0.5)
        return w.at[:real_shape[0], :real_shape[1]].set(blk).astype(jnp.bfloat16)

    def bias(k, real, pad):
        return jnp.zeros((1, pad), f32).at[:, :real].set(
            jax.random.normal(k, (1, real), f32) * 0.05)

    return {
        # Conv1d(1, 32, 7, padding=3): MXU layout (K1 padded to 8, Cout).
        "conv1_w": jnp.zeros((8, _C1), f32).at[:_K1].set(
            jax.random.normal(ks[0], (_K1, _C1), f32) * (_K1 ** -0.5)),
        "conv1_b": jax.random.normal(ks[1], (1, _C1), f32) * 0.05,
        # Conv1d(32, 128, 5, padding=2): im2col layout (K2*Cin 160->256, Cout).
        "conv2_w": jnp.zeros((_KC, _C2), f32).at[:_K2 * _C1].set(
            jax.random.normal(ks[2], (_K2 * _C1, _C2), f32)
            * ((_K2 * _C1) ** -0.5)),
        "conv2_b": jax.random.normal(ks[3], (1, _C2), f32) * 0.05,
        # Synthetic "pretrained" head: Linear(384, 1000) + ReLU, padded to 1024.
        "pre_w": dense(ks[4], (384, 1000), (384, 1024), 384),
        "pre_b": bias(ks[5], 1000, 1024),
        # my_layers (lane-padded, zero-filled; real sizes 800 / 500 / 200 / 3).
        "fc1_w": dense(ks[6], (1000, 800), (1024, 1024), 1000),
        "fc1_b": bias(ks[7], 800, 1024),
        "fc2_w": dense(ks[8], (800, 500), (1024, 512), 800),
        "fc2_b": bias(ks[9], 500, 512),
        "fc3_w": dense(ks[10], (500, 200), (512, 256), 500),
        "fc3_b": bias(ks[11], 200, 256),
        "fc4_w": dense(ks[12], (200, 3), (256, 128), 200),
        "fc4_b": bias(ks[13], 3, 128),
    }


# ----------------------------------------------------------------------------
# Pure-JAX reference (same padded weights) for a correctness check
# ----------------------------------------------------------------------------
def reference_forward(params, x, y, z):
    B = x.shape[0]
    w1_t = jnp.transpose(params["conv1_w"][:_K1], (1, 0))[:, None, :]   # (32,1,7)
    b1 = params["conv1_b"].reshape(-1)
    w2_t = jnp.transpose(
        params["conv2_w"][:_K2 * _C1].reshape(_K2, _C1, _C2), (2, 1, 0))  # (128,32,5)
    b2 = params["conv2_b"].reshape(-1)

    def branch(s):
        h = s[:, None, :]                                               # (B,1,L)
        h = jax.lax.conv_general_dilated(
            h, w1_t, (1,), [(_K1 // 2,) * 2],
            dimension_numbers=("NCH", "OIH", "NCH"),
            precision=jax.lax.Precision.HIGHEST)
        h = h + b1[None, :, None]
        h = jax.lax.conv_general_dilated(
            h, w2_t, (1,), [(_K2 // 2,) * 2],
            dimension_numbers=("NCH", "OIH", "NCH"),
            precision=jax.lax.Precision.HIGHEST)
        h = h + b2[None, :, None]
        return jnp.maximum(h, 0.0)                                      # (B,128,L)

    stacked = jnp.stack([branch(x), branch(y), branch(z)], axis=1)      # (B,3,128,L)
    feat = jnp.mean(stacked, axis=-1).reshape(B, -1)                    # (B,384)

    def lin(h, w, b, relu):
        o = jnp.dot(h.astype(w.dtype), w,
                    preferred_element_type=jnp.float32) + b
        return jnp.maximum(o, 0.0) if relu else o

    h = lin(feat, params["pre_w"], params["pre_b"], True)
    h = lin(h, params["fc1_w"], params["fc1_b"], True)
    h = lin(h, params["fc2_w"], params["fc2_b"], True)
    h = lin(h, params["fc3_w"], params["fc3_b"], True)
    return lin(h, params["fc4_w"], params["fc4_b"], False)[:, :3]


if __name__ == "__main__":
    key = jax.random.PRNGKey(0)
    kx, ky, kz, kp = jax.random.split(key, 4)

    B, L = 2, 16
    x = jax.random.normal(kx, (B, L), jnp.float32)
    y = jax.random.normal(ky, (B, L), jnp.float32)
    z = jax.random.normal(kz, (B, L), jnp.float32)

    params = init_params(kp)

    fwd = jax.jit(adaptative_net_forward)
    out = jax.block_until_ready(fwd(params, x, y, z))

    assert out.shape == (B, 3), out.shape
    assert out.dtype == jnp.float32, out.dtype

    ref = reference_forward(params, x, y, z)
    assert jnp.allclose(out, ref, rtol=5e-2, atol=1e-2), (out, ref)

    print("KERNEL_OK")
</pallas_src>

<mosaic_0001>
module attributes {stable_mosaic.version = 11 : i64} {
  func.func @kernel(%arg0: i32, %arg1: memref<2x3x30xf32, #tpu.memory_space<vmem>>, %arg2: memref<8x32xf32, #tpu.memory_space<vmem>>, %arg3: memref<1x32xf32, #tpu.memory_space<vmem>>, %arg4: memref<256x128xf32, #tpu.memory_space<vmem>>, %arg5: memref<1x128xf32, #tpu.memory_space<vmem>>, %arg6: memref<384x1024xbf16, #tpu.memory_space<vmem>>, %arg7: memref<1x1024xf32, #tpu.memory_space<vmem>>, %arg8: memref<1024x1024xbf16, #tpu.memory_space<vmem>>, %arg9: memref<1x1024xf32, #tpu.memory_space<vmem>>, %arg10: memref<1024x512xbf16, #tpu.memory_space<vmem>>, %arg11: memref<1x512xf32, #tpu.memory_space<vmem>>, %arg12: memref<512x256xbf16, #tpu.memory_space<vmem>>, %arg13: memref<1x256xf32, #tpu.memory_space<vmem>>, %arg14: memref<256x128xbf16, #tpu.memory_space<vmem>>, %arg15: memref<1x128xf32, #tpu.memory_space<vmem>>, %arg16: memref<2x128xf32, #tpu.memory_space<vmem>>) attributes {dimension_semantics = [#tpu.dimension_semantics<parallel>], iteration_bounds = array<i64: 1>, scalar_prefetch = 0 : i64, scratch_operands = 0 : i64, tpu.core_type = #tpu.core_type<tc>, window_params = [{transform_indices = @transform_0, window_bounds = array<i64: 2, 3, 30>}, {pipeline_mode = #tpu.pipeline_mode<synchronous>, transform_indices = @transform_1, window_bounds = array<i64: 8, 32>}, {pipeline_mode = #tpu.pipeline_mode<synchronous>, transform_indices = @transform_2, window_bounds = array<i64: 1, 32>}, {pipeline_mode = #tpu.pipeline_mode<synchronous>, transform_indices = @transform_3, window_bounds = array<i64: 256, 128>}, {pipeline_mode = #tpu.pipeline_mode<synchronous>, transform_indices = @transform_4, window_bounds = array<i64: 1, 128>}, {pipeline_mode = #tpu.pipeline_mode<synchronous>, transform_indices = @transform_5, window_bounds = array<i64: 384, 1024>}, {pipeline_mode = #tpu.pipeline_mode<synchronous>, transform_indices = @transform_6, window_bounds = array<i64: 1, 1024>}, {pipeline_mode = #tpu.pipeline_mode<synchronous>, transform_indices = @transform_7, window_bounds = array<i64: 1024, 1024>}, {pipeline_mode = #tpu.pipeline_mode<synchronous>, transform_indices = @transform_8, window_bounds = array<i64: 1, 1024>}, {pipeline_mode = #tpu.pipeline_mode<synchronous>, transform_indices = @transform_9, window_bounds = array<i64: 1024, 512>}, {pipeline_mode = #tpu.pipeline_mode<synchronous>, transform_indices = @transform_10, window_bounds = array<i64: 1, 512>}, {pipeline_mode = #tpu.pipeline_mode<synchronous>, transform_indices = @transform_11, window_bounds = array<i64: 512, 256>}, {pipeline_mode = #tpu.pipeline_mode<synchronous>, transform_indices = @transform_12, window_bounds = array<i64: 1, 256>}, {pipeline_mode = #tpu.pipeline_mode<synchronous>, transform_indices = @transform_13, window_bounds = array<i64: 256, 128>}, {pipeline_mode = #tpu.pipeline_mode<synchronous>, transform_indices = @transform_14, window_bounds = array<i64: 1, 128>}, {transform_indices = @transform_15, window_bounds = array<i64: 2, 128>}]} {
    %c0 = arith.constant 0 : index
    %c0_0 = arith.constant 0 : index
    %c0_1 = arith.constant 0 : index
    %0 = vector.load %arg1[%c0, %c0_0, %c0_1] : memref<2x3x30xf32, #tpu.memory_space<vmem>>, vector<2x3x30xf32>
    %1 = vector.shape_cast %0 : vector<2x3x30xf32> to vector<6x30xf32>
    %2 = vector.extract_strided_slice %1 {offsets = [0, 0], sizes = [6, 24], strides = [1, 1]} : vector<6x30xf32> to vector<6x24xf32>
    %3 = vector.extract_strided_slice %1 {offsets = [0, 1], sizes = [6, 24], strides = [1, 1]} : vector<6x30xf32> to vector<6x24xf32>
    %4 = vector.extract_strided_slice %1 {offsets = [0, 2], sizes = [6, 24], strides = [1, 1]} : vector<6x30xf32> to vector<6x24xf32>
    %5 = vector.extract_strided_slice %1 {offsets = [0, 3], sizes = [6, 24], strides = [1, 1]} : vector<6x30xf32> to vector<6x24xf32>
    %6 = vector.extract_strided_slice %1 {offsets = [0, 4], sizes = [6, 24], strides = [1, 1]} : vector<6x30xf32> to vector<6x24xf32>
    %7 = vector.extract_strided_slice %1 {offsets = [0, 5], sizes = [6, 24], strides = [1, 1]} : vector<6x30xf32> to vector<6x24xf32>
    %8 = vector.extract_strided_slice %1 {offsets = [0, 6], sizes = [6, 24], strides = [1, 1]} : vector<6x30xf32> to vector<6x24xf32>
    %cst = arith.constant 0.000000e+00 : f32
    %9 = vector.broadcast %cst : f32 to vector<6x24xf32>
    %10 = vector.shape_cast %2 : vector<6x24xf32> to vector<6x24x1xf32>
    %11 = vector.shape_cast %3 : vector<6x24xf32> to vector<6x24x1xf32>
    %12 = vector.shape_cast %4 : vector<6x24xf32> to vector<6x24x1xf32>
    %13 = vector.shape_cast %5 : vector<6x24xf32> to vector<6x24x1xf32>
    %14 = vector.shape_cast %6 : vector<6x24xf32> to vector<6x24x1xf32>
    %15 = vector.shape_cast %7 : vector<6x24xf32> to vector<6x24x1xf32>
    %16 = vector.shape_cast %8 : vector<6x24xf32> to vector<6x24x1xf32>
    %17 = vector.shape_cast %9 : vector<6x24xf32> to vector<6x24x1xf32>
    %18 = tpu.concatenate %10, %11, %12, %13, %14, %15, %16, %17 in 2 : vector<6x24x1xf32>, vector<6x24x1xf32>, vector<6x24x1xf32>, vector<6x24x1xf32>, vector<6x24x1xf32>, vector<6x24x1xf32>, vector<6x24x1xf32>, vector<6x24x1xf32> -> vector<6x24x8xf32>
    %19 = vector.shape_cast %18 : vector<6x24x8xf32> to vector<144x8xf32>
    %c0_2 = arith.constant 0 : index
    %c0_3 = arith.constant 0 : index
    %20 = vector.load %arg2[%c0_2, %c0_3] : memref<8x32xf32, #tpu.memory_space<vmem>>, vector<8x32xf32>
    %cst_4 = arith.constant dense<0.000000e+00> : vector<144x32xf32>
    %21 = tpu.matmul %19, %20, %cst_4 {dimension_numbers = #tpu.dot_dimension_numbers<[1], [0], [0], [1], [0, 0, 1, 1], [], []>} : vector<144x8xf32>, vector<8x32xf32>, vector<144x32xf32> -> vector<144x32xf32>
    %c0_5 = arith.constant 0 : index
    %c0_6 = arith.constant 0 : index
    %22 = vector.load %arg3[%c0_5, %c0_6] : memref<1x32xf32, #tpu.memory_space<vmem>>, vector<1x32xf32>
    %23 = vector.broadcast %22 : vector<1x32xf32> to vector<144x32xf32>
    %24 = arith.addf %21, %23 : vector<144x32xf32>
    %25 = vector.shape_cast %24 : vector<144x32xf32> to vector<6x24x32xf32>
    %26 = tpu.iota {dimensions = array<i32: 1>} : vector<1x24x1xi32>
    %c2_i32 = arith.constant 2 : i32
    %27 = vector.broadcast %c2_i32 : i32 to vector<1x24x1xi32>
    %28 = arith.cmpi sge, %26, %27 : vector<1x24x1xi32>
    %c18_i32 = arith.constant 18 : i32
    %29 = vector.broadcast %c18_i32 : i32 to vector<1x24x1xi32>
    %30 = arith.cmpi slt, %26, %29 : vector<1x24x1xi32>
    %31 = arith.andi %28, %30 : vector<1x24x1xi1>
    %cst_7 = arith.constant 0.000000e+00 : f32
    %32 = vector.shape_cast %31 : vector<1x24x1xi1> to vector<1x24x1xi1>
    %33 = vector.broadcast %32 : vector<1x24x1xi1> to vector<6x24x32xi1>
    %34 = vector.broadcast %cst_7 : f32 to vector<6x24x32xf32>
    %35 = arith.select %33, %25, %34 : vector<6x24x32xi1>, vector<6x24x32xf32>
    %36 = vector.extract_strided_slice %35 {offsets = [0, 0, 0], sizes = [6, 16, 32], strides = [1, 1, 1]} : vector<6x24x32xf32> to vector<6x16x32xf32>
    %37 = vector.extract_strided_slice %35 {offsets = [0, 1, 0], sizes = [6, 16, 32], strides = [1, 1, 1]} : vector<6x24x32xf32> to vector<6x16x32xf32>
    %38 = vector.extract_strided_slice %35 {offsets = [0, 2, 0], sizes = [6, 16, 32], strides = [1, 1, 1]} : vector<6x24x32xf32> to vector<6x16x32xf32>
    %39 = vector.extract_strided_slice %35 {offsets = [0, 3, 0], sizes = [6, 16, 32], strides = [1, 1, 1]} : vector<6x24x32xf32> to vector<6x16x32xf32>
    %40 = vector.extract_strided_slice %35 {offsets = [0, 4, 0], sizes = [6, 16, 32], strides = [1, 1, 1]} : vector<6x24x32xf32> to vector<6x16x32xf32>
    %cst_8 = arith.constant 0.000000e+00 : f32
    %41 = vector.broadcast %cst_8 : f32 to vector<6x16x96xf32>
    %42 = tpu.concatenate %36, %37, %38, %39, %40, %41 in 2 : vector<6x16x32xf32>, vector<6x16x32xf32>, vector<6x16x32xf32>, vector<6x16x32xf32>, vector<6x16x32xf32>, vector<6x16x96xf32> -> vector<6x16x256xf32>
    %43 = vector.shape_cast %42 : vector<6x16x256xf32> to vector<96x256xf32>
    %c0_9 = arith.constant 0 : index
    %c0_10 = arith.constant 0 : index
    %44 = vector.load %arg4[%c0_9, %c0_10] : memref<256x128xf32, #tpu.memory_space<vmem>>, vector<256x128xf32>
    %cst_11 = arith.constant dense<0.000000e+00> : vector<96x128xf32>
    %45 = tpu.matmul %43, %44, %cst_11 {dimension_numbers = #tpu.dot_dimension_numbers<[1], [0], [0], [1], [0, 0, 1, 1], [], []>} : vector<96x256xf32>, vector<256x128xf32>, vector<96x128xf32> -> vector<96x128xf32>
    %c0_12 = arith.constant 0 : index
    %c0_13 = arith.constant 0 : index
    %46 = vector.load %arg5[%c0_12, %c0_13] : memref<1x128xf32, #tpu.memory_space<vmem>>, vector<1x128xf32>
    %47 = vector.broadcast %46 : vector<1x128xf32> to vector<96x128xf32>
    %48 = arith.addf %45, %47 : vector<96x128xf32>
    %cst_14 = arith.constant 0.000000e+00 : f32
    %49 = vector.broadcast %cst_14 : f32 to vector<96x128xf32>
    %50 = arith.maximumf %48, %49 : vector<96x128xf32>
    %51 = vector.shape_cast %50 : vector<96x128xf32> to vector<6x16x128xf32>
    %cst_15 = arith.constant dense<0.000000e+00> : vector<6x128xf32>
    %52 = vector.multi_reduction <add>, %51, %cst_15 [1] : vector<6x16x128xf32> to vector<6x128xf32>
    %cst_16 = arith.constant 6.250000e-02 : f32
    %53 = vector.broadcast %cst_16 : f32 to vector<6x128xf32>
    %54 = arith.mulf %52, %53 : vector<6x128xf32>
    %55 = vector.shape_cast %54 : vector<6x128xf32> to vector<2x3x128xf32>
    %56 = vector.extract_strided_slice %55 {offsets = [0, 0, 0], sizes = [2, 1, 128], strides = [1, 1, 1]} : vector<2x3x128xf32> to vector<2x1x128xf32>
    %57 = vector.shape_cast %56 : vector<2x1x128xf32> to vector<2x128xf32>
    %58 = vector.extract_strided_slice %55 {offsets = [0, 1, 0], sizes = [2, 1, 128], strides = [1, 1, 1]} : vector<2x3x128xf32> to vector<2x1x128xf32>
    %59 = vector.shape_cast %58 : vector<2x1x128xf32> to vector<2x128xf32>
    %60 = vector.extract_strided_slice %55 {offsets = [0, 2, 0], sizes = [2, 1, 128], strides = [1, 1, 1]} : vector<2x3x128xf32> to vector<2x1x128xf32>
    %61 = vector.shape_cast %60 : vector<2x1x128xf32> to vector<2x128xf32>
    %62 = tpu.concatenate %57, %59, %61 in 1 : vector<2x128xf32>, vector<2x128xf32>, vector<2x128xf32> -> vector<2x384xf32>
    %63 = arith.truncf %62 : vector<2x384xf32> to vector<2x384xbf16>
    %c0_17 = arith.constant 0 : index
    %c0_18 = arith.constant 0 : index
    %64 = vector.load %arg6[%c0_17, %c0_18] : memref<384x1024xbf16, #tpu.memory_space<vmem>>, vector<384x1024xbf16>
    %cst_19 = arith.constant dense<0.000000e+00> : vector<2x1024xf32>
    %65 = tpu.matmul %63, %64, %cst_19 {dimension_numbers = #tpu.dot_dimension_numbers<[1], [0], [0], [1], [0, 0, 1, 1], [], []>} : vector<2x384xbf16>, vector<384x1024xbf16>, vector<2x1024xf32> -> vector<2x1024xf32>
    %c0_20 = arith.constant 0 : index
    %c0_21 = arith.constant 0 : index
    %66 = vector.load %arg7[%c0_20, %c0_21] : memref<1x1024xf32, #tpu.memory_space<vmem>>, vector<1x1024xf32>
    %67 = vector.broadcast %66 : vector<1x1024xf32> to vector<2x1024xf32>
    %68 = arith.addf %65, %67 : vector<2x1024xf32>
    %cst_22 = arith.constant 0.000000e+00 : f32
    %69 = vector.broadcast %cst_22 : f32 to vector<2x1024xf32>
    %70 = arith.maximumf %68, %69 : vector<2x1024xf32>
    %71 = arith.truncf %70 : vector<2x1024xf32> to vector<2x1024xbf16>
    %c0_23 = arith.constant 0 : index
    %c0_24 = arith.constant 0 : index
    %72 = vector.load %arg8[%c0_23, %c0_24] : memref<1024x1024xbf16, #tpu.memory_space<vmem>>, vector<1024x1024xbf16>
    %cst_25 = arith.constant dense<0.000000e+00> : vector<2x1024xf32>
    %73 = tpu.matmul %71, %72, %cst_25 {dimension_numbers = #tpu.dot_dimension_numbers<[1], [0], [0], [1], [0, 0, 1, 1], [], []>} : vector<2x1024xbf16>, vector<1024x1024xbf16>, vector<2x1024xf32> -> vector<2x1024xf32>
    %c0_26 = arith.constant 0 : index
    %c0_27 = arith.constant 0 : index
    %74 = vector.load %arg9[%c0_26, %c0_27] : memref<1x1024xf32, #tpu.memory_space<vmem>>, vector<1x1024xf32>
    %75 = vector.broadcast %74 : vector<1x1024xf32> to vector<2x1024xf32>
    %76 = arith.addf %73, %75 : vector<2x1024xf32>
    %cst_28 = arith.constant 0.000000e+00 : f32
    %77 = vector.broadcast %cst_28 : f32 to vector<2x1024xf32>
    %78 = arith.maximumf %76, %77 : vector<2x1024xf32>
    %79 = arith.truncf %78 : vector<2x1024xf32> to vector<2x1024xbf16>
    %c0_29 = arith.constant 0 : index
    %c0_30 = arith.constant 0 : index
    %80 = vector.load %arg10[%c0_29, %c0_30] : memref<1024x512xbf16, #tpu.memory_space<vmem>>, vector<1024x512xbf16>
    %cst_31 = arith.constant dense<0.000000e+00> : vector<2x512xf32>
    %81 = tpu.matmul %79, %80, %cst_31 {dimension_numbers = #tpu.dot_dimension_numbers<[1], [0], [0], [1], [0, 0, 1, 1], [], []>} : vector<2x1024xbf16>, vector<1024x512xbf16>, vector<2x512xf32> -> vector<2x512xf32>
    %c0_32 = arith.constant 0 : index
    %c0_33 = arith.constant 0 : index
    %82 = vector.load %arg11[%c0_32, %c0_33] : memref<1x512xf32, #tpu.memory_space<vmem>>, vector<1x512xf32>
    %83 = vector.broadcast %82 : vector<1x512xf32> to vector<2x512xf32>
    %84 = arith.addf %81, %83 : vector<2x512xf32>
    %cst_34 = arith.constant 0.000000e+00 : f32
    %85 = vector.broadcast %cst_34 : f32 to vector<2x512xf32>
    %86 = arith.maximumf %84, %85 : vector<2x512xf32>
    %87 = arith.truncf %86 : vector<2x512xf32> to vector<2x512xbf16>
    %c0_35 = arith.constant 0 : index
    %c0_36 = arith.constant 0 : index
    %88 = vector.load %arg12[%c0_35, %c0_36] : memref<512x256xbf16, #tpu.memory_space<vmem>>, vector<512x256xbf16>
    %cst_37 = arith.constant dense<0.000000e+00> : vector<2x256xf32>
    %89 = tpu.matmul %87, %88, %cst_37 {dimension_numbers = #tpu.dot_dimension_numbers<[1], [0], [0], [1], [0, 0, 1, 1], [], []>} : vector<2x512xbf16>, vector<512x256xbf16>, vector<2x256xf32> -> vector<2x256xf32>
    %c0_38 = arith.constant 0 : index
    %c0_39 = arith.constant 0 : index
    %90 = vector.load %arg13[%c0_38, %c0_39] : memref<1x256xf32, #tpu.memory_space<vmem>>, vector<1x256xf32>
    %91 = vector.broadcast %90 : vector<1x256xf32> to vector<2x256xf32>
    %92 = arith.addf %89, %91 : vector<2x256xf32>
    %cst_40 = arith.constant 0.000000e+00 : f32
    %93 = vector.broadcast %cst_40 : f32 to vector<2x256xf32>
    %94 = arith.maximumf %92, %93 : vector<2x256xf32>
    %95 = arith.truncf %94 : vector<2x256xf32> to vector<2x256xbf16>
    %c0_41 = arith.constant 0 : index
    %c0_42 = arith.constant 0 : index
    %96 = vector.load %arg14[%c0_41, %c0_42] : memref<256x128xbf16, #tpu.memory_space<vmem>>, vector<256x128xbf16>
    %cst_43 = arith.constant dense<0.000000e+00> : vector<2x128xf32>
    %97 = tpu.matmul %95, %96, %cst_43 {dimension_numbers = #tpu.dot_dimension_numbers<[1], [0], [0], [1], [0, 0, 1, 1], [], []>} : vector<2x256xbf16>, vector<256x128xbf16>, vector<2x128xf32> -> vector<2x128xf32>
    %c0_44 = arith.constant 0 : index
    %c0_45 = arith.constant 0 : index
    %98 = vector.load %arg15[%c0_44, %c0_45] : memref<1x128xf32, #tpu.memory_space<vmem>>, vector<1x128xf32>
    %99 = vector.broadcast %98 : vector<1x128xf32> to vector<2x128xf32>
    %100 = arith.addf %97, %99 : vector<2x128xf32>
    %c0_46 = arith.constant 0 : index
    %c0_47 = arith.constant 0 : index
    %101 = vector.load %arg16[%c0_46, %c0_47] : memref<2x128xf32, #tpu.memory_space<vmem>>, vector<2x128xf32>
    tpu.vector_store %arg16[%c0_46, %c0_47], %100 {strides = array<i32>} : memref<2x128xf32, #tpu.memory_space<vmem>>, vector<2x128xf32>,
    return
  }
  func.func @transform_0(%arg0: i32) -> (i32, i32, i32) {
    %c0_i32 = arith.constant 0 : i32
    %c0_i32_0 = arith.constant 0 : i32
    %c0_i32_1 = arith.constant 0 : i32
    return %arg0, %c0_i32, %c0_i32_0 : i32, i32, i32
  }
  func.func @transform_1(%arg0: i32) -> (i32, i32) {
    %c0_i32 = arith.constant 0 : i32
    %c0_i32_0 = arith.constant 0 : i32
    %c0_i32_1 = arith.constant 0 : i32
    return %c0_i32, %c0_i32_0 : i32, i32
  }
  func.func @transform_2(%arg0: i32) -> (i32, i32) {
    %c0_i32 = arith.constant 0 : i32
    %c0_i32_0 = arith.constant 0 : i32
    %c0_i32_1 = arith.constant 0 : i32
    return %c0_i32, %c0_i32_0 : i32, i32
  }
  func.func @transform_3(%arg0: i32) -> (i32, i32) {
    %c0_i32 = arith.constant 0 : i32
    %c0_i32_0 = arith.constant 0 : i32
    %c0_i32_1 = arith.constant 0 : i32
    return %c0_i32, %c0_i32_0 : i32, i32
  }
  func.func @transform_4(%arg0: i32) -> (i32, i32) {
    %c0_i32 = arith.constant 0 : i32
    %c0_i32_0 = arith.constant 0 : i32
    %c0_i32_1 = arith.constant 0 : i32
    return %c0_i32, %c0_i32_0 : i32, i32
  }
  func.func @transform_5(%arg0: i32) -> (i32, i32) {
    %c0_i32 = arith.constant 0 : i32
    %c0_i32_0 = arith.constant 0 : i32
    %c0_i32_1 = arith.constant 0 : i32
    return %c0_i32, %c0_i32_0 : i32, i32
  }
  func.func @transform_6(%arg0: i32) -> (i32, i32) {
    %c0_i32 = arith.constant 0 : i32
    %c0_i32_0 = arith.constant 0 : i32
    %c0_i32_1 = arith.constant 0 : i32
    return %c0_i32, %c0_i32_0 : i32, i32
  }
  func.func @transform_7(%arg0: i32) -> (i32, i32) {
    %c0_i32 = arith.constant 0 : i32
    %c0_i32_0 = arith.constant 0 : i32
    %c0_i32_1 = arith.constant 0 : i32
    return %c0_i32, %c0_i32_0 : i32, i32
  }
  func.func @transform_8(%arg0: i32) -> (i32, i32) {
    %c0_i32 = arith.constant 0 : i32
    %c0_i32_0 = arith.constant 0 : i32
    %c0_i32_1 = arith.constant 0 : i32
    return %c0_i32, %c0_i32_0 : i32, i32
  }
  func.func @transform_9(%arg0: i32) -> (i32, i32) {
    %c0_i32 = arith.constant 0 : i32
    %c0_i32_0 = arith.constant 0 : i32
    %c0_i32_1 = arith.constant 0 : i32
    return %c0_i32, %c0_i32_0 : i32, i32
  }
  func.func @transform_10(%arg0: i32) -> (i32, i32) {
    %c0_i32 = arith.constant 0 : i32
    %c0_i32_0 = arith.constant 0 : i32
    %c0_i32_1 = arith.constant 0 : i32
    return %c0_i32, %c0_i32_0 : i32, i32
  }
  func.func @transform_11(%arg0: i32) -> (i32, i32) {
    %c0_i32 = arith.constant 0 : i32
    %c0_i32_0 = arith.constant 0 : i32
    %c0_i32_1 = arith.constant 0 : i32
    return %c0_i32, %c0_i32_0 : i32, i32
  }
  func.func @transform_12(%arg0: i32) -> (i32, i32) {
    %c0_i32 = arith.constant 0 : i32
    %c0_i32_0 = arith.constant 0 : i32
    %c0_i32_1 = arith.constant 0 : i32
    return %c0_i32, %c0_i32_0 : i32, i32
  }
  func.func @transform_13(%arg0: i32) -> (i32, i32) {
    %c0_i32 = arith.constant 0 : i32
    %c0_i32_0 = arith.constant 0 : i32
    %c0_i32_1 = arith.constant 0 : i32
    return %c0_i32, %c0_i32_0 : i32, i32
  }
  func.func @transform_14(%arg0: i32) -> (i32, i32) {
    %c0_i32 = arith.constant 0 : i32
    %c0_i32_0 = arith.constant 0 : i32
    %c0_i32_1 = arith.constant 0 : i32
    return %c0_i32, %c0_i32_0 : i32, i32
  }
  func.func @transform_15(%arg0: i32) -> (i32, i32) {
    %c0_i32 = arith.constant 0 : i32
    %c0_i32_0 = arith.constant 0 : i32
    return %arg0, %c0_i32 : i32, i32
  }
}

</mosaic_0001>

<llo_original>
// kernel: adaptative_net_forward.1
$region0: #{adaptative_net_forward.1}
  #allocation0 [shape = 'u32[]', space=smem, size = 0x4, offset = 0x4, fixed_abs, tag = 'smem constant byte address 0x4 - core index']
  #allocation1 [shape = 'u32[144,128]{1,0:T(1,128)}', space=vmem, size = 0x12000, scoped, tag = 'internal scratch']
  %s0 = inlined_call_operand.vmem [shape: f32[2,3,30], index: 0, kind: input, shape index: {}]
  %s1 = inlined_call_operand.hbm [shape: f32[8,32], index: 1, kind: input, shape index: {}]
  %s2 = inlined_call_operand.hbm [shape: f32[1,32], index: 2, kind: input, shape index: {}]
  %s3 = inlined_call_operand.hbm [shape: f32[256,128], index: 3, kind: input, shape index: {}]
  %s4 = inlined_call_operand.hbm [shape: f32[1,128], index: 4, kind: input, shape index: {}]
  %s5 = inlined_call_operand.hbm [shape: bf16[384,1024], index: 5, kind: input, shape index: {}]
  %s6 = inlined_call_operand.hbm [shape: f32[1,1024], index: 6, kind: input, shape index: {}]
  %s7 = inlined_call_operand.hbm [shape: bf16[1024,1024], index: 7, kind: input, shape index: {}]
  %s8 = inlined_call_operand.hbm [shape: f32[1,1024], index: 8, kind: input, shape index: {}]
  %s9 = inlined_call_operand.hbm [shape: bf16[1024,512], index: 9, kind: input, shape index: {}]
  %s10 = inlined_call_operand.hbm [shape: f32[1,512], index: 10, kind: input, shape index: {}]
  %s11 = inlined_call_operand.hbm [shape: bf16[512,256], index: 11, kind: input, shape index: {}]
  %s12 = inlined_call_operand.hbm [shape: f32[1,256], index: 12, kind: input, shape index: {}]
  %s13 = inlined_call_operand.hbm [shape: bf16[256,128], index: 13, kind: input, shape index: {}]
  %s14 = inlined_call_operand.hbm [shape: f32[1,128], index: 14, kind: input, shape index: {}]
  %s15 = inlined_call_operand.hbm [shape: f32[2,128], index: 15, kind: output, shape index: {}]
  %s16 = sld [smem:[#allocation0]]
  $region126: #{adaptative_net_forward.1} parent=0
    _
  %s18 = ssub.s32 1, %s16
  %s19 = scalar_select 0, %s18, %s16
  $region1: #{adaptative_net_forward.1} parent=0
    #allocation2 [shape = 'u8[4096]{0}', space=vmem, size = 0x1000, scoped, tag = 'input window, operand 1, single buffered']
    #allocation3 [shape = 's32[1]{0}', space=sflag, size = 0x4, scoped, tag = 'scoped memory for adaptative_net_forward.1']
    #allocation4 [shape = 's32[1]{0}', space=sflag, size = 0x4, scoped, tag = 'scoped memory for adaptative_net_forward.1']
    #allocation5 [shape = 'u8[512]{0}', space=vmem, size = 0x400, scoped, tag = 'input window, operand 2, single buffered']
    #allocation6 [shape = 's32[1]{0}', space=sflag, size = 0x4, scoped, tag = 'scoped memory for adaptative_net_forward.1']
    #allocation7 [shape = 'u8[131072]{0}', space=vmem, size = 0x20000, scoped, tag = 'input window, operand 3, single buffered']
    #allocation8 [shape = 'u8[512]{0}', space=vmem, size = 0x400, scoped, tag = 'input window, operand 4, single buffered']
    #allocation9 [shape = 's32[1]{0}', space=sflag, size = 0x4, scoped, tag = 'scoped memory for adaptative_net_forward.1']
    #allocation10 [shape = 'u8[786432]{0}', space=vmem, size = 0xc0000, scoped, tag = 'input window, operand 5, single buffered']
    #allocation11 [shape = 'u8[4096]{0}', space=vmem, size = 0x1000, scoped, tag = 'input window, operand 6, single buffered']
    #allocation12 [shape = 's32[1]{0}', space=sflag, size = 0x4, scoped, tag = 'scoped memory for adaptative_net_forward.1']
    #allocation13 [shape = 'u8[2097152]{0}', space=vmem, size = 0x200000, scoped, tag = 'input window, operand 7, single buffered']
    #allocation14 [shape = 'u8[4096]{0}', space=vmem, size = 0x1000, scoped, tag = 'input window, operand 8, single buffered']
    #allocation15 [shape = 's32[1]{0}', space=sflag, size = 0x4, scoped, tag = 'scoped memory for adaptative_net_forward.1']
    #allocation16 [shape = 'u8[1048576]{0}', space=vmem, size = 0x100000, scoped, tag = 'input window, operand 9, single buffered']
    #allocation17 [shape = 'u8[2048]{0}', space=vmem, size = 0x800, scoped, tag = 'input window, operand 10, single buffered']
    #allocation18 [shape = 's32[1]{0}', space=sflag, size = 0x4, scoped, tag = 'scoped memory for adaptative_net_forward.1']
    #allocation19 [shape = 'u8[262144]{0}', space=vmem, size = 0x40000, scoped, tag = 'input window, operand 11, single buffered']
    #allocation20 [shape = 'u8[1024]{0}', space=vmem, size = 0x400, scoped, tag = 'input window, operand 12, single buffered']
    #allocation21 [shape = 's32[1]{0}', space=sflag, size = 0x4, scoped, tag = 'scoped memory for adaptative_net_forward.1']
    #allocation22 [shape = 'u8[65536]{0}', space=vmem, size = 0x10000, scoped, tag = 'input window, operand 13, single buffered']
    #allocation23 [shape = 'u8[512]{0}', space=vmem, size = 0x400, scoped, tag = 'input window, operand 14, single buffered']
    #allocation24 [shape = 's32[1]{0}', space=sflag, size = 0x4, scoped, tag = 'scoped memory for adaptative_net_forward.1']
    #allocation25 [shape = 'u8[1024]{0}', space=vmem, size = 0x400, scoped, tag = 'output window, operand 0, single buffered']
    %20 = vsyncpa [#allocation3], 0
    %21 = vsyncpa [#allocation6], 0
    %22 = vsyncpa [#allocation9], 0
    %23 = vsyncpa [#allocation12], 0
    %24 = vsyncpa [#allocation15], 0
    %25 = vsyncpa [#allocation18], 0
    %26 = vsyncpa [#allocation21], 0
    %27 = vsyncpa [#allocation24], 0
    %28 = vsyncpa [#allocation4], 0
    // Predicated region
    $region2: #{adaptative_net_forward.1} parent=1 // pred_check
      _
    $region3: #{adaptative_net_forward.1} parent=1 // pred_check_branch
      %30 = sbr.rel (0) target = $region5
    $region4: #{adaptative_net_forward.1} parent=1 // pred_region
      _
    $region5: #{adaptative_net_forward.1} parent=1 // pred_fallthru
      _
    // Predicated region
    $region6: #{adaptative_net_forward.1} parent=1 // pred_check
      _
    $region7: #{adaptative_net_forward.1} parent=1 // pred_check_branch
      %32 = sbr.rel (0) target = $region9
    $region8: #{adaptative_net_forward.1} parent=1 // pred_region
      %s34 = ssub.s32 128, 128
      %35 = vsyncadd [#allocation3], %s34
      %s37 = sshll.u32 [#allocation2], 4
      %s38 = int_to_ptr.vmem [resolvable:$true] %s37
      %40 = dma.hbm_to_vmem [thread:$0]  %s1, 128, %s38, [#allocation3]
    $region9: #{adaptative_net_forward.1} parent=1 // pred_fallthru
      _
    // Predicated region
    $region10: #{adaptative_net_forward.1} parent=1 // pred_check
      _
    $region11: #{adaptative_net_forward.1} parent=1 // pred_check_branch
      %42 = sbr.rel (0) target = $region13
    $region12: #{adaptative_net_forward.1} parent=1 // pred_region
      %s44 = ssub.s32 16, 16
      %45 = vsyncadd [#allocation6], %s44
      %s47 = sshll.u32 [#allocation5], 4
      %s48 = int_to_ptr.vmem [resolvable:$true] %s47
      %50 = dma.hbm_to_vmem [thread:$0]  %s2, 16, %s48, [#allocation6]
    $region13: #{adaptative_net_forward.1} parent=1 // pred_fallthru
      _
    // Predicated region
    $region14: #{adaptative_net_forward.1} parent=1 // pred_check
      _
    $region15: #{adaptative_net_forward.1} parent=1 // pred_check_branch
      %52 = sbr.rel (0) target = $region17
    $region16: #{adaptative_net_forward.1} parent=1 // pred_region
      %s54 = ssub.s32 4096, 4096
      %55 = vsyncadd [#allocation6], %s54
      %s56 = sshll.u32 [#allocation7], 4
      %s57 = int_to_ptr.vmem [resolvable:$true] %s56
      %62 = dma.hbm_to_vmem [thread:$0]  %s3, 4096, %s57, [#allocation6], 128, 128, 8
    $region17: #{adaptative_net_forward.1} parent=1 // pred_fallthru
      _
    // Predicated region
    $region18: #{adaptative_net_forward.1} parent=1 // pred_check
      _
    $region19: #{adaptative_net_forward.1} parent=1 // pred_check_branch
      %64 = sbr.rel (0) target = $region21
    $region20: #{adaptative_net_forward.1} parent=1 // pred_region
      %s66 = ssub.s32 16, 16
      %67 = vsyncadd [#allocation9], %s66
      %s69 = sshll.u32 [#allocation8], 4
      %s70 = int_to_ptr.vmem [resolvable:$true] %s69
      %72 = dma.hbm_to_vmem [thread:$0]  %s4, 16, %s70, [#allocation9]
    $region21: #{adaptative_net_forward.1} parent=1 // pred_fallthru
      _
    // Predicated region
    $region22: #{adaptative_net_forward.1} parent=1 // pred_check
      _
    $region23: #{adaptative_net_forward.1} parent=1 // pred_check_branch
      %74 = sbr.rel (0) target = $region25
    $region24: #{adaptative_net_forward.1} parent=1 // pred_region
      %s76 = ssub.s32 24576, 24576
      %77 = vsyncadd [#allocation9], %s76
      %s78 = sshll.u32 [#allocation10], 4
      %s79 = int_to_ptr.vmem [resolvable:$true] %s78
      %84 = dma.hbm_to_vmem [thread:$0]  %s5, 24576, %s79, [#allocation9], 512, 512, 32
    $region25: #{adaptative_net_forward.1} parent=1 // pred_fallthru
      _
    // Predicated region
    $region26: #{adaptative_net_forward.1} parent=1 // pred_check
      _
    $region27: #{adaptative_net_forward.1} parent=1 // pred_check_branch
      %86 = sbr.rel (0) target = $region29
    $region28: #{adaptative_net_forward.1} parent=1 // pred_region
      %s88 = ssub.s32 128, 128
      %89 = vsyncadd [#allocation12], %s88
      %s91 = sshll.u32 [#allocation11], 4
      %s92 = int_to_ptr.vmem [resolvable:$true] %s91
      %94 = dma.hbm_to_vmem [thread:$0]  %s6, 128, %s92, [#allocation12]
    $region29: #{adaptative_net_forward.1} parent=1 // pred_fallthru
      _
    // Predicated region
    $region30: #{adaptative_net_forward.1} parent=1 // pred_check
      _
    $region31: #{adaptative_net_forward.1} parent=1 // pred_check_branch
      %96 = sbr.rel (0) target = $region33
    $region32: #{adaptative_net_forward.1} parent=1 // pred_region
      %s98 = ssub.s32 65536, 65536
      %99 = vsyncadd [#allocation12], %s98
      %s100 = sshll.u32 [#allocation13], 4
      %s101 = int_to_ptr.vmem [resolvable:$true] %s100
      %106 = dma.hbm_to_vmem [thread:$0]  %s7, 65536, %s101, [#allocation12], 512, 512, 32
    $region33: #{adaptative_net_forward.1} parent=1 // pred_fallthru
      _
    // Predicated region
    $region34: #{adaptative_net_forward.1} parent=1 // pred_check
      _
    $region35: #{adaptative_net_forward.1} parent=1 // pred_check_branch
      %108 = sbr.rel (0) target = $region37
    $region36: #{adaptative_net_forward.1} parent=1 // pred_region
      %s110 = ssub.s32 128, 128
      %111 = vsyncadd [#allocation15], %s110
      %s113 = sshll.u32 [#allocation14], 4
      %s114 = int_to_ptr.vmem [resolvable:$true] %s113
      %116 = dma.hbm_to_vmem [thread:$0]  %s8, 128, %s114, [#allocation15]
    $region37: #{adaptative_net_forward.1} parent=1 // pred_fallthru
      _
    // Predicated region
    $region38: #{adaptative_net_forward.1} parent=1 // pred_check
      _
    $region39: #{adaptative_net_forward.1} parent=1 // pred_check_branch
      %118 = sbr.rel (0) target = $region41
    $region40: #{adaptative_net_forward.1} parent=1 // pred_region
      %s120 = ssub.s32 32768, 32768
      %121 = vsyncadd [#allocation15], %s120
      %s122 = sshll.u32 [#allocation16], 4
      %s123 = int_to_ptr.vmem [resolvable:$true] %s122
      %128 = dma.hbm_to_vmem [thread:$0]  %s9, 32768, %s123, [#allocation15], 256, 256, 16
    $region41: #{adaptative_net_forward.1} parent=1 // pred_fallthru
      _
    // Predicated region
    $region42: #{adaptative_net_forward.1} parent=1 // pred_check
      _
    $region43: #{adaptative_net_forward.1} parent=1 // pred_check_branch
      %130 = sbr.rel (0) target = $region45
    $region44: #{adaptative_net_forward.1} parent=1 // pred_region
      %s132 = ssub.s32 64, 64
      %133 = vsyncadd [#allocation18], %s132
      %s135 = sshll.u32 [#allocation17], 4
      %s136 = int_to_ptr.vmem [resolvable:$true] %s135
      %138 = dma.hbm_to_vmem [thread:$0]  %s10, 64, %s136, [#allocation18]
    $region45: #{adaptative_net_forward.1} parent=1 // pred_fallthru
      _
    // Predicated region
    $region46: #{adaptative_net_forward.1} parent=1 // pred_check
      _
    $region47: #{adaptative_net_forward.1} parent=1 // pred_check_branch
      %140 = sbr.rel (0) target = $region49
    $region48: #{adaptative_net_forward.1} parent=1 // pred_region
      %s142 = ssub.s32 8192, 8192
      %143 = vsyncadd [#allocation18], %s142
      %s144 = sshll.u32 [#allocation19], 4
      %s145 = int_to_ptr.vmem [resolvable:$true] %s144
      %150 = dma.hbm_to_vmem [thread:$0]  %s11, 8192, %s145, [#allocation18], 128, 128, 8
    $region49: #{adaptative_net_forward.1} parent=1 // pred_fallthru
      _
    // Predicated region
    $region50: #{adaptative_net_forward.1} parent=1 // pred_check
      _
    $region51: #{adaptative_net_forward.1} parent=1 // pred_check_branch
      %152 = sbr.rel (0) target = $region53
    $region52: #{adaptative_net_forward.1} parent=1 // pred_region
      %s154 = ssub.s32 32, 32
      %155 = vsyncadd [#allocation21], %s154
      %s157 = sshll.u32 [#allocation20], 4
      %s158 = int_to_ptr.vmem [resolvable:$true] %s157
      %160 = dma.hbm_to_vmem [thread:$0]  %s12, 32, %s158, [#allocation21]
    $region53: #{adaptative_net_forward.1} parent=1 // pred_fallthru
      _
    // Predicated region
    $region54: #{adaptative_net_forward.1} parent=1 // pred_check
      _
    $region55: #{adaptative_net_forward.1} parent=1 // pred_check_branch
      %162 = sbr.rel (0) target = $region57
    $region56: #{adaptative_net_forward.1} parent=1 // pred_region
      %s164 = ssub.s32 2048, 2048
      %165 = vsyncadd [#allocation21], %s164
      %s166 = sshll.u32 [#allocation22], 4
      %s167 = int_to_ptr.vmem [resolvable:$true] %s166
      %172 = dma.hbm_to_vmem [thread:$0]  %s13, 2048, %s167, [#allocation21], 64, 64, 4
    $region57: #{adaptative_net_forward.1} parent=1 // pred_fallthru
      _
    // Predicated region
    $region58: #{adaptative_net_forward.1} parent=1 // pred_check
      _
    $region59: #{adaptative_net_forward.1} parent=1 // pred_check_branch
      %174 = sbr.rel (0) target = $region61
    $region60: #{adaptative_net_forward.1} parent=1 // pred_region
      %s176 = ssub.s32 16, 16
      %177 = vsyncadd [#allocation24], %s176
      %s179 = sshll.u32 [#allocation23], 4
      %s180 = int_to_ptr.vmem [resolvable:$true] %s179
      %182 = dma.hbm_to_vmem [thread:$0]  %s14, 16, %s180, [#allocation24]
    $region61: #{adaptative_net_forward.1} parent=1 // pred_fallthru
      _
    // Predicated region
    $region62: #{adaptative_net_forward.1} parent=1 // pred_check
      _
    $region63: #{adaptative_net_forward.1} parent=1 // pred_check_branch
      %184 = sbr.rel (0) target = $region65
    $region64: #{adaptative_net_forward.1} parent=1 // pred_region
      %185 = dma.done [#allocation3], 128
    $region65: #{adaptative_net_forward.1} parent=1 // pred_fallthru
      _
    // Predicated region
    $region66: #{adaptative_net_forward.1} parent=1 // pred_check
      _
    $region67: #{adaptative_net_forward.1} parent=1 // pred_check_branch
      %187 = sbr.rel (0) target = $region69
    $region68: #{adaptative_net_forward.1} parent=1 // pred_region
      %188 = dma.done [#allocation6], 16
    $region69: #{adaptative_net_forward.1} parent=1 // pred_fallthru
      _
    // Predicated region
    $region70: #{adaptative_net_forward.1} parent=1 // pred_check
      _
    $region71: #{adaptative_net_forward.1} parent=1 // pred_check_branch
      %190 = sbr.rel (0) target = $region73
    $region72: #{adaptative_net_forward.1} parent=1 // pred_region
      %191 = dma.done [#allocation6], 4096
    $region73: #{adaptative_net_forward.1} parent=1 // pred_fallthru
      _
    // Predicated region
    $region74: #{adaptative_net_forward.1} parent=1 // pred_check
      _
    $region75: #{adaptative_net_forward.1} parent=1 // pred_check_branch
      %193 = sbr.rel (0) target = $region77
    $region76: #{adaptative_net_forward.1} parent=1 // pred_region
      %194 = dma.done [#allocation9], 16
    $region77: #{adaptative_net_forward.1} parent=1 // pred_fallthru
      _
    // Predicated region
    $region78: #{adaptative_net_forward.1} parent=1 // pred_check
      _
    $region79: #{adaptative_net_forward.1} parent=1 // pred_check_branch
      %196 = sbr.rel (0) target = $region81
    $region80: #{adaptative_net_forward.1} parent=1 // pred_region
      %197 = dma.done [#allocation9], 24576
    $region81: #{adaptative_net_forward.1} parent=1 // pred_fallthru
      _
    // Predicated region
    $region82: #{adaptative_net_forward.1} parent=1 // pred_check
      _
    $region83: #{adaptative_net_forward.1} parent=1 // pred_check_branch
      %199 = sbr.rel (0) target = $region85
    $region84: #{adaptative_net_forward.1} parent=1 // pred_region
      %200 = dma.done [#allocation12], 128
    $region85: #{adaptative_net_forward.1} parent=1 // pred_fallthru
      _
    // Predicated region
    $region86: #{adaptative_net_forward.1} parent=1 // pred_check
      _
    $region87: #{adaptative_net_forward.1} parent=1 // pred_check_branch
      %202 = sbr.rel (0) target = $region89
    $region88: #{adaptative_net_forward.1} parent=1 // pred_region
      %203 = dma.done [#allocation12], 65536
    $region89: #{adaptative_net_forward.1} parent=1 // pred_fallthru
      _
    // Predicated region
    $region90: #{adaptative_net_forward.1} parent=1 // pred_check
      _
    $region91: #{adaptative_net_forward.1} parent=1 // pred_check_branch
      %205 = sbr.rel (0) target = $region93
    $region92: #{adaptative_net_forward.1} parent=1 // pred_region
      %206 = dma.done [#allocation15], 128
    $region93: #{adaptative_net_forward.1} parent=1 // pred_fallthru
      _
    // Predicated region
    $region94: #{adaptative_net_forward.1} parent=1 // pred_check
      _
    $region95: #{adaptative_net_forward.1} parent=1 // pred_check_branch
      %208 = sbr.rel (0) target = $region97
    $region96: #{adaptative_net_forward.1} parent=1 // pred_region
      %209 = dma.done [#allocation15], 32768
    $region97: #{adaptative_net_forward.1} parent=1 // pred_fallthru
      _
    // Predicated region
    $region98: #{adaptative_net_forward.1} parent=1 // pred_check
      _
    $region99: #{adaptative_net_forward.1} parent=1 // pred_check_branch
      %211 = sbr.rel (0) target = $region101
    $region100: #{adaptative_net_forward.1} parent=1 // pred_region
      %212 = dma.done [#allocation18], 64
    $region101: #{adaptative_net_forward.1} parent=1 // pred_fallthru
      _
    // Predicated region
    $region102: #{adaptative_net_forward.1} parent=1 // pred_check
      _
    $region103: #{adaptative_net_forward.1} parent=1 // pred_check_branch
      %214 = sbr.rel (0) target = $region105
    $region104: #{adaptative_net_forward.1} parent=1 // pred_region
      %215 = dma.done [#allocation18], 8192
    $region105: #{adaptative_net_forward.1} parent=1 // pred_fallthru
      _
    // Predicated region
    $region106: #{adaptative_net_forward.1} parent=1 // pred_check
      _
    $region107: #{adaptative_net_forward.1} parent=1 // pred_check_branch
      %217 = sbr.rel (0) target = $region109
    $region108: #{adaptative_net_forward.1} parent=1 // pred_region
      %218 = dma.done [#allocation21], 32
    $region109: #{adaptative_net_forward.1} parent=1 // pred_fallthru
      _
    // Predicated region
    $region110: #{adaptative_net_forward.1} parent=1 // pred_check
      _
    $region111: #{adaptative_net_forward.1} parent=1 // pred_check_branch
      %220 = sbr.rel (0) target = $region113
    $region112: #{adaptative_net_forward.1} parent=1 // pred_region
      %221 = dma.done [#allocation21], 2048
    $region113: #{adaptative_net_forward.1} parent=1 // pred_fallthru
      _
    // Predicated region
    $region114: #{adaptative_net_forward.1} parent=1 // pred_check
      _
    $region115: #{adaptative_net_forward.1} parent=1 // pred_check_branch
      %223 = sbr.rel (0) target = $region117
    $region116: #{adaptative_net_forward.1} parent=1 // pred_region
      %224 = dma.done [#allocation24], 16
    $region117: #{adaptative_net_forward.1} parent=1 // pred_fallthru
      _
    %v226 = vld [vmem:[%s0] sm:$0x7]
    %v227 = vld [vmem:[%s0 + $0x4] sm:$0x7]
    %v231 = vunpack.c.l.s4 1966171168
    %v232 = vunpack.c.0.s8 %v231
    %v233 = vlaneseq
    %v234 = vshrl.u32 %v233, 7
    %v235 = vsub.s32 %v232, %v234
    %v236 = vrot.slane %v226, %v235
    %v237 = vcombine.high %v236, %v236
    %v239 = vunpack.c.l.s4 1966171168
    %v240 = vunpack.c.0.s8 %v239
    %v241 = vlaneseq
    %v242 = vshrl.u32 %v241, 7
    %v243 = vsub.s32 %v240, %v242
    %v244 = vrot.slane %v236, %v243
    %v246 = vunpack.c.l.s4 1966171168
    %v247 = vunpack.c.0.s8 %v246
    %v248 = vlaneseq
    %v249 = vshrl.u32 %v248, 7
    %v250 = vsub.s32 %v247, %v249
    %v251 = vrot.slane %v237, %v250
    %v252 = vcombine.high %v244, %v244
    %v254 = vunpack.c.l.s4 1966171168
    %v255 = vunpack.c.0.s8 %v254
    %v256 = vlaneseq
    %v257 = vshrl.u32 %v256, 7
    %v258 = vsub.s32 %v255, %v257
    %v259 = vrot.slane %v227, %v258
    %v260 = vcombine.high %v259, %v259
    %v262 = vunpack.c.l.s4 1966171168
    %v263 = vunpack.c.0.s8 %v262
    %v264 = vlaneseq
    %v265 = vshrl.u32 %v264, 7
    %v266 = vsub.s32 %v263, %v265
    %v267 = vrot.slane %v259, %v266
    %v269 = vunpack.c.l.s4 1966171168
    %v270 = vunpack.c.0.s8 %v269
    %v271 = vlaneseq
    %v272 = vshrl.u32 %v271, 7
    %v273 = vsub.s32 %v270, %v272
    %v274 = vrot.slane %v260, %v273
    %v275 = vcombine.high %v267, %v267
    %v276 = vcombine.low %v244, %v251
    %v277 = vcombine.low %v252, %v267
    %v278 = vcombine.low %v274, %v275
    %v280 = vunpack.c.l.s4 1966171168
    %v281 = vunpack.c.0.s8 %v280
    %v282 = vlaneseq
    %v283 = vshrl.u32 %v282, 7
    %v284 = vsub.s32 %v281, %v283
    %v285 = vrot.slane %v276, %v284
    %v287 = vunpack.c.l.s4 1966171168
    %v288 = vunpack.c.0.s8 %v287
    %v289 = vlaneseq
    %v290 = vshrl.u32 %v289, 7
    %v291 = vsub.s32 %v288, %v290
    %v292 = vrot.slane %v277, %v291
    %v294 = vunpack.c.l.s4 1966171168
    %v295 = vunpack.c.0.s8 %v294
    %v296 = vlaneseq
    %v297 = vshrl.u32 %v296, 7
    %v298 = vsub.s32 %v295, %v297
    %v299 = vrot.slane %v278, %v298
    %v300 = vcombine.low %v285, %v292
    %v302 = vunpack.c.l.s4 1966171168
    %v303 = vunpack.c.0.s8 %v302
    %v304 = vlaneseq
    %v305 = vshrl.u32 %v304, 7
    %v306 = vsub.s32 %v303, %v305
    %v307 = vrot.slane %v300, %v306
    %v309 = vunpack.c.l.s4 1966171168
    %v310 = vunpack.c.0.s8 %v309
    %v311 = vlaneseq
    %v312 = vshrl.u32 %v311, 7
    %v313 = vsub.s32 %v310, %v312
    %v314 = vrot.slane %v299, %v313
    %v315 = vcombine.low %v307, %v314
    %v317 = vlaneseq
    %v318 = vshrl.u32 %v317, 7
    %v319 = vsub.s32 0, %v318
    %v320 = vrot.slane %v315, %v319
    %322 = vbcast.lane.b32.xlu0 %v320, 256
    %v323 = vpop.permute.xlu0 %322
    %s325 = sor.u32 256, 8
    %326 = vbcast.lane.b32.xlu0 %v320, %s325
    %v327 = vpop.permute.xlu0 %326
    %s329 = sor.u32 256, 16
    %330 = vbcast.lane.b32.xlu0 %v320, %s329
    %v331 = vpop.permute.xlu0 %330
    %v332 = vlaneseq
    %v333 = vshrl.u32 %v332, 7
    %v334 = vsub.s32 1, %v333
    %v335 = vrot.slane %v315, %v334
    %337 = vbcast.lane.b32.xlu0 %v335, 256
    %v338 = vpop.permute.xlu0 %337
    %s340 = sor.u32 256, 8
    %341 = vbcast.lane.b32.xlu0 %v335, %s340
    %v342 = vpop.permute.xlu0 %341
    %s344 = sor.u32 256, 16
    %345 = vbcast.lane.b32.xlu0 %v335, %s344
    %v346 = vpop.permute.xlu0 %345
    %v347 = vlaneseq
    %v348 = vshrl.u32 %v347, 7
    %v349 = vsub.s32 2, %v348
    %v350 = vrot.slane %v315, %v349
    %352 = vbcast.lane.b32.xlu0 %v350, 256
    %v353 = vpop.permute.xlu0 %352
    %s355 = sor.u32 256, 8
    %356 = vbcast.lane.b32.xlu0 %v350, %s355
    %v357 = vpop.permute.xlu0 %356
    %s359 = sor.u32 256, 16
    %360 = vbcast.lane.b32.xlu0 %v350, %s359
    %v361 = vpop.permute.xlu0 %360
    %v362 = vlaneseq
    %v363 = vshrl.u32 %v362, 7
    %v364 = vsub.s32 3, %v363
    %v365 = vrot.slane %v315, %v364
    %367 = vbcast.lane.b32.xlu0 %v365, 256
    %v368 = vpop.permute.xlu0 %367
    %s370 = sor.u32 256, 8
    %371 = vbcast.lane.b32.xlu0 %v365, %s370
    %v372 = vpop.permute.xlu0 %371
    %s374 = sor.u32 256, 16
    %375 = vbcast.lane.b32.xlu0 %v365, %s374
    %v376 = vpop.permute.xlu0 %375
    %v377 = vlaneseq
    %v378 = vshrl.u32 %v377, 7
    %v379 = vsub.s32 4, %v378
    %v380 = vrot.slane %v315, %v379
    %382 = vbcast.lane.b32.xlu0 %v380, 256
    %v383 = vpop.permute.xlu0 %382
    %s385 = sor.u32 256, 8
    %386 = vbcast.lane.b32.xlu0 %v380, %s385
    %v387 = vpop.permute.xlu0 %386
    %s389 = sor.u32 256, 16
    %390 = vbcast.lane.b32.xlu0 %v380, %s389
    %v391 = vpop.permute.xlu0 %390
    %v392 = vlaneseq
    %v393 = vshrl.u32 %v392, 7
    %v394 = vsub.s32 5, %v393
    %v395 = vrot.slane %v315, %v394
    %397 = vbcast.lane.b32.xlu0 %v395, 256
    %v398 = vpop.permute.xlu0 %397
    %s400 = sor.u32 256, 8
    %401 = vbcast.lane.b32.xlu0 %v395, %s400
    %v402 = vpop.permute.xlu0 %401
    %s404 = sor.u32 256, 16
    %405 = vbcast.lane.b32.xlu0 %v395, %s404
    %v406 = vpop.permute.xlu0 %405
    %s408 = sor.u32 256, 1
    %409 = vbcast.lane.b32.xlu0 %v320, %s408
    %v410 = vpop.permute.xlu0 %409
    %s412 = sor.u32 256, 9
    %413 = vbcast.lane.b32.xlu0 %v320, %s412
    %v414 = vpop.permute.xlu0 %413
    %s416 = sor.u32 256, 17
    %417 = vbcast.lane.b32.xlu0 %v320, %s416
    %v418 = vpop.permute.xlu0 %417
    %s420 = sor.u32 256, 1
    %421 = vbcast.lane.b32.xlu0 %v335, %s420
    %v422 = vpop.permute.xlu0 %421
    %s424 = sor.u32 256, 9
    %425 = vbcast.lane.b32.xlu0 %v335, %s424
    %v426 = vpop.permute.xlu0 %425
    %s428 = sor.u32 256, 17
    %429 = vbcast.lane.b32.xlu0 %v335, %s428
    %v430 = vpop.permute.xlu0 %429
    %s432 = sor.u32 256, 1
    %433 = vbcast.lane.b32.xlu0 %v350, %s432
    %v434 = vpop.permute.xlu0 %433
    %s436 = sor.u32 256, 9
    %437 = vbcast.lane.b32.xlu0 %v350, %s436
    %v438 = vpop.permute.xlu0 %437
    %s440 = sor.u32 256, 17
    %441 = vbcast.lane.b32.xlu0 %v350, %s440
    %v442 = vpop.permute.xlu0 %441
    %s444 = sor.u32 256, 1
    %445 = vbcast.lane.b32.xlu0 %v365, %s444
    %v446 = vpop.permute.xlu0 %445
    %s448 = sor.u32 256, 9
    %449 = vbcast.lane.b32.xlu0 %v365, %s448
    %v450 = vpop.permute.xlu0 %449
    %s452 = sor.u32 256, 17
    %453 = vbcast.lane.b32.xlu0 %v365, %s452
    %v454 = vpop.permute.xlu0 %453
    %s456 = sor.u32 256, 1
    %457 = vbcast.lane.b32.xlu0 %v380, %s456
    %v458 = vpop.permute.xlu0 %457
    %s460 = sor.u32 256, 9
    %461 = vbcast.lane.b32.xlu0 %v380, %s460
    %v462 = vpop.permute.xlu0 %461
    %s464 = sor.u32 256, 17
    %465 = vbcast.lane.b32.xlu0 %v380, %s464
    %v466 = vpop.permute.xlu0 %465
    %s468 = sor.u32 256, 1
    %469 = vbcast.lane.b32.xlu0 %v395, %s468
    %v470 = vpop.permute.xlu0 %469
    %s472 = sor.u32 256, 9
    %473 = vbcast.lane.b32.xlu0 %v395, %s472
    %v474 = vpop.permute.xlu0 %473
    %s476 = sor.u32 256, 17
    %477 = vbcast.lane.b32.xlu0 %v395, %s476
    %v478 = vpop.permute.xlu0 %477
    %s480 = sor.u32 256, 2
    %481 = vbcast.lane.b32.xlu0 %v320, %s480
    %v482 = vpop.permute.xlu0 %481
    %s484 = sor.u32 256, 10
    %485 = vbcast.lane.b32.xlu0 %v320, %s484
    %v486 = vpop.permute.xlu0 %485
    %s488 = sor.u32 256, 18
    %489 = vbcast.lane.b32.xlu0 %v320, %s488
    %v490 = vpop.permute.xlu0 %489
    %s492 = sor.u32 256, 2
    %493 = vbcast.lane.b32.xlu0 %v335, %s492
    %v494 = vpop.permute.xlu0 %493
    %s496 = sor.u32 256, 10
    %497 = vbcast.lane.b32.xlu0 %v335, %s496
    %v498 = vpop.permute.xlu0 %497
    %s500 = sor.u32 256, 18
    %501 = vbcast.lane.b32.xlu0 %v335, %s500
    %v502 = vpop.permute.xlu0 %501
    %s504 = sor.u32 256, 2
    %505 = vbcast.lane.b32.xlu0 %v350, %s504
    %v506 = vpop.permute.xlu0 %505
    %s508 = sor.u32 256, 10
    %509 = vbcast.lane.b32.xlu0 %v350, %s508
    %v510 = vpop.permute.xlu0 %509
    %s512 = sor.u32 256, 18
    %513 = vbcast.lane.b32.xlu0 %v350, %s512
    %v514 = vpop.permute.xlu0 %513
    %s516 = sor.u32 256, 2
    %517 = vbcast.lane.b32.xlu0 %v365, %s516
    %v518 = vpop.permute.xlu0 %517
    %s520 = sor.u32 256, 10
    %521 = vbcast.lane.b32.xlu0 %v365, %s520
    %v522 = vpop.permute.xlu0 %521
    %s524 = sor.u32 256, 18
    %525 = vbcast.lane.b32.xlu0 %v365, %s524
    %v526 = vpop.permute.xlu0 %525
    %s528 = sor.u32 256, 2
    %529 = vbcast.lane.b32.xlu0 %v380, %s528
    %v530 = vpop.permute.xlu0 %529
    %s532 = sor.u32 256, 10
    %533 = vbcast.lane.b32.xlu0 %v380, %s532
    %v534 = vpop.permute.xlu0 %533
    %s536 = sor.u32 256, 18
    %537 = vbcast.lane.b32.xlu0 %v380, %s536
    %v538 = vpop.permute.xlu0 %537
    %s540 = sor.u32 256, 2
    %541 = vbcast.lane.b32.xlu0 %v395, %s540
    %v542 = vpop.permute.xlu0 %541
    %s544 = sor.u32 256, 10
    %545 = vbcast.lane.b32.xlu0 %v395, %s544
    %v546 = vpop.permute.xlu0 %545
    %s548 = sor.u32 256, 18
    %549 = vbcast.lane.b32.xlu0 %v395, %s548
    %v550 = vpop.permute.xlu0 %549
    %s552 = sor.u32 256, 3
    %553 = vbcast.lane.b32.xlu0 %v320, %s552
    %v554 = vpop.permute.xlu0 %553
    %s556 = sor.u32 256, 11
    %557 = vbcast.lane.b32.xlu0 %v320, %s556
    %v558 = vpop.permute.xlu0 %557
    %s560 = sor.u32 256, 19
    %561 = vbcast.lane.b32.xlu0 %v320, %s560
    %v562 = vpop.permute.xlu0 %561
    %s564 = sor.u32 256, 3
    %565 = vbcast.lane.b32.xlu0 %v335, %s564
    %v566 = vpop.permute.xlu0 %565
    %s568 = sor.u32 256, 11
    %569 = vbcast.lane.b32.xlu0 %v335, %s568
    %v570 = vpop.permute.xlu0 %569
    %s572 = sor.u32 256, 19
    %573 = vbcast.lane.b32.xlu0 %v335, %s572
    %v574 = vpop.permute.xlu0 %573
    %s576 = sor.u32 256, 3
    %577 = vbcast.lane.b32.xlu0 %v350, %s576
    %v578 = vpop.permute.xlu0 %577
    %s580 = sor.u32 256, 11
    %581 = vbcast.lane.b32.xlu0 %v350, %s580
    %v582 = vpop.permute.xlu0 %581
    %s584 = sor.u32 256, 19
    %585 = vbcast.lane.b32.xlu0 %v350, %s584
    %v586 = vpop.permute.xlu0 %585
    %s588 = sor.u32 256, 3
    %589 = vbcast.lane.b32.xlu0 %v365, %s588
    %v590 = vpop.permute.xlu0 %589
    %s592 = sor.u32 256, 11
    %593 = vbcast.lane.b32.xlu0 %v365, %s592
    %v594 = vpop.permute.xlu0 %593
    %s596 = sor.u32 256, 19
    %597 = vbcast.lane.b32.xlu0 %v365, %s596
    %v598 = vpop.permute.xlu0 %597
    %s600 = sor.u32 256, 3
    %601 = vbcast.lane.b32.xlu0 %v380, %s600
    %v602 = vpop.permute.xlu0 %601
    %s604 = sor.u32 256, 11
    %605 = vbcast.lane.b32.xlu0 %v380, %s604
    %v606 = vpop.permute.xlu0 %605
    %s608 = sor.u32 256, 19
    %609 = vbcast.lane.b32.xlu0 %v380, %s608
    %v610 = vpop.permute.xlu0 %609
    %s612 = sor.u32 256, 3
    %613 = vbcast.lane.b32.xlu0 %v395, %s612
    %v614 = vpop.permute.xlu0 %613
    %s616 = sor.u32 256, 11
    %617 = vbcast.lane.b32.xlu0 %v395, %s616
    %v618 = vpop.permute.xlu0 %617
    %s620 = sor.u32 256, 19
    %621 = vbcast.lane.b32.xlu0 %v395, %s620
    %v622 = vpop.permute.xlu0 %621
    %s624 = sor.u32 256, 4
    %625 = vbcast.lane.b32.xlu0 %v320, %s624
    %v626 = vpop.permute.xlu0 %625
    %s628 = sor.u32 256, 12
    %629 = vbcast.lane.b32.xlu0 %v320, %s628
    %v630 = vpop.permute.xlu0 %629
    %s632 = sor.u32 256, 20
    %633 = vbcast.lane.b32.xlu0 %v320, %s632
    %v634 = vpop.permute.xlu0 %633
    %s636 = sor.u32 256, 4
    %637 = vbcast.lane.b32.xlu0 %v335, %s636
    %v638 = vpop.permute.xlu0 %637
    %s640 = sor.u32 256, 12
    %641 = vbcast.lane.b32.xlu0 %v335, %s640
    %v642 = vpop.permute.xlu0 %641
    %s644 = sor.u32 256, 20
    %645 = vbcast.lane.b32.xlu0 %v335, %s644
    %v646 = vpop.permute.xlu0 %645
    %s648 = sor.u32 256, 4
    %649 = vbcast.lane.b32.xlu0 %v350, %s648
    %v650 = vpop.permute.xlu0 %649
    %s652 = sor.u32 256, 12
    %653 = vbcast.lane.b32.xlu0 %v350, %s652
    %v654 = vpop.permute.xlu0 %653
    %s656 = sor.u32 256, 20
    %657 = vbcast.lane.b32.xlu0 %v350, %s656
    %v658 = vpop.permute.xlu0 %657
    %s660 = sor.u32 256, 4
    %661 = vbcast.lane.b32.xlu0 %v365, %s660
    %v662 = vpop.permute.xlu0 %661
    %s664 = sor.u32 256, 12
    %665 = vbcast.lane.b32.xlu0 %v365, %s664
    %v666 = vpop.permute.xlu0 %665
    %s668 = sor.u32 256, 20
    %669 = vbcast.lane.b32.xlu0 %v365, %s668
    %v670 = vpop.permute.xlu0 %669
    %s672 = sor.u32 256, 4
    %673 = vbcast.lane.b32.xlu0 %v380, %s672
    %v674 = vpop.permute.xlu0 %673
    %s676 = sor.u32 256, 12
    %677 = vbcast.lane.b32.xlu0 %v380, %s676
    %v678 = vpop.permute.xlu0 %677
    %s680 = sor.u32 256, 20
    %681 = vbcast.lane.b32.xlu0 %v380, %s680
    %v682 = vpop.permute.xlu0 %681
    %s684 = sor.u32 256, 4
    %685 = vbcast.lane.b32.xlu0 %v395, %s684
    %v686 = vpop.permute.xlu0 %685
    %s688 = sor.u32 256, 12
    %689 = vbcast.lane.b32.xlu0 %v395, %s688
    %v690 = vpop.permute.xlu0 %689
    %s692 = sor.u32 256, 20
    %693 = vbcast.lane.b32.xlu0 %v395, %s692
    %v694 = vpop.permute.xlu0 %693
    %s696 = sor.u32 256, 5
    %697 = vbcast.lane.b32.xlu0 %v320, %s696
    %v698 = vpop.permute.xlu0 %697
    %s700 = sor.u32 256, 13
    %701 = vbcast.lane.b32.xlu0 %v320, %s700
    %v702 = vpop.permute.xlu0 %701
    %s704 = sor.u32 256, 21
    %705 = vbcast.lane.b32.xlu0 %v320, %s704
    %v706 = vpop.permute.xlu0 %705
    %s708 = sor.u32 256, 5
    %709 = vbcast.lane.b32.xlu0 %v335, %s708
    %v710 = vpop.permute.xlu0 %709
    %s712 = sor.u32 256, 13
    %713 = vbcast.lane.b32.xlu0 %v335, %s712
    %v714 = vpop.permute.xlu0 %713
    %s716 = sor.u32 256, 21
    %717 = vbcast.lane.b32.xlu0 %v335, %s716
    %v718 = vpop.permute.xlu0 %717
    %s720 = sor.u32 256, 5
    %721 = vbcast.lane.b32.xlu0 %v350, %s720
    %v722 = vpop.permute.xlu0 %721
    %s724 = sor.u32 256, 13
    %725 = vbcast.lane.b32.xlu0 %v350, %s724
    %v726 = vpop.permute.xlu0 %725
    %s728 = sor.u32 256, 21
    %729 = vbcast.lane.b32.xlu0 %v350, %s728
    %v730 = vpop.permute.xlu0 %729
    %s732 = sor.u32 256, 5
    %733 = vbcast.lane.b32.xlu0 %v365, %s732
    %v734 = vpop.permute.xlu0 %733
    %s736 = sor.u32 256, 13
    %737 = vbcast.lane.b32.xlu0 %v365, %s736
    %v738 = vpop.permute.xlu0 %737
    %s740 = sor.u32 256, 21
    %741 = vbcast.lane.b32.xlu0 %v365, %s740
    %v742 = vpop.permute.xlu0 %741
    %s744 = sor.u32 256, 5
    %745 = vbcast.lane.b32.xlu0 %v380, %s744
    %v746 = vpop.permute.xlu0 %745
    %s748 = sor.u32 256, 13
    %749 = vbcast.lane.b32.xlu0 %v380, %s748
    %v750 = vpop.permute.xlu0 %749
    %s752 = sor.u32 256, 21
    %753 = vbcast.lane.b32.xlu0 %v380, %s752
    %v754 = vpop.permute.xlu0 %753
    %s756 = sor.u32 256, 5
    %757 = vbcast.lane.b32.xlu0 %v395, %s756
    %v758 = vpop.permute.xlu0 %757
    %s760 = sor.u32 256, 13
    %761 = vbcast.lane.b32.xlu0 %v395, %s760
    %v762 = vpop.permute.xlu0 %761
    %s764 = sor.u32 256, 21
    %765 = vbcast.lane.b32.xlu0 %v395, %s764
    %v766 = vpop.permute.xlu0 %765
    %s768 = sor.u32 256, 6
    %769 = vbcast.lane.b32.xlu0 %v320, %s768
    %v770 = vpop.permute.xlu0 %769
    %s772 = sor.u32 256, 14
    %773 = vbcast.lane.b32.xlu0 %v320, %s772
    %v774 = vpop.permute.xlu0 %773
    %s776 = sor.u32 256, 22
    %777 = vbcast.lane.b32.xlu0 %v320, %s776
    %v778 = vpop.permute.xlu0 %777
    %s780 = sor.u32 256, 6
    %781 = vbcast.lane.b32.xlu0 %v335, %s780
    %v782 = vpop.permute.xlu0 %781
    %s784 = sor.u32 256, 14
    %785 = vbcast.lane.b32.xlu0 %v335, %s784
    %v786 = vpop.permute.xlu0 %785
    %s788 = sor.u32 256, 22
    %789 = vbcast.lane.b32.xlu0 %v335, %s788
    %v790 = vpop.permute.xlu0 %789
    %s792 = sor.u32 256, 6
    %793 = vbcast.lane.b32.xlu0 %v350, %s792
    %v794 = vpop.permute.xlu0 %793
    %s796 = sor.u32 256, 14
    %797 = vbcast.lane.b32.xlu0 %v350, %s796
    %v798 = vpop.permute.xlu0 %797
    %s800 = sor.u32 256, 22
    %801 = vbcast.lane.b32.xlu0 %v350, %s800
    %v802 = vpop.permute.xlu0 %801
    %s804 = sor.u32 256, 6
    %805 = vbcast.lane.b32.xlu0 %v365, %s804
    %v806 = vpop.permute.xlu0 %805
    %s808 = sor.u32 256, 14
    %809 = vbcast.lane.b32.xlu0 %v365, %s808
    %v810 = vpop.permute.xlu0 %809
    %s812 = sor.u32 256, 22
    %813 = vbcast.lane.b32.xlu0 %v365, %s812
    %v814 = vpop.permute.xlu0 %813
    %s816 = sor.u32 256, 6
    %817 = vbcast.lane.b32.xlu0 %v380, %s816
    %v818 = vpop.permute.xlu0 %817
    %s820 = sor.u32 256, 14
    %821 = vbcast.lane.b32.xlu0 %v380, %s820
    %v822 = vpop.permute.xlu0 %821
    %s824 = sor.u32 256, 22
    %825 = vbcast.lane.b32.xlu0 %v380, %s824
    %v826 = vpop.permute.xlu0 %825
    %s828 = sor.u32 256, 6
    %829 = vbcast.lane.b32.xlu0 %v395, %s828
    %v830 = vpop.permute.xlu0 %829
    %s832 = sor.u32 256, 14
    %833 = vbcast.lane.b32.xlu0 %v395, %s832
    %v834 = vpop.permute.xlu0 %833
    %s836 = sor.u32 256, 22
    %837 = vbcast.lane.b32.xlu0 %v395, %s836
    %v838 = vpop.permute.xlu0 %837
    %vm839 = vcmask 7168
    %v840 = vsel %vm839, %v323, %v410
    %v841 = vsel %vm839, %v327, %v414
    %v842 = vsel %vm839, %v331, %v418
    %v843 = vsel %vm839, %v338, %v422
    %v844 = vsel %vm839, %v342, %v426
    %v845 = vsel %vm839, %v346, %v430
    %v846 = vsel %vm839, %v353, %v434
    %v847 = vsel %vm839, %v357, %v438
    %v848 = vsel %vm839, %v361, %v442
    %v849 = vsel %vm839, %v368, %v446
    %v850 = vsel %vm839, %v372, %v450
    %v851 = vsel %vm839, %v376, %v454
    %v852 = vsel %vm839, %v383, %v458
    %v853 = vsel %vm839, %v387, %v462
    %v854 = vsel %vm839, %v391, %v466
    %v855 = vsel %vm839, %v398, %v470
    %v856 = vsel %vm839, %v402, %v474
    %v857 = vsel %vm839, %v406, %v478
    %vm858 = vcmask 15360
    %v859 = vsel %vm858, %v840, %v482
    %v860 = vsel %vm858, %v841, %v486
    %v861 = vsel %vm858, %v842, %v490
    %v862 = vsel %vm858, %v843, %v494
    %v863 = vsel %vm858, %v844, %v498
    %v864 = vsel %vm858, %v845, %v502
    %v865 = vsel %vm858, %v846, %v506
    %v866 = vsel %vm858, %v847, %v510
    %v867 = vsel %vm858, %v848, %v514
    %v868 = vsel %vm858, %v849, %v518
    %v869 = vsel %vm858, %v850, %v522
    %v870 = vsel %vm858, %v851, %v526
    %v871 = vsel %vm858, %v852, %v530
    %v872 = vsel %vm858, %v853, %v534
    %v873 = vsel %vm858, %v854, %v538
    %v874 = vsel %vm858, %v855, %v542
    %v875 = vsel %vm858, %v856, %v546
    %v876 = vsel %vm858, %v857, %v550
    %vm877 = vcmask 23552
    %v878 = vsel %vm877, %v859, %v554
    %v879 = vsel %vm877, %v860, %v558
    %v880 = vsel %vm877, %v861, %v562
    %v881 = vsel %vm877, %v862, %v566
    %v882 = vsel %vm877, %v863, %v570
    %v883 = vsel %vm877, %v864, %v574
    %v884 = vsel %vm877, %v865, %v578
    %v885 = vsel %vm877, %v866, %v582
    %v886 = vsel %vm877, %v867, %v586
    %v887 = vsel %vm877, %v868, %v590
    %v888 = vsel %vm877, %v869, %v594
    %v889 = vsel %vm877, %v870, %v598
    %v890 = vsel %vm877, %v871, %v602
    %v891 = vsel %vm877, %v872, %v606
    %v892 = vsel %vm877, %v873, %v610
    %v893 = vsel %vm877, %v874, %v614
    %v894 = vsel %vm877, %v875, %v618
    %v895 = vsel %vm877, %v876, %v622
    %vm896 = vcmask 31744
    %v897 = vsel %vm896, %v878, %v626
    %v898 = vsel %vm896, %v879, %v630
    %v899 = vsel %vm896, %v880, %v634
    %v900 = vsel %vm896, %v881, %v638
    %v901 = vsel %vm896, %v882, %v642
    %v902 = vsel %vm896, %v883, %v646
    %v903 = vsel %vm896, %v884, %v650
    %v904 = vsel %vm896, %v885, %v654
    %v905 = vsel %vm896, %v886, %v658
    %v906 = vsel %vm896, %v887, %v662
    %v907 = vsel %vm896, %v888, %v666
    %v908 = vsel %vm896, %v889, %v670
    %v909 = vsel %vm896, %v890, %v674
    %v910 = vsel %vm896, %v891, %v678
    %v911 = vsel %vm896, %v892, %v682
    %v912 = vsel %vm896, %v893, %v686
    %v913 = vsel %vm896, %v894, %v690
    %v914 = vsel %vm896, %v895, %v694
    %vm915 = vcmask 39936
    %v916 = vsel %vm915, %v897, %v698
    %v917 = vsel %vm915, %v898, %v702
    %v918 = vsel %vm915, %v899, %v706
    %v919 = vsel %vm915, %v900, %v710
    %v920 = vsel %vm915, %v901, %v714
    %v921 = vsel %vm915, %v902, %v718
    %v922 = vsel %vm915, %v903, %v722
    %v923 = vsel %vm915, %v904, %v726
    %v924 = vsel %vm915, %v905, %v730
    %v925 = vsel %vm915, %v906, %v734
    %v926 = vsel %vm915, %v907, %v738
    %v927 = vsel %vm915, %v908, %v742
    %v928 = vsel %vm915, %v909, %v746
    %v929 = vsel %vm915, %v910, %v750
    %v930 = vsel %vm915, %v911, %v754
    %v931 = vsel %vm915, %v912, %v758
    %v932 = vsel %vm915, %v913, %v762
    %v933 = vsel %vm915, %v914, %v766
    %vm934 = vcmask 48128
    %v935 = vsel %vm934, %v916, %v770
    %v936 = vsel %vm934, %v917, %v774
    %v937 = vsel %vm934, %v918, %v778
    %v938 = vsel %vm934, %v919, %v782
    %v939 = vsel %vm934, %v920, %v786
    %v940 = vsel %vm934, %v921, %v790
    %v941 = vsel %vm934, %v922, %v794
    %v942 = vsel %vm934, %v923, %v798
    %v943 = vsel %vm934, %v924, %v802
    %v944 = vsel %vm934, %v925, %v806
    %v945 = vsel %vm934, %v926, %v810
    %v946 = vsel %vm934, %v927, %v814
    %v947 = vsel %vm934, %v928, %v818
    %v948 = vsel %vm934, %v929, %v822
    %v949 = vsel %vm934, %v930, %v826
    %v950 = vsel %vm934, %v931, %v830
    %v951 = vsel %vm934, %v932, %v834
    %v952 = vsel %vm934, %v933, %v838
    %vm953 = vcmask 56320
    %v954 = vsel %vm953, %v935, 0.0
    %v955 = vsel %vm953, %v936, 0.0
    %v956 = vsel %vm953, %v937, 0.0
    %v957 = vsel %vm953, %v938, 0.0
    %v958 = vsel %vm953, %v939, 0.0
    %v959 = vsel %vm953, %v940, 0.0
    %v960 = vsel %vm953, %v941, 0.0
    %v961 = vsel %vm953, %v942, 0.0
    %v962 = vsel %vm953, %v943, 0.0
    %v963 = vsel %vm953, %v944, 0.0
    %v964 = vsel %vm953, %v945, 0.0
    %v965 = vsel %vm953, %v946, 0.0
    %v966 = vsel %vm953, %v947, 0.0
    %v967 = vsel %vm953, %v948, 0.0
    %v968 = vsel %vm953, %v949, 0.0
    %v969 = vsel %vm953, %v950, 0.0
    %v970 = vsel %vm953, %v951, 0.0
    %v971 = vsel %vm953, %v952, 0.0
    %v972 = vld [vmem:[#allocation2] sm:$0xff]
    %v973 = vld [vmem:[#allocation5] sm:$0x1]
    %v975 = vlaneseq
    %v976 = vshrl.u32 %v975, 7
    %v977 = vsub.s32 0, %v976
    %v978 = vrot.slane %v973, %v977
    %vm980 = vcmask 64512
    %v982 = vsel %vm980, %v954, 0
    %v985 = vsel %vm980, %v955, 0
    %v988 = vsel %vm980, %v956, 0
    %v991 = vsel %vm980, %v957, 0
    %v994 = vsel %vm980, %v958, 0
    %v997 = vsel %vm980, %v959, 0
    %v1000 = vsel %vm980, %v960, 0
    %v1003 = vsel %vm980, %v961, 0
    %v1006 = vsel %vm980, %v962, 0
    %v1009 = vsel %vm980, %v963, 0
    %v1012 = vsel %vm980, %v964, 0
    %v1015 = vsel %vm980, %v965, 0
    %v1018 = vsel %vm980, %v966, 0
    %v1021 = vsel %vm980, %v967, 0
    %v1024 = vsel %vm980, %v968, 0
    %v1027 = vsel %vm980, %v969, 0
    %v1030 = vsel %vm980, %v970, 0
    %v1033 = vsel %vm980, %v971, 0
    %1035 = vmatprep.subr.mxu0 0.0
    %1036 = vmatpush1.msra.mxu0 %v972
    %1037 = vmatprep.subr.mxu0 0.0
    %1038 = vmatpush1.msra.mxu0 0.0
    %1039 = vmatprep.subr.mxu0 0.0
    %1040 = vmatpush1.msra.mxu0 0.0
    %1041 = vmatprep.subr.mxu0 0.0
    %1042 = vmatpush1.msra.mxu0 0.0
    %1043 = vmatprep.subr.mxu0 0.0
    %1044 = vmatpush1.msra.mxu0 0.0
    %1045 = vmatprep.subr.mxu0 0.0
    %1046 = vmatpush1.msra.mxu0 0.0
    %1047 = vmatprep.subr.mxu0 0.0
    %1048 = vmatpush1.msra.mxu0 0.0
    %1049 = vmatprep.subr.mxu0 0.0
    %1050 = vmatpush1.msra.mxu0 0.0
    %1051 = vmatprep.subr.mxu0 0.0
    %1052 = vmatpush1.msra.mxu0 0.0
    %1053 = vmatprep.subr.mxu0 0.0
    %1054 = vmatpush1.msra.mxu0 0.0
    %1055 = vmatprep.subr.mxu0 0.0
    %1056 = vmatpush1.msra.mxu0 0.0
    %1057 = vmatprep.subr.mxu0 0.0
    %1058 = vmatpush1.msra.mxu0 0.0
    %1059 = vmatprep.subr.mxu0 0.0
    %1060 = vmatpush1.msra.mxu0 0.0
    %1061 = vmatprep.subr.mxu0 0.0
    %1062 = vmatpush1.msra.mxu0 0.0
    %1063 = vmatprep.subr.mxu0 0.0
    %1064 = vmatpush1.msra.mxu0 0.0
    %1065 = vmatprep.subr.mxu0 0.0
    %1066 = vmatpush1.msra.mxu0 0.0
    %1067 = vmatprep.subr.mxu0 0.0
    %1068 = vmatpush1.msra.mxu0 0.0
    %1069 = vmatprep.subr.mxu0 0.0
    %1070 = vmatpush1.msra.mxu0 0.0
    %1071 = vmatprep.subr.mxu0 0.0
    %1072 = vmatpush1.msra.mxu0 0.0
    %1073 = vmatprep.subr.mxu0 0.0
    %1074 = vmatpush1.msra.mxu0 0.0
    %1075 = vmatprep.subr.mxu0 0.0
    %1076 = vmatpush1.msra.mxu0 0.0
    %1077 = vmatprep.subr.mxu0 0.0
    %1078 = vmatpush1.msra.mxu0 0.0
    %1079 = vmatprep.subr.mxu0 0.0
    %1080 = vmatpush1.msra.mxu0 0.0
    %1081 = vmatprep.subr.mxu0 0.0
    %1082 = vmatpush1.msra.mxu0 0.0
    %1083 = vmatprep.subr.mxu0 0.0
    %1084 = vmatpush1.msra.mxu0 0.0
    %1085 = vmatprep.subr.mxu0 0.0
    %1086 = vmatpush1.msra.mxu0 0.0
    %1087 = vmatprep.subr.mxu0 0.0
    %1088 = vmatpush1.msra.mxu0 0.0
    %1089 = vmatprep.subr.mxu0 0.0
    %1090 = vmatpush1.msra.mxu0 0.0
    %1091 = vmatprep.subr.mxu0 0.0
    %1092 = vmatpush1.msra.mxu0 0.0
    %1093 = vmatprep.subr.mxu0 0.0
    %1094 = vmatpush1.msra.mxu0 0.0
    %1095 = vmatprep.subr.mxu0 0.0
    %1096 = vmatpush1.msra.mxu0 0.0
    %1097 = vmatprep.subr.mxu0 0.0
    %1098 = vmatpush1.msra.mxu0 0.0
    %1099 = vmatprep.mubr.f32.mxu0 0.0
    %1100 = vmatmul.mubr.f32.gmra.mrb[0].mxu0 %v982
    %v1101 = vpop.f32.mrb[0].mxu0
    %v1102 = vadd.f32 %v978, %v1101
    %v1103 = vpop.f32.mrb[0].mxu0
    %1104 = vmatprep.mubr.f32.mxu0 0.0
    %1105 = vmatmul.mubr.f32.gmra.mrb[0].mxu0 %v985
    %v1106 = vpop.f32.mrb[0].mxu0
    %v1107 = vadd.f32 %v978, %v1106
    %v1108 = vpop.f32.mrb[0].mxu0
    %1109 = vmatprep.mubr.f32.mxu0 0.0
    %1110 = vmatmul.mubr.f32.gmra.mrb[0].mxu0 %v988
    %v1111 = vpop.f32.mrb[0].mxu0
    %v1112 = vadd.f32 %v978, %v1111
    %v1113 = vpop.f32.mrb[0].mxu0
    %1114 = vmatprep.mubr.f32.mxu0 0.0
    %1115 = vmatmul.mubr.f32.gmra.mrb[0].mxu0 %v991
    %v1116 = vpop.f32.mrb[0].mxu0
    %v1117 = vadd.f32 %v978, %v1116
    %v1118 = vpop.f32.mrb[0].mxu0
    %1119 = vmatprep.mubr.f32.mxu0 0.0
    %1120 = vmatmul.mubr.f32.gmra.mrb[0].mxu0 %v994
    %v1121 = vpop.f32.mrb[0].mxu0
    %v1122 = vadd.f32 %v978, %v1121
    %v1123 = vpop.f32.mrb[0].mxu0
    %1124 = vmatprep.mubr.f32.mxu0 0.0
    %1125 = vmatmul.mubr.f32.gmra.mrb[0].mxu0 %v997
    %v1126 = vpop.f32.mrb[0].mxu0
    %v1127 = vadd.f32 %v978, %v1126
    %v1128 = vpop.f32.mrb[0].mxu0
    %1129 = vmatprep.mubr.f32.mxu0 0.0
    %1130 = vmatmul.mubr.f32.gmra.mrb[0].mxu0 %v1000
    %v1131 = vpop.f32.mrb[0].mxu0
    %v1132 = vadd.f32 %v978, %v1131
    %v1133 = vpop.f32.mrb[0].mxu0
    %1134 = vmatprep.mubr.f32.mxu0 0.0
    %1135 = vmatmul.mubr.f32.gmra.mrb[0].mxu0 %v1003
    %v1136 = vpop.f32.mrb[0].mxu0
    %v1137 = vadd.f32 %v978, %v1136
    %v1138 = vpop.f32.mrb[0].mxu0
    %1139 = vmatprep.mubr.f32.mxu0 0.0
    %1140 = vmatmul.mubr.f32.gmra.mrb[0].mxu0 %v1006
    %v1141 = vpop.f32.mrb[0].mxu0
    %v1142 = vadd.f32 %v978, %v1141
    %v1143 = vpop.f32.mrb[0].mxu0
    %1144 = vmatprep.mubr.f32.mxu0 0.0
    %1145 = vmatmul.mubr.f32.gmra.mrb[0].mxu0 %v1009
    %v1146 = vpop.f32.mrb[0].mxu0
    %v1147 = vadd.f32 %v978, %v1146
    %v1148 = vpop.f32.mrb[0].mxu0
    %1149 = vmatprep.mubr.f32.mxu0 0.0
    %1150 = vmatmul.mubr.f32.gmra.mrb[0].mxu0 %v1012
    %v1151 = vpop.f32.mrb[0].mxu0
    %v1152 = vadd.f32 %v978, %v1151
    %v1153 = vpop.f32.mrb[0].mxu0
    %1154 = vmatprep.mubr.f32.mxu0 0.0
    %1155 = vmatmul.mubr.f32.gmra.mrb[0].mxu0 %v1015
    %v1156 = vpop.f32.mrb[0].mxu0
    %v1157 = vadd.f32 %v978, %v1156
    %v1158 = vpop.f32.mrb[0].mxu0
    %1159 = vmatprep.mubr.f32.mxu0 0.0
    %1160 = vmatmul.mubr.f32.gmra.mrb[0].mxu0 %v1018
    %v1161 = vpop.f32.mrb[0].mxu0
    %v1162 = vadd.f32 %v978, %v1161
    %v1163 = vpop.f32.mrb[0].mxu0
    %1164 = vmatprep.mubr.f32.mxu0 0.0
    %1165 = vmatmul.mubr.f32.gmra.mrb[0].mxu0 %v1021
    %v1166 = vpop.f32.mrb[0].mxu0
    %v1167 = vadd.f32 %v978, %v1166
    %v1168 = vpop.f32.mrb[0].mxu0
    %1169 = vmatprep.mubr.f32.mxu0 0.0
    %1170 = vmatmul.mubr.f32.gmra.mrb[0].mxu0 %v1024
    %v1171 = vpop.f32.mrb[0].mxu0
    %v1172 = vadd.f32 %v978, %v1171
    %v1173 = vpop.f32.mrb[0].mxu0
    %1174 = vmatprep.mubr.f32.mxu0 0.0
    %1175 = vmatmul.mubr.f32.gmra.mrb[0].mxu0 %v1027
    %v1176 = vpop.f32.mrb[0].mxu0
    %v1177 = vadd.f32 %v978, %v1176
    %v1178 = vpop.f32.mrb[0].mxu0
    %1179 = vmatprep.mubr.f32.mxu0 0.0
    %1180 = vmatmul.mubr.f32.gmra.mrb[0].mxu0 %v1030
    %v1181 = vpop.f32.mrb[0].mxu0
    %v1182 = vadd.f32 %v978, %v1181
    %v1183 = vpop.f32.mrb[0].mxu0
    %1184 = vmatprep.mubr.f32.mxu0 0.0
    %1185 = vmatmul.mubr.f32.gmra.mrb[0].mxu0 %v1033
    %v1186 = vpop.f32.mrb[0].mxu0
    %v1187 = vadd.f32 %v978, %v1186
    %v1188 = vpop.f32.mrb[0].mxu0
    %1189 = vdwg.mxu0
    %v1190 = vlaneseq
    %v1191 = vshrl.u32 %v1190, 7
    %v1192 = vadd.s32 %v1191, 8
    %v1193 = vadd.s32 %v1191, 16
    %vm1194 = vcmp.ge.s32.totalorder %v1191, 2
    %vm1195 = vcmp.ge.s32.totalorder %v1192, 2
    %vm1196 = vcmp.ge.s32.totalorder %v1193, 2
    %vm1197 = vcmp.lt.s32.totalorder %v1191, 18
    %vm1198 = vcmp.lt.s32.totalorder %v1192, 18
    %vm1199 = vcmp.lt.s32.totalorder %v1193, 18
    %vm1200 = vmand %vm1194, %vm1197
    %vm1201 = vmand %vm1195, %vm1198
    %vm1202 = vmand %vm1196, %vm1199
    %v1203 = vsel %vm1200, 1, 0
    %v1204 = vsel %vm1201, 1, 0
    %v1205 = vsel %vm1202, 1, 0
    %vm1206 = vcmp.eq.s32.totalorder %v1203, 1
    %vm1207 = vcmp.eq.s32.totalorder %v1204, 1
    %vm1208 = vcmp.eq.s32.totalorder %v1205, 1
    %v1209 = vsel %vm1206, %v1102, 0.0
    %v1210 = vsel %vm1207, %v1107, 0.0
    %v1211 = vsel %vm1208, %v1112, 0.0
    %v1212 = vsel %vm1206, %v1117, 0.0
    %v1213 = vsel %vm1207, %v1122, 0.0
    %v1214 = vsel %vm1208, %v1127, 0.0
    %v1215 = vsel %vm1206, %v1132, 0.0
    %v1216 = vsel %vm1207, %v1137, 0.0
    %v1217 = vsel %vm1208, %v1142, 0.0
    %v1218 = vsel %vm1206, %v1147, 0.0
    %v1219 = vsel %vm1207, %v1152, 0.0
    %v1220 = vsel %vm1208, %v1157, 0.0
    %v1221 = vsel %vm1206, %v1162, 0.0
    %v1222 = vsel %vm1207, %v1167, 0.0
    %v1223 = vsel %vm1208, %v1172, 0.0
    %v1224 = vsel %vm1206, %v1177, 0.0
    %v1225 = vsel %vm1207, %v1182, 0.0
    %v1226 = vsel %vm1208, %v1187, 0.0
    %vm1245 = vcmask 1046528
    %v1246 = vrot.slane %v1209, 1
    %v1247 = vrot.slane %v1210, 1
    %v1248 = vsel %vm1245, %v1246, %v1247
    %v1249 = vrot.slane %v1211, 1
    %v1250 = vsel %vm1245, %v1247, %v1249
    %v1251 = vrot.slane %v1212, 1
    %v1252 = vrot.slane %v1213, 1
    %v1253 = vsel %vm1245, %v1251, %v1252
    %v1254 = vrot.slane %v1214, 1
    %v1255 = vsel %vm1245, %v1252, %v1254
    %v1256 = vrot.slane %v1215, 1
    %v1257 = vrot.slane %v1216, 1
    %v1258 = vsel %vm1245, %v1256, %v1257
    %v1259 = vrot.slane %v1217, 1
    %v1260 = vsel %vm1245, %v1257, %v1259
    %v1261 = vrot.slane %v1218, 1
    %v1262 = vrot.slane %v1219, 1
    %v1263 = vsel %vm1245, %v1261, %v1262
    %v1264 = vrot.slane %v1220, 1
    %v1265 = vsel %vm1245, %v1262, %v1264
    %v1266 = vrot.slane %v1221, 1
    %v1267 = vrot.slane %v1222, 1
    %v1268 = vsel %vm1245, %v1266, %v1267
    %v1269 = vrot.slane %v1223, 1
    %v1270 = vsel %vm1245, %v1267, %v1269
    %v1271 = vrot.slane %v1224, 1
    %v1272 = vrot.slane %v1225, 1
    %v1273 = vsel %vm1245, %v1271, %v1272
    %v1274 = vrot.slane %v1226, 1
    %v1275 = vsel %vm1245, %v1272, %v1274
    %1276 = vrot.lane.b32.xlu0 %v1248, 32
    %v1277 = vpop.permute.xlu0 %1276
    %1278 = vrot.lane.b32.xlu0 %v1250, 32
    %v1279 = vpop.permute.xlu0 %1278
    %1280 = vrot.lane.b32.xlu0 %v1253, 32
    %v1281 = vpop.permute.xlu0 %1280
    %1282 = vrot.lane.b32.xlu0 %v1255, 32
    %v1283 = vpop.permute.xlu0 %1282
    %1284 = vrot.lane.b32.xlu0 %v1258, 32
    %v1285 = vpop.permute.xlu0 %1284
    %1286 = vrot.lane.b32.xlu0 %v1260, 32
    %v1287 = vpop.permute.xlu0 %1286
    %1288 = vrot.lane.b32.xlu0 %v1263, 32
    %v1289 = vpop.permute.xlu0 %1288
    %1290 = vrot.lane.b32.xlu0 %v1265, 32
    %v1291 = vpop.permute.xlu0 %1290
    %1292 = vrot.lane.b32.xlu0 %v1268, 32
    %v1293 = vpop.permute.xlu0 %1292
    %1294 = vrot.lane.b32.xlu0 %v1270, 32
    %v1295 = vpop.permute.xlu0 %1294
    %1296 = vrot.lane.b32.xlu0 %v1273, 32
    %v1297 = vpop.permute.xlu0 %1296
    %1298 = vrot.lane.b32.xlu0 %v1275, 32
    %v1299 = vpop.permute.xlu0 %1298
    %vm1312 = vcmask 1045504
    %v1313 = vrot.slane %v1209, 2
    %v1314 = vrot.slane %v1210, 2
    %v1315 = vsel %vm1312, %v1313, %v1314
    %v1316 = vrot.slane %v1211, 2
    %v1317 = vsel %vm1312, %v1314, %v1316
    %v1318 = vrot.slane %v1212, 2
    %v1319 = vrot.slane %v1213, 2
    %v1320 = vsel %vm1312, %v1318, %v1319
    %v1321 = vrot.slane %v1214, 2
    %v1322 = vsel %vm1312, %v1319, %v1321
    %v1323 = vrot.slane %v1215, 2
    %v1324 = vrot.slane %v1216, 2
    %v1325 = vsel %vm1312, %v1323, %v1324
    %v1326 = vrot.slane %v1217, 2
    %v1327 = vsel %vm1312, %v1324, %v1326
    %v1328 = vrot.slane %v1218, 2
    %v1329 = vrot.slane %v1219, 2
    %v1330 = vsel %vm1312, %v1328, %v1329
    %v1331 = vrot.slane %v1220, 2
    %v1332 = vsel %vm1312, %v1329, %v1331
    %v1333 = vrot.slane %v1221, 2
    %v1334 = vrot.slane %v1222, 2
    %v1335 = vsel %vm1312, %v1333, %v1334
    %v1336 = vrot.slane %v1223, 2
    %v1337 = vsel %vm1312, %v1334, %v1336
    %v1338 = vrot.slane %v1224, 2
    %v1339 = vrot.slane %v1225, 2
    %v1340 = vsel %vm1312, %v1338, %v1339
    %v1341 = vrot.slane %v1226, 2
    %v1342 = vsel %vm1312, %v1339, %v1341
    %1343 = vrot.lane.b32.xlu0 %v1315, 64
    %v1344 = vpop.permute.xlu0 %1343
    %1345 = vrot.lane.b32.xlu0 %v1317, 64
    %v1346 = vpop.permute.xlu0 %1345
    %1347 = vrot.lane.b32.xlu0 %v1320, 64
    %v1348 = vpop.permute.xlu0 %1347
    %1349 = vrot.lane.b32.xlu0 %v1322, 64
    %v1350 = vpop.permute.xlu0 %1349
    %1351 = vrot.lane.b32.xlu0 %v1325, 64
    %v1352 = vpop.permute.xlu0 %1351
    %1353 = vrot.lane.b32.xlu0 %v1327, 64
    %v1354 = vpop.permute.xlu0 %1353
    %1355 = vrot.lane.b32.xlu0 %v1330, 64
    %v1356 = vpop.permute.xlu0 %1355
    %1357 = vrot.lane.b32.xlu0 %v1332, 64
    %v1358 = vpop.permute.xlu0 %1357
    %1359 = vrot.lane.b32.xlu0 %v1335, 64
    %v1360 = vpop.permute.xlu0 %1359
    %1361 = vrot.lane.b32.xlu0 %v1337, 64
    %v1362 = vpop.permute.xlu0 %1361
    %1363 = vrot.lane.b32.xlu0 %v1340, 64
    %v1364 = vpop.permute.xlu0 %1363
    %1365 = vrot.lane.b32.xlu0 %v1342, 64
    %v1366 = vpop.permute.xlu0 %1365
    %vm1379 = vcmask 1044480
    %v1380 = vrot.slane %v1209, 3
    %v1381 = vrot.slane %v1210, 3
    %v1382 = vsel %vm1379, %v1380, %v1381
    %v1383 = vrot.slane %v1211, 3
    %v1384 = vsel %vm1379, %v1381, %v1383
    %v1385 = vrot.slane %v1212, 3
    %v1386 = vrot.slane %v1213, 3
    %v1387 = vsel %vm1379, %v1385, %v1386
    %v1388 = vrot.slane %v1214, 3
    %v1389 = vsel %vm1379, %v1386, %v1388
    %v1390 = vrot.slane %v1215, 3
    %v1391 = vrot.slane %v1216, 3
    %v1392 = vsel %vm1379, %v1390, %v1391
    %v1393 = vrot.slane %v1217, 3
    %v1394 = vsel %vm1379, %v1391, %v1393
    %v1395 = vrot.slane %v1218, 3
    %v1396 = vrot.slane %v1219, 3
    %v1397 = vsel %vm1379, %v1395, %v1396
    %v1398 = vrot.slane %v1220, 3
    %v1399 = vsel %vm1379, %v1396, %v1398
    %v1400 = vrot.slane %v1221, 3
    %v1401 = vrot.slane %v1222, 3
    %v1402 = vsel %vm1379, %v1400, %v1401
    %v1403 = vrot.slane %v1223, 3
    %v1404 = vsel %vm1379, %v1401, %v1403
    %v1405 = vrot.slane %v1224, 3
    %v1406 = vrot.slane %v1225, 3
    %v1407 = vsel %vm1379, %v1405, %v1406
    %v1408 = vrot.slane %v1226, 3
    %v1409 = vsel %vm1379, %v1406, %v1408
    %1410 = vrot.lane.b32.xlu0 %v1382, 96
    %v1411 = vpop.permute.xlu0 %1410
    %1412 = vrot.lane.b32.xlu0 %v1384, 96
    %v1413 = vpop.permute.xlu0 %1412
    %1414 = vrot.lane.b32.xlu0 %v1387, 96
    %v1415 = vpop.permute.xlu0 %1414
    %1416 = vrot.lane.b32.xlu0 %v1389, 96
    %v1417 = vpop.permute.xlu0 %1416
    %1418 = vrot.lane.b32.xlu0 %v1392, 96
    %v1419 = vpop.permute.xlu0 %1418
    %1420 = vrot.lane.b32.xlu0 %v1394, 96
    %v1421 = vpop.permute.xlu0 %1420
    %1422 = vrot.lane.b32.xlu0 %v1397, 96
    %v1423 = vpop.permute.xlu0 %1422
    %1424 = vrot.lane.b32.xlu0 %v1399, 96
    %v1425 = vpop.permute.xlu0 %1424
    %1426 = vrot.lane.b32.xlu0 %v1402, 96
    %v1427 = vpop.permute.xlu0 %1426
    %1428 = vrot.lane.b32.xlu0 %v1404, 96
    %v1429 = vpop.permute.xlu0 %1428
    %1430 = vrot.lane.b32.xlu0 %v1407, 96
    %v1431 = vpop.permute.xlu0 %1430
    %1432 = vrot.lane.b32.xlu0 %v1409, 96
    %v1433 = vpop.permute.xlu0 %1432
    %vm1446 = vcmask 1043456
    %v1447 = vrot.slane %v1209, 4
    %v1448 = vrot.slane %v1210, 4
    %v1449 = vsel %vm1446, %v1447, %v1448
    %v1450 = vrot.slane %v1211, 4
    %v1451 = vsel %vm1446, %v1448, %v1450
    %v1452 = vrot.slane %v1212, 4
    %v1453 = vrot.slane %v1213, 4
    %v1454 = vsel %vm1446, %v1452, %v1453
    %v1455 = vrot.slane %v1214, 4
    %v1456 = vsel %vm1446, %v1453, %v1455
    %v1457 = vrot.slane %v1215, 4
    %v1458 = vrot.slane %v1216, 4
    %v1459 = vsel %vm1446, %v1457, %v1458
    %v1460 = vrot.slane %v1217, 4
    %v1461 = vsel %vm1446, %v1458, %v1460
    %v1462 = vrot.slane %v1218, 4
    %v1463 = vrot.slane %v1219, 4
    %v1464 = vsel %vm1446, %v1462, %v1463
    %v1465 = vrot.slane %v1220, 4
    %v1466 = vsel %vm1446, %v1463, %v1465
    %v1467 = vrot.slane %v1221, 4
    %v1468 = vrot.slane %v1222, 4
    %v1469 = vsel %vm1446, %v1467, %v1468
    %v1470 = vrot.slane %v1223, 4
    %v1471 = vsel %vm1446, %v1468, %v1470
    %v1472 = vrot.slane %v1224, 4
    %v1473 = vrot.slane %v1225, 4
    %v1474 = vsel %vm1446, %v1472, %v1473
    %v1475 = vrot.slane %v1226, 4
    %v1476 = vsel %vm1446, %v1473, %v1475
    %vm1489 = vcmask 261120
    %v1490 = vsel %vm1489, %v1209, %v1277
    %v1491 = vsel %vm1489, %v1210, %v1279
    %v1492 = vsel %vm1489, %v1212, %v1281
    %v1493 = vsel %vm1489, %v1213, %v1283
    %v1494 = vsel %vm1489, %v1215, %v1285
    %v1495 = vsel %vm1489, %v1216, %v1287
    %v1496 = vsel %vm1489, %v1218, %v1289
    %v1497 = vsel %vm1489, %v1219, %v1291
    %v1498 = vsel %vm1489, %v1221, %v1293
    %v1499 = vsel %vm1489, %v1222, %v1295
    %v1500 = vsel %vm1489, %v1224, %v1297
    %v1501 = vsel %vm1489, %v1225, %v1299
    %vm1502 = vcmask 523264
    %v1503 = vsel %vm1502, %v1490, %v1344
    %v1504 = vsel %vm1502, %v1491, %v1346
    %v1505 = vsel %vm1502, %v1492, %v1348
    %v1506 = vsel %vm1502, %v1493, %v1350
    %v1507 = vsel %vm1502, %v1494, %v1352
    %v1508 = vsel %vm1502, %v1495, %v1354
    %v1509 = vsel %vm1502, %v1496, %v1356
    %v1510 = vsel %vm1502, %v1497, %v1358
    %v1511 = vsel %vm1502, %v1498, %v1360
    %v1512 = vsel %vm1502, %v1499, %v1362
    %v1513 = vsel %vm1502, %v1500, %v1364
    %v1514 = vsel %vm1502, %v1501, %v1366
    %vm1515 = vcmask 785408
    %v1516 = vsel %vm1515, %v1503, %v1411
    %v1517 = vsel %vm1515, %v1504, %v1413
    %v1518 = vsel %vm1515, %v1505, %v1415
    %v1519 = vsel %vm1515, %v1506, %v1417
    %v1520 = vsel %vm1515, %v1507, %v1419
    %v1521 = vsel %vm1515, %v1508, %v1421
    %v1522 = vsel %vm1515, %v1509, %v1423
    %v1523 = vsel %vm1515, %v1510, %v1425
    %v1524 = vsel %vm1515, %v1511, %v1427
    %v1525 = vsel %vm1515, %v1512, %v1429
    %v1526 = vsel %vm1515, %v1513, %v1431
    %v1527 = vsel %vm1515, %v1514, %v1433
    %v1528 = vsel %vm1489, %v1449, 0.0
    %v1529 = vsel %vm1489, %v1451, 0.0
    %v1530 = vsel %vm1489, %v1454, 0.0
    %v1531 = vsel %vm1489, %v1456, 0.0
    %v1532 = vsel %vm1489, %v1459, 0.0
    %v1533 = vsel %vm1489, %v1461, 0.0
    %v1534 = vsel %vm1489, %v1464, 0.0
    %v1535 = vsel %vm1489, %v1466, 0.0
    %v1536 = vsel %vm1489, %v1469, 0.0
    %v1537 = vsel %vm1489, %v1471, 0.0
    %v1538 = vsel %vm1489, %v1474, 0.0
    %v1539 = vsel %vm1489, %v1476, 0.0
    %v1540 = vld [vmem:[#allocation7] sm:$0xff]
    %v1541 = vld [vmem:[#allocation7 + $0x8] sm:$0xff]
    %v1542 = vld [vmem:[#allocation7 + $0x10] sm:$0xff]
    %v1543 = vld [vmem:[#allocation7 + $0x18] sm:$0xff]
    %v1544 = vld [vmem:[#allocation7 + $0x20] sm:$0xff]
    %v1545 = vld [vmem:[#allocation7 + $0x28] sm:$0xff]
    %v1546 = vld [vmem:[#allocation7 + $0x30] sm:$0xff]
    %v1547 = vld [vmem:[#allocation7 + $0x38] sm:$0xff]
    %v1548 = vld [vmem:[#allocation7 + $0x40] sm:$0xff]
    %v1549 = vld [vmem:[#allocation7 + $0x48] sm:$0xff]
    %v1550 = vld [vmem:[#allocation7 + $0x50] sm:$0xff]
    %v1551 = vld [vmem:[#allocation7 + $0x58] sm:$0xff]
    %v1552 = vld [vmem:[#allocation7 + $0x60] sm:$0xff]
    %v1553 = vld [vmem:[#allocation7 + $0x68] sm:$0xff]
    %v1554 = vld [vmem:[#allocation7 + $0x70] sm:$0xff]
    %v1555 = vld [vmem:[#allocation7 + $0x78] sm:$0xff]
    %v1556 = vld [vmem:[#allocation7 + $0x80] sm:$0xff]
    %v1557 = vld [vmem:[#allocation7 + $0x88] sm:$0xff]
    %v1558 = vld [vmem:[#allocation7 + $0x90] sm:$0xff]
    %v1559 = vld [vmem:[#allocation7 + $0x98] sm:$0xff]
    %v1560 = vld [vmem:[#allocation7 + $0xa0] sm:$0xff]
    %v1561 = vld [vmem:[#allocation7 + $0xa8] sm:$0xff]
    %v1562 = vld [vmem:[#allocation7 + $0xb0] sm:$0xff]
    %v1563 = vld [vmem:[#allocation7 + $0xb8] sm:$0xff]
    %v1564 = vld [vmem:[#allocation7 + $0xc0] sm:$0xff]
    %v1565 = vld [vmem:[#allocation7 + $0xc8] sm:$0xff]
    %v1566 = vld [vmem:[#allocation7 + $0xd0] sm:$0xff]
    %v1567 = vld [vmem:[#allocation7 + $0xd8] sm:$0xff]
    %v1568 = vld [vmem:[#allocation7 + $0xe0] sm:$0xff]
    %v1569 = vld [vmem:[#allocation7 + $0xe8] sm:$0xff]
    %v1570 = vld [vmem:[#allocation7 + $0xf0] sm:$0xff]
    %v1571 = vld [vmem:[#allocation7 + $0xf8] sm:$0xff]
    %v1572 = vld [vmem:[#allocation8] sm:$0x1]
    %v1574 = vlaneseq
    %v1575 = vshrl.u32 %v1574, 7
    %v1576 = vsub.s32 0, %v1575
    %v1577 = vrot.slane %v1572, %v1576
    %1579 = vmatprep.subr.mxu0 0.0
    %1580 = vmatpush1.msra.mxu0 %v1540
    %1581 = vmatprep.subr.mxu0 0.0
    %1582 = vmatpush1.msra.mxu0 %v1541
    %1583 = vmatprep.subr.mxu0 0.0
    %1584 = vmatpush1.msra.mxu0 %v1542
    %1585 = vmatprep.subr.mxu0 0.0
    %1586 = vmatpush1.msra.mxu0 %v1543
    %1587 = vmatprep.subr.mxu0 0.0
    %1588 = vmatpush1.msra.mxu0 %v1544
    %1589 = vmatprep.subr.mxu0 0.0
    %1590 = vmatpush1.msra.mxu0 %v1545
    %1591 = vmatprep.subr.mxu0 0.0
    %1592 = vmatpush1.msra.mxu0 %v1546
    %1593 = vmatprep.subr.mxu0 0.0
    %1594 = vmatpush1.msra.mxu0 %v1547
    %1595 = vmatprep.subr.mxu0 0.0
    %1596 = vmatpush1.msra.mxu0 %v1548
    %1597 = vmatprep.subr.mxu0 0.0
    %1598 = vmatpush1.msra.mxu0 %v1549
    %1599 = vmatprep.subr.mxu0 0.0
    %1600 = vmatpush1.msra.mxu0 %v1550
    %1601 = vmatprep.subr.mxu0 0.0
    %1602 = vmatpush1.msra.mxu0 %v1551
    %1603 = vmatprep.subr.mxu0 0.0
    %1604 = vmatpush1.msra.mxu0 %v1552
    %1605 = vmatprep.subr.mxu0 0.0
    %1606 = vmatpush1.msra.mxu0 %v1553
    %1607 = vmatprep.subr.mxu0 0.0
    %1608 = vmatpush1.msra.mxu0 %v1554
    %1609 = vmatprep.subr.mxu0 0.0
    %1610 = vmatpush1.msra.mxu0 %v1555
    %1611 = vmatprep.subr.mxu0 0.0
    %1612 = vmatpush1.msra.mxu0 %v1556
    %1613 = vmatprep.subr.mxu0 0.0
    %1614 = vmatpush1.msra.mxu0 %v1557
    %1615 = vmatprep.subr.mxu0 0.0
    %1616 = vmatpush1.msra.mxu0 %v1558
    %1617 = vmatprep.subr.mxu0 0.0
    %1618 = vmatpush1.msra.mxu0 %v1559
    %1619 = vmatprep.subr.mxu0 0.0
    %1620 = vmatpush1.msra.mxu0 %v1560
    %1621 = vmatprep.subr.mxu0 0.0
    %1622 = vmatpush1.msra.mxu0 %v1561
    %1623 = vmatprep.subr.mxu0 0.0
    %1624 = vmatpush1.msra.mxu0 %v1562
    %1625 = vmatprep.subr.mxu0 0.0
    %1626 = vmatpush1.msra.mxu0 %v1563
    %1627 = vmatprep.subr.mxu0 0.0
    %1628 = vmatpush1.msra.mxu0 %v1564
    %1629 = vmatprep.subr.mxu0 0.0
    %1630 = vmatpush1.msra.mxu0 %v1565
    %1631 = vmatprep.subr.mxu0 0.0
    %1632 = vmatpush1.msra.mxu0 %v1566
    %1633 = vmatprep.subr.mxu0 0.0
    %1634 = vmatpush1.msra.mxu0 %v1567
    %1635 = vmatprep.subr.mxu0 0.0
    %1636 = vmatpush1.msra.mxu0 %v1568
    %1637 = vmatprep.subr.mxu0 0.0
    %1638 = vmatpush1.msra.mxu0 %v1569
    %1639 = vmatprep.subr.mxu0 0.0
    %1640 = vmatpush1.msra.mxu0 %v1570
    %1641 = vmatprep.subr.mxu0 0.0
    %1642 = vmatpush1.msra.mxu0 %v1571
    %1643 = vmatprep.mubr.f32.mxu0 %v1528
    %1644 = vmatmul.mubr.f32.gmra.mrb[0].mxu0 %v1516
    %v1645 = vpop.f32.mrb[0].mxu0
    %v1646 = vadd.f32 %v1577, %v1645
    %v1647 = vpop.f32.mrb[0].mxu0
    %1648 = vmatprep.mubr.f32.mxu0 %v1529
    %1649 = vmatmul.mubr.f32.gmra.mrb[0].mxu0 %v1517
    %v1650 = vpop.f32.mrb[0].mxu0
    %v1651 = vadd.f32 %v1577, %v1650
    %v1652 = vpop.f32.mrb[0].mxu0
    %1653 = vmatprep.mubr.f32.mxu0 %v1530
    %1654 = vmatmul.mubr.f32.gmra.mrb[0].mxu0 %v1518
    %v1655 = vpop.f32.mrb[0].mxu0
    %v1656 = vadd.f32 %v1577, %v1655
    %v1657 = vpop.f32.mrb[0].mxu0
    %1658 = vmatprep.mubr.f32.mxu0 %v1531
    %1659 = vmatmul.mubr.f32.gmra.mrb[0].mxu0 %v1519
    %v1660 = vpop.f32.mrb[0].mxu0
    %v1661 = vadd.f32 %v1577, %v1660
    %v1662 = vpop.f32.mrb[0].mxu0
    %1663 = vmatprep.mubr.f32.mxu0 %v1532
    %1664 = vmatmul.mubr.f32.gmra.mrb[0].mxu0 %v1520
    %v1665 = vpop.f32.mrb[0].mxu0
    %v1666 = vadd.f32 %v1577, %v1665
    %v1667 = vpop.f32.mrb[0].mxu0
    %1668 = vmatprep.mubr.f32.mxu0 %v1533
    %1669 = vmatmul.mubr.f32.gmra.mrb[0].mxu0 %v1521
    %v1670 = vpop.f32.mrb[0].mxu0
    %v1671 = vadd.f32 %v1577, %v1670
    %v1672 = vpop.f32.mrb[0].mxu0
    %1673 = vmatprep.mubr.f32.mxu0 %v1534
    %1674 = vmatmul.mubr.f32.gmra.mrb[0].mxu0 %v1522
    %v1675 = vpop.f32.mrb[0].mxu0
    %v1676 = vadd.f32 %v1577, %v1675
    %v1677 = vpop.f32.mrb[0].mxu0
    %1678 = vmatprep.mubr.f32.mxu0 %v1535
    %1679 = vmatmul.mubr.f32.gmra.mrb[0].mxu0 %v1523
    %v1680 = vpop.f32.mrb[0].mxu0
    %v1681 = vadd.f32 %v1577, %v1680
    %v1682 = vpop.f32.mrb[0].mxu0
    %1683 = vmatprep.mubr.f32.mxu0 %v1536
    %1684 = vmatmul.mubr.f32.gmra.mrb[0].mxu0 %v1524
    %v1685 = vpop.f32.mrb[0].mxu0
    %v1686 = vadd.f32 %v1577, %v1685
    %v1687 = vpop.f32.mrb[0].mxu0
    %1688 = vmatprep.mubr.f32.mxu0 %v1537
    %1689 = vmatmul.mubr.f32.gmra.mrb[0].mxu0 %v1525
    %v1690 = vpop.f32.mrb[0].mxu0
    %v1691 = vadd.f32 %v1577, %v1690
    %v1692 = vpop.f32.mrb[0].mxu0
    %1693 = vmatprep.mubr.f32.mxu0 %v1538
    %1694 = vmatmul.mubr.f32.gmra.mrb[0].mxu0 %v1526
    %v1695 = vpop.f32.mrb[0].mxu0
    %v1696 = vadd.f32 %v1577, %v1695
    %v1697 = vpop.f32.mrb[0].mxu0
    %1698 = vmatprep.mubr.f32.mxu0 %v1539
    %1699 = vmatmul.mubr.f32.gmra.mrb[0].mxu0 %v1527
    %v1700 = vpop.f32.mrb[0].mxu0
    %v1701 = vadd.f32 %v1577, %v1700
    %v1702 = vpop.f32.mrb[0].mxu0
    %1703 = vdwg.mxu0
    %v1704 = vmax.f32 %v1646, 0.0
    %v1705 = vmax.f32 %v1651, 0.0
    %v1706 = vmax.f32 %v1656, 0.0
    %v1707 = vmax.f32 %v1661, 0.0
    %v1708 = vmax.f32 %v1666, 0.0
    %v1709 = vmax.f32 %v1671, 0.0
    %v1710 = vmax.f32 %v1676, 0.0
    %v1711 = vmax.f32 %v1681, 0.0
    %v1712 = vmax.f32 %v1686, 0.0
    %v1713 = vmax.f32 %v1691, 0.0
    %v1714 = vmax.f32 %v1696, 0.0
    %v1715 = vmax.f32 %v1701, 0.0
    %v1716 = vadd.f32 %v1704, %v1705
    %v1717 = vrot.slane %v1716, 4
    %v1718 = vadd.f32 %v1716, %v1717
    %v1719 = vrot.slane %v1718, 2
    %v1720 = vadd.f32 %v1718, %v1719
    %v1721 = vrot.slane %v1720, 1
    %v1722 = vadd.f32 %v1720, %v1721
    %v1723 = vadd.f32 %v1706, %v1707
    %v1724 = vrot.slane %v1723, 4
    %v1725 = vadd.f32 %v1723, %v1724
    %v1726 = vrot.slane %v1725, 2
    %v1727 = vadd.f32 %v1725, %v1726
    %v1728 = vrot.slane %v1727, 1
    %v1729 = vadd.f32 %v1727, %v1728
    %v1730 = vadd.f32 %v1708, %v1709
    %v1731 = vrot.slane %v1730, 4
    %v1732 = vadd.f32 %v1730, %v1731
    %v1733 = vrot.slane %v1732, 2
    %v1734 = vadd.f32 %v1732, %v1733
    %v1735 = vrot.slane %v1734, 1
    %v1736 = vadd.f32 %v1734, %v1735
    %v1737 = vadd.f32 %v1710, %v1711
    %v1738 = vrot.slane %v1737, 4
    %v1739 = vadd.f32 %v1737, %v1738
    %v1740 = vrot.slane %v1739, 2
    %v1741 = vadd.f32 %v1739, %v1740
    %v1742 = vrot.slane %v1741, 1
    %v1743 = vadd.f32 %v1741, %v1742
    %v1744 = vadd.f32 %v1712, %v1713
    %v1745 = vrot.slane %v1744, 4
    %v1746 = vadd.f32 %v1744, %v1745
    %v1747 = vrot.slane %v1746, 2
    %v1748 = vadd.f32 %v1746, %v1747
    %v1749 = vrot.slane %v1748, 1
    %v1750 = vadd.f32 %v1748, %v1749
    %v1751 = vadd.f32 %v1714, %v1715
    %v1752 = vrot.slane %v1751, 4
    %v1753 = vadd.f32 %v1751, %v1752
    %v1754 = vrot.slane %v1753, 2
    %v1755 = vadd.f32 %v1753, %v1754
    %v1756 = vrot.slane %v1755, 1
    %v1757 = vadd.f32 %v1755, %v1756
    %v1758 = vmul.f32 %v1722, 0.0625
    %v1759 = vmul.f32 %v1729, 0.0625
    %v1760 = vmul.f32 %v1736, 0.0625
    %v1761 = vmul.f32 %v1743, 0.0625
    %v1762 = vmul.f32 %v1750, 0.0625
    %v1763 = vmul.f32 %v1757, 0.0625
    %vm1766 = vcmask 1041409
    %v1767 = vsel %vm1766, %v1761, %v1758
    %v1771 = vsel %vm1766, %v1762, %v1759
    %v1775 = vsel %vm1766, %v1763, %v1760
    %v1777 = vpack.c.bf16 %v1767, %v1767
    %v1778 = vpack.c.bf16 %v1771, %v1771
    %v1779 = vpack.c.bf16 %v1775, %v1775
    %v1780 = vld [vmem:[#allocation10] sm:$0xff]
    %v1781 = vld [vmem:[#allocation10 + $0x8] sm:$0xff]
    %v1782 = vld [vmem:[#allocation10 + $0x10] sm:$0xff]
    %v1783 = vld [vmem:[#allocation10 + $0x18] sm:$0xff]
    %v1784 = vld [vmem:[#allocation10 + $0x20] sm:$0xff]
    %v1785 = vld [vmem:[#allocation10 + $0x28] sm:$0xff]
    %v1786 = vld [vmem:[#allocation10 + $0x30] sm:$0xff]
    %v1787 = vld [vmem:[#allocation10 + $0x38] sm:$0xff]
    %v1788 = vld [vmem:[#allocation10 + $0x40] sm:$0xff]
    %v1789 = vld [vmem:[#allocation10 + $0x48] sm:$0xff]
    %v1790 = vld [vmem:[#allocation10 + $0x50] sm:$0xff]
    %v1791 = vld [vmem:[#allocation10 + $0x58] sm:$0xff]
    %v1792 = vld [vmem:[#allocation10 + $0x60] sm:$0xff]
    %v1793 = vld [vmem:[#allocation10 + $0x68] sm:$0xff]
    %v1794 = vld [vmem:[#allocation10 + $0x70] sm:$0xff]
    %v1795 = vld [vmem:[#allocation10 + $0x78] sm:$0xff]
    %v1796 = vld [vmem:[#allocation10 + $0x80] sm:$0xff]
    %v1797 = vld [vmem:[#allocation10 + $0x88] sm:$0xff]
    %v1798 = vld [vmem:[#allocation10 + $0x90] sm:$0xff]
    %v1799 = vld [vmem:[#allocation10 + $0x98] sm:$0xff]
    %v1800 = vld [vmem:[#allocation10 + $0xa0] sm:$0xff]
    %v1801 = vld [vmem:[#allocation10 + $0xa8] sm:$0xff]
    %v1802 = vld [vmem:[#allocation10 + $0xb0] sm:$0xff]
    %v1803 = vld [vmem:[#allocation10 + $0xb8] sm:$0xff]
    %v1804 = vld [vmem:[#allocation10 + $0xc0] sm:$0xff]
    %v1805 = vld [vmem:[#allocation10 + $0xc8] sm:$0xff]
    %v1806 = vld [vmem:[#allocation10 + $0xd0] sm:$0xff]
    %v1807 = vld [vmem:[#allocation10 + $0xd8] sm:$0xff]
    %v1808 = vld [vmem:[#allocation10 + $0xe0] sm:$0xff]
    %v1809 = vld [vmem:[#allocation10 + $0xe8] sm:$0xff]
    %v1810 = vld [vmem:[#allocation10 + $0xf0] sm:$0xff]
    %v1811 = vld [vmem:[#allocation10 + $0xf8] sm:$0xff]
    %v1812 = vld [vmem:[#allocation10 + $0x100] sm:$0xff]
    %v1813 = vld [vmem:[#allocation10 + $0x108] sm:$0xff]
    %v1814 = vld [vmem:[#allocation10 + $0x110] sm:$0xff]
    %v1815 = vld [vmem:[#allocation10 + $0x118] sm:$0xff]
    %v1816 = vld [vmem:[#allocation10 + $0x120] sm:$0xff]
    %v1817 = vld [vmem:[#allocation10 + $0x128] sm:$0xff]
    %v1818 = vld [vmem:[#allocation10 + $0x130] sm:$0xff]
    %v1819 = vld [vmem:[#allocation10 + $0x138] sm:$0xff]
    %v1820 = vld [vmem:[#allocation10 + $0x140] sm:$0xff]
    %v1821 = vld [vmem:[#allocation10 + $0x148] sm:$0xff]
    %v1822 = vld [vmem:[#allocation10 + $0x150] sm:$0xff]
    %v1823 = vld [vmem:[#allocation10 + $0x158] sm:$0xff]
    %v1824 = vld [vmem:[#allocation10 + $0x160] sm:$0xff]
    %v1825 = vld [vmem:[#allocation10 + $0x168] sm:$0xff]
    %v1826 = vld [vmem:[#allocation10 + $0x170] sm:$0xff]
    %v1827 = vld [vmem:[#allocation10 + $0x178] sm:$0xff]
    %v1828 = vld [vmem:[#allocation10 + $0x180] sm:$0xff]
    %v1829 = vld [vmem:[#allocation10 + $0x188] sm:$0xff]
    %v1830 = vld [vmem:[#allocation10 + $0x190] sm:$0xff]
    %v1831 = vld [vmem:[#allocation10 + $0x198] sm:$0xff]
    %v1832 = vld [vmem:[#allocation10 + $0x1a0] sm:$0xff]
    %v1833 = vld [vmem:[#allocation10 + $0x1a8] sm:$0xff]
    %v1834 = vld [vmem:[#allocation10 + $0x1b0] sm:$0xff]
    %v1835 = vld [vmem:[#allocation10 + $0x1b8] sm:$0xff]
    %v1836 = vld [vmem:[#allocation10 + $0x1c0] sm:$0xff]
    %v1837 = vld [vmem:[#allocation10 + $0x1c8] sm:$0xff]
    %v1838 = vld [vmem:[#allocation10 + $0x1d0] sm:$0xff]
    %v1839 = vld [vmem:[#allocation10 + $0x1d8] sm:$0xff]
    %v1840 = vld [vmem:[#allocation10 + $0x1e0] sm:$0xff]
    %v1841 = vld [vmem:[#allocation10 + $0x1e8] sm:$0xff]
    %v1842 = vld [vmem:[#allocation10 + $0x1f0] sm:$0xff]
    %v1843 = vld [vmem:[#allocation10 + $0x1f8] sm:$0xff]
    %v1844 = vld [vmem:[#allocation10 + $0x200] sm:$0xff]
    %v1845 = vld [vmem:[#allocation10 + $0x208] sm:$0xff]
    %v1846 = vld [vmem:[#allocation10 + $0x210] sm:$0xff]
    %v1847 = vld [vmem:[#allocation10 + $0x218] sm:$0xff]
    %v1848 = vld [vmem:[#allocation10 + $0x220] sm:$0xff]
    %v1849 = vld [vmem:[#allocation10 + $0x228] sm:$0xff]
    %v1850 = vld [vmem:[#allocation10 + $0x230] sm:$0xff]
    %v1851 = vld [vmem:[#allocation10 + $0x238] sm:$0xff]
    %v1852 = vld [vmem:[#allocation10 + $0x240] sm:$0xff]
    %v1853 = vld [vmem:[#allocation10 + $0x248] sm:$0xff]
    %v1854 = vld [vmem:[#allocation10 + $0x250] sm:$0xff]
    %v1855 = vld [vmem:[#allocation10 + $0x258] sm:$0xff]
    %v1856 = vld [vmem:[#allocation10 + $0x260] sm:$0xff]
    %v1857 = vld [vmem:[#allocation10 + $0x268] sm:$0xff]
    %v1858 = vld [vmem:[#allocation10 + $0x270] sm:$0xff]
    %v1859 = vld [vmem:[#allocation10 + $0x278] sm:$0xff]
    %v1860 = vld [vmem:[#allocation10 + $0x280] sm:$0xff]
    %v1861 = vld [vmem:[#allocation10 + $0x288] sm:$0xff]
    %v1862 = vld [vmem:[#allocation10 + $0x290] sm:$0xff]
    %v1863 = vld [vmem:[#allocation10 + $0x298] sm:$0xff]
    %v1864 = vld [vmem:[#allocation10 + $0x2a0] sm:$0xff]
    %v1865 = vld [vmem:[#allocation10 + $0x2a8] sm:$0xff]
    %v1866 = vld [vmem:[#allocation10 + $0x2b0] sm:$0xff]
    %v1867 = vld [vmem:[#allocation10 + $0x2b8] sm:$0xff]
    %v1868 = vld [vmem:[#allocation10 + $0x2c0] sm:$0xff]
    %v1869 = vld [vmem:[#allocation10 + $0x2c8] sm:$0xff]
    %v1870 = vld [vmem:[#allocation10 + $0x2d0] sm:$0xff]
    %v1871 = vld [vmem:[#allocation10 + $0x2d8] sm:$0xff]
    %v1872 = vld [vmem:[#allocation10 + $0x2e0] sm:$0xff]
    %v1873 = vld [vmem:[#allocation10 + $0x2e8] sm:$0xff]
    %v1874 = vld [vmem:[#allocation10 + $0x2f0] sm:$0xff]
    %v1875 = vld [vmem:[#allocation10 + $0x2f8] sm:$0xff]
    %v1876 = vld [vmem:[#allocation10 + $0x300] sm:$0xff]
    %v1877 = vld [vmem:[#allocation10 + $0x308] sm:$0xff]
    %v1878 = vld [vmem:[#allocation10 + $0x310] sm:$0xff]
    %v1879 = vld [vmem:[#allocation10 + $0x318] sm:$0xff]
    %v1880 = vld [vmem:[#allocation10 + $0x320] sm:$0xff]
    %v1881 = vld [vmem:[#allocation10 + $0x328] sm:$0xff]
    %v1882 = vld [vmem:[#allocation10 + $0x330] sm:$0xff]
    %v1883 = vld [vmem:[#allocation10 + $0x338] sm:$0xff]
    %v1884 = vld [vmem:[#allocation10 + $0x340] sm:$0xff]
    %v1885 = vld [vmem:[#allocation10 + $0x348] sm:$0xff]
    %v1886 = vld [vmem:[#allocation10 + $0x350] sm:$0xff]
    %v1887 = vld [vmem:[#allocation10 + $0x358] sm:$0xff]
    %v1888 = vld [vmem:[#allocation10 + $0x360] sm:$0xff]
    %v1889 = vld [vmem:[#allocation10 + $0x368] sm:$0xff]
    %v1890 = vld [vmem:[#allocation10 + $0x370] sm:$0xff]
    %v1891 = vld [vmem:[#allocation10 + $0x378] sm:$0xff]
    %v1892 = vld [vmem:[#allocation10 + $0x380] sm:$0xff]
    %v1893 = vld [vmem:[#allocation10 + $0x388] sm:$0xff]
    %v1894 = vld [vmem:[#allocation10 + $0x390] sm:$0xff]
    %v1895 = vld [vmem:[#allocation10 + $0x398] sm:$0xff]
    %v1896 = vld [vmem:[#allocation10 + $0x3a0] sm:$0xff]
    %v1897 = vld [vmem:[#allocation10 + $0x3a8] sm:$0xff]
    %v1898 = vld [vmem:[#allocation10 + $0x3b0] sm:$0xff]
    %v1899 = vld [vmem:[#allocation10 + $0x3b8] sm:$0xff]
    %v1900 = vld [vmem:[#allocation10 + $0x3c0] sm:$0xff]
    %v1901 = vld [vmem:[#allocation10 + $0x3c8] sm:$0xff]
    %v1902 = vld [vmem:[#allocation10 + $0x3d0] sm:$0xff]
    %v1903 = vld [vmem:[#allocation10 + $0x3d8] sm:$0xff]
    %v1904 = vld [vmem:[#allocation10 + $0x3e0] sm:$0xff]
    %v1905 = vld [vmem:[#allocation10 + $0x3e8] sm:$0xff]
    %v1906 = vld [vmem:[#allocation10 + $0x3f0] sm:$0xff]
    %v1907 = vld [vmem:[#allocation10 + $0x3f8] sm:$0xff]
    %v1908 = vld [vmem:[#allocation10 + $0x400] sm:$0xff]
    %v1909 = vld [vmem:[#allocation10 + $0x408] sm:$0xff]
    %v1910 = vld [vmem:[#allocation10 + $0x410] sm:$0xff]
    %v1911 = vld [vmem:[#allocation10 + $0x418] sm:$0xff]
    %v1912 = vld [vmem:[#allocation10 + $0x420] sm:$0xff]
    %v1913 = vld [vmem:[#allocation10 + $0x428] sm:$0xff]
    %v1914 = vld [vmem:[#allocation10 + $0x430] sm:$0xff]
    %v1915 = vld [vmem:[#allocation10 + $0x438] sm:$0xff]
    %v1916 = vld [vmem:[#allocation10 + $0x440] sm:$0xff]
    %v1917 = vld [vmem:[#allocation10 + $0x448] sm:$0xff]
    %v1918 = vld [vmem:[#allocation10 + $0x450] sm:$0xff]
    %v1919 = vld [vmem:[#allocation10 + $0x458] sm:$0xff]
    %v1920 = vld [vmem:[#allocation10 + $0x460] sm:$0xff]
    %v1921 = vld [vmem:[#allocation10 + $0x468] sm:$0xff]
    %v1922 = vld [vmem:[#allocation10 + $0x470] sm:$0xff]
    %v1923 = vld [vmem:[#allocation10 + $0x478] sm:$0xff]
    %v1924 = vld [vmem:[#allocation10 + $0x480] sm:$0xff]
    %v1925 = vld [vmem:[#allocation10 + $0x488] sm:$0xff]
    %v1926 = vld [vmem:[#allocation10 + $0x490] sm:$0xff]
    %v1927 = vld [vmem:[#allocation10 + $0x498] sm:$0xff]
    %v1928 = vld [vmem:[#allocation10 + $0x4a0] sm:$0xff]
    %v1929 = vld [vmem:[#allocation10 + $0x4a8] sm:$0xff]
    %v1930 = vld [vmem:[#allocation10 + $0x4b0] sm:$0xff]
    %v1931 = vld [vmem:[#allocation10 + $0x4b8] sm:$0xff]
    %v1932 = vld [vmem:[#allocation10 + $0x4c0] sm:$0xff]
    %v1933 = vld [vmem:[#allocation10 + $0x4c8] sm:$0xff]
    %v1934 = vld [vmem:[#allocation10 + $0x4d0] sm:$0xff]
    %v1935 = vld [vmem:[#allocation10 + $0x4d8] sm:$0xff]
    %v1936 = vld [vmem:[#allocation10 + $0x4e0] sm:$0xff]
    %v1937 = vld [vmem:[#allocation10 + $0x4e8] sm:$0xff]
    %v1938 = vld [vmem:[#allocation10 + $0x4f0] sm:$0xff]
    %v1939 = vld [vmem:[#allocation10 + $0x4f8] sm:$0xff]
    %v1940 = vld [vmem:[#allocation10 + $0x500] sm:$0xff]
    %v1941 = vld [vmem:[#allocation10 + $0x508] sm:$0xff]
    %v1942 = vld [vmem:[#allocation10 + $0x510] sm:$0xff]
    %v1943 = vld [vmem:[#allocation10 + $0x518] sm:$0xff]
    %v1944 = vld [vmem:[#allocation10 + $0x520] sm:$0xff]
    %v1945 = vld [vmem:[#allocation10 + $0x528] sm:$0xff]
    %v1946 = vld [vmem:[#allocation10 + $0x530] sm:$0xff]
    %v1947 = vld [vmem:[#allocation10 + $0x538] sm:$0xff]
    %v1948 = vld [vmem:[#allocation10 + $0x540] sm:$0xff]
    %v1949 = vld [vmem:[#allocation10 + $0x548] sm:$0xff]
    %v1950 = vld [vmem:[#allocation10 + $0x550] sm:$0xff]
    %v1951 = vld [vmem:[#allocation10 + $0x558] sm:$0xff]
    %v1952 = vld [vmem:[#allocation10 + $0x560] sm:$0xff]
    %v1953 = vld [vmem:[#allocation10 + $0x568] sm:$0xff]
    %v1954 = vld [vmem:[#allocation10 + $0x570] sm:$0xff]
    %v1955 = vld [vmem:[#allocation10 + $0x578] sm:$0xff]
    %v1956 = vld [vmem:[#allocation10 + $0x580] sm:$0xff]
    %v1957 = vld [vmem:[#allocation10 + $0x588] sm:$0xff]
    %v1958 = vld [vmem:[#allocation10 + $0x590] sm:$0xff]
    %v1959 = vld [vmem:[#allocation10 + $0x598] sm:$0xff]
    %v1960 = vld [vmem:[#allocation10 + $0x5a0] sm:$0xff]
    %v1961 = vld [vmem:[#allocation10 + $0x5a8] sm:$0xff]
    %v1962 = vld [vmem:[#allocation10 + $0x5b0] sm:$0xff]
    %v1963 = vld [vmem:[#allocation10 + $0x5b8] sm:$0xff]
    %v1964 = vld [vmem:[#allocation10 + $0x5c0] sm:$0xff]
    %v1965 = vld [vmem:[#allocation10 + $0x5c8] sm:$0xff]
    %v1966 = vld [vmem:[#allocation10 + $0x5d0] sm:$0xff]
    %v1967 = vld [vmem:[#allocation10 + $0x5d8] sm:$0xff]
    %v1968 = vld [vmem:[#allocation10 + $0x5e0] sm:$0xff]
    %v1969 = vld [vmem:[#allocation10 + $0x5e8] sm:$0xff]
    %v1970 = vld [vmem:[#allocation10 + $0x5f0] sm:$0xff]
    %v1971 = vld [vmem:[#allocation10 + $0x5f8] sm:$0xff]
    %v1972 = vld [vmem:[#allocation11] sm:$0xff]
    %v1974 = vlaneseq
    %v1975 = vshrl.u32 %v1974, 7
    %v1976 = vsub.s32 0, %v1975
    %v1977 = vrot.slane %v1972, %v1976
    %v1978 = vlaneseq
    %v1979 = vshrl.u32 %v1978, 7
    %v1980 = vsub.s32 1, %v1979
    %v1981 = vrot.slane %v1972, %v1980
    %v1982 = vlaneseq
    %v1983 = vshrl.u32 %v1982, 7
    %v1984 = vsub.s32 2, %v1983
    %v1985 = vrot.slane %v1972, %v1984
    %v1986 = vlaneseq
    %v1987 = vshrl.u32 %v1986, 7
    %v1988 = vsub.s32 3, %v1987
    %v1989 = vrot.slane %v1972, %v1988
    %v1990 = vlaneseq
    %v1991 = vshrl.u32 %v1990, 7
    %v1992 = vsub.s32 4, %v1991
    %v1993 = vrot.slane %v1972, %v1992
    %v1994 = vlaneseq
    %v1995 = vshrl.u32 %v1994, 7
    %v1996 = vsub.s32 5, %v1995
    %v1997 = vrot.slane %v1972, %v1996
    %v1998 = vlaneseq
    %v1999 = vshrl.u32 %v1998, 7
    %v2000 = vsub.s32 6, %v1999
    %v2001 = vrot.slane %v1972, %v2000
    %v2002 = vlaneseq
    %v2003 = vshrl.u32 %v2002, 7
    %v2004 = vsub.s32 7, %v2003
    %v2005 = vrot.slane %v1972, %v2004
    %v2206 = vunpack.c.l.b16 %v1780
    %v2207 = vunpack.c.h.b16 %v1780
    %v2208 = vunpack.c.l.b16 %v1781
    %v2209 = vunpack.c.h.b16 %v1781
    %v2210 = vunpack.c.l.b16 %v1782
    %v2211 = vunpack.c.h.b16 %v1782
    %v2212 = vunpack.c.l.b16 %v1783
    %v2213 = vunpack.c.h.b16 %v1783
    %v2214 = vunpack.c.l.b16 %v1784
    %v2215 = vunpack.c.h.b16 %v1784
    %v2216 = vunpack.c.l.b16 %v1785
    %v2217 = vunpack.c.h.b16 %v1785
    %v2218 = vunpack.c.l.b16 %v1786
    %v2219 = vunpack.c.h.b16 %v1786
    %v2220 = vunpack.c.l.b16 %v1787
    %v2221 = vunpack.c.h.b16 %v1787
    %v2222 = vunpack.c.l.b16 %v1788
    %v2223 = vunpack.c.h.b16 %v1788
    %v2224 = vunpack.c.l.b16 %v1789
    %v2225 = vunpack.c.h.b16 %v1789
    %v2226 = vunpack.c.l.b16 %v1790
    %v2227 = vunpack.c.h.b16 %v1790
    %v2228 = vunpack.c.l.b16 %v1791
    %v2229 = vunpack.c.h.b16 %v1791
    %v2230 = vunpack.c.l.b16 %v1792
    %v2231 = vunpack.c.h.b16 %v1792
    %v2232 = vunpack.c.l.b16 %v1793
    %v2233 = vunpack.c.h.b16 %v1793
    %v2234 = vunpack.c.l.b16 %v1794
    %v2235 = vunpack.c.h.b16 %v1794
    %v2236 = vunpack.c.l.b16 %v1795
    %v2237 = vunpack.c.h.b16 %v1795
    %v2238 = vunpack.c.l.b16 %v1796
    %v2239 = vunpack.c.h.b16 %v1796
    %v2240 = vunpack.c.l.b16 %v1797
    %v2241 = vunpack.c.h.b16 %v1797
    %v2242 = vunpack.c.l.b16 %v1798
    %v2243 = vunpack.c.h.b16 %v1798
    %v2244 = vunpack.c.l.b16 %v1799
    %v2245 = vunpack.c.h.b16 %v1799
    %v2246 = vunpack.c.l.b16 %v1800
    %v2247 = vunpack.c.h.b16 %v1800
    %v2248 = vunpack.c.l.b16 %v1801
    %v2249 = vunpack.c.h.b16 %v1801
    %v2250 = vunpack.c.l.b16 %v1802
    %v2251 = vunpack.c.h.b16 %v1802
    %v2252 = vunpack.c.l.b16 %v1803
    %v2253 = vunpack.c.h.b16 %v1803
    %v2254 = vunpack.c.l.b16 %v1804
    %v2255 = vunpack.c.h.b16 %v1804
    %v2256 = vunpack.c.l.b16 %v1805
    %v2257 = vunpack.c.h.b16 %v1805
    %v2258 = vunpack.c.l.b16 %v1806
    %v2259 = vunpack.c.h.b16 %v1806
    %v2260 = vunpack.c.l.b16 %v1807
    %v2261 = vunpack.c.h.b16 %v1807
    %v2262 = vunpack.c.l.b16 %v1808
    %v2263 = vunpack.c.h.b16 %v1808
    %v2264 = vunpack.c.l.b16 %v1809
    %v2265 = vunpack.c.h.b16 %v1809
    %v2266 = vunpack.c.l.b16 %v1810
    %v2267 = vunpack.c.h.b16 %v1810
    %v2268 = vunpack.c.l.b16 %v1811
    %v2269 = vunpack.c.h.b16 %v1811
    %v2270 = vunpack.c.l.b16 %v1812
    %v2271 = vunpack.c.h.b16 %v1812
    %v2272 = vunpack.c.l.b16 %v1813
    %v2273 = vunpack.c.h.b16 %v1813
    %v2274 = vunpack.c.l.b16 %v1814
    %v2275 = vunpack.c.h.b16 %v1814
    %v2276 = vunpack.c.l.b16 %v1815
    %v2277 = vunpack.c.h.b16 %v1815
    %v2278 = vunpack.c.l.b16 %v1816
    %v2279 = vunpack.c.h.b16 %v1816
    %v2280 = vunpack.c.l.b16 %v1817
    %v2281 = vunpack.c.h.b16 %v1817
    %v2282 = vunpack.c.l.b16 %v1818
    %v2283 = vunpack.c.h.b16 %v1818
    %v2284 = vunpack.c.l.b16 %v1819
    %v2285 = vunpack.c.h.b16 %v1819
    %v2286 = vunpack.c.l.b16 %v1820
    %v2287 = vunpack.c.h.b16 %v1820
    %v2288 = vunpack.c.l.b16 %v1821
    %v2289 = vunpack.c.h.b16 %v1821
    %v2290 = vunpack.c.l.b16 %v1822
    %v2291 = vunpack.c.h.b16 %v1822
    %v2292 = vunpack.c.l.b16 %v1823
    %v2293 = vunpack.c.h.b16 %v1823
    %v2294 = vunpack.c.l.b16 %v1824
    %v2295 = vunpack.c.h.b16 %v1824
    %v2296 = vunpack.c.l.b16 %v1825
    %v2297 = vunpack.c.h.b16 %v1825
    %v2298 = vunpack.c.l.b16 %v1826
    %v2299 = vunpack.c.h.b16 %v1826
    %v2300 = vunpack.c.l.b16 %v1827
    %v2301 = vunpack.c.h.b16 %v1827
    %v2302 = vunpack.c.l.b16 %v1828
    %v2303 = vunpack.c.h.b16 %v1828
    %v2304 = vunpack.c.l.b16 %v1829
    %v2305 = vunpack.c.h.b16 %v1829
    %v2306 = vunpack.c.l.b16 %v1830
    %v2307 = vunpack.c.h.b16 %v1830
    %v2308 = vunpack.c.l.b16 %v1831
    %v2309 = vunpack.c.h.b16 %v1831
    %v2310 = vunpack.c.l.b16 %v1832
    %v2311 = vunpack.c.h.b16 %v1832
    %v2312 = vunpack.c.l.b16 %v1833
    %v2313 = vunpack.c.h.b16 %v1833
    %v2314 = vunpack.c.l.b16 %v1834
    %v2315 = vunpack.c.h.b16 %v1834
    %v2316 = vunpack.c.l.b16 %v1835
    %v2317 = vunpack.c.h.b16 %v1835
    %v2318 = vunpack.c.l.b16 %v1836
    %v2319 = vunpack.c.h.b16 %v1836
    %v2320 = vunpack.c.l.b16 %v1837
    %v2321 = vunpack.c.h.b16 %v1837
    %v2322 = vunpack.c.l.b16 %v1838
    %v2323 = vunpack.c.h.b16 %v1838
    %v2324 = vunpack.c.l.b16 %v1839
    %v2325 = vunpack.c.h.b16 %v1839
    %v2326 = vunpack.c.l.b16 %v1840
    %v2327 = vunpack.c.h.b16 %v1840
    %v2328 = vunpack.c.l.b16 %v1841
    %v2329 = vunpack.c.h.b16 %v1841
    %v2330 = vunpack.c.l.b16 %v1842
    %v2331 = vunpack.c.h.b16 %v1842
    %v2332 = vunpack.c.l.b16 %v1843
    %v2333 = vunpack.c.h.b16 %v1843
    %v2334 = vunpack.c.l.b16 %v1844
    %v2335 = vunpack.c.h.b16 %v1844
    %v2336 = vunpack.c.l.b16 %v1845
    %v2337 = vunpack.c.h.b16 %v1845
    %v2338 = vunpack.c.l.b16 %v1846
    %v2339 = vunpack.c.h.b16 %v1846
    %v2340 = vunpack.c.l.b16 %v1847
    %v2341 = vunpack.c.h.b16 %v1847
    %v2342 = vunpack.c.l.b16 %v1848
    %v2343 = vunpack.c.h.b16 %v1848
    %v2344 = vunpack.c.l.b16 %v1849
    %v2345 = vunpack.c.h.b16 %v1849
    %v2346 = vunpack.c.l.b16 %v1850
    %v2347 = vunpack.c.h.b16 %v1850
    %v2348 = vunpack.c.l.b16 %v1851
    %v2349 = vunpack.c.h.b16 %v1851
    %v2350 = vunpack.c.l.b16 %v1852
    %v2351 = vunpack.c.h.b16 %v1852
    %v2352 = vunpack.c.l.b16 %v1853
    %v2353 = vunpack.c.h.b16 %v1853
    %v2354 = vunpack.c.l.b16 %v1854
    %v2355 = vunpack.c.h.b16 %v1854
    %v2356 = vunpack.c.l.b16 %v1855
    %v2357 = vunpack.c.h.b16 %v1855
    %v2358 = vunpack.c.l.b16 %v1856
    %v2359 = vunpack.c.h.b16 %v1856
    %v2360 = vunpack.c.l.b16 %v1857
    %v2361 = vunpack.c.h.b16 %v1857
    %v2362 = vunpack.c.l.b16 %v1858
    %v2363 = vunpack.c.h.b16 %v1858
    %v2364 = vunpack.c.l.b16 %v1859
    %v2365 = vunpack.c.h.b16 %v1859
    %v2366 = vunpack.c.l.b16 %v1860
    %v2367 = vunpack.c.h.b16 %v1860
    %v2368 = vunpack.c.l.b16 %v1861
    %v2369 = vunpack.c.h.b16 %v1861
    %v2370 = vunpack.c.l.b16 %v1862
    %v2371 = vunpack.c.h.b16 %v1862
    %v2372 = vunpack.c.l.b16 %v1863
    %v2373 = vunpack.c.h.b16 %v1863
    %v2374 = vunpack.c.l.b16 %v1864
    %v2375 = vunpack.c.h.b16 %v1864
    %v2376 = vunpack.c.l.b16 %v1865
    %v2377 = vunpack.c.h.b16 %v1865
    %v2378 = vunpack.c.l.b16 %v1866
    %v2379 = vunpack.c.h.b16 %v1866
    %v2380 = vunpack.c.l.b16 %v1867
    %v2381 = vunpack.c.h.b16 %v1867
    %v2382 = vunpack.c.l.b16 %v1868
    %v2383 = vunpack.c.h.b16 %v1868
    %v2384 = vunpack.c.l.b16 %v1869
    %v2385 = vunpack.c.h.b16 %v1869
    %v2386 = vunpack.c.l.b16 %v1870
    %v2387 = vunpack.c.h.b16 %v1870
    %v2388 = vunpack.c.l.b16 %v1871
    %v2389 = vunpack.c.h.b16 %v1871
    %v2390 = vunpack.c.l.b16 %v1872
    %v2391 = vunpack.c.h.b16 %v1872
    %v2392 = vunpack.c.l.b16 %v1873
    %v2393 = vunpack.c.h.b16 %v1873
    %v2394 = vunpack.c.l.b16 %v1874
    %v2395 = vunpack.c.h.b16 %v1874
    %v2396 = vunpack.c.l.b16 %v1875
    %v2397 = vunpack.c.h.b16 %v1875
    %v2398 = vunpack.c.l.b16 %v1876
    %v2399 = vunpack.c.h.b16 %v1876
    %v2400 = vunpack.c.l.b16 %v1877
    %v2401 = vunpack.c.h.b16 %v1877
    %v2402 = vunpack.c.l.b16 %v1878
    %v2403 = vunpack.c.h.b16 %v1878
    %v2404 = vunpack.c.l.b16 %v1879
    %v2405 = vunpack.c.h.b16 %v1879
    %v2406 = vunpack.c.l.b16 %v1880
    %v2407 = vunpack.c.h.b16 %v1880
    %v2408 = vunpack.c.l.b16 %v1881
    %v2409 = vunpack.c.h.b16 %v1881
    %v2410 = vunpack.c.l.b16 %v1882
    %v2411 = vunpack.c.h.b16 %v1882
    %v2412 = vunpack.c.l.b16 %v1883
    %v2413 = vunpack.c.h.b16 %v1883
    %v2414 = vunpack.c.l.b16 %v1884
    %v2415 = vunpack.c.h.b16 %v1884
    %v2416 = vunpack.c.l.b16 %v1885
    %v2417 = vunpack.c.h.b16 %v1885
    %v2418 = vunpack.c.l.b16 %v1886
    %v2419 = vunpack.c.h.b16 %v1886
    %v2420 = vunpack.c.l.b16 %v1887
    %v2421 = vunpack.c.h.b16 %v1887
    %v2422 = vunpack.c.l.b16 %v1888
    %v2423 = vunpack.c.h.b16 %v1888
    %v2424 = vunpack.c.l.b16 %v1889
    %v2425 = vunpack.c.h.b16 %v1889
    %v2426 = vunpack.c.l.b16 %v1890
    %v2427 = vunpack.c.h.b16 %v1890
    %v2428 = vunpack.c.l.b16 %v1891
    %v2429 = vunpack.c.h.b16 %v1891
    %v2430 = vunpack.c.l.b16 %v1892
    %v2431 = vunpack.c.h.b16 %v1892
    %v2432 = vunpack.c.l.b16 %v1893
    %v2433 = vunpack.c.h.b16 %v1893
    %v2434 = vunpack.c.l.b16 %v1894
    %v2435 = vunpack.c.h.b16 %v1894
    %v2436 = vunpack.c.l.b16 %v1895
    %v2437 = vunpack.c.h.b16 %v1895
    %v2438 = vunpack.c.l.b16 %v1896
    %v2439 = vunpack.c.h.b16 %v1896
    %v2440 = vunpack.c.l.b16 %v1897
    %v2441 = vunpack.c.h.b16 %v1897
    %v2442 = vunpack.c.l.b16 %v1898
    %v2443 = vunpack.c.h.b16 %v1898
    %v2444 = vunpack.c.l.b16 %v1899
    %v2445 = vunpack.c.h.b16 %v1899
    %v2446 = vunpack.c.l.b16 %v1900
    %v2447 = vunpack.c.h.b16 %v1900
    %v2448 = vunpack.c.l.b16 %v1901
    %v2449 = vunpack.c.h.b16 %v1901
    %v2450 = vunpack.c.l.b16 %v1902
    %v2451 = vunpack.c.h.b16 %v1902
    %v2452 = vunpack.c.l.b16 %v1903
    %v2453 = vunpack.c.h.b16 %v1903
    %v2454 = vunpack.c.l.b16 %v1904
    %v2455 = vunpack.c.h.b16 %v1904
    %v2456 = vunpack.c.l.b16 %v1905
    %v2457 = vunpack.c.h.b16 %v1905
    %v2458 = vunpack.c.l.b16 %v1906
    %v2459 = vunpack.c.h.b16 %v1906
    %v2460 = vunpack.c.l.b16 %v1907
    %v2461 = vunpack.c.h.b16 %v1907
    %v2462 = vunpack.c.l.b16 %v1908
    %v2463 = vunpack.c.h.b16 %v1908
    %v2464 = vunpack.c.l.b16 %v1909
    %v2465 = vunpack.c.h.b16 %v1909
    %v2466 = vunpack.c.l.b16 %v1910
    %v2467 = vunpack.c.h.b16 %v1910
    %v2468 = vunpack.c.l.b16 %v1911
    %v2469 = vunpack.c.h.b16 %v1911
    %v2470 = vunpack.c.l.b16 %v1912
    %v2471 = vunpack.c.h.b16 %v1912
    %v2472 = vunpack.c.l.b16 %v1913
    %v2473 = vunpack.c.h.b16 %v1913
    %v2474 = vunpack.c.l.b16 %v1914
    %v2475 = vunpack.c.h.b16 %v1914
    %v2476 = vunpack.c.l.b16 %v1915
    %v2477 = vunpack.c.h.b16 %v1915
    %v2478 = vunpack.c.l.b16 %v1916
    %v2479 = vunpack.c.h.b16 %v1916
    %v2480 = vunpack.c.l.b16 %v1917
    %v2481 = vunpack.c.h.b16 %v1917
    %v2482 = vunpack.c.l.b16 %v1918
    %v2483 = vunpack.c.h.b16 %v1918
    %v2484 = vunpack.c.l.b16 %v1919
    %v2485 = vunpack.c.h.b16 %v1919
    %v2486 = vunpack.c.l.b16 %v1920
    %v2487 = vunpack.c.h.b16 %v1920
    %v2488 = vunpack.c.l.b16 %v1921
    %v2489 = vunpack.c.h.b16 %v1921
    %v2490 = vunpack.c.l.b16 %v1922
    %v2491 = vunpack.c.h.b16 %v1922
    %v2492 = vunpack.c.l.b16 %v1923
    %v2493 = vunpack.c.h.b16 %v1923
    %v2494 = vunpack.c.l.b16 %v1924
    %v2495 = vunpack.c.h.b16 %v1924
    %v2496 = vunpack.c.l.b16 %v1925
    %v2497 = vunpack.c.h.b16 %v1925
    %v2498 = vunpack.c.l.b16 %v1926
    %v2499 = vunpack.c.h.b16 %v1926
    %v2500 = vunpack.c.l.b16 %v1927
    %v2501 = vunpack.c.h.b16 %v1927
    %v2502 = vunpack.c.l.b16 %v1928
    %v2503 = vunpack.c.h.b16 %v1928
    %v2504 = vunpack.c.l.b16 %v1929
    %v2505 = vunpack.c.h.b16 %v1929
    %v2506 = vunpack.c.l.b16 %v1930
    %v2507 = vunpack.c.h.b16 %v1930
    %v2508 = vunpack.c.l.b16 %v1931
    %v2509 = vunpack.c.h.b16 %v1931
    %v2510 = vunpack.c.l.b16 %v1932
    %v2511 = vunpack.c.h.b16 %v1932
    %v2512 = vunpack.c.l.b16 %v1933
    %v2513 = vunpack.c.h.b16 %v1933
    %v2514 = vunpack.c.l.b16 %v1934
    %v2515 = vunpack.c.h.b16 %v1934
    %v2516 = vunpack.c.l.b16 %v1935
    %v2517 = vunpack.c.h.b16 %v1935
    %v2518 = vunpack.c.l.b16 %v1936
    %v2519 = vunpack.c.h.b16 %v1936
    %v2520 = vunpack.c.l.b16 %v1937
    %v2521 = vunpack.c.h.b16 %v1937
    %v2522 = vunpack.c.l.b16 %v1938
    %v2523 = vunpack.c.h.b16 %v1938
    %v2524 = vunpack.c.l.b16 %v1939
    %v2525 = vunpack.c.h.b16 %v1939
    %v2526 = vunpack.c.l.b16 %v1940
    %v2527 = vunpack.c.h.b16 %v1940
    %v2528 = vunpack.c.l.b16 %v1941
    %v2529 = vunpack.c.h.b16 %v1941
    %v2530 = vunpack.c.l.b16 %v1942
    %v2531 = vunpack.c.h.b16 %v1942
    %v2532 = vunpack.c.l.b16 %v1943
    %v2533 = vunpack.c.h.b16 %v1943
    %v2534 = vunpack.c.l.b16 %v1944
    %v2535 = vunpack.c.h.b16 %v1944
    %v2536 = vunpack.c.l.b16 %v1945
    %v2537 = vunpack.c.h.b16 %v1945
    %v2538 = vunpack.c.l.b16 %v1946
    %v2539 = vunpack.c.h.b16 %v1946
    %v2540 = vunpack.c.l.b16 %v1947
    %v2541 = vunpack.c.h.b16 %v1947
    %v2542 = vunpack.c.l.b16 %v1948
    %v2543 = vunpack.c.h.b16 %v1948
    %v2544 = vunpack.c.l.b16 %v1949
    %v2545 = vunpack.c.h.b16 %v1949
    %v2546 = vunpack.c.l.b16 %v1950
    %v2547 = vunpack.c.h.b16 %v1950
    %v2548 = vunpack.c.l.b16 %v1951
    %v2549 = vunpack.c.h.b16 %v1951
    %v2550 = vunpack.c.l.b16 %v1952
    %v2551 = vunpack.c.h.b16 %v1952
    %v2552 = vunpack.c.l.b16 %v1953
    %v2553 = vunpack.c.h.b16 %v1953
    %v2554 = vunpack.c.l.b16 %v1954
    %v2555 = vunpack.c.h.b16 %v1954
    %v2556 = vunpack.c.l.b16 %v1955
    %v2557 = vunpack.c.h.b16 %v1955
    %v2558 = vunpack.c.l.b16 %v1956
    %v2559 = vunpack.c.h.b16 %v1956
    %v2560 = vunpack.c.l.b16 %v1957
    %v2561 = vunpack.c.h.b16 %v1957
    %v2562 = vunpack.c.l.b16 %v1958
    %v2563 = vunpack.c.h.b16 %v1958
    %v2564 = vunpack.c.l.b16 %v1959
    %v2565 = vunpack.c.h.b16 %v1959
    %v2566 = vunpack.c.l.b16 %v1960
    %v2567 = vunpack.c.h.b16 %v1960
    %v2568 = vunpack.c.l.b16 %v1961
    %v2569 = vunpack.c.h.b16 %v1961
    %v2570 = vunpack.c.l.b16 %v1962
    %v2571 = vunpack.c.h.b16 %v1962
    %v2572 = vunpack.c.l.b16 %v1963
    %v2573 = vunpack.c.h.b16 %v1963
    %v2574 = vunpack.c.l.b16 %v1964
    %v2575 = vunpack.c.h.b16 %v1964
    %v2576 = vunpack.c.l.b16 %v1965
    %v2577 = vunpack.c.h.b16 %v1965
    %v2578 = vunpack.c.l.b16 %v1966
    %v2579 = vunpack.c.h.b16 %v1966
    %v2580 = vunpack.c.l.b16 %v1967
    %v2581 = vunpack.c.h.b16 %v1967
    %v2582 = vunpack.c.l.b16 %v1968
    %v2583 = vunpack.c.h.b16 %v1968
    %v2584 = vunpack.c.l.b16 %v1969
    %v2585 = vunpack.c.h.b16 %v1969
    %v2586 = vunpack.c.l.b16 %v1970
    %v2587 = vunpack.c.h.b16 %v1970
    %v2588 = vunpack.c.l.b16 %v1971
    %v2589 = vunpack.c.h.b16 %v1971
    %v2590 = vpack.c.b16 %v2214, %v2206
    %v2591 = vpack.c.b16 %v2215, %v2207
    %v2592 = vpack.c.b16 %v2216, %v2208
    %v2593 = vpack.c.b16 %v2217, %v2209
    %v2594 = vpack.c.b16 %v2218, %v2210
    %v2595 = vpack.c.b16 %v2219, %v2211
    %v2596 = vpack.c.b16 %v2220, %v2212
    %v2597 = vpack.c.b16 %v2221, %v2213
    %v2598 = vpack.c.b16 %v2230, %v2222
    %v2599 = vpack.c.b16 %v2231, %v2223
    %v2600 = vpack.c.b16 %v2232, %v2224
    %v2601 = vpack.c.b16 %v2233, %v2225
    %v2602 = vpack.c.b16 %v2234, %v2226
    %v2603 = vpack.c.b16 %v2235, %v2227
    %v2604 = vpack.c.b16 %v2236, %v2228
    %v2605 = vpack.c.b16 %v2237, %v2229
    %v2606 = vpack.c.b16 %v2246, %v2238
    %v2607 = vpack.c.b16 %v2247, %v2239
    %v2608 = vpack.c.b16 %v2248, %v2240
    %v2609 = vpack.c.b16 %v2249, %v2241
    %v2610 = vpack.c.b16 %v2250, %v2242
    %v2611 = vpack.c.b16 %v2251, %v2243
    %v2612 = vpack.c.b16 %v2252, %v2244
    %v2613 = vpack.c.b16 %v2253, %v2245
    %v2614 = vpack.c.b16 %v2262, %v2254
    %v2615 = vpack.c.b16 %v2263, %v2255
    %v2616 = vpack.c.b16 %v2264, %v2256
    %v2617 = vpack.c.b16 %v2265, %v2257
    %v2618 = vpack.c.b16 %v2266, %v2258
    %v2619 = vpack.c.b16 %v2267, %v2259
    %v2620 = vpack.c.b16 %v2268, %v2260
    %v2621 = vpack.c.b16 %v2269, %v2261
    %v2622 = vpack.c.b16 %v2278, %v2270
    %v2623 = vpack.c.b16 %v2279, %v2271
    %v2624 = vpack.c.b16 %v2280, %v2272
    %v2625 = vpack.c.b16 %v2281, %v2273
    %v2626 = vpack.c.b16 %v2282, %v2274
    %v2627 = vpack.c.b16 %v2283, %v2275
    %v2628 = vpack.c.b16 %v2284, %v2276
    %v2629 = vpack.c.b16 %v2285, %v2277
    %v2630 = vpack.c.b16 %v2294, %v2286
    %v2631 = vpack.c.b16 %v2295, %v2287
    %v2632 = vpack.c.b16 %v2296, %v2288
    %v2633 = vpack.c.b16 %v2297, %v2289
    %v2634 = vpack.c.b16 %v2298, %v2290
    %v2635 = vpack.c.b16 %v2299, %v2291
    %v2636 = vpack.c.b16 %v2300, %v2292
    %v2637 = vpack.c.b16 %v2301, %v2293
    %v2638 = vpack.c.b16 %v2310, %v2302
    %v2639 = vpack.c.b16 %v2311, %v2303
    %v2640 = vpack.c.b16 %v2312, %v2304
    %v2641 = vpack.c.b16 %v2313, %v2305
    %v2642 = vpack.c.b16 %v2314, %v2306
    %v2643 = vpack.c.b16 %v2315, %v2307
    %v2644 = vpack.c.b16 %v2316, %v2308
    %v2645 = vpack.c.b16 %v2317, %v2309
    %v2646 = vpack.c.b16 %v2326, %v2318
    %v2647 = vpack.c.b16 %v2327, %v2319
    %v2648 = vpack.c.b16 %v2328, %v2320
    %v2649 = vpack.c.b16 %v2329, %v2321
    %v2650 = vpack.c.b16 %v2330, %v2322
    %v2651 = vpack.c.b16 %v2331, %v2323
    %v2652 = vpack.c.b16 %v2332, %v2324
    %v2653 = vpack.c.b16 %v2333, %v2325
    %v2654 = vpack.c.b16 %v2342, %v2334
    %v2655 = vpack.c.b16 %v2343, %v2335
    %v2656 = vpack.c.b16 %v2344, %v2336
    %v2657 = vpack.c.b16 %v2345, %v2337
    %v2658 = vpack.c.b16 %v2346, %v2338
    %v2659 = vpack.c.b16 %v2347, %v2339
    %v2660 = vpack.c.b16 %v2348, %v2340
    %v2661 = vpack.c.b16 %v2349, %v2341
    %v2662 = vpack.c.b16 %v2358, %v2350
    %v2663 = vpack.c.b16 %v2359, %v2351
    %v2664 = vpack.c.b16 %v2360, %v2352
    %v2665 = vpack.c.b16 %v2361, %v2353
    %v2666 = vpack.c.b16 %v2362, %v2354
    %v2667 = vpack.c.b16 %v2363, %v2355
    %v2668 = vpack.c.b16 %v2364, %v2356
    %v2669 = vpack.c.b16 %v2365, %v2357
    %v2670 = vpack.c.b16 %v2374, %v2366
    %v2671 = vpack.c.b16 %v2375, %v2367
    %v2672 = vpack.c.b16 %v2376, %v2368
    %v2673 = vpack.c.b16 %v2377, %v2369
    %v2674 = vpack.c.b16 %v2378, %v2370
    %v2675 = vpack.c.b16 %v2379, %v2371
    %v2676 = vpack.c.b16 %v2380, %v2372
    %v2677 = vpack.c.b16 %v2381, %v2373
    %v2678 = vpack.c.b16 %v2390, %v2382
    %v2679 = vpack.c.b16 %v2391, %v2383
    %v2680 = vpack.c.b16 %v2392, %v2384
    %v2681 = vpack.c.b16 %v2393, %v2385
    %v2682 = vpack.c.b16 %v2394, %v2386
    %v2683 = vpack.c.b16 %v2395, %v2387
    %v2684 = vpack.c.b16 %v2396, %v2388
    %v2685 = vpack.c.b16 %v2397, %v2389
    %v2686 = vpack.c.b16 %v2406, %v2398
    %v2687 = vpack.c.b16 %v2407, %v2399
    %v2688 = vpack.c.b16 %v2408, %v2400
    %v2689 = vpack.c.b16 %v2409, %v2401
    %v2690 = vpack.c.b16 %v2410, %v2402
    %v2691 = vpack.c.b16 %v2411, %v2403
    %v2692 = vpack.c.b16 %v2412, %v2404
    %v2693 = vpack.c.b16 %v2413, %v2405
    %v2694 = vpack.c.b16 %v2422, %v2414
    %v2695 = vpack.c.b16 %v2423, %v2415
    %v2696 = vpack.c.b16 %v2424, %v2416
    %v2697 = vpack.c.b16 %v2425, %v2417
    %v2698 = vpack.c.b16 %v2426, %v2418
    %v2699 = vpack.c.b16 %v2427, %v2419
    %v2700 = vpack.c.b16 %v2428, %v2420
    %v2701 = vpack.c.b16 %v2429, %v2421
    %v2702 = vpack.c.b16 %v2438, %v2430
    %v2703 = vpack.c.b16 %v2439, %v2431
    %v2704 = vpack.c.b16 %v2440, %v2432
    %v2705 = vpack.c.b16 %v2441, %v2433
    %v2706 = vpack.c.b16 %v2442, %v2434
    %v2707 = vpack.c.b16 %v2443, %v2435
    %v2708 = vpack.c.b16 %v2444, %v2436
    %v2709 = vpack.c.b16 %v2445, %v2437
    %v2710 = vpack.c.b16 %v2454, %v2446
    %v2711 = vpack.c.b16 %v2455, %v2447
    %v2712 = vpack.c.b16 %v2456, %v2448
    %v2713 = vpack.c.b16 %v2457, %v2449
    %v2714 = vpack.c.b16 %v2458, %v2450
    %v2715 = vpack.c.b16 %v2459, %v2451
    %v2716 = vpack.c.b16 %v2460, %v2452
    %v2717 = vpack.c.b16 %v2461, %v2453
    %v2718 = vpack.c.b16 %v2470, %v2462
    %v2719 = vpack.c.b16 %v2471, %v2463
    %v2720 = vpack.c.b16 %v2472, %v2464
    %v2721 = vpack.c.b16 %v2473, %v2465
    %v2722 = vpack.c.b16 %v2474, %v2466
    %v2723 = vpack.c.b16 %v2475, %v2467
    %v2724 = vpack.c.b16 %v2476, %v2468
    %v2725 = vpack.c.b16 %v2477, %v2469
    %v2726 = vpack.c.b16 %v2486, %v2478
    %v2727 = vpack.c.b16 %v2487, %v2479
    %v2728 = vpack.c.b16 %v2488, %v2480
    %v2729 = vpack.c.b16 %v2489, %v2481
    %v2730 = vpack.c.b16 %v2490, %v2482
    %v2731 = vpack.c.b16 %v2491, %v2483
    %v2732 = vpack.c.b16 %v2492, %v2484
    %v2733 = vpack.c.b16 %v2493, %v2485
    %v2734 = vpack.c.b16 %v2502, %v2494
    %v2735 = vpack.c.b16 %v2503, %v2495
    %v2736 = vpack.c.b16 %v2504, %v2496
    %v2737 = vpack.c.b16 %v2505, %v2497
    %v2738 = vpack.c.b16 %v2506, %v2498
    %v2739 = vpack.c.b16 %v2507, %v2499
    %v2740 = vpack.c.b16 %v2508, %v2500
    %v2741 = vpack.c.b16 %v2509, %v2501
    %v2742 = vpack.c.b16 %v2518, %v2510
    %v2743 = vpack.c.b16 %v2519, %v2511
    %v2744 = vpack.c.b16 %v2520, %v2512
    %v2745 = vpack.c.b16 %v2521, %v2513
    %v2746 = vpack.c.b16 %v2522, %v2514
    %v2747 = vpack.c.b16 %v2523, %v2515
    %v2748 = vpack.c.b16 %v2524, %v2516
    %v2749 = vpack.c.b16 %v2525, %v2517
    %v2750 = vpack.c.b16 %v2534, %v2526
    %v2751 = vpack.c.b16 %v2535, %v2527
    %v2752 = vpack.c.b16 %v2536, %v2528
    %v2753 = vpack.c.b16 %v2537, %v2529
    %v2754 = vpack.c.b16 %v2538, %v2530
    %v2755 = vpack.c.b16 %v2539, %v2531
    %v2756 = vpack.c.b16 %v2540, %v2532
    %v2757 = vpack.c.b16 %v2541, %v2533
    %v2758 = vpack.c.b16 %v2550, %v2542
    %v2759 = vpack.c.b16 %v2551, %v2543
    %v2760 = vpack.c.b16 %v2552, %v2544
    %v2761 = vpack.c.b16 %v2553, %v2545
    %v2762 = vpack.c.b16 %v2554, %v2546
    %v2763 = vpack.c.b16 %v2555, %v2547
    %v2764 = vpack.c.b16 %v2556, %v2548
    %v2765 = vpack.c.b16 %v2557, %v2549
    %v2766 = vpack.c.b16 %v2566, %v2558
    %v2767 = vpack.c.b16 %v2567, %v2559
    %v2768 = vpack.c.b16 %v2568, %v2560
    %v2769 = vpack.c.b16 %v2569, %v2561
    %v2770 = vpack.c.b16 %v2570, %v2562
    %v2771 = vpack.c.b16 %v2571, %v2563
    %v2772 = vpack.c.b16 %v2572, %v2564
    %v2773 = vpack.c.b16 %v2573, %v2565
    %v2774 = vpack.c.b16 %v2582, %v2574
    %v2775 = vpack.c.b16 %v2583, %v2575
    %v2776 = vpack.c.b16 %v2584, %v2576
    %v2777 = vpack.c.b16 %v2585, %v2577
    %v2778 = vpack.c.b16 %v2586, %v2578
    %v2779 = vpack.c.b16 %v2587, %v2579
    %v2780 = vpack.c.b16 %v2588, %v2580
    %v2781 = vpack.c.b16 %v2589, %v2581
    %2974 = vmatprep.subr.bf16.mxu0 %v2591
    %2975 = vmatpush1.bf16.msra.mxu0 %v2590
    %2976 = vmatprep.subr.bf16.mxu0 %v2599
    %2977 = vmatpush1.bf16.msra.mxu0 %v2598
    %2978 = vmatprep.subr.bf16.mxu0 %v2607
    %2979 = vmatpush1.bf16.msra.mxu0 %v2606
    %2980 = vmatprep.subr.bf16.mxu0 %v2615
    %2981 = vmatpush1.bf16.msra.mxu0 %v2614
    %2982 = vmatprep.subr.bf16.mxu0 %v2623
    %2983 = vmatpush1.bf16.msra.mxu0 %v2622
    %2984 = vmatprep.subr.bf16.mxu0 %v2631
    %2985 = vmatpush1.bf16.msra.mxu0 %v2630
    %2986 = vmatprep.subr.bf16.mxu0 %v2639
    %2987 = vmatpush1.bf16.msra.mxu0 %v2638
    %2988 = vmatprep.subr.bf16.mxu0 %v2647
    %2989 = vmatpush1.bf16.msra.mxu0 %v2646
    %2990 = vmatprep.subr.bf16.mxu0 %v2655
    %2991 = vmatpush1.bf16.msra.mxu0 %v2654
    %2992 = vmatprep.subr.bf16.mxu0 %v2663
    %2993 = vmatpush1.bf16.msra.mxu0 %v2662
    %2994 = vmatprep.subr.bf16.mxu0 %v2671
    %2995 = vmatpush1.bf16.msra.mxu0 %v2670
    %2996 = vmatprep.subr.bf16.mxu0 %v2679
    %2997 = vmatpush1.bf16.msra.mxu0 %v2678
    %2998 = vmatprep.subr.bf16.mxu0 %v2687
    %2999 = vmatpush1.bf16.msra.mxu0 %v2686
    %3000 = vmatprep.subr.bf16.mxu0 %v2695
    %3001 = vmatpush1.bf16.msra.mxu0 %v2694
    %3002 = vmatprep.subr.bf16.mxu0 %v2703
    %3003 = vmatpush1.bf16.msra.mxu0 %v2702
    %3004 = vmatprep.subr.bf16.mxu0 %v2711
    %3005 = vmatpush1.bf16.msra.mxu0 %v2710
    %3006 = vmatprep.mubr.bf16.mxu0 %v1778
    %3007 = vmatmul.mubr.bf16.gmra.mrb[0].mxu0 %v1777
    %v3008 = vpop.f32.mrb[0].mxu0
    %v3009 = vadd.f32 %v1977, %v3008
    %v3010 = vpop.f32.mrb[0].mxu0
    %v3011 = vadd.f32 %v1981, %v3010
    %v3012 = vpop.f32.mrb[0].mxu0
    %v3013 = vpop.f32.mrb[0].mxu0
    %3014 = vdwg.mxu0
    %3015 = vmatprep.subr.bf16.mxu0 %v2719
    %3016 = vmatpush1.bf16.msra.mxu0 %v2718
    %3017 = vmatprep.subr.bf16.mxu0 %v2727
    %3018 = vmatpush1.bf16.msra.mxu0 %v2726
    %3019 = vmatprep.subr.bf16.mxu0 %v2735
    %3020 = vmatpush1.bf16.msra.mxu0 %v2734
    %3021 = vmatprep.subr.bf16.mxu0 %v2743
    %3022 = vmatpush1.bf16.msra.mxu0 %v2742
    %3023 = vmatprep.subr.bf16.mxu0 %v2751
    %3024 = vmatpush1.bf16.msra.mxu0 %v2750
    %3025 = vmatprep.subr.bf16.mxu0 %v2759
    %3026 = vmatpush1.bf16.msra.mxu0 %v2758
    %3027 = vmatprep.subr.bf16.mxu0 %v2767
    %3028 = vmatpush1.bf16.msra.mxu0 %v2766
    %3029 = vmatprep.subr.bf16.mxu0 %v2775
    %3030 = vmatpush1.bf16.msra.mxu0 %v2774
    %3031 = vmatprep.subr.bf16.mxu0 0
    %3032 = vmatpush1.bf16.msra.mxu0 0
    %3033 = vmatprep.subr.bf16.mxu0 0
    %3034 = vmatpush1.bf16.msra.mxu0 0
    %3035 = vmatprep.subr.bf16.mxu0 0
    %3036 = vmatpush1.bf16.msra.mxu0 0
    %3037 = vmatprep.subr.bf16.mxu0 0
    %3038 = vmatpush1.bf16.msra.mxu0 0
    %3039 = vmatprep.subr.bf16.mxu0 0
    %3040 = vmatpush1.bf16.msra.mxu0 0
    %3041 = vmatprep.subr.bf16.mxu0 0
    %3042 = vmatpush1.bf16.msra.mxu0 0
    %3043 = vmatprep.subr.bf16.mxu0 0
    %3044 = vmatpush1.bf16.msra.mxu0 0
    %3045 = vmatprep.subr.bf16.mxu0 0
    %3046 = vmatpush1.bf16.msra.mxu0 0
    %3047 = vmatprep.mubr.bf16.mxu0 0
    %3048 = vmatmul.mubr.bf16.gmra.mrb[0].mxu0 %v1779
    %v3049 = vpop.f32.mrb[0].mxu0
    %v3050 = vadd.f32 %v3009, %v3049
    %v3051 = vpop.f32.mrb[0].mxu0
    %v3052 = vadd.f32 %v3011, %v3051
    %v3053 = vpop.f32.mrb[0].mxu0
    %v3054 = vpop.f32.mrb[0].mxu0
    %3055 = vdwg.mxu0
    %3056 = vmatprep.subr.bf16.mxu0 %v2593
    %3057 = vmatpush1.bf16.msra.mxu0 %v2592
    %3058 = vmatprep.subr.bf16.mxu0 %v2601
    %3059 = vmatpush1.bf16.msra.mxu0 %v2600
    %3060 = vmatprep.subr.bf16.mxu0 %v2609
    %3061 = vmatpush1.bf16.msra.mxu0 %v2608
    %3062 = vmatprep.subr.bf16.mxu0 %v2617
    %3063 = vmatpush1.bf16.msra.mxu0 %v2616
    %3064 = vmatprep.subr.bf16.mxu0 %v2625
    %3065 = vmatpush1.bf16.msra.mxu0 %v2624
    %3066 = vmatprep.subr.bf16.mxu0 %v2633
    %3067 = vmatpush1.bf16.msra.mxu0 %v2632
    %3068 = vmatprep.subr.bf16.mxu0 %v2641
    %3069 = vmatpush1.bf16.msra.mxu0 %v2640
    %3070 = vmatprep.subr.bf16.mxu0 %v2649
    %3071 = vmatpush1.bf16.msra.mxu0 %v2648
    %3072 = vmatprep.subr.bf16.mxu0 %v2657
    %3073 = vmatpush1.bf16.msra.mxu0 %v2656
    %3074 = vmatprep.subr.bf16.mxu0 %v2665
    %3075 = vmatpush1.bf16.msra.mxu0 %v2664
    %3076 = vmatprep.subr.bf16.mxu0 %v2673
    %3077 = vmatpush1.bf16.msra.mxu0 %v2672
    %3078 = vmatprep.subr.bf16.mxu0 %v2681
    %3079 = vmatpush1.bf16.msra.mxu0 %v2680
    %3080 = vmatprep.subr.bf16.mxu0 %v2689
    %3081 = vmatpush1.bf16.msra.mxu0 %v2688
    %3082 = vmatprep.subr.bf16.mxu0 %v2697
    %3083 = vmatpush1.bf16.msra.mxu0 %v2696
    %3084 = vmatprep.subr.bf16.mxu0 %v2705
    %3085 = vmatpush1.bf16.msra.mxu0 %v2704
    %3086 = vmatprep.subr.bf16.mxu0 %v2713
    %3087 = vmatpush1.bf16.msra.mxu0 %v2712
    %3088 = vmatprep.mubr.bf16.mxu0 %v1778
    %3089 = vmatmul.mubr.bf16.gmra.mrb[0].mxu0 %v1777
    %v3090 = vpop.f32.mrb[0].mxu0
    %v3091 = vadd.f32 %v1985, %v3090
    %v3092 = vpop.f32.mrb[0].mxu0
    %v3093 = vadd.f32 %v1989, %v3092
    %v3094 = vpop.f32.mrb[0].mxu0
    %v3095 = vpop.f32.mrb[0].mxu0
    %3096 = vdwg.mxu0
    %3097 = vmatprep.subr.bf16.mxu0 %v2721
    %3098 = vmatpush1.bf16.msra.mxu0 %v2720
    %3099 = vmatprep.subr.bf16.mxu0 %v2729
    %3100 = vmatpush1.bf16.msra.mxu0 %v2728
    %3101 = vmatprep.subr.bf16.mxu0 %v2737
    %3102 = vmatpush1.bf16.msra.mxu0 %v2736
    %3103 = vmatprep.subr.bf16.mxu0 %v2745
    %3104 = vmatpush1.bf16.msra.mxu0 %v2744
    %3105 = vmatprep.subr.bf16.mxu0 %v2753
    %3106 = vmatpush1.bf16.msra.mxu0 %v2752
    %3107 = vmatprep.subr.bf16.mxu0 %v2761
    %3108 = vmatpush1.bf16.msra.mxu0 %v2760
    %3109 = vmatprep.subr.bf16.mxu0 %v2769
    %3110 = vmatpush1.bf16.msra.mxu0 %v2768
    %3111 = vmatprep.subr.bf16.mxu0 %v2777
    %3112 = vmatpush1.bf16.msra.mxu0 %v2776
    %3113 = vmatprep.subr.bf16.mxu0 0
    %3114 = vmatpush1.bf16.msra.mxu0 0
    %3115 = vmatprep.subr.bf16.mxu0 0
    %3116 = vmatpush1.bf16.msra.mxu0 0
    %3117 = vmatprep.subr.bf16.mxu0 0
    %3118 = vmatpush1.bf16.msra.mxu0 0
    %3119 = vmatprep.subr.bf16.mxu0 0
    %3120 = vmatpush1.bf16.msra.mxu0 0
    %3121 = vmatprep.subr.bf16.mxu0 0
    %3122 = vmatpush1.bf16.msra.mxu0 0
    %3123 = vmatprep.subr.bf16.mxu0 0
    %3124 = vmatpush1.bf16.msra.mxu0 0
    %3125 = vmatprep.subr.bf16.mxu0 0
    %3126 = vmatpush1.bf16.msra.mxu0 0
    %3127 = vmatprep.subr.bf16.mxu0 0
    %3128 = vmatpush1.bf16.msra.mxu0 0
    %3129 = vmatprep.mubr.bf16.mxu0 0
    %3130 = vmatmul.mubr.bf16.gmra.mrb[0].mxu0 %v1779
    %v3131 = vpop.f32.mrb[0].mxu0
    %v3132 = vadd.f32 %v3091, %v3131
    %v3133 = vpop.f32.mrb[0].mxu0
    %v3134 = vadd.f32 %v3093, %v3133
    %v3135 = vpop.f32.mrb[0].mxu0
    %v3136 = vpop.f32.mrb[0].mxu0
    %3137 = vdwg.mxu0
    %3138 = vmatprep.subr.bf16.mxu0 %v2595
    %3139 = vmatpush1.bf16.msra.mxu0 %v2594
    %3140 = vmatprep.subr.bf16.mxu0 %v2603
    %3141 = vmatpush1.bf16.msra.mxu0 %v2602
    %3142 = vmatprep.subr.bf16.mxu0 %v2611
    %3143 = vmatpush1.bf16.msra.mxu0 %v2610
    %3144 = vmatprep.subr.bf16.mxu0 %v2619
    %3145 = vmatpush1.bf16.msra.mxu0 %v2618
    %3146 = vmatprep.subr.bf16.mxu0 %v2627
    %3147 = vmatpush1.bf16.msra.mxu0 %v2626
    %3148 = vmatprep.subr.bf16.mxu0 %v2635
    %3149 = vmatpush1.bf16.msra.mxu0 %v2634
    %3150 = vmatprep.subr.bf16.mxu0 %v2643
    %3151 = vmatpush1.bf16.msra.mxu0 %v2642
    %3152 = vmatprep.subr.bf16.mxu0 %v2651
    %3153 = vmatpush1.bf16.msra.mxu0 %v2650
    %3154 = vmatprep.subr.bf16.mxu0 %v2659
    %3155 = vmatpush1.bf16.msra.mxu0 %v2658
    %3156 = vmatprep.subr.bf16.mxu0 %v2667
    %3157 = vmatpush1.bf16.msra.mxu0 %v2666
    %3158 = vmatprep.subr.bf16.mxu0 %v2675
    %3159 = vmatpush1.bf16.msra.mxu0 %v2674
    %3160 = vmatprep.subr.bf16.mxu0 %v2683
    %3161 = vmatpush1.bf16.msra.mxu0 %v2682
    %3162 = vmatprep.subr.bf16.mxu0 %v2691
    %3163 = vmatpush1.bf16.msra.mxu0 %v2690
    %3164 = vmatprep.subr.bf16.mxu0 %v2699
    %3165 = vmatpush1.bf16.msra.mxu0 %v2698
    %3166 = vmatprep.subr.bf16.mxu0 %v2707
    %3167 = vmatpush1.bf16.msra.mxu0 %v2706
    %3168 = vmatprep.subr.bf16.mxu0 %v2715
    %3169 = vmatpush1.bf16.msra.mxu0 %v2714
    %3170 = vmatprep.mubr.bf16.mxu0 %v1778
    %3171 = vmatmul.mubr.bf16.gmra.mrb[0].mxu0 %v1777
    %v3172 = vpop.f32.mrb[0].mxu0
    %v3173 = vadd.f32 %v1993, %v3172
    %v3174 = vpop.f32.mrb[0].mxu0
    %v3175 = vadd.f32 %v1997, %v3174
    %v3176 = vpop.f32.mrb[0].mxu0
    %v3177 = vpop.f32.mrb[0].mxu0
    %3178 = vdwg.mxu0
    %3179 = vmatprep.subr.bf16.mxu0 %v2723
    %3180 = vmatpush1.bf16.msra.mxu0 %v2722
    %3181 = vmatprep.subr.bf16.mxu0 %v2731
    %3182 = vmatpush1.bf16.msra.mxu0 %v2730
    %3183 = vmatprep.subr.bf16.mxu0 %v2739
    %3184 = vmatpush1.bf16.msra.mxu0 %v2738
    %3185 = vmatprep.subr.bf16.mxu0 %v2747
    %3186 = vmatpush1.bf16.msra.mxu0 %v2746
    %3187 = vmatprep.subr.bf16.mxu0 %v2755
    %3188 = vmatpush1.bf16.msra.mxu0 %v2754
    %3189 = vmatprep.subr.bf16.mxu0 %v2763
    %3190 = vmatpush1.bf16.msra.mxu0 %v2762
    %3191 = vmatprep.subr.bf16.mxu0 %v2771
    %3192 = vmatpush1.bf16.msra.mxu0 %v2770
    %3193 = vmatprep.subr.bf16.mxu0 %v2779
    %3194 = vmatpush1.bf16.msra.mxu0 %v2778
    %3195 = vmatprep.subr.bf16.mxu0 0
    %3196 = vmatpush1.bf16.msra.mxu0 0
    %3197 = vmatprep.subr.bf16.mxu0 0
    %3198 = vmatpush1.bf16.msra.mxu0 0
    %3199 = vmatprep.subr.bf16.mxu0 0
    %3200 = vmatpush1.bf16.msra.mxu0 0
    %3201 = vmatprep.subr.bf16.mxu0 0
    %3202 = vmatpush1.bf16.msra.mxu0 0
    %3203 = vmatprep.subr.bf16.mxu0 0
    %3204 = vmatpush1.bf16.msra.mxu0 0
    %3205 = vmatprep.subr.bf16.mxu0 0
    %3206 = vmatpush1.bf16.msra.mxu0 0
    %3207 = vmatprep.subr.bf16.mxu0 0
    %3208 = vmatpush1.bf16.msra.mxu0 0
    %3209 = vmatprep.subr.bf16.mxu0 0
    %3210 = vmatpush1.bf16.msra.mxu0 0
    %3211 = vmatprep.mubr.bf16.mxu0 0
    %3212 = vmatmul.mubr.bf16.gmra.mrb[0].mxu0 %v1779
    %v3213 = vpop.f32.mrb[0].mxu0
    %v3214 = vadd.f32 %v3173, %v3213
    %v3215 = vpop.f32.mrb[0].mxu0
    %v3216 = vadd.f32 %v3175, %v3215
    %v3217 = vpop.f32.mrb[0].mxu0
    %v3218 = vpop.f32.mrb[0].mxu0
    %3219 = vdwg.mxu0
    %3220 = vmatprep.subr.bf16.mxu0 %v2597
    %3221 = vmatpush1.bf16.msra.mxu0 %v2596
    %3222 = vmatprep.subr.bf16.mxu0 %v2605
    %3223 = vmatpush1.bf16.msra.mxu0 %v2604
    %3224 = vmatprep.subr.bf16.mxu0 %v2613
    %3225 = vmatpush1.bf16.msra.mxu0 %v2612
    %3226 = vmatprep.subr.bf16.mxu0 %v2621
    %3227 = vmatpush1.bf16.msra.mxu0 %v2620
    %3228 = vmatprep.subr.bf16.mxu0 %v2629
    %3229 = vmatpush1.bf16.msra.mxu0 %v2628
    %3230 = vmatprep.subr.bf16.mxu0 %v2637
    %3231 = vmatpush1.bf16.msra.mxu0 %v2636
    %3232 = vmatprep.subr.bf16.mxu0 %v2645
    %3233 = vmatpush1.bf16.msra.mxu0 %v2644
    %3234 = vmatprep.subr.bf16.mxu0 %v2653
    %3235 = vmatpush1.bf16.msra.mxu0 %v2652
    %3236 = vmatprep.subr.bf16.mxu0 %v2661
    %3237 = vmatpush1.bf16.msra.mxu0 %v2660
    %3238 = vmatprep.subr.bf16.mxu0 %v2669
    %3239 = vmatpush1.bf16.msra.mxu0 %v2668
    %3240 = vmatprep.subr.bf16.mxu0 %v2677
    %3241 = vmatpush1.bf16.msra.mxu0 %v2676
    %3242 = vmatprep.subr.bf16.mxu0 %v2685
    %3243 = vmatpush1.bf16.msra.mxu0 %v2684
    %3244 = vmatprep.subr.bf16.mxu0 %v2693
    %3245 = vmatpush1.bf16.msra.mxu0 %v2692
    %3246 = vmatprep.subr.bf16.mxu0 %v2701
    %3247 = vmatpush1.bf16.msra.mxu0 %v2700
    %3248 = vmatprep.subr.bf16.mxu0 %v2709
    %3249 = vmatpush1.bf16.msra.mxu0 %v2708
    %3250 = vmatprep.subr.bf16.mxu0 %v2717
    %3251 = vmatpush1.bf16.msra.mxu0 %v2716
    %3252 = vmatprep.mubr.bf16.mxu0 %v1778
    %3253 = vmatmul.mubr.bf16.gmra.mrb[0].mxu0 %v1777
    %v3254 = vpop.f32.mrb[0].mxu0
    %v3255 = vadd.f32 %v2001, %v3254
    %v3256 = vpop.f32.mrb[0].mxu0
    %v3257 = vadd.f32 %v2005, %v3256
    %v3258 = vpop.f32.mrb[0].mxu0
    %v3259 = vpop.f32.mrb[0].mxu0
    %3260 = vdwg.mxu0
    %3261 = vmatprep.subr.bf16.mxu0 %v2725
    %3262 = vmatpush1.bf16.msra.mxu0 %v2724
    %3263 = vmatprep.subr.bf16.mxu0 %v2733
    %3264 = vmatpush1.bf16.msra.mxu0 %v2732
    %3265 = vmatprep.subr.bf16.mxu0 %v2741
    %3266 = vmatpush1.bf16.msra.mxu0 %v2740
    %3267 = vmatprep.subr.bf16.mxu0 %v2749
    %3268 = vmatpush1.bf16.msra.mxu0 %v2748
    %3269 = vmatprep.subr.bf16.mxu0 %v2757
    %3270 = vmatpush1.bf16.msra.mxu0 %v2756
    %3271 = vmatprep.subr.bf16.mxu0 %v2765
    %3272 = vmatpush1.bf16.msra.mxu0 %v2764
    %3273 = vmatprep.subr.bf16.mxu0 %v2773
    %3274 = vmatpush1.bf16.msra.mxu0 %v2772
    %3275 = vmatprep.subr.bf16.mxu0 %v2781
    %3276 = vmatpush1.bf16.msra.mxu0 %v2780
    %3277 = vmatprep.subr.bf16.mxu0 0
    %3278 = vmatpush1.bf16.msra.mxu0 0
    %3279 = vmatprep.subr.bf16.mxu0 0
    %3280 = vmatpush1.bf16.msra.mxu0 0
    %3281 = vmatprep.subr.bf16.mxu0 0
    %3282 = vmatpush1.bf16.msra.mxu0 0
    %3283 = vmatprep.subr.bf16.mxu0 0
    %3284 = vmatpush1.bf16.msra.mxu0 0
    %3285 = vmatprep.subr.bf16.mxu0 0
    %3286 = vmatpush1.bf16.msra.mxu0 0
    %3287 = vmatprep.subr.bf16.mxu0 0
    %3288 = vmatpush1.bf16.msra.mxu0 0
    %3289 = vmatprep.subr.bf16.mxu0 0
    %3290 = vmatpush1.bf16.msra.mxu0 0
    %3291 = vmatprep.subr.bf16.mxu0 0
    %3292 = vmatpush1.bf16.msra.mxu0 0
    %3293 = vmatprep.mubr.bf16.mxu0 0
    %3294 = vmatmul.mubr.bf16.gmra.mrb[0].mxu0 %v1779
    %v3295 = vpop.f32.mrb[0].mxu0
    %v3296 = vadd.f32 %v3255, %v3295
    %v3297 = vpop.f32.mrb[0].mxu0
    %v3298 = vadd.f32 %v3257, %v3297
    %v3299 = vpop.f32.mrb[0].mxu0
    %v3300 = vpop.f32.mrb[0].mxu0
    %3301 = vdwg.mxu0
    %v3302 = vmax.f32 %v3050, 0.0
    %v3303 = vmax.f32 %v3052, 0.0
    %v3304 = vmax.f32 %v3132, 0.0
    %v3305 = vmax.f32 %v3134, 0.0
    %v3306 = vmax.f32 %v3214, 0.0
    %v3307 = vmax.f32 %v3216, 0.0
    %v3308 = vmax.f32 %v3296, 0.0
    %v3309 = vmax.f32 %v3298, 0.0
    %v3310 = vpack.c.bf16 %v3302, %v3302
    %v3311 = vpack.c.bf16 %v3303, %v3303
    %v3312 = vpack.c.bf16 %v3304, %v3304
    %v3313 = vpack.c.bf16 %v3305, %v3305
    %v3314 = vpack.c.bf16 %v3306, %v3306
    %v3315 = vpack.c.bf16 %v3307, %v3307
    %v3316 = vpack.c.bf16 %v3308, %v3308
    %v3317 = vpack.c.bf16 %v3309, %v3309
    %v3318 = vld [vmem:[#allocation13] sm:$0xff]
    %v3319 = vld [vmem:[#allocation13 + $0x8] sm:$0xff]
    %v3320 = vld [vmem:[#allocation13 + $0x10] sm:$0xff]
    %v3321 = vld [vmem:[#allocation13 + $0x18] sm:$0xff]
    %v3322 = vld [vmem:[#allocation13 + $0x20] sm:$0xff]
    %v3323 = vld [vmem:[#allocation13 + $0x28] sm:$0xff]
    %v3324 = vld [vmem:[#allocation13 + $0x30] sm:$0xff]
    %v3325 = vld [vmem:[#allocation13 + $0x38] sm:$0xff]
    %v3326 = vld [vmem:[#allocation13 + $0x40] sm:$0xff]
    %v3327 = vld [vmem:[#allocation13 + $0x48] sm:$0xff]
    %v3328 = vld [vmem:[#allocation13 + $0x50] sm:$0xff]
    %v3329 = vld [vmem:[#allocation13 + $0x58] sm:$0xff]
    %v3330 = vld [vmem:[#allocation13 + $0x60] sm:$0xff]
    %v3331 = vld [vmem:[#allocation13 + $0x68] sm:$0xff]
    %v3332 = vld [vmem:[#allocation13 + $0x70] sm:$0xff]
    %v3333 = vld [vmem:[#allocation13 + $0x78] sm:$0xff]
    %v3334 = vld [vmem:[#allocation13 + $0x80] sm:$0xff]
    %v3335 = vld [vmem:[#allocation13 + $0x88] sm:$0xff]
    %v3336 = vld [vmem:[#allocation13 + $0x90] sm:$0xff]
    %v3337 = vld [vmem:[#allocation13 + $0x98] sm:$0xff]
    %v3338 = vld [vmem:[#allocation13 + $0xa0] sm:$0xff]
    %v3339 = vld [vmem:[#allocation13 + $0xa8] sm:$0xff]
    %v3340 = vld [vmem:[#allocation13 + $0xb0] sm:$0xff]
    %v3341 = vld [vmem:[#allocation13 + $0xb8] sm:$0xff]
    %v3342 = vld [vmem:[#allocation13 + $0xc0] sm:$0xff]
    %v3343 = vld [vmem:[#allocation13 + $0xc8] sm:$0xff]
    %v3344 = vld [vmem:[#allocation13 + $0xd0] sm:$0xff]
    %v3345 = vld [vmem:[#allocation13 + $0xd8] sm:$0xff]
    %v3346 = vld [vmem:[#allocation13 + $0xe0] sm:$0xff]
    %v3347 = vld [vmem:[#allocation13 + $0xe8] sm:$0xff]
    %v3348 = vld [vmem:[#allocation13 + $0xf0] sm:$0xff]
    %v3349 = vld [vmem:[#allocation13 + $0xf8] sm:$0xff]
    %v3350 = vld [vmem:[#allocation13 + $0x100] sm:$0xff]
    %v3351 = vld [vmem:[#allocation13 + $0x108] sm:$0xff]
    %v3352 = vld [vmem:[#allocation13 + $0x110] sm:$0xff]
    %v3353 = vld [vmem:[#allocation13 + $0x118] sm:$0xff]
    %v3354 = vld [vmem:[#allocation13 + $0x120] sm:$0xff]
    %v3355 = vld [vmem:[#allocation13 + $0x128] sm:$0xff]
    %v3356 = vld [vmem:[#allocation13 + $0x130] sm:$0xff]
    %v3357 = vld [vmem:[#allocation13 + $0x138] sm:$0xff]
    %v3358 = vld [vmem:[#allocation13 + $0x140] sm:$0xff]
    %v3359 = vld [vmem:[#allocation13 + $0x148] sm:$0xff]
    %v3360 = vld [vmem:[#allocation13 + $0x150] sm:$0xff]
    %v3361 = vld [vmem:[#allocation13 + $0x158] sm:$0xff]
    %v3362 = vld [vmem:[#allocation13 + $0x160] sm:$0xff]
    %v3363 = vld [vmem:[#allocation13 + $0x168] sm:$0xff]
    %v3364 = vld [vmem:[#allocation13 + $0x170] sm:$0xff]
    %v3365 = vld [vmem:[#allocation13 + $0x178] sm:$0xff]
    %v3366 = vld [vmem:[#allocation13 + $0x180] sm:$0xff]
    %v3367 = vld [vmem:[#allocation13 + $0x188] sm:$0xff]
    %v3368 = vld [vmem:[#allocation13 + $0x190] sm:$0xff]
    %v3369 = vld [vmem:[#allocation13 + $0x198] sm:$0xff]
    %v3370 = vld [vmem:[#allocation13 + $0x1a0] sm:$0xff]
    %v3371 = vld [vmem:[#allocation13 + $0x1a8] sm:$0xff]
    %v3372 = vld [vmem:[#allocation13 + $0x1b0] sm:$0xff]
    %v3373 = vld [vmem:[#allocation13 + $0x1b8] sm:$0xff]
    %v3374 = vld [vmem:[#allocation13 + $0x1c0] sm:$0xff]
    %v3375 = vld [vmem:[#allocation13 + $0x1c8] sm:$0xff]
    %v3376 = vld [vmem:[#allocation13 + $0x1d0] sm:$0xff]
    %v3377 = vld [vmem:[#allocation13 + $0x1d8] sm:$0xff]
    %v3378 = vld [vmem:[#allocation13 + $0x1e0] sm:$0xff]
    %v3379 = vld [vmem:[#allocation13 + $0x1e8] sm:$0xff]
    %v3380 = vld [vmem:[#allocation13 + $0x1f0] sm:$0xff]
    %v3381 = vld [vmem:[#allocation13 + $0x1f8] sm:$0xff]
    %v3382 = vld [vmem:[#allocation13 + $0x200] sm:$0xff]
    %v3383 = vld [vmem:[#allocation13 + $0x208] sm:$0xff]
    %v3384 = vld [vmem:[#allocation13 + $0x210] sm:$0xff]
    %v3385 = vld [vmem:[#allocation13 + $0x218] sm:$0xff]
    %v3386 = vld [vmem:[#allocation13 + $0x220] sm:$0xff]
    %v3387 = vld [vmem:[#allocation13 + $0x228] sm:$0xff]
    %v3388 = vld [vmem:[#allocation13 + $0x230] sm:$0xff]
    %v3389 = vld [vmem:[#allocation13 + $0x238] sm:$0xff]
    %v3390 = vld [vmem:[#allocation13 + $0x240] sm:$0xff]
    %v3391 = vld [vmem:[#allocation13 + $0x248] sm:$0xff]
    %v3392 = vld [vmem:[#allocation13 + $0x250] sm:$0xff]
    %v3393 = vld [vmem:[#allocation13 + $0x258] sm:$0xff]
    %v3394 = vld [vmem:[#allocation13 + $0x260] sm:$0xff]
    %v3395 = vld [vmem:[#allocation13 + $0x268] sm:$0xff]
    %v3396 = vld [vmem:[#allocation13 + $0x270] sm:$0xff]
    %v3397 = vld [vmem:[#allocation13 + $0x278] sm:$0xff]
    %v3398 = vld [vmem:[#allocation13 + $0x280] sm:$0xff]
    %v3399 = vld [vmem:[#allocation13 + $0x288] sm:$0xff]
    %v3400 = vld [vmem:[#allocation13 + $0x290] sm:$0xff]
    %v3401 = vld [vmem:[#allocation13 + $0x298] sm:$0xff]
    %v3402 = vld [vmem:[#allocation13 + $0x2a0] sm:$0xff]
    %v3403 = vld [vmem:[#allocation13 + $0x2a8] sm:$0xff]
    %v3404 = vld [vmem:[#allocation13 + $0x2b0] sm:$0xff]
    %v3405 = vld [vmem:[#allocation13 + $0x2b8] sm:$0xff]
    %v3406 = vld [vmem:[#allocation13 + $0x2c0] sm:$0xff]
    %v3407 = vld [vmem:[#allocation13 + $0x2c8] sm:$0xff]
    %v3408 = vld [vmem:[#allocation13 + $0x2d0] sm:$0xff]
    %v3409 = vld [vmem:[#allocation13 + $0x2d8] sm:$0xff]
    %v3410 = vld [vmem:[#allocation13 + $0x2e0] sm:$0xff]
    %v3411 = vld [vmem:[#allocation13 + $0x2e8] sm:$0xff]
    %v3412 = vld [vmem:[#allocation13 + $0x2f0] sm:$0xff]
    %v3413 = vld [vmem:[#allocation13 + $0x2f8] sm:$0xff]
    %v3414 = vld [vmem:[#allocation13 + $0x300] sm:$0xff]
    %v3415 = vld [vmem:[#allocation13 + $0x308] sm:$0xff]
    %v3416 = vld [vmem:[#allocation13 + $0x310] sm:$0xff]
    %v3417 = vld [vmem:[#allocation13 + $0x318] sm:$0xff]
    %v3418 = vld [vmem:[#allocation13 + $0x320] sm:$0xff]
    %v3419 = vld [vmem:[#allocation13 + $0x328] sm:$0xff]
    %v3420 = vld [vmem:[#allocation13 + $0x330] sm:$0xff]
    %v3421 = vld [vmem:[#allocation13 + $0x338] sm:$0xff]
    %v3422 = vld [vmem:[#allocation13 + $0x340] sm:$0xff]
    %v3423 = vld [vmem:[#allocation13 + $0x348] sm:$0xff]
    %v3424 = vld [vmem:[#allocation13 + $0x350] sm:$0xff]
    %v3425 = vld [vmem:[#allocation13 + $0x358] sm:$0xff]
    %v3426 = vld [vmem:[#allocation13 + $0x360] sm:$0xff]
    %v3427 = vld [vmem:[#allocation13 + $0x368] sm:$0xff]
    %v3428 = vld [vmem:[#allocation13 + $0x370] sm:$0xff]
    %v3429 = vld [vmem:[#allocation13 + $0x378] sm:$0xff]
    %v3430 = vld [vmem:[#allocation13 + $0x380] sm:$0xff]
    %v3431 = vld [vmem:[#allocation13 + $0x388] sm:$0xff]
    %v3432 = vld [vmem:[#allocation13 + $0x390] sm:$0xff]
    %v3433 = vld [vmem:[#allocation13 + $0x398] sm:$0xff]
    %v3434 = vld [vmem:[#allocation13 + $0x3a0] sm:$0xff]
    %v3435 = vld [vmem:[#allocation13 + $0x3a8] sm:$0xff]
    %v3436 = vld [vmem:[#allocation13 + $0x3b0] sm:$0xff]
    %v3437 = vld [vmem:[#allocation13 + $0x3b8] sm:$0xff]
    %v3438 = vld [vmem:[#allocation13 + $0x3c0] sm:$0xff]
    %v3439 = vld [vmem:[#allocation13 + $0x3c8] sm:$0xff]
    %v3440 = vld [vmem:[#allocation13 + $0x3d0] sm:$0xff]
    %v3441 = vld [vmem:[#allocation13 + $0x3d8] sm:$0xff]
    %v3442 = vld [vmem:[#allocation13 + $0x3e0] sm:$0xff]
    %v3443 = vld [vmem:[#allocation13 + $0x3e8] sm:$0xff]
    %v3444 = vld [vmem:[#allocation13 + $0x3f0] sm:$0xff]
    %v3445 = vld [vmem:[#allocation13 + $0x3f8] sm:$0xff]
    %v3446 = vld [vmem:[#allocation13 + $0x400] sm:$0xff]
    %v3447 = vld [vmem:[#allocation13 + $0x408] sm:$0xff]
    %v3448 = vld [vmem:[#allocation13 + $0x410] sm:$0xff]
    %v3449 = vld [vmem:[#allocation13 + $0x418] sm:$0xff]
    %v3450 = vld [vmem:[#allocation13 + $0x420] sm:$0xff]
    %v3451 = vld [vmem:[#allocation13 + $0x428] sm:$0xff]
    %v3452 = vld [vmem:[#allocation13 + $0x430] sm:$0xff]
    %v3453 = vld [vmem:[#allocation13 + $0x438] sm:$0xff]
    %v3454 = vld [vmem:[#allocation13 + $0x440] sm:$0xff]
    %v3455 = vld [vmem:[#allocation13 + $0x448] sm:$0xff]
    %v3456 = vld [vmem:[#allocation13 + $0x450] sm:$0xff]
    %v3457 = vld [vmem:[#allocation13 + $0x458] sm:$0xff]
    %v3458 = vld [vmem:[#allocation13 + $0x460] sm:$0xff]
    %v3459 = vld [vmem:[#allocation13 + $0x468] sm:$0xff]
    %v3460 = vld [vmem:[#allocation13 + $0x470] sm:$0xff]
    %v3461 = vld [vmem:[#allocation13 + $0x478] sm:$0xff]
    %v3462 = vld [vmem:[#allocation13 + $0x480] sm:$0xff]
    %v3463 = vld [vmem:[#allocation13 + $0x488] sm:$0xff]
    %v3464 = vld [vmem:[#allocation13 + $0x490] sm:$0xff]
    %v3465 = vld [vmem:[#allocation13 + $0x498] sm:$0xff]
    %v3466 = vld [vmem:[#allocation13 + $0x4a0] sm:$0xff]
    %v3467 = vld [vmem:[#allocation13 + $0x4a8] sm:$0xff]
    %v3468 = vld [vmem:[#allocation13 + $0x4b0] sm:$0xff]
    %v3469 = vld [vmem:[#allocation13 + $0x4b8] sm:$0xff]
    %v3470 = vld [vmem:[#allocation13 + $0x4c0] sm:$0xff]
    %v3471 = vld [vmem:[#allocation13 + $0x4c8] sm:$0xff]
    %v3472 = vld [vmem:[#allocation13 + $0x4d0] sm:$0xff]
    %v3473 = vld [vmem:[#allocation13 + $0x4d8] sm:$0xff]
    %v3474 = vld [vmem:[#allocation13 + $0x4e0] sm:$0xff]
    %v3475 = vld [vmem:[#allocation13 + $0x4e8] sm:$0xff]
    %v3476 = vld [vmem:[#allocation13 + $0x4f0] sm:$0xff]
    %v3477 = vld [vmem:[#allocation13 + $0x4f8] sm:$0xff]
    %v3478 = vld [vmem:[#allocation13 + $0x500] sm:$0xff]
    %v3479 = vld [vmem:[#allocation13 + $0x508] sm:$0xff]
    %v3480 = vld [vmem:[#allocation13 + $0x510] sm:$0xff]
    %v3481 = vld [vmem:[#allocation13 + $0x518] sm:$0xff]
    %v3482 = vld [vmem:[#allocation13 + $0x520] sm:$0xff]
    %v3483 = vld [vmem:[#allocation13 + $0x528] sm:$0xff]
    %v3484 = vld [vmem:[#allocation13 + $0x530] sm:$0xff]
    %v3485 = vld [vmem:[#allocation13 + $0x538] sm:$0xff]
    %v3486 = vld [vmem:[#allocation13 + $0x540] sm:$0xff]
    %v3487 = vld [vmem:[#allocation13 + $0x548] sm:$0xff]
    %v3488 = vld [vmem:[#allocation13 + $0x550] sm:$0xff]
    %v3489 = vld [vmem:[#allocation13 + $0x558] sm:$0xff]
    %v3490 = vld [vmem:[#allocation13 + $0x560] sm:$0xff]
    %v3491 = vld [vmem:[#allocation13 + $0x568] sm:$0xff]
    %v3492 = vld [vmem:[#allocation13 + $0x570] sm:$0xff]
    %v3493 = vld [vmem:[#allocation13 + $0x578] sm:$0xff]
    %v3494 = vld [vmem:[#allocation13 + $0x580] sm:$0xff]
    %v3495 = vld [vmem:[#allocation13 + $0x588] sm:$0xff]
    %v3496 = vld [vmem:[#allocation13 + $0x590] sm:$0xff]
    %v3497 = vld [vmem:[#allocation13 + $0x598] sm:$0xff]
    %v3498 = vld [vmem:[#allocation13 + $0x5a0] sm:$0xff]
    %v3499 = vld [vmem:[#allocation13 + $0x5a8] sm:$0xff]
    %v3500 = vld [vmem:[#allocation13 + $0x5b0] sm:$0xff]
    %v3501 = vld [vmem:[#allocation13 + $0x5b8] sm:$0xff]
    %v3502 = vld [vmem:[#allocation13 + $0x5c0] sm:$0xff]
    %v3503 = vld [vmem:[#allocation13 + $0x5c8] sm:$0xff]
    %v3504 = vld [vmem:[#allocation13 + $0x5d0] sm:$0xff]
    %v3505 = vld [vmem:[#allocation13 + $0x5d8] sm:$0xff]
    %v3506 = vld [vmem:[#allocation13 + $0x5e0] sm:$0xff]
    %v3507 = vld [vmem:[#allocation13 + $0x5e8] sm:$0xff]
    %v3508 = vld [vmem:[#allocation13 + $0x5f0] sm:$0xff]
    %v3509 = vld [vmem:[#allocation13 + $0x5f8] sm:$0xff]
    %v3510 = vld [vmem:[#allocation13 + $0x600] sm:$0xff]
    %v3511 = vld [vmem:[#allocation13 + $0x608] sm:$0xff]
    %v3512 = vld [vmem:[#allocation13 + $0x610] sm:$0xff]
    %v3513 = vld [vmem:[#allocation13 + $0x618] sm:$0xff]
    %v3514 = vld [vmem:[#allocation13 + $0x620] sm:$0xff]
    %v3515 = vld [vmem:[#allocation13 + $0x628] sm:$0xff]
    %v3516 = vld [vmem:[#allocation13 + $0x630] sm:$0xff]
    %v3517 = vld [vmem:[#allocation13 + $0x638] sm:$0xff]
    %v3518 = vld [vmem:[#allocation13 + $0x640] sm:$0xff]
    %v3519 = vld [vmem:[#allocation13 + $0x648] sm:$0xff]
    %v3520 = vld [vmem:[#allocation13 + $0x650] sm:$0xff]
    %v3521 = vld [vmem:[#allocation13 + $0x658] sm:$0xff]
    %v3522 = vld [vmem:[#allocation13 + $0x660] sm:$0xff]
    %v3523 = vld [vmem:[#allocation13 + $0x668] sm:$0xff]
    %v3524 = vld [vmem:[#allocation13 + $0x670] sm:$0xff]
    %v3525 = vld [vmem:[#allocation13 + $0x678] sm:$0xff]
    %v3526 = vld [vmem:[#allocation13 + $0x680] sm:$0xff]
    %v3527 = vld [vmem:[#allocation13 + $0x688] sm:$0xff]
    %v3528 = vld [vmem:[#allocation13 + $0x690] sm:$0xff]
    %v3529 = vld [vmem:[#allocation13 + $0x698] sm:$0xff]
    %v3530 = vld [vmem:[#allocation13 + $0x6a0] sm:$0xff]
    %v3531 = vld [vmem:[#allocation13 + $0x6a8] sm:$0xff]
    %v3532 = vld [vmem:[#allocation13 + $0x6b0] sm:$0xff]
    %v3533 = vld [vmem:[#allocation13 + $0x6b8] sm:$0xff]
    %v3534 = vld [vmem:[#allocation13 + $0x6c0] sm:$0xff]
    %v3535 = vld [vmem:[#allocation13 + $0x6c8] sm:$0xff]
    %v3536 = vld [vmem:[#allocation13 + $0x6d0] sm:$0xff]
    %v3537 = vld [vmem:[#allocation13 + $0x6d8] sm:$0xff]
    %v3538 = vld [vmem:[#allocation13 + $0x6e0] sm:$0xff]
    %v3539 = vld [vmem:[#allocation13 + $0x6e8] sm:$0xff]
    %v3540 = vld [vmem:[#allocation13 + $0x6f0] sm:$0xff]
    %v3541 = vld [vmem:[#allocation13 + $0x6f8] sm:$0xff]
    %v3542 = vld [vmem:[#allocation13 + $0x700] sm:$0xff]
    %v3543 = vld [vmem:[#allocation13 + $0x708] sm:$0xff]
    %v3544 = vld [vmem:[#allocation13 + $0x710] sm:$0xff]
    %v3545 = vld [vmem:[#allocation13 + $0x718] sm:$0xff]
    %v3546 = vld [vmem:[#allocation13 + $0x720] sm:$0xff]
    %v3547 = vld [vmem:[#allocation13 + $0x728] sm:$0xff]
    %v3548 = vld [vmem:[#allocation13 + $0x730] sm:$0xff]
    %v3549 = vld [vmem:[#allocation13 + $0x738] sm:$0xff]
    %v3550 = vld [vmem:[#allocation13 + $0x740] sm:$0xff]
    %v3551 = vld [vmem:[#allocation13 + $0x748] sm:$0xff]
    %v3552 = vld [vmem:[#allocation13 + $0x750] sm:$0xff]
    %v3553 = vld [vmem:[#allocation13 + $0x758] sm:$0xff]
    %v3554 = vld [vmem:[#allocation13 + $0x760] sm:$0xff]
    %v3555 = vld [vmem:[#allocation13 + $0x768] sm:$0xff]
    %v3556 = vld [vmem:[#allocation13 + $0x770] sm:$0xff]
    %v3557 = vld [vmem:[#allocation13 + $0x778] sm:$0xff]
    %v3558 = vld [vmem:[#allocation13 + $0x780] sm:$0xff]
    %v3559 = vld [vmem:[#allocation13 + $0x788] sm:$0xff]
    %v3560 = vld [vmem:[#allocation13 + $0x790] sm:$0xff]
    %v3561 = vld [vmem:[#allocation13 + $0x798] sm:$0xff]
    %v3562 = vld [vmem:[#allocation13 + $0x7a0] sm:$0xff]
    %v3563 = vld [vmem:[#allocation13 + $0x7a8] sm:$0xff]
    %v3564 = vld [vmem:[#allocation13 + $0x7b0] sm:$0xff]
    %v3565 = vld [vmem:[#allocation13 + $0x7b8] sm:$0xff]
    %v3566 = vld [vmem:[#allocation13 + $0x7c0] sm:$0xff]
    %v3567 = vld [vmem:[#allocation13 + $0x7c8] sm:$0xff]
    %v3568 = vld [vmem:[#allocation13 + $0x7d0] sm:$0xff]
    %v3569 = vld [vmem:[#allocation13 + $0x7d8] sm:$0xff]
    %v3570 = vld [vmem:[#allocation13 + $0x7e0] sm:$0xff]
    %v3571 = vld [vmem:[#allocation13 + $0x7e8] sm:$0xff]
    %v3572 = vld [vmem:[#allocation13 + $0x7f0] sm:$0xff]
    %v3573 = vld [vmem:[#allocation13 + $0x7f8] sm:$0xff]
    %v3574 = vld [vmem:[#allocation13 + $0x800] sm:$0xff]
    %v3575 = vld [vmem:[#allocation13 + $0x808] sm:$0xff]
    %v3576 = vld [vmem:[#allocation13 + $0x810] sm:$0xff]
    %v3577 = vld [vmem:[#allocation13 + $0x818] sm:$0xff]
    %v3578 = vld [vmem:[#allocation13 + $0x820] sm:$0xff]
    %v3579 = vld [vmem:[#allocation13 + $0x828] sm:$0xff]
    %v3580 = vld [vmem:[#allocation13 + $0x830] sm:$0xff]
    %v3581 = vld [vmem:[#allocation13 + $0x838] sm:$0xff]
    %v3582 = vld [vmem:[#allocation13 + $0x840] sm:$0xff]
    %v3583 = vld [vmem:[#allocation13 + $0x848] sm:$0xff]
    %v3584 = vld [vmem:[#allocation13 + $0x850] sm:$0xff]
    %v3585 = vld [vmem:[#allocation13 + $0x858] sm:$0xff]
    %v3586 = vld [vmem:[#allocation13 + $0x860] sm:$0xff]
    %v3587 = vld [vmem:[#allocation13 + $0x868] sm:$0xff]
    %v3588 = vld [vmem:[#allocation13 + $0x870] sm:$0xff]
    %v3589 = vld [vmem:[#allocation13 + $0x878] sm:$0xff]
    %v3590 = vld [vmem:[#allocation13 + $0x880] sm:$0xff]
    %v3591 = vld [vmem:[#allocation13 + $0x888] sm:$0xff]
    %v3592 = vld [vmem:[#allocation13 + $0x890] sm:$0xff]
    %v3593 = vld [vmem:[#allocation13 + $0x898] sm:$0xff]
    %v3594 = vld [vmem:[#allocation13 + $0x8a0] sm:$0xff]
    %v3595 = vld [vmem:[#allocation13 + $0x8a8] sm:$0xff]
    %v3596 = vld [vmem:[#allocation13 + $0x8b0] sm:$0xff]
    %v3597 = vld [vmem:[#allocation13 + $0x8b8] sm:$0xff]
    %v3598 = vld [vmem:[#allocation13 + $0x8c0] sm:$0xff]
    %v3599 = vld [vmem:[#allocation13 + $0x8c8] sm:$0xff]
    %v3600 = vld [vmem:[#allocation13 + $0x8d0] sm:$0xff]
    %v3601 = vld [vmem:[#allocation13 + $0x8d8] sm:$0xff]
    %v3602 = vld [vmem:[#allocation13 + $0x8e0] sm:$0xff]
    %v3603 = vld [vmem:[#allocation13 + $0x8e8] sm:$0xff]
    %v3604 = vld [vmem:[#allocation13 + $0x8f0] sm:$0xff]
    %v3605 = vld [vmem:[#allocation13 + $0x8f8] sm:$0xff]
    %v3606 = vld [vmem:[#allocation13 + $0x900] sm:$0xff]
    %v3607 = vld [vmem:[#allocation13 + $0x908] sm:$0xff]
    %v3608 = vld [vmem:[#allocation13 + $0x910] sm:$0xff]
    %v3609 = vld [vmem:[#allocation13 + $0x918] sm:$0xff]
    %v3610 = vld [vmem:[#allocation13 + $0x920] sm:$0xff]
    %v3611 = vld [vmem:[#allocation13 + $0x928] sm:$0xff]
    %v3612 = vld [vmem:[#allocation13 + $0x930] sm:$0xff]
    %v3613 = vld [vmem:[#allocation13 + $0x938] sm:$0xff]
    %v3614 = vld [vmem:[#allocation13 + $0x940] sm:$0xff]
    %v3615 = vld [vmem:[#allocation13 + $0x948] sm:$0xff]
    %v3616 = vld [vmem:[#allocation13 + $0x950] sm:$0xff]
    %v3617 = vld [vmem:[#allocation13 + $0x958] sm:$0xff]
    %v3618 = vld [vmem:[#allocation13 + $0x960] sm:$0xff]
    %v3619 = vld [vmem:[#allocation13 + $0x968] sm:$0xff]
    %v3620 = vld [vmem:[#allocation13 + $0x970] sm:$0xff]
    %v3621 = vld [vmem:[#allocation13 + $0x978] sm:$0xff]
    %v3622 = vld [vmem:[#allocation13 + $0x980] sm:$0xff]
    %v3623 = vld [vmem:[#allocation13 + $0x988] sm:$0xff]
    %v3624 = vld [vmem:[#allocation13 + $0x990] sm:$0xff]
    %v3625 = vld [vmem:[#allocation13 + $0x998] sm:$0xff]
    %v3626 = vld [vmem:[#allocation13 + $0x9a0] sm:$0xff]
    %v3627 = vld [vmem:[#allocation13 + $0x9a8] sm:$0xff]
    %v3628 = vld [vmem:[#allocation13 + $0x9b0] sm:$0xff]
    %v3629 = vld [vmem:[#allocation13 + $0x9b8] sm:$0xff]
    %v3630 = vld [vmem:[#allocation13 + $0x9c0] sm:$0xff]
    %v3631 = vld [vmem:[#allocation13 + $0x9c8] sm:$0xff]
    %v3632 = vld [vmem:[#allocation13 + $0x9d0] sm:$0xff]
    %v3633 = vld [vmem:[#allocation13 + $0x9d8] sm:$0xff]
    %v3634 = vld [vmem:[#allocation13 + $0x9e0] sm:$0xff]
    %v3635 = vld [vmem:[#allocation13 + $0x9e8] sm:$0xff]
    %v3636 = vld [vmem:[#allocation13 + $0x9f0] sm:$0xff]
    %v3637 = vld [vmem:[#allocation13 + $0x9f8] sm:$0xff]
    %v3638 = vld [vmem:[#allocation13 + $0xa00] sm:$0xff]
    %v3639 = vld [vmem:[#allocation13 + $0xa08] sm:$0xff]
    %v3640 = vld [vmem:[#allocation13 + $0xa10] sm:$0xff]
    %v3641 = vld [vmem:[#allocation13 + $0xa18] sm:$0xff]
    %v3642 = vld [vmem:[#allocation13 + $0xa20] sm:$0xff]
    %v3643 = vld [vmem:[#allocation13 + $0xa28] sm:$0xff]
    %v3644 = vld [vmem:[#allocation13 + $0xa30] sm:$0xff]
    %v3645 = vld [vmem:[#allocation13 + $0xa38] sm:$0xff]
    %v3646 = vld [vmem:[#allocation13 + $0xa40] sm:$0xff]
    %v3647 = vld [vmem:[#allocation13 + $0xa48] sm:$0xff]
    %v3648 = vld [vmem:[#allocation13 + $0xa50] sm:$0xff]
    %v3649 = vld [vmem:[#allocation13 + $0xa58] sm:$0xff]
    %v3650 = vld [vmem:[#allocation13 + $0xa60] sm:$0xff]
    %v3651 = vld [vmem:[#allocation13 + $0xa68] sm:$0xff]
    %v3652 = vld [vmem:[#allocation13 + $0xa70] sm:$0xff]
    %v3653 = vld [vmem:[#allocation13 + $0xa78] sm:$0xff]
    %v3654 = vld [vmem:[#allocation13 + $0xa80] sm:$0xff]
    %v3655 = vld [vmem:[#allocation13 + $0xa88] sm:$0xff]
    %v3656 = vld [vmem:[#allocation13 + $0xa90] sm:$0xff]
    %v3657 = vld [vmem:[#allocation13 + $0xa98] sm:$0xff]
    %v3658 = vld [vmem:[#allocation13 + $0xaa0] sm:$0xff]
    %v3659 = vld [vmem:[#allocation13 + $0xaa8] sm:$0xff]
    %v3660 = vld [vmem:[#allocation13 + $0xab0] sm:$0xff]
    %v3661 = vld [vmem:[#allocation13 + $0xab8] sm:$0xff]
    %v3662 = vld [vmem:[#allocation13 + $0xac0] sm:$0xff]
    %v3663 = vld [vmem:[#allocation13 + $0xac8] sm:$0xff]
    %v3664 = vld [vmem:[#allocation13 + $0xad0] sm:$0xff]
    %v3665 = vld [vmem:[#allocation13 + $0xad8] sm:$0xff]
    %v3666 = vld [vmem:[#allocation13 + $0xae0] sm:$0xff]
    %v3667 = vld [vmem:[#allocation13 + $0xae8] sm:$0xff]
    %v3668 = vld [vmem:[#allocation13 + $0xaf0] sm:$0xff]
    %v3669 = vld [vmem:[#allocation13 + $0xaf8] sm:$0xff]
    %v3670 = vld [vmem:[#allocation13 + $0xb00] sm:$0xff]
    %v3671 = vld [vmem:[#allocation13 + $0xb08] sm:$0xff]
    %v3672 = vld [vmem:[#allocation13 + $0xb10] sm:$0xff]
    %v3673 = vld [vmem:[#allocation13 + $0xb18] sm:$0xff]
    %v3674 = vld [vmem:[#allocation13 + $0xb20] sm:$0xff]
    %v3675 = vld [vmem:[#allocation13 + $0xb28] sm:$0xff]
    %v3676 = vld [vmem:[#allocation13 + $0xb30] sm:$0xff]
    %v3677 = vld [vmem:[#allocation13 + $0xb38] sm:$0xff]
    %v3678 = vld [vmem:[#allocation13 + $0xb40] sm:$0xff]
    %v3679 = vld [vmem:[#allocation13 + $0xb48] sm:$0xff]
    %v3680 = vld [vmem:[#allocation13 + $0xb50] sm:$0xff]
    %v3681 = vld [vmem:[#allocation13 + $0xb58] sm:$0xff]
    %v3682 = vld [vmem:[#allocation13 + $0xb60] sm:$0xff]
    %v3683 = vld [vmem:[#allocation13 + $0xb68] sm:$0xff]
    %v3684 = vld [vmem:[#allocation13 + $0xb70] sm:$0xff]
    %v3685 = vld [vmem:[#allocation13 + $0xb78] sm:$0xff]
    %v3686 = vld [vmem:[#allocation13 + $0xb80] sm:$0xff]
    %v3687 = vld [vmem:[#allocation13 + $0xb88] sm:$0xff]
    %v3688 = vld [vmem:[#allocation13 + $0xb90] sm:$0xff]
    %v3689 = vld [vmem:[#allocation13 + $0xb98] sm:$0xff]
    %v3690 = vld [vmem:[#allocation13 + $0xba0] sm:$0xff]
    %v3691 = vld [vmem:[#allocation13 + $0xba8] sm:$0xff]
    %v3692 = vld [vmem:[#allocation13 + $0xbb0] sm:$0xff]
    %v3693 = vld [vmem:[#allocation13 + $0xbb8] sm:$0xff]
    %v3694 = vld [vmem:[#allocation13 + $0xbc0] sm:$0xff]
    %v3695 = vld [vmem:[#allocation13 + $0xbc8] sm:$0xff]
    %v3696 = vld [vmem:[#allocation13 + $0xbd0] sm:$0xff]
    %v3697 = vld [vmem:[#allocation13 + $0xbd8] sm:$0xff]
    %v3698 = vld [vmem:[#allocation13 + $0xbe0] sm:$0xff]
    %v3699 = vld [vmem:[#allocation13 + $0xbe8] sm:$0xff]
    %v3700 = vld [vmem:[#allocation13 + $0xbf0] sm:$0xff]
    %v3701 = vld [vmem:[#allocation13 + $0xbf8] sm:$0xff]
    %v3702 = vld [vmem:[#allocation13 + $0xc00] sm:$0xff]
    %v3703 = vld [vmem:[#allocation13 + $0xc08] sm:$0xff]
    %v3704 = vld [vmem:[#allocation13 + $0xc10] sm:$0xff]
    %v3705 = vld [vmem:[#allocation13 + $0xc18] sm:$0xff]
    %v3706 = vld [vmem:[#allocation13 + $0xc20] sm:$0xff]
    %v3707 = vld [vmem:[#allocation13 + $0xc28] sm:$0xff]
    %v3708 = vld [vmem:[#allocation13 + $0xc30] sm:$0xff]
    %v3709 = vld [vmem:[#allocation13 + $0xc38] sm:$0xff]
    %v3710 = vld [vmem:[#allocation13 + $0xc40] sm:$0xff]
    %v3711 = vld [vmem:[#allocation13 + $0xc48] sm:$0xff]
    %v3712 = vld [vmem:[#allocation13 + $0xc50] sm:$0xff]
    %v3713 = vld [vmem:[#allocation13 + $0xc58] sm:$0xff]
    %v3714 = vld [vmem:[#allocation13 + $0xc60] sm:$0xff]
    %v3715 = vld [vmem:[#allocation13 + $0xc68] sm:$0xff]
    %v3716 = vld [vmem:[#allocation13 + $0xc70] sm:$0xff]
    %v3717 = vld [vmem:[#allocation13 + $0xc78] sm:$0xff]
    %v3718 = vld [vmem:[#allocation13 + $0xc80] sm:$0xff]
    %v3719 = vld [vmem:[#allocation13 + $0xc88] sm:$0xff]
    %v3720 = vld [vmem:[#allocation13 + $0xc90] sm:$0xff]
    %v3721 = vld [vmem:[#allocation13 + $0xc98] sm:$0xff]
    %v3722 = vld [vmem:[#allocation13 + $0xca0] sm:$0xff]
    %v3723 = vld [vmem:[#allocation13 + $0xca8] sm:$0xff]
    %v3724 = vld [vmem:[#allocation13 + $0xcb0] sm:$0xff]
    %v3725 = vld [vmem:[#allocation13 + $0xcb8] sm:$0xff]
    %v3726 = vld [vmem:[#allocation13 + $0xcc0] sm:$0xff]
    %v3727 = vld [vmem:[#allocation13 + $0xcc8] sm:$0xff]
    %v3728 = vld [vmem:[#allocation13 + $0xcd0] sm:$0xff]
    %v3729 = vld [vmem:[#allocation13 + $0xcd8] sm:$0xff]
    %v3730 = vld [vmem:[#allocation13 + $0xce0] sm:$0xff]
    %v3731 = vld [vmem:[#allocation13 + $0xce8] sm:$0xff]
    %v3732 = vld [vmem:[#allocation13 + $0xcf0] sm:$0xff]
    %v3733 = vld [vmem:[#allocation13 + $0xcf8] sm:$0xff]
    %v3734 = vld [vmem:[#allocation13 + $0xd00] sm:$0xff]
    %v3735 = vld [vmem:[#allocation13 + $0xd08] sm:$0xff]
    %v3736 = vld [vmem:[#allocation13 + $0xd10] sm:$0xff]
    %v3737 = vld [vmem:[#allocation13 + $0xd18] sm:$0xff]
    %v3738 = vld [vmem:[#allocation13 + $0xd20] sm:$0xff]
    %v3739 = vld [vmem:[#allocation13 + $0xd28] sm:$0xff]
    %v3740 = vld [vmem:[#allocation13 + $0xd30] sm:$0xff]
    %v3741 = vld [vmem:[#allocation13 + $0xd38] sm:$0xff]
    %v3742 = vld [vmem:[#allocation13 + $0xd40] sm:$0xff]
    %v3743 = vld [vmem:[#allocation13 + $0xd48] sm:$0xff]
    %v3744 = vld [vmem:[#allocation13 + $0xd50] sm:$0xff]
    %v3745 = vld [vmem:[#allocation13 + $0xd58] sm:$0xff]
    %v3746 = vld [vmem:[#allocation13 + $0xd60] sm:$0xff]
    %v3747 = vld [vmem:[#allocation13 + $0xd68] sm:$0xff]
    %v3748 = vld [vmem:[#allocation13 + $0xd70] sm:$0xff]
    %v3749 = vld [vmem:[#allocation13 + $0xd78] sm:$0xff]
    %v3750 = vld [vmem:[#allocation13 + $0xd80] sm:$0xff]
    %v3751 = vld [vmem:[#allocation13 + $0xd88] sm:$0xff]
    %v3752 = vld [vmem:[#allocation13 + $0xd90] sm:$0xff]
    %v3753 = vld [vmem:[#allocation13 + $0xd98] sm:$0xff]
    %v3754 = vld [vmem:[#allocation13 + $0xda0] sm:$0xff]
    %v3755 = vld [vmem:[#allocation13 + $0xda8] sm:$0xff]
    %v3756 = vld [vmem:[#allocation13 + $0xdb0] sm:$0xff]
    %v3757 = vld [vmem:[#allocation13 + $0xdb8] sm:$0xff]
    %v3758 = vld [vmem:[#allocation13 + $0xdc0] sm:$0xff]
    %v3759 = vld [vmem:[#allocation13 + $0xdc8] sm:$0xff]
    %v3760 = vld [vmem:[#allocation13 + $0xdd0] sm:$0xff]
    %v3761 = vld [vmem:[#allocation13 + $0xdd8] sm:$0xff]
    %v3762 = vld [vmem:[#allocation13 + $0xde0] sm:$0xff]
    %v3763 = vld [vmem:[#allocation13 + $0xde8] sm:$0xff]
    %v3764 = vld [vmem:[#allocation13 + $0xdf0] sm:$0xff]
    %v3765 = vld [vmem:[#allocation13 + $0xdf8] sm:$0xff]
    %v3766 = vld [vmem:[#allocation13 + $0xe00] sm:$0xff]
    %v3767 = vld [vmem:[#allocation13 + $0xe08] sm:$0xff]
    %v3768 = vld [vmem:[#allocation13 + $0xe10] sm:$0xff]
    %v3769 = vld [vmem:[#allocation13 + $0xe18] sm:$0xff]
    %v3770 = vld [vmem:[#allocation13 + $0xe20] sm:$0xff]
    %v3771 = vld [vmem:[#allocation13 + $0xe28] sm:$0xff]
    %v3772 = vld [vmem:[#allocation13 + $0xe30] sm:$0xff]
    %v3773 = vld [vmem:[#allocation13 + $0xe38] sm:$0xff]
    %v3774 = vld [vmem:[#allocation13 + $0xe40] sm:$0xff]
    %v3775 = vld [vmem:[#allocation13 + $0xe48] sm:$0xff]
    %v3776 = vld [vmem:[#allocation13 + $0xe50] sm:$0xff]
    %v3777 = vld [vmem:[#allocation13 + $0xe58] sm:$0xff]
    %v3778 = vld [vmem:[#allocation13 + $0xe60] sm:$0xff]
    %v3779 = vld [vmem:[#allocation13 + $0xe68] sm:$0xff]
    %v3780 = vld [vmem:[#allocation13 + $0xe70] sm:$0xff]
    %v3781 = vld [vmem:[#allocation13 + $0xe78] sm:$0xff]
    %v3782 = vld [vmem:[#allocation13 + $0xe80] sm:$0xff]
    %v3783 = vld [vmem:[#allocation13 + $0xe88] sm:$0xff]
    %v3784 = vld [vmem:[#allocation13 + $0xe90] sm:$0xff]
    %v3785 = vld [vmem:[#allocation13 + $0xe98] sm:$0xff]
    %v3786 = vld [vmem:[#allocation13 + $0xea0] sm:$0xff]
    %v3787 = vld [vmem:[#allocation13 + $0xea8] sm:$0xff]
    %v3788 = vld [vmem:[#allocation13 + $0xeb0] sm:$0xff]
    %v3789 = vld [vmem:[#allocation13 + $0xeb8] sm:$0xff]
    %v3790 = vld [vmem:[#allocation13 + $0xec0] sm:$0xff]
    %v3791 = vld [vmem:[#allocation13 + $0xec8] sm:$0xff]
    %v3792 = vld [vmem:[#allocation13 + $0xed0] sm:$0xff]
    %v3793 = vld [vmem:[#allocation13 + $0xed8] sm:$0xff]
    %v3794 = vld [vmem:[#allocation13 + $0xee0] sm:$0xff]
    %v3795 = vld [vmem:[#allocation13 + $0xee8] sm:$0xff]
    %v3796 = vld [vmem:[#allocation13 + $0xef0] sm:$0xff]
    %v3797 = vld [vmem:[#allocation13 + $0xef8] sm:$0xff]
    %v3798 = vld [vmem:[#allocation13 + $0xf00] sm:$0xff]
    %v3799 = vld [vmem:[#allocation13 + $0xf08] sm:$0xff]
    %v3800 = vld [vmem:[#allocation13 + $0xf10] sm:$0xff]
    %v3801 = vld [vmem:[#allocation13 + $0xf18] sm:$0xff]
    %v3802 = vld [vmem:[#allocation13 + $0xf20] sm:$0xff]
    %v3803 = vld [vmem:[#allocation13 + $0xf28] sm:$0xff]
    %v3804 = vld [vmem:[#allocation13 + $0xf30] sm:$0xff]
    %v3805 = vld [vmem:[#allocation13 + $0xf38] sm:$0xff]
    %v3806 = vld [vmem:[#allocation13 + $0xf40] sm:$0xff]
    %v3807 = vld [vmem:[#allocation13 + $0xf48] sm:$0xff]
    %v3808 = vld [vmem:[#allocation13 + $0xf50] sm:$0xff]
    %v3809 = vld [vmem:[#allocation13 + $0xf58] sm:$0xff]
    %v3810 = vld [vmem:[#allocation13 + $0xf60] sm:$0xff]
    %v3811 = vld [vmem:[#allocation13 + $0xf68] sm:$0xff]
    %v3812 = vld [vmem:[#allocation13 + $0xf70] sm:$0xff]
    %v3813 = vld [vmem:[#allocation13 + $0xf78] sm:$0xff]
    %v3814 = vld [vmem:[#allocation13 + $0xf80] sm:$0xff]
    %v3815 = vld [vmem:[#allocation13 + $0xf88] sm:$0xff]
    %v3816 = vld [vmem:[#allocation13 + $0xf90] sm:$0xff]
    %v3817 = vld [vmem:[#allocation13 + $0xf98] sm:$0xff]
    %v3818 = vld [vmem:[#allocation13 + $0xfa0] sm:$0xff]
    %v3819 = vld [vmem:[#allocation13 + $0xfa8] sm:$0xff]
    %v3820 = vld [vmem:[#allocation13 + $0xfb0] sm:$0xff]
    %v3821 = vld [vmem:[#allocation13 + $0xfb8] sm:$0xff]
    %v3822 = vld [vmem:[#allocation13 + $0xfc0] sm:$0xff]
    %v3823 = vld [vmem:[#allocation13 + $0xfc8] sm:$0xff]
    %v3824 = vld [vmem:[#allocation13 + $0xfd0] sm:$0xff]
    %v3825 = vld [vmem:[#allocation13 + $0xfd8] sm:$0xff]
    %v3826 = vld [vmem:[#allocation13 + $0xfe0] sm:$0xff]
    %v3827 = vld [vmem:[#allocation13 + $0xfe8] sm:$0xff]
    %v3828 = vld [vmem:[#allocation13 + $0xff0] sm:$0xff]
    %v3829 = vld [vmem:[#allocation13 + $0xff8] sm:$0xff]
    %v3830 = vld [vmem:[#allocation14] sm:$0xff]
    %v3832 = vlaneseq
    %v3833 = vshrl.u32 %v3832, 7
    %v3834 = vsub.s32 0, %v3833
    %v3835 = vrot.slane %v3830, %v3834
    %v3836 = vlaneseq
    %v3837 = vshrl.u32 %v3836, 7
    %v3838 = vsub.s32 1, %v3837
    %v3839 = vrot.slane %v3830, %v3838
    %v3840 = vlaneseq
    %v3841 = vshrl.u32 %v3840, 7
    %v3842 = vsub.s32 2, %v3841
    %v3843 = vrot.slane %v3830, %v3842
    %v3844 = vlaneseq
    %v3845 = vshrl.u32 %v3844, 7
    %v3846 = vsub.s32 3, %v3845
    %v3847 = vrot.slane %v3830, %v3846
    %v3848 = vlaneseq
    %v3849 = vshrl.u32 %v3848, 7
    %v3850 = vsub.s32 4, %v3849
    %v3851 = vrot.slane %v3830, %v3850
    %v3852 = vlaneseq
    %v3853 = vshrl.u32 %v3852, 7
    %v3854 = vsub.s32 5, %v3853
    %v3855 = vrot.slane %v3830, %v3854
    %v3856 = vlaneseq
    %v3857 = vshrl.u32 %v3856, 7
    %v3858 = vsub.s32 6, %v3857
    %v3859 = vrot.slane %v3830, %v3858
    %v3860 = vlaneseq
    %v3861 = vshrl.u32 %v3860, 7
    %v3862 = vsub.s32 7, %v3861
    %v3863 = vrot.slane %v3830, %v3862
    %v4384 = vunpack.c.l.b16 %v3318
    %v4385 = vunpack.c.h.b16 %v3318
    %v4386 = vunpack.c.l.b16 %v3319
    %v4387 = vunpack.c.h.b16 %v3319
    %v4388 = vunpack.c.l.b16 %v3320
    %v4389 = vunpack.c.h.b16 %v3320
    %v4390 = vunpack.c.l.b16 %v3321
    %v4391 = vunpack.c.h.b16 %v3321
    %v4392 = vunpack.c.l.b16 %v3322
    %v4393 = vunpack.c.h.b16 %v3322
    %v4394 = vunpack.c.l.b16 %v3323
    %v4395 = vunpack.c.h.b16 %v3323
    %v4396 = vunpack.c.l.b16 %v3324
    %v4397 = vunpack.c.h.b16 %v3324
    %v4398 = vunpack.c.l.b16 %v3325
    %v4399 = vunpack.c.h.b16 %v3325
    %v4400 = vunpack.c.l.b16 %v3326
    %v4401 = vunpack.c.h.b16 %v3326
    %v4402 = vunpack.c.l.b16 %v3327
    %v4403 = vunpack.c.h.b16 %v3327
    %v4404 = vunpack.c.l.b16 %v3328
    %v4405 = vunpack.c.h.b16 %v3328
    %v4406 = vunpack.c.l.b16 %v3329
    %v4407 = vunpack.c.h.b16 %v3329
    %v4408 = vunpack.c.l.b16 %v3330
    %v4409 = vunpack.c.h.b16 %v3330
    %v4410 = vunpack.c.l.b16 %v3331
    %v4411 = vunpack.c.h.b16 %v3331
    %v4412 = vunpack.c.l.b16 %v3332
    %v4413 = vunpack.c.h.b16 %v3332
    %v4414 = vunpack.c.l.b16 %v3333
    %v4415 = vunpack.c.h.b16 %v3333
    %v4416 = vunpack.c.l.b16 %v3334
    %v4417 = vunpack.c.h.b16 %v3334
    %v4418 = vunpack.c.l.b16 %v3335
    %v4419 = vunpack.c.h.b16 %v3335
    %v4420 = vunpack.c.l.b16 %v3336
    %v4421 = vunpack.c.h.b16 %v3336
    %v4422 = vunpack.c.l.b16 %v3337
    %v4423 = vunpack.c.h.b16 %v3337
    %v4424 = vunpack.c.l.b16 %v3338
    %v4425 = vunpack.c.h.b16 %v3338
    %v4426 = vunpack.c.l.b16 %v3339
    %v4427 = vunpack.c.h.b16 %v3339
    %v4428 = vunpack.c.l.b16 %v3340
    %v4429 = vunpack.c.h.b16 %v3340
    %v4430 = vunpack.c.l.b16 %v3341
    %v4431 = vunpack.c.h.b16 %v3341
    %v4432 = vunpack.c.l.b16 %v3342
    %v4433 = vunpack.c.h.b16 %v3342
    %v4434 = vunpack.c.l.b16 %v3343
    %v4435 = vunpack.c.h.b16 %v3343
    %v4436 = vunpack.c.l.b16 %v3344
    %v4437 = vunpack.c.h.b16 %v3344
    %v4438 = vunpack.c.l.b16 %v3345
    %v4439 = vunpack.c.h.b16 %v3345
    %v4440 = vunpack.c.l.b16 %v3346
    %v4441 = vunpack.c.h.b16 %v3346
    %v4442 = vunpack.c.l.b16 %v3347
    %v4443 = vunpack.c.h.b16 %v3347
    %v4444 = vunpack.c.l.b16 %v3348
    %v4445 = vunpack.c.h.b16 %v3348
    %v4446 = vunpack.c.l.b16 %v3349
    %v4447 = vunpack.c.h.b16 %v3349
    %v4448 = vunpack.c.l.b16 %v3350
    %v4449 = vunpack.c.h.b16 %v3350
    %v4450 = vunpack.c.l.b16 %v3351
    %v4451 = vunpack.c.h.b16 %v3351
    %v4452 = vunpack.c.l.b16 %v3352
    %v4453 = vunpack.c.h.b16 %v3352
    %v4454 = vunpack.c.l.b16 %v3353
    %v4455 = vunpack.c.h.b16 %v3353
    %v4456 = vunpack.c.l.b16 %v3354
    %v4457 = vunpack.c.h.b16 %v3354
    %v4458 = vunpack.c.l.b16 %v3355
    %v4459 = vunpack.c.h.b16 %v3355
    %v4460 = vunpack.c.l.b16 %v3356
    %v4461 = vunpack.c.h.b16 %v3356
    %v4462 = vunpack.c.l.b16 %v3357
    %v4463 = vunpack.c.h.b16 %v3357
    %v4464 = vunpack.c.l.b16 %v3358
    %v4465 = vunpack.c.h.b16 %v3358
    %v4466 = vunpack.c.l.b16 %v3359
    %v4467 = vunpack.c.h.b16 %v3359
    %v4468 = vunpack.c.l.b16 %v3360
    %v4469 = vunpack.c.h.b16 %v3360
    %v4470 = vunpack.c.l.b16 %v3361
    %v4471 = vunpack.c.h.b16 %v3361
    %v4472 = vunpack.c.l.b16 %v3362
    %v4473 = vunpack.c.h.b16 %v3362
    %v4474 = vunpack.c.l.b16 %v3363
    %v4475 = vunpack.c.h.b16 %v3363
    %v4476 = vunpack.c.l.b16 %v3364
    %v4477 = vunpack.c.h.b16 %v3364
    %v4478 = vunpack.c.l.b16 %v3365
    %v4479 = vunpack.c.h.b16 %v3365
    %v4480 = vunpack.c.l.b16 %v3366
    %v4481 = vunpack.c.h.b16 %v3366
    %v4482 = vunpack.c.l.b16 %v3367
    %v4483 = vunpack.c.h.b16 %v3367
    %v4484 = vunpack.c.l.b16 %v3368
    %v4485 = vunpack.c.h.b16 %v3368
    %v4486 = vunpack.c.l.b16 %v3369
    %v4487 = vunpack.c.h.b16 %v3369
    %v4488 = vunpack.c.l.b16 %v3370
    %v4489 = vunpack.c.h.b16 %v3370
    %v4490 = vunpack.c.l.b16 %v3371
    %v4491 = vunpack.c.h.b16 %v3371
    %v4492 = vunpack.c.l.b16 %v3372
    %v4493 = vunpack.c.h.b16 %v3372
    %v4494 = vunpack.c.l.b16 %v3373
    %v4495 = vunpack.c.h.b16 %v3373
    %v4496 = vunpack.c.l.b16 %v3374
    %v4497 = vunpack.c.h.b16 %v3374
    %v4498 = vunpack.c.l.b16 %v3375
    %v4499 = vunpack.c.h.b16 %v3375
    %v4500 = vunpack.c.l.b16 %v3376
    %v4501 = vunpack.c.h.b16 %v3376
    %v4502 = vunpack.c.l.b16 %v3377
    %v4503 = vunpack.c.h.b16 %v3377
    %v4504 = vunpack.c.l.b16 %v3378
    %v4505 = vunpack.c.h.b16 %v3378
    %v4506 = vunpack.c.l.b16 %v3379
    %v4507 = vunpack.c.h.b16 %v3379
    %v4508 = vunpack.c.l.b16 %v3380
    %v4509 = vunpack.c.h.b16 %v3380
    %v4510 = vunpack.c.l.b16 %v3381
    %v4511 = vunpack.c.h.b16 %v3381
    %v4512 = vunpack.c.l.b16 %v3382
    %v4513 = vunpack.c.h.b16 %v3382
    %v4514 = vunpack.c.l.b16 %v3383
    %v4515 = vunpack.c.h.b16 %v3383
    %v4516 = vunpack.c.l.b16 %v3384
    %v4517 = vunpack.c.h.b16 %v3384
    %v4518 = vunpack.c.l.b16 %v3385
    %v4519 = vunpack.c.h.b16 %v3385
    %v4520 = vunpack.c.l.b16 %v3386
    %v4521 = vunpack.c.h.b16 %v3386
    %v4522 = vunpack.c.l.b16 %v3387
    %v4523 = vunpack.c.h.b16 %v3387
    %v4524 = vunpack.c.l.b16 %v3388
    %v4525 = vunpack.c.h.b16 %v3388
    %v4526 = vunpack.c.l.b16 %v3389
    %v4527 = vunpack.c.h.b16 %v3389
    %v4528 = vunpack.c.l.b16 %v3390
    %v4529 = vunpack.c.h.b16 %v3390
    %v4530 = vunpack.c.l.b16 %v3391
    %v4531 = vunpack.c.h.b16 %v3391
    %v4532 = vunpack.c.l.b16 %v3392
    %v4533 = vunpack.c.h.b16 %v3392
    %v4534 = vunpack.c.l.b16 %v3393
    %v4535 = vunpack.c.h.b16 %v3393
    %v4536 = vunpack.c.l.b16 %v3394
    %v4537 = vunpack.c.h.b16 %v3394
    %v4538 = vunpack.c.l.b16 %v3395
    %v4539 = vunpack.c.h.b16 %v3395
    %v4540 = vunpack.c.l.b16 %v3396
    %v4541 = vunpack.c.h.b16 %v3396
    %v4542 = vunpack.c.l.b16 %v3397
    %v4543 = vunpack.c.h.b16 %v3397
    %v4544 = vunpack.c.l.b16 %v3398
    %v4545 = vunpack.c.h.b16 %v3398
    %v4546 = vunpack.c.l.b16 %v3399
    %v4547 = vunpack.c.h.b16 %v3399
    %v4548 = vunpack.c.l.b16 %v3400
    %v4549 = vunpack.c.h.b16 %v3400
    %v4550 = vunpack.c.l.b16 %v3401
    %v4551 = vunpack.c.h.b16 %v3401
    %v4552 = vunpack.c.l.b16 %v3402
    %v4553 = vunpack.c.h.b16 %v3402
    %v4554 = vunpack.c.l.b16 %v3403
    %v4555 = vunpack.c.h.b16 %v3403
    %v4556 = vunpack.c.l.b16 %v3404
    %v4557 = vunpack.c.h.b16 %v3404
    %v4558 = vunpack.c.l.b16 %v3405
    %v4559 = vunpack.c.h.b16 %v3405
    %v4560 = vunpack.c.l.b16 %v3406
    %v4561 = vunpack.c.h.b16 %v3406
    %v4562 = vunpack.c.l.b16 %v3407
    %v4563 = vunpack.c.h.b16 %v3407
    %v4564 = vunpack.c.l.b16 %v3408
    %v4565 = vunpack.c.h.b16 %v3408
    %v4566 = vunpack.c.l.b16 %v3409
    %v4567 = vunpack.c.h.b16 %v3409
    %v4568 = vunpack.c.l.b16 %v3410
    %v4569 = vunpack.c.h.b16 %v3410
    %v4570 = vunpack.c.l.b16 %v3411
    %v4571 = vunpack.c.h.b16 %v3411
    %v4572 = vunpack.c.l.b16 %v3412
    %v4573 = vunpack.c.h.b16 %v3412
    %v4574 = vunpack.c.l.b16 %v3413
    %v4575 = vunpack.c.h.b16 %v3413
    %v4576 = vunpack.c.l.b16 %v3414
    %v4577 = vunpack.c.h.b16 %v3414
    %v4578 = vunpack.c.l.b16 %v3415
    %v4579 = vunpack.c.h.b16 %v3415
    %v4580 = vunpack.c.l.b16 %v3416
    %v4581 = vunpack.c.h.b16 %v3416
    %v4582 = vunpack.c.l.b16 %v3417
    %v4583 = vunpack.c.h.b16 %v3417
    %v4584 = vunpack.c.l.b16 %v3418
    %v4585 = vunpack.c.h.b16 %v3418
    %v4586 = vunpack.c.l.b16 %v3419
    %v4587 = vunpack.c.h.b16 %v3419
    %v4588 = vunpack.c.l.b16 %v3420
    %v4589 = vunpack.c.h.b16 %v3420
    %v4590 = vunpack.c.l.b16 %v3421
    %v4591 = vunpack.c.h.b16 %v3421
    %v4592 = vunpack.c.l.b16 %v3422
    %v4593 = vunpack.c.h.b16 %v3422
    %v4594 = vunpack.c.l.b16 %v3423
    %v4595 = vunpack.c.h.b16 %v3423
    %v4596 = vunpack.c.l.b16 %v3424
    %v4597 = vunpack.c.h.b16 %v3424
    %v4598 = vunpack.c.l.b16 %v3425
    %v4599 = vunpack.c.h.b16 %v3425
    %v4600 = vunpack.c.l.b16 %v3426
    %v4601 = vunpack.c.h.b16 %v3426
    %v4602 = vunpack.c.l.b16 %v3427
    %v4603 = vunpack.c.h.b16 %v3427
    %v4604 = vunpack.c.l.b16 %v3428
    %v4605 = vunpack.c.h.b16 %v3428
    %v4606 = vunpack.c.l.b16 %v3429
    %v4607 = vunpack.c.h.b16 %v3429
    %v4608 = vunpack.c.l.b16 %v3430
    %v4609 = vunpack.c.h.b16 %v3430
    %v4610 = vunpack.c.l.b16 %v3431
    %v4611 = vunpack.c.h.b16 %v3431
    %v4612 = vunpack.c.l.b16 %v3432
    %v4613 = vunpack.c.h.b16 %v3432
    %v4614 = vunpack.c.l.b16 %v3433
    %v4615 = vunpack.c.h.b16 %v3433
    %v4616 = vunpack.c.l.b16 %v3434
    %v4617 = vunpack.c.h.b16 %v3434
    %v4618 = vunpack.c.l.b16 %v3435
    %v4619 = vunpack.c.h.b16 %v3435
    %v4620 = vunpack.c.l.b16 %v3436
    %v4621 = vunpack.c.h.b16 %v3436
    %v4622 = vunpack.c.l.b16 %v3437
    %v4623 = vunpack.c.h.b16 %v3437
    %v4624 = vunpack.c.l.b16 %v3438
    %v4625 = vunpack.c.h.b16 %v3438
    %v4626 = vunpack.c.l.b16 %v3439
    %v4627 = vunpack.c.h.b16 %v3439
    %v4628 = vunpack.c.l.b16 %v3440
    %v4629 = vunpack.c.h.b16 %v3440
    %v4630 = vunpack.c.l.b16 %v3441
    %v4631 = vunpack.c.h.b16 %v3441
    %v4632 = vunpack.c.l.b16 %v3442
    %v4633 = vunpack.c.h.b16 %v3442
    %v4634 = vunpack.c.l.b16 %v3443
    %v4635 = vunpack.c.h.b16 %v3443
    %v4636 = vunpack.c.l.b16 %v3444
    %v4637 = vunpack.c.h.b16 %v3444
    %v4638 = vunpack.c.l.b16 %v3445
    %v4639 = vunpack.c.h.b16 %v3445
    %v4640 = vunpack.c.l.b16 %v3446
    %v4641 = vunpack.c.h.b16 %v3446
    %v4642 = vunpack.c.l.b16 %v3447
    %v4643 = vunpack.c.h.b16 %v3447
    %v4644 = vunpack.c.l.b16 %v3448
    %v4645 = vunpack.c.h.b16 %v3448
    %v4646 = vunpack.c.l.b16 %v3449
    %v4647 = vunpack.c.h.b16 %v3449
    %v4648 = vunpack.c.l.b16 %v3450
    %v4649 = vunpack.c.h.b16 %v3450
    %v4650 = vunpack.c.l.b16 %v3451
    %v4651 = vunpack.c.h.b16 %v3451
    %v4652 = vunpack.c.l.b16 %v3452
    %v4653 = vunpack.c.h.b16 %v3452
    %v4654 = vunpack.c.l.b16 %v3453
    %v4655 = vunpack.c.h.b16 %v3453
    %v4656 = vunpack.c.l.b16 %v3454
    %v4657 = vunpack.c.h.b16 %v3454
    %v4658 = vunpack.c.l.b16 %v3455
    %v4659 = vunpack.c.h.b16 %v3455
    %v4660 = vunpack.c.l.b16 %v3456
    %v4661 = vunpack.c.h.b16 %v3456
    %v4662 = vunpack.c.l.b16 %v3457
    %v4663 = vunpack.c.h.b16 %v3457
    %v4664 = vunpack.c.l.b16 %v3458
    %v4665 = vunpack.c.h.b16 %v3458
    %v4666 = vunpack.c.l.b16 %v3459
    %v4667 = vunpack.c.h.b16 %v3459
    %v4668 = vunpack.c.l.b16 %v3460
    %v4669 = vunpack.c.h.b16 %v3460
    %v4670 = vunpack.c.l.b16 %v3461
    %v4671 = vunpack.c.h.b16 %v3461
    %v4672 = vunpack.c.l.b16 %v3462
    %v4673 = vunpack.c.h.b16 %v3462
    %v4674 = vunpack.c.l.b16 %v3463
    %v4675 = vunpack.c.h.b16 %v3463
    %v4676 = vunpack.c.l.b16 %v3464
    %v4677 = vunpack.c.h.b16 %v3464
    %v4678 = vunpack.c.l.b16 %v3465
    %v4679 = vunpack.c.h.b16 %v3465
    %v4680 = vunpack.c.l.b16 %v3466
    %v4681 = vunpack.c.h.b16 %v3466
    %v4682 = vunpack.c.l.b16 %v3467
    %v4683 = vunpack.c.h.b16 %v3467
    %v4684 = vunpack.c.l.b16 %v3468
    %v4685 = vunpack.c.h.b16 %v3468
    %v4686 = vunpack.c.l.b16 %v3469
    %v4687 = vunpack.c.h.b16 %v3469
    %v4688 = vunpack.c.l.b16 %v3470
    %v4689 = vunpack.c.h.b16 %v3470
    %v4690 = vunpack.c.l.b16 %v3471
    %v4691 = vunpack.c.h.b16 %v3471
    %v4692 = vunpack.c.l.b16 %v3472
    %v4693 = vunpack.c.h.b16 %v3472
    %v4694 = vunpack.c.l.b16 %v3473
    %v4695 = vunpack.c.h.b16 %v3473
    %v4696 = vunpack.c.l.b16 %v3474
    %v4697 = vunpack.c.h.b16 %v3474
    %v4698 = vunpack.c.l.b16 %v3475
    %v4699 = vunpack.c.h.b16 %v3475
    %v4700 = vunpack.c.l.b16 %v3476
    %v4701 = vunpack.c.h.b16 %v3476
    %v4702 = vunpack.c.l.b16 %v3477
    %v4703 = vunpack.c.h.b16 %v3477
    %v4704 = vunpack.c.l.b16 %v3478
    %v4705 = vunpack.c.h.b16 %v3478
    %v4706 = vunpack.c.l.b16 %v3479
    %v4707 = vunpack.c.h.b16 %v3479
    %v4708 = vunpack.c.l.b16 %v3480
    %v4709 = vunpack.c.h.b16 %v3480
    %v4710 = vunpack.c.l.b16 %v3481
    %v4711 = vunpack.c.h.b16 %v3481
    %v4712 = vunpack.c.l.b16 %v3482
    %v4713 = vunpack.c.h.b16 %v3482
    %v4714 = vunpack.c.l.b16 %v3483
    %v4715 = vunpack.c.h.b16 %v3483
    %v4716 = vunpack.c.l.b16 %v3484
    %v4717 = vunpack.c.h.b16 %v3484
    %v4718 = vunpack.c.l.b16 %v3485
    %v4719 = vunpack.c.h.b16 %v3485
    %v4720 = vunpack.c.l.b16 %v3486
    %v4721 = vunpack.c.h.b16 %v3486
    %v4722 = vunpack.c.l.b16 %v3487
    %v4723 = vunpack.c.h.b16 %v3487
    %v4724 = vunpack.c.l.b16 %v3488
    %v4725 = vunpack.c.h.b16 %v3488
    %v4726 = vunpack.c.l.b16 %v3489
    %v4727 = vunpack.c.h.b16 %v3489
    %v4728 = vunpack.c.l.b16 %v3490
    %v4729 = vunpack.c.h.b16 %v3490
    %v4730 = vunpack.c.l.b16 %v3491
    %v4731 = vunpack.c.h.b16 %v3491
    %v4732 = vunpack.c.l.b16 %v3492
    %v4733 = vunpack.c.h.b16 %v3492
    %v4734 = vunpack.c.l.b16 %v3493
    %v4735 = vunpack.c.h.b16 %v3493
    %v4736 = vunpack.c.l.b16 %v3494
    %v4737 = vunpack.c.h.b16 %v3494
    %v4738 = vunpack.c.l.b16 %v3495
    %v4739 = vunpack.c.h.b16 %v3495
    %v4740 = vunpack.c.l.b16 %v3496
    %v4741 = vunpack.c.h.b16 %v3496
    %v4742 = vunpack.c.l.b16 %v3497
    %v4743 = vunpack.c.h.b16 %v3497
    %v4744 = vunpack.c.l.b16 %v3498
    %v4745 = vunpack.c.h.b16 %v3498
    %v4746 = vunpack.c.l.b16 %v3499
    %v4747 = vunpack.c.h.b16 %v3499
    %v4748 = vunpack.c.l.b16 %v3500
    %v4749 = vunpack.c.h.b16 %v3500
    %v4750 = vunpack.c.l.b16 %v3501
    %v4751 = vunpack.c.h.b16 %v3501
    %v4752 = vunpack.c.l.b16 %v3502
    %v4753 = vunpack.c.h.b16 %v3502
    %v4754 = vunpack.c.l.b16 %v3503
    %v4755 = vunpack.c.h.b16 %v3503
    %v4756 = vunpack.c.l.b16 %v3504
    %v4757 = vunpack.c.h.b16 %v3504
    %v4758 = vunpack.c.l.b16 %v3505
    %v4759 = vunpack.c.h.b16 %v3505
    %v4760 = vunpack.c.l.b16 %v3506
    %v4761 = vunpack.c.h.b16 %v3506
    %v4762 = vunpack.c.l.b16 %v3507
    %v4763 = vunpack.c.h.b16 %v3507
    %v4764 = vunpack.c.l.b16 %v3508
    %v4765 = vunpack.c.h.b16 %v3508
    %v4766 = vunpack.c.l.b16 %v3509
    %v4767 = vunpack.c.h.b16 %v3509
    %v4768 = vunpack.c.l.b16 %v3510
    %v4769 = vunpack.c.h.b16 %v3510
    %v4770 = vunpack.c.l.b16 %v3511
    %v4771 = vunpack.c.h.b16 %v3511
    %v4772 = vunpack.c.l.b16 %v3512
    %v4773 = vunpack.c.h.b16 %v3512
    %v4774 = vunpack.c.l.b16 %v3513
    %v4775 = vunpack.c.h.b16 %v3513
    %v4776 = vunpack.c.l.b16 %v3514
    %v4777 = vunpack.c.h.b16 %v3514
    %v4778 = vunpack.c.l.b16 %v3515
    %v4779 = vunpack.c.h.b16 %v3515
    %v4780 = vunpack.c.l.b16 %v3516
    %v4781 = vunpack.c.h.b16 %v3516
    %v4782 = vunpack.c.l.b16 %v3517
    %v4783 = vunpack.c.h.b16 %v3517
    %v4784 = vunpack.c.l.b16 %v3518
    %v4785 = vunpack.c.h.b16 %v3518
    %v4786 = vunpack.c.l.b16 %v3519
    %v4787 = vunpack.c.h.b16 %v3519
    %v4788 = vunpack.c.l.b16 %v3520
    %v4789 = vunpack.c.h.b16 %v3520
    %v4790 = vunpack.c.l.b16 %v3521
    %v4791 = vunpack.c.h.b16 %v3521
    %v4792 = vunpack.c.l.b16 %v3522
    %v4793 = vunpack.c.h.b16 %v3522
    %v4794 = vunpack.c.l.b16 %v3523
    %v4795 = vunpack.c.h.b16 %v3523
    %v4796 = vunpack.c.l.b16 %v3524
    %v4797 = vunpack.c.h.b16 %v3524
    %v4798 = vunpack.c.l.b16 %v3525
    %v4799 = vunpack.c.h.b16 %v3525
    %v4800 = vunpack.c.l.b16 %v3526
    %v4801 = vunpack.c.h.b16 %v3526
    %v4802 = vunpack.c.l.b16 %v3527
    %v4803 = vunpack.c.h.b16 %v3527
    %v4804 = vunpack.c.l.b16 %v3528
    %v4805 = vunpack.c.h.b16 %v3528
    %v4806 = vunpack.c.l.b16 %v3529
    %v4807 = vunpack.c.h.b16 %v3529
    %v4808 = vunpack.c.l.b16 %v3530
    %v4809 = vunpack.c.h.b16 %v3530
    %v4810 = vunpack.c.l.b16 %v3531
    %v4811 = vunpack.c.h.b16 %v3531
    %v4812 = vunpack.c.l.b16 %v3532
    %v4813 = vunpack.c.h.b16 %v3532
    %v4814 = vunpack.c.l.b16 %v3533
    %v4815 = vunpack.c.h.b16 %v3533
    %v4816 = vunpack.c.l.b16 %v3534
    %v4817 = vunpack.c.h.b16 %v3534
    %v4818 = vunpack.c.l.b16 %v3535
    %v4819 = vunpack.c.h.b16 %v3535
    %v4820 = vunpack.c.l.b16 %v3536
    %v4821 = vunpack.c.h.b16 %v3536
    %v4822 = vunpack.c.l.b16 %v3537
    %v4823 = vunpack.c.h.b16 %v3537
    %v4824 = vunpack.c.l.b16 %v3538
    %v4825 = vunpack.c.h.b16 %v3538
    %v4826 = vunpack.c.l.b16 %v3539
    %v4827 = vunpack.c.h.b16 %v3539
    %v4828 = vunpack.c.l.b16 %v3540
    %v4829 = vunpack.c.h.b16 %v3540
    %v4830 = vunpack.c.l.b16 %v3541
    %v4831 = vunpack.c.h.b16 %v3541
    %v4832 = vunpack.c.l.b16 %v3542
    %v4833 = vunpack.c.h.b16 %v3542
    %v4834 = vunpack.c.l.b16 %v3543
    %v4835 = vunpack.c.h.b16 %v3543
    %v4836 = vunpack.c.l.b16 %v3544
    %v4837 = vunpack.c.h.b16 %v3544
    %v4838 = vunpack.c.l.b16 %v3545
    %v4839 = vunpack.c.h.b16 %v3545
    %v4840 = vunpack.c.l.b16 %v3546
    %v4841 = vunpack.c.h.b16 %v3546
    %v4842 = vunpack.c.l.b16 %v3547
    %v4843 = vunpack.c.h.b16 %v3547
    %v4844 = vunpack.c.l.b16 %v3548
    %v4845 = vunpack.c.h.b16 %v3548
    %v4846 = vunpack.c.l.b16 %v3549
    %v4847 = vunpack.c.h.b16 %v3549
    %v4848 = vunpack.c.l.b16 %v3550
    %v4849 = vunpack.c.h.b16 %v3550
    %v4850 = vunpack.c.l.b16 %v3551
    %v4851 = vunpack.c.h.b16 %v3551
    %v4852 = vunpack.c.l.b16 %v3552
    %v4853 = vunpack.c.h.b16 %v3552
    %v4854 = vunpack.c.l.b16 %v3553
    %v4855 = vunpack.c.h.b16 %v3553
    %v4856 = vunpack.c.l.b16 %v3554
    %v4857 = vunpack.c.h.b16 %v3554
    %v4858 = vunpack.c.l.b16 %v3555
    %v4859 = vunpack.c.h.b16 %v3555
    %v4860 = vunpack.c.l.b16 %v3556
    %v4861 = vunpack.c.h.b16 %v3556
    %v4862 = vunpack.c.l.b16 %v3557
    %v4863 = vunpack.c.h.b16 %v3557
    %v4864 = vunpack.c.l.b16 %v3558
    %v4865 = vunpack.c.h.b16 %v3558
    %v4866 = vunpack.c.l.b16 %v3559
    %v4867 = vunpack.c.h.b16 %v3559
    %v4868 = vunpack.c.l.b16 %v3560
    %v4869 = vunpack.c.h.b16 %v3560
    %v4870 = vunpack.c.l.b16 %v3561
    %v4871 = vunpack.c.h.b16 %v3561
    %v4872 = vunpack.c.l.b16 %v3562
    %v4873 = vunpack.c.h.b16 %v3562
    %v4874 = vunpack.c.l.b16 %v3563
    %v4875 = vunpack.c.h.b16 %v3563
    %v4876 = vunpack.c.l.b16 %v3564
    %v4877 = vunpack.c.h.b16 %v3564
    %v4878 = vunpack.c.l.b16 %v3565
    %v4879 = vunpack.c.h.b16 %v3565
    %v4880 = vunpack.c.l.b16 %v3566
    %v4881 = vunpack.c.h.b16 %v3566
    %v4882 = vunpack.c.l.b16 %v3567
    %v4883 = vunpack.c.h.b16 %v3567
    %v4884 = vunpack.c.l.b16 %v3568
    %v4885 = vunpack.c.h.b16 %v3568
    %v4886 = vunpack.c.l.b16 %v3569
    %v4887 = vunpack.c.h.b16 %v3569
    %v4888 = vunpack.c.l.b16 %v3570
    %v4889 = vunpack.c.h.b16 %v3570
    %v4890 = vunpack.c.l.b16 %v3571
    %v4891 = vunpack.c.h.b16 %v3571
    %v4892 = vunpack.c.l.b16 %v3572
    %v4893 = vunpack.c.h.b16 %v3572
    %v4894 = vunpack.c.l.b16 %v3573
    %v4895 = vunpack.c.h.b16 %v3573
    %v4896 = vunpack.c.l.b16 %v3574
    %v4897 = vunpack.c.h.b16 %v3574
    %v4898 = vunpack.c.l.b16 %v3575
    %v4899 = vunpack.c.h.b16 %v3575
    %v4900 = vunpack.c.l.b16 %v3576
    %v4901 = vunpack.c.h.b16 %v3576
    %v4902 = vunpack.c.l.b16 %v3577
    %v4903 = vunpack.c.h.b16 %v3577
    %v4904 = vunpack.c.l.b16 %v3578
    %v4905 = vunpack.c.h.b16 %v3578
    %v4906 = vunpack.c.l.b16 %v3579
    %v4907 = vunpack.c.h.b16 %v3579
    %v4908 = vunpack.c.l.b16 %v3580
    %v4909 = vunpack.c.h.b16 %v3580
    %v4910 = vunpack.c.l.b16 %v3581
    %v4911 = vunpack.c.h.b16 %v3581
    %v4912 = vunpack.c.l.b16 %v3582
    %v4913 = vunpack.c.h.b16 %v3582
    %v4914 = vunpack.c.l.b16 %v3583
    %v4915 = vunpack.c.h.b16 %v3583
    %v4916 = vunpack.c.l.b16 %v3584
    %v4917 = vunpack.c.h.b16 %v3584
    %v4918 = vunpack.c.l.b16 %v3585
    %v4919 = vunpack.c.h.b16 %v3585
    %v4920 = vunpack.c.l.b16 %v3586
    %v4921 = vunpack.c.h.b16 %v3586
    %v4922 = vunpack.c.l.b16 %v3587
    %v4923 = vunpack.c.h.b16 %v3587
    %v4924 = vunpack.c.l.b16 %v3588
    %v4925 = vunpack.c.h.b16 %v3588
    %v4926 = vunpack.c.l.b16 %v3589
    %v4927 = vunpack.c.h.b16 %v3589
    %v4928 = vunpack.c.l.b16 %v3590
    %v4929 = vunpack.c.h.b16 %v3590
    %v4930 = vunpack.c.l.b16 %v3591
    %v4931 = vunpack.c.h.b16 %v3591
    %v4932 = vunpack.c.l.b16 %v3592
    %v4933 = vunpack.c.h.b16 %v3592
    %v4934 = vunpack.c.l.b16 %v3593
    %v4935 = vunpack.c.h.b16 %v3593
    %v4936 = vunpack.c.l.b16 %v3594
    %v4937 = vunpack.c.h.b16 %v3594
    %v4938 = vunpack.c.l.b16 %v3595
    %v4939 = vunpack.c.h.b16 %v3595
    %v4940 = vunpack.c.l.b16 %v3596
    %v4941 = vunpack.c.h.b16 %v3596
    %v4942 = vunpack.c.l.b16 %v3597
    %v4943 = vunpack.c.h.b16 %v3597
    %v4944 = vunpack.c.l.b16 %v3598
    %v4945 = vunpack.c.h.b16 %v3598
    %v4946 = vunpack.c.l.b16 %v3599
    %v4947 = vunpack.c.h.b16 %v3599
    %v4948 = vunpack.c.l.b16 %v3600
    %v4949 = vunpack.c.h.b16 %v3600
    %v4950 = vunpack.c.l.b16 %v3601
    %v4951 = vunpack.c.h.b16 %v3601
    %v4952 = vunpack.c.l.b16 %v3602
    %v4953 = vunpack.c.h.b16 %v3602
    %v4954 = vunpack.c.l.b16 %v3603
    %v4955 = vunpack.c.h.b16 %v3603
    %v4956 = vunpack.c.l.b16 %v3604
    %v4957 = vunpack.c.h.b16 %v3604
    %v4958 = vunpack.c.l.b16 %v3605
    %v4959 = vunpack.c.h.b16 %v3605
    %v4960 = vunpack.c.l.b16 %v3606
    %v4961 = vunpack.c.h.b16 %v3606
    %v4962 = vunpack.c.l.b16 %v3607
    %v4963 = vunpack.c.h.b16 %v3607
    %v4964 = vunpack.c.l.b16 %v3608
    %v4965 = vunpack.c.h.b16 %v3608
    %v4966 = vunpack.c.l.b16 %v3609
    %v4967 = vunpack.c.h.b16 %v3609
    %v4968 = vunpack.c.l.b16 %v3610
    %v4969 = vunpack.c.h.b16 %v3610
    %v4970 = vunpack.c.l.b16 %v3611
    %v4971 = vunpack.c.h.b16 %v3611
    %v4972 = vunpack.c.l.b16 %v3612
    %v4973 = vunpack.c.h.b16 %v3612
    %v4974 = vunpack.c.l.b16 %v3613
    %v4975 = vunpack.c.h.b16 %v3613
    %v4976 = vunpack.c.l.b16 %v3614
    %v4977 = vunpack.c.h.b16 %v3614
    %v4978 = vunpack.c.l.b16 %v3615
    %v4979 = vunpack.c.h.b16 %v3615
    %v4980 = vunpack.c.l.b16 %v3616
    %v4981 = vunpack.c.h.b16 %v3616
    %v4982 = vunpack.c.l.b16 %v3617
    %v4983 = vunpack.c.h.b16 %v3617
    %v4984 = vunpack.c.l.b16 %v3618
    %v4985 = vunpack.c.h.b16 %v3618
    %v4986 = vunpack.c.l.b16 %v3619
    %v4987 = vunpack.c.h.b16 %v3619
    %v4988 = vunpack.c.l.b16 %v3620
    %v4989 = vunpack.c.h.b16 %v3620
    %v4990 = vunpack.c.l.b16 %v3621
    %v4991 = vunpack.c.h.b16 %v3621
    %v4992 = vunpack.c.l.b16 %v3622
    %v4993 = vunpack.c.h.b16 %v3622
    %v4994 = vunpack.c.l.b16 %v3623
    %v4995 = vunpack.c.h.b16 %v3623
    %v4996 = vunpack.c.l.b16 %v3624
    %v4997 = vunpack.c.h.b16 %v3624
    %v4998 = vunpack.c.l.b16 %v3625
    %v4999 = vunpack.c.h.b16 %v3625
    %v5000 = vunpack.c.l.b16 %v3626
    %v5001 = vunpack.c.h.b16 %v3626
    %v5002 = vunpack.c.l.b16 %v3627
    %v5003 = vunpack.c.h.b16 %v3627
    %v5004 = vunpack.c.l.b16 %v3628
    %v5005 = vunpack.c.h.b16 %v3628
    %v5006 = vunpack.c.l.b16 %v3629
    %v5007 = vunpack.c.h.b16 %v3629
    %v5008 = vunpack.c.l.b16 %v3630
    %v5009 = vunpack.c.h.b16 %v3630
    %v5010 = vunpack.c.l.b16 %v3631
    %v5011 = vunpack.c.h.b16 %v3631
    %v5012 = vunpack.c.l.b16 %v3632
    %v5013 = vunpack.c.h.b16 %v3632
    %v5014 = vunpack.c.l.b16 %v3633
    %v5015 = vunpack.c.h.b16 %v3633
    %v5016 = vunpack.c.l.b16 %v3634
    %v5017 = vunpack.c.h.b16 %v3634
    %v5018 = vunpack.c.l.b16 %v3635
    %v5019 = vunpack.c.h.b16 %v3635
    %v5020 = vunpack.c.l.b16 %v3636
    %v5021 = vunpack.c.h.b16 %v3636
    %v5022 = vunpack.c.l.b16 %v3637
    %v5023 = vunpack.c.h.b16 %v3637
    %v5024 = vunpack.c.l.b16 %v3638
    %v5025 = vunpack.c.h.b16 %v3638
    %v5026 = vunpack.c.l.b16 %v3639
    %v5027 = vunpack.c.h.b16 %v3639
    %v5028 = vunpack.c.l.b16 %v3640
    %v5029 = vunpack.c.h.b16 %v3640
    %v5030 = vunpack.c.l.b16 %v3641
    %v5031 = vunpack.c.h.b16 %v3641
    %v5032 = vunpack.c.l.b16 %v3642
    %v5033 = vunpack.c.h.b16 %v3642
    %v5034 = vunpack.c.l.b16 %v3643
    %v5035 = vunpack.c.h.b16 %v3643
    %v5036 = vunpack.c.l.b16 %v3644
    %v5037 = vunpack.c.h.b16 %v3644
    %v5038 = vunpack.c.l.b16 %v3645
    %v5039 = vunpack.c.h.b16 %v3645
    %v5040 = vunpack.c.l.b16 %v3646
    %v5041 = vunpack.c.h.b16 %v3646
    %v5042 = vunpack.c.l.b16 %v3647
    %v5043 = vunpack.c.h.b16 %v3647
    %v5044 = vunpack.c.l.b16 %v3648
    %v5045 = vunpack.c.h.b16 %v3648
    %v5046 = vunpack.c.l.b16 %v3649
    %v5047 = vunpack.c.h.b16 %v3649
    %v5048 = vunpack.c.l.b16 %v3650
    %v5049 = vunpack.c.h.b16 %v3650
    %v5050 = vunpack.c.l.b16 %v3651
    %v5051 = vunpack.c.h.b16 %v3651
    %v5052 = vunpack.c.l.b16 %v3652
    %v5053 = vunpack.c.h.b16 %v3652
    %v5054 = vunpack.c.l.b16 %v3653
    %v5055 = vunpack.c.h.b16 %v3653
    %v5056 = vunpack.c.l.b16 %v3654
    %v5057 = vunpack.c.h.b16 %v3654
    %v5058 = vunpack.c.l.b16 %v3655
    %v5059 = vunpack.c.h.b16 %v3655
    %v5060 = vunpack.c.l.b16 %v3656
    %v5061 = vunpack.c.h.b16 %v3656
    %v5062 = vunpack.c.l.b16 %v3657
    %v5063 = vunpack.c.h.b16 %v3657
    %v5064 = vunpack.c.l.b16 %v3658
    %v5065 = vunpack.c.h.b16 %v3658
    %v5066 = vunpack.c.l.b16 %v3659
    %v5067 = vunpack.c.h.b16 %v3659
    %v5068 = vunpack.c.l.b16 %v3660
    %v5069 = vunpack.c.h.b16 %v3660
    %v5070 = vunpack.c.l.b16 %v3661
    %v5071 = vunpack.c.h.b16 %v3661
    %v5072 = vunpack.c.l.b16 %v3662
    %v5073 = vunpack.c.h.b16 %v3662
    %v5074 = vunpack.c.l.b16 %v3663
    %v5075 = vunpack.c.h.b16 %v3663
    %v5076 = vunpack.c.l.b16 %v3664
    %v5077 = vunpack.c.h.b16 %v3664
    %v5078 = vunpack.c.l.b16 %v3665
    %v5079 = vunpack.c.h.b16 %v3665
    %v5080 = vunpack.c.l.b16 %v3666
    %v5081 = vunpack.c.h.b16 %v3666
    %v5082 = vunpack.c.l.b16 %v3667
    %v5083 = vunpack.c.h.b16 %v3667
    %v5084 = vunpack.c.l.b16 %v3668
    %v5085 = vunpack.c.h.b16 %v3668
    %v5086 = vunpack.c.l.b16 %v3669
    %v5087 = vunpack.c.h.b16 %v3669
    %v5088 = vunpack.c.l.b16 %v3670
    %v5089 = vunpack.c.h.b16 %v3670
    %v5090 = vunpack.c.l.b16 %v3671
    %v5091 = vunpack.c.h.b16 %v3671
    %v5092 = vunpack.c.l.b16 %v3672
    %v5093 = vunpack.c.h.b16 %v3672
    %v5094 = vunpack.c.l.b16 %v3673
    %v5095 = vunpack.c.h.b16 %v3673
    %v5096 = vunpack.c.l.b16 %v3674
    %v5097 = vunpack.c.h.b16 %v3674
    %v5098 = vunpack.c.l.b16 %v3675
    %v5099 = vunpack.c.h.b16 %v3675
    %v5100 = vunpack.c.l.b16 %v3676
    %v5101 = vunpack.c.h.b16 %v3676
    %v5102 = vunpack.c.l.b16 %v3677
    %v5103 = vunpack.c.h.b16 %v3677
    %v5104 = vunpack.c.l.b16 %v3678
    %v5105 = vunpack.c.h.b16 %v3678
    %v5106 = vunpack.c.l.b16 %v3679
    %v5107 = vunpack.c.h.b16 %v3679
    %v5108 = vunpack.c.l.b16 %v3680
    %v5109 = vunpack.c.h.b16 %v3680
    %v5110 = vunpack.c.l.b16 %v3681
    %v5111 = vunpack.c.h.b16 %v3681
    %v5112 = vunpack.c.l.b16 %v3682
    %v5113 = vunpack.c.h.b16 %v3682
    %v5114 = vunpack.c.l.b16 %v3683
    %v5115 = vunpack.c.h.b16 %v3683
    %v5116 = vunpack.c.l.b16 %v3684
    %v5117 = vunpack.c.h.b16 %v3684
    %v5118 = vunpack.c.l.b16 %v3685
    %v5119 = vunpack.c.h.b16 %v3685
    %v5120 = vunpack.c.l.b16 %v3686
    %v5121 = vunpack.c.h.b16 %v3686
    %v5122 = vunpack.c.l.b16 %v3687
    %v5123 = vunpack.c.h.b16 %v3687
    %v5124 = vunpack.c.l.b16 %v3688
    %v5125 = vunpack.c.h.b16 %v3688
    %v5126 = vunpack.c.l.b16 %v3689
    %v5127 = vunpack.c.h.b16 %v3689
    %v5128 = vunpack.c.l.b16 %v3690
    %v5129 = vunpack.c.h.b16 %v3690
    %v5130 = vunpack.c.l.b16 %v3691
    %v5131 = vunpack.c.h.b16 %v3691
    %v5132 = vunpack.c.l.b16 %v3692
    %v5133 = vunpack.c.h.b16 %v3692
    %v5134 = vunpack.c.l.b16 %v3693
    %v5135 = vunpack.c.h.b16 %v3693
    %v5136 = vunpack.c.l.b16 %v3694
    %v5137 = vunpack.c.h.b16 %v3694
    %v5138 = vunpack.c.l.b16 %v3695
    %v5139 = vunpack.c.h.b16 %v3695
    %v5140 = vunpack.c.l.b16 %v3696
    %v5141 = vunpack.c.h.b16 %v3696
    %v5142 = vunpack.c.l.b16 %v3697
    %v5143 = vunpack.c.h.b16 %v3697
    %v5144 = vunpack.c.l.b16 %v3698
    %v5145 = vunpack.c.h.b16 %v3698
    %v5146 = vunpack.c.l.b16 %v3699
    %v5147 = vunpack.c.h.b16 %v3699
    %v5148 = vunpack.c.l.b16 %v3700
    %v5149 = vunpack.c.h.b16 %v3700
    %v5150 = vunpack.c.l.b16 %v3701
    %v5151 = vunpack.c.h.b16 %v3701
    %v5152 = vunpack.c.l.b16 %v3702
    %v5153 = vunpack.c.h.b16 %v3702
    %v5154 = vunpack.c.l.b16 %v3703
    %v5155 = vunpack.c.h.b16 %v3703
    %v5156 = vunpack.c.l.b16 %v3704
    %v5157 = vunpack.c.h.b16 %v3704
    %v5158 = vunpack.c.l.b16 %v3705
    %v5159 = vunpack.c.h.b16 %v3705
    %v5160 = vunpack.c.l.b16 %v3706
    %v5161 = vunpack.c.h.b16 %v3706
    %v5162 = vunpack.c.l.b16 %v3707
    %v5163 = vunpack.c.h.b16 %v3707
    %v5164 = vunpack.c.l.b16 %v3708
    %v5165 = vunpack.c.h.b16 %v3708
    %v5166 = vunpack.c.l.b16 %v3709
    %v5167 = vunpack.c.h.b16 %v3709
    %v5168 = vunpack.c.l.b16 %v3710
    %v5169 = vunpack.c.h.b16 %v3710
    %v5170 = vunpack.c.l.b16 %v3711
    %v5171 = vunpack.c.h.b16 %v3711
    %v5172 = vunpack.c.l.b16 %v3712
    %v5173 = vunpack.c.h.b16 %v3712
    %v5174 = vunpack.c.l.b16 %v3713
    %v5175 = vunpack.c.h.b16 %v3713
    %v5176 = vunpack.c.l.b16 %v3714
    %v5177 = vunpack.c.h.b16 %v3714
    %v5178 = vunpack.c.l.b16 %v3715
    %v5179 = vunpack.c.h.b16 %v3715
    %v5180 = vunpack.c.l.b16 %v3716
    %v5181 = vunpack.c.h.b16 %v3716
    %v5182 = vunpack.c.l.b16 %v3717
    %v5183 = vunpack.c.h.b16 %v3717
    %v5184 = vunpack.c.l.b16 %v3718
    %v5185 = vunpack.c.h.b16 %v3718
    %v5186 = vunpack.c.l.b16 %v3719
    %v5187 = vunpack.c.h.b16 %v3719
    %v5188 = vunpack.c.l.b16 %v3720
    %v5189 = vunpack.c.h.b16 %v3720
    %v5190 = vunpack.c.l.b16 %v3721
    %v5191 = vunpack.c.h.b16 %v3721
    %v5192 = vunpack.c.l.b16 %v3722
    %v5193 = vunpack.c.h.b16 %v3722
    %v5194 = vunpack.c.l.b16 %v3723
    %v5195 = vunpack.c.h.b16 %v3723
    %v5196 = vunpack.c.l.b16 %v3724
    %v5197 = vunpack.c.h.b16 %v3724
    %v5198 = vunpack.c.l.b16 %v3725
    %v5199 = vunpack.c.h.b16 %v3725
    %v5200 = vunpack.c.l.b16 %v3726
    %v5201 = vunpack.c.h.b16 %v3726
    %v5202 = vunpack.c.l.b16 %v3727
    %v5203 = vunpack.c.h.b16 %v3727
    %v5204 = vunpack.c.l.b16 %v3728
    %v5205 = vunpack.c.h.b16 %v3728
    %v5206 = vunpack.c.l.b16 %v3729
    %v5207 = vunpack.c.h.b16 %v3729
    %v5208 = vunpack.c.l.b16 %v3730
    %v5209 = vunpack.c.h.b16 %v3730
    %v5210 = vunpack.c.l.b16 %v3731
    %v5211 = vunpack.c.h.b16 %v3731
    %v5212 = vunpack.c.l.b16 %v3732
    %v5213 = vunpack.c.h.b16 %v3732
    %v5214 = vunpack.c.l.b16 %v3733
    %v5215 = vunpack.c.h.b16 %v3733
    %v5216 = vunpack.c.l.b16 %v3734
    %v5217 = vunpack.c.h.b16 %v3734
    %v5218 = vunpack.c.l.b16 %v3735
    %v5219 = vunpack.c.h.b16 %v3735
    %v5220 = vunpack.c.l.b16 %v3736
    %v5221 = vunpack.c.h.b16 %v3736
    %v5222 = vunpack.c.l.b16 %v3737
    %v5223 = vunpack.c.h.b16 %v3737
    %v5224 = vunpack.c.l.b16 %v3738
    %v5225 = vunpack.c.h.b16 %v3738
    %v5226 = vunpack.c.l.b16 %v3739
    %v5227 = vunpack.c.h.b16 %v3739
    %v5228 = vunpack.c.l.b16 %v3740
    %v5229 = vunpack.c.h.b16 %v3740
    %v5230 = vunpack.c.l.b16 %v3741
    %v5231 = vunpack.c.h.b16 %v3741
    %v5232 = vunpack.c.l.b16 %v3742
    %v5233 = vunpack.c.h.b16 %v3742
    %v5234 = vunpack.c.l.b16 %v3743
    %v5235 = vunpack.c.h.b16 %v3743
    %v5236 = vunpack.c.l.b16 %v3744
    %v5237 = vunpack.c.h.b16 %v3744
    %v5238 = vunpack.c.l.b16 %v3745
    %v5239 = vunpack.c.h.b16 %v3745
    %v5240 = vunpack.c.l.b16 %v3746
    %v5241 = vunpack.c.h.b16 %v3746
    %v5242 = vunpack.c.l.b16 %v3747
    %v5243 = vunpack.c.h.b16 %v3747
    %v5244 = vunpack.c.l.b16 %v3748
    %v5245 = vunpack.c.h.b16 %v3748
    %v5246 = vunpack.c.l.b16 %v3749
    %v5247 = vunpack.c.h.b16 %v3749
    %v5248 = vunpack.c.l.b16 %v3750
    %v5249 = vunpack.c.h.b16 %v3750
    %v5250 = vunpack.c.l.b16 %v3751
    %v5251 = vunpack.c.h.b16 %v3751
    %v5252 = vunpack.c.l.b16 %v3752
    %v5253 = vunpack.c.h.b16 %v3752
    %v5254 = vunpack.c.l.b16 %v3753
    %v5255 = vunpack.c.h.b16 %v3753
    %v5256 = vunpack.c.l.b16 %v3754
    %v5257 = vunpack.c.h.b16 %v3754
    %v5258 = vunpack.c.l.b16 %v3755
    %v5259 = vunpack.c.h.b16 %v3755
    %v5260 = vunpack.c.l.b16 %v3756
    %v5261 = vunpack.c.h.b16 %v3756
    %v5262 = vunpack.c.l.b16 %v3757
    %v5263 = vunpack.c.h.b16 %v3757
    %v5264 = vunpack.c.l.b16 %v3758
    %v5265 = vunpack.c.h.b16 %v3758
    %v5266 = vunpack.c.l.b16 %v3759
    %v5267 = vunpack.c.h.b16 %v3759
    %v5268 = vunpack.c.l.b16 %v3760
    %v5269 = vunpack.c.h.b16 %v3760
    %v5270 = vunpack.c.l.b16 %v3761
    %v5271 = vunpack.c.h.b16 %v3761
    %v5272 = vunpack.c.l.b16 %v3762
    %v5273 = vunpack.c.h.b16 %v3762
    %v5274 = vunpack.c.l.b16 %v3763
    %v5275 = vunpack.c.h.b16 %v3763
    %v5276 = vunpack.c.l.b16 %v3764
    %v5277 = vunpack.c.h.b16 %v3764
    %v5278 = vunpack.c.l.b16 %v3765
    %v5279 = vunpack.c.h.b16 %v3765
    %v5280 = vunpack.c.l.b16 %v3766
    %v5281 = vunpack.c.h.b16 %v3766
    %v5282 = vunpack.c.l.b16 %v3767
    %v5283 = vunpack.c.h.b16 %v3767
    %v5284 = vunpack.c.l.b16 %v3768
    %v5285 = vunpack.c.h.b16 %v3768
    %v5286 = vunpack.c.l.b16 %v3769
    %v5287 = vunpack.c.h.b16 %v3769
    %v5288 = vunpack.c.l.b16 %v3770
    %v5289 = vunpack.c.h.b16 %v3770
    %v5290 = vunpack.c.l.b16 %v3771
    %v5291 = vunpack.c.h.b16 %v3771
    %v5292 = vunpack.c.l.b16 %v3772
    %v5293 = vunpack.c.h.b16 %v3772
    %v5294 = vunpack.c.l.b16 %v3773
    %v5295 = vunpack.c.h.b16 %v3773
    %v5296 = vunpack.c.l.b16 %v3774
    %v5297 = vunpack.c.h.b16 %v3774
    %v5298 = vunpack.c.l.b16 %v3775
    %v5299 = vunpack.c.h.b16 %v3775
    %v5300 = vunpack.c.l.b16 %v3776
    %v5301 = vunpack.c.h.b16 %v3776
    %v5302 = vunpack.c.l.b16 %v3777
    %v5303 = vunpack.c.h.b16 %v3777
    %v5304 = vunpack.c.l.b16 %v3778
    %v5305 = vunpack.c.h.b16 %v3778
    %v5306 = vunpack.c.l.b16 %v3779
    %v5307 = vunpack.c.h.b16 %v3779
    %v5308 = vunpack.c.l.b16 %v3780
    %v5309 = vunpack.c.h.b16 %v3780
    %v5310 = vunpack.c.l.b16 %v3781
    %v5311 = vunpack.c.h.b16 %v3781
    %v5312 = vunpack.c.l.b16 %v3782
    %v5313 = vunpack.c.h.b16 %v3782
    %v5314 = vunpack.c.l.b16 %v3783
    %v5315 = vunpack.c.h.b16 %v3783
    %v5316 = vunpack.c.l.b16 %v3784
    %v5317 = vunpack.c.h.b16 %v3784
    %v5318 = vunpack.c.l.b16 %v3785
    %v5319 = vunpack.c.h.b16 %v3785
    %v5320 = vunpack.c.l.b16 %v3786
    %v5321 = vunpack.c.h.b16 %v3786
    %v5322 = vunpack.c.l.b16 %v3787
    %v5323 = vunpack.c.h.b16 %v3787
    %v5324 = vunpack.c.l.b16 %v3788
    %v5325 = vunpack.c.h.b16 %v3788
    %v5326 = vunpack.c.l.b16 %v3789
    %v5327 = vunpack.c.h.b16 %v3789
    %v5328 = vunpack.c.l.b16 %v3790
    %v5329 = vunpack.c.h.b16 %v3790
    %v5330 = vunpack.c.l.b16 %v3791
    %v5331 = vunpack.c.h.b16 %v3791
    %v5332 = vunpack.c.l.b16 %v3792
    %v5333 = vunpack.c.h.b16 %v3792
    %v5334 = vunpack.c.l.b16 %v3793
    %v5335 = vunpack.c.h.b16 %v3793
    %v5336 = vunpack.c.l.b16 %v3794
    %v5337 = vunpack.c.h.b16 %v3794
    %v5338 = vunpack.c.l.b16 %v3795
    %v5339 = vunpack.c.h.b16 %v3795
    %v5340 = vunpack.c.l.b16 %v3796
    %v5341 = vunpack.c.h.b16 %v3796
    %v5342 = vunpack.c.l.b16 %v3797
    %v5343 = vunpack.c.h.b16 %v3797
    %v5344 = vunpack.c.l.b16 %v3798
    %v5345 = vunpack.c.h.b16 %v3798
    %v5346 = vunpack.c.l.b16 %v3799
    %v5347 = vunpack.c.h.b16 %v3799
    %v5348 = vunpack.c.l.b16 %v3800
    %v5349 = vunpack.c.h.b16 %v3800
    %v5350 = vunpack.c.l.b16 %v3801
    %v5351 = vunpack.c.h.b16 %v3801
    %v5352 = vunpack.c.l.b16 %v3802
    %v5353 = vunpack.c.h.b16 %v3802
    %v5354 = vunpack.c.l.b16 %v3803
    %v5355 = vunpack.c.h.b16 %v3803
    %v5356 = vunpack.c.l.b16 %v3804
    %v5357 = vunpack.c.h.b16 %v3804
    %v5358 = vunpack.c.l.b16 %v3805
    %v5359 = vunpack.c.h.b16 %v3805
    %v5360 = vunpack.c.l.b16 %v3806
    %v5361 = vunpack.c.h.b16 %v3806
    %v5362 = vunpack.c.l.b16 %v3807
    %v5363 = vunpack.c.h.b16 %v3807
    %v5364 = vunpack.c.l.b16 %v3808
    %v5365 = vunpack.c.h.b16 %v3808
    %v5366 = vunpack.c.l.b16 %v3809
    %v5367 = vunpack.c.h.b16 %v3809
    %v5368 = vunpack.c.l.b16 %v3810
    %v5369 = vunpack.c.h.b16 %v3810
    %v5370 = vunpack.c.l.b16 %v3811
    %v5371 = vunpack.c.h.b16 %v3811
    %v5372 = vunpack.c.l.b16 %v3812
    %v5373 = vunpack.c.h.b16 %v3812
    %v5374 = vunpack.c.l.b16 %v3813
    %v5375 = vunpack.c.h.b16 %v3813
    %v5376 = vunpack.c.l.b16 %v3814
    %v5377 = vunpack.c.h.b16 %v3814
    %v5378 = vunpack.c.l.b16 %v3815
    %v5379 = vunpack.c.h.b16 %v3815
    %v5380 = vunpack.c.l.b16 %v3816
    %v5381 = vunpack.c.h.b16 %v3816
    %v5382 = vunpack.c.l.b16 %v3817
    %v5383 = vunpack.c.h.b16 %v3817
    %v5384 = vunpack.c.l.b16 %v3818
    %v5385 = vunpack.c.h.b16 %v3818
    %v5386 = vunpack.c.l.b16 %v3819
    %v5387 = vunpack.c.h.b16 %v3819
    %v5388 = vunpack.c.l.b16 %v3820
    %v5389 = vunpack.c.h.b16 %v3820
    %v5390 = vunpack.c.l.b16 %v3821
    %v5391 = vunpack.c.h.b16 %v3821
    %v5392 = vunpack.c.l.b16 %v3822
    %v5393 = vunpack.c.h.b16 %v3822
    %v5394 = vunpack.c.l.b16 %v3823
    %v5395 = vunpack.c.h.b16 %v3823
    %v5396 = vunpack.c.l.b16 %v3824
    %v5397 = vunpack.c.h.b16 %v3824
    %v5398 = vunpack.c.l.b16 %v3825
    %v5399 = vunpack.c.h.b16 %v3825
    %v5400 = vunpack.c.l.b16 %v3826
    %v5401 = vunpack.c.h.b16 %v3826
    %v5402 = vunpack.c.l.b16 %v3827
    %v5403 = vunpack.c.h.b16 %v3827
    %v5404 = vunpack.c.l.b16 %v3828
    %v5405 = vunpack.c.h.b16 %v3828
    %v5406 = vunpack.c.l.b16 %v3829
    %v5407 = vunpack.c.h.b16 %v3829
    %v5408 = vpack.c.b16 %v4392, %v4384
    %v5409 = vpack.c.b16 %v4393, %v4385
    %v5410 = vpack.c.b16 %v4394, %v4386
    %v5411 = vpack.c.b16 %v4395, %v4387
    %v5412 = vpack.c.b16 %v4396, %v4388
    %v5413 = vpack.c.b16 %v4397, %v4389
    %v5414 = vpack.c.b16 %v4398, %v4390
    %v5415 = vpack.c.b16 %v4399, %v4391
    %v5416 = vpack.c.b16 %v4408, %v4400
    %v5417 = vpack.c.b16 %v4409, %v4401
    %v5418 = vpack.c.b16 %v4410, %v4402
    %v5419 = vpack.c.b16 %v4411, %v4403
    %v5420 = vpack.c.b16 %v4412, %v4404
    %v5421 = vpack.c.b16 %v4413, %v4405
    %v5422 = vpack.c.b16 %v4414, %v4406
    %v5423 = vpack.c.b16 %v4415, %v4407
    %v5424 = vpack.c.b16 %v4424, %v4416
    %v5425 = vpack.c.b16 %v4425, %v4417
    %v5426 = vpack.c.b16 %v4426, %v4418
    %v5427 = vpack.c.b16 %v4427, %v4419
    %v5428 = vpack.c.b16 %v4428, %v4420
    %v5429 = vpack.c.b16 %v4429, %v4421
    %v5430 = vpack.c.b16 %v4430, %v4422
    %v5431 = vpack.c.b16 %v4431, %v4423
    %v5432 = vpack.c.b16 %v4440, %v4432
    %v5433 = vpack.c.b16 %v4441, %v4433
    %v5434 = vpack.c.b16 %v4442, %v4434
    %v5435 = vpack.c.b16 %v4443, %v4435
    %v5436 = vpack.c.b16 %v4444, %v4436
    %v5437 = vpack.c.b16 %v4445, %v4437
    %v5438 = vpack.c.b16 %v4446, %v4438
    %v5439 = vpack.c.b16 %v4447, %v4439
    %v5440 = vpack.c.b16 %v4456, %v4448
    %v5441 = vpack.c.b16 %v4457, %v4449
    %v5442 = vpack.c.b16 %v4458, %v4450
    %v5443 = vpack.c.b16 %v4459, %v4451
    %v5444 = vpack.c.b16 %v4460, %v4452
    %v5445 = vpack.c.b16 %v4461, %v4453
    %v5446 = vpack.c.b16 %v4462, %v4454
    %v5447 = vpack.c.b16 %v4463, %v4455
    %v5448 = vpack.c.b16 %v4472, %v4464
    %v5449 = vpack.c.b16 %v4473, %v4465
    %v5450 = vpack.c.b16 %v4474, %v4466
    %v5451 = vpack.c.b16 %v4475, %v4467
    %v5452 = vpack.c.b16 %v4476, %v4468
    %v5453 = vpack.c.b16 %v4477, %v4469
    %v5454 = vpack.c.b16 %v4478, %v4470
    %v5455 = vpack.c.b16 %v4479, %v4471
    %v5456 = vpack.c.b16 %v4488, %v4480
    %v5457 = vpack.c.b16 %v4489, %v4481
    %v5458 = vpack.c.b16 %v4490, %v4482
    %v5459 = vpack.c.b16 %v4491, %v4483
    %v5460 = vpack.c.b16 %v4492, %v4484
    %v5461 = vpack.c.b16 %v4493, %v4485
    %v5462 = vpack.c.b16 %v4494, %v4486
    %v5463 = vpack.c.b16 %v4495, %v4487
    %v5464 = vpack.c.b16 %v4504, %v4496
    %v5465 = vpack.c.b16 %v4505, %v4497
    %v5466 = vpack.c.b16 %v4506, %v4498
    %v5467 = vpack.c.b16 %v4507, %v4499
    %v5468 = vpack.c.b16 %v4508, %v4500
    %v5469 = vpack.c.b16 %v4509, %v4501
    %v5470 = vpack.c.b16 %v4510, %v4502
    %v5471 = vpack.c.b16 %v4511, %v4503
    %v5472 = vpack.c.b16 %v4520, %v4512
    %v5473 = vpack.c.b16 %v4521, %v4513
    %v5474 = vpack.c.b16 %v4522, %v4514
    %v5475 = vpack.c.b16 %v4523, %v4515
    %v5476 = vpack.c.b16 %v4524, %v4516
    %v5477 = vpack.c.b16 %v4525, %v4517
    %v5478 = vpack.c.b16 %v4526, %v4518
    %v5479 = vpack.c.b16 %v4527, %v4519
    %v5480 = vpack.c.b16 %v4536, %v4528
    %v5481 = vpack.c.b16 %v4537, %v4529
    %v5482 = vpack.c.b16 %v4538, %v4530
    %v5483 = vpack.c.b16 %v4539, %v4531
    %v5484 = vpack.c.b16 %v4540, %v4532
    %v5485 = vpack.c.b16 %v4541, %v4533
    %v5486 = vpack.c.b16 %v4542, %v4534
    %v5487 = vpack.c.b16 %v4543, %v4535
    %v5488 = vpack.c.b16 %v4552, %v4544
    %v5489 = vpack.c.b16 %v4553, %v4545
    %v5490 = vpack.c.b16 %v4554, %v4546
    %v5491 = vpack.c.b16 %v4555, %v4547
    %v5492 = vpack.c.b16 %v4556, %v4548
    %v5493 = vpack.c.b16 %v4557, %v4549
    %v5494 = vpack.c.b16 %v4558, %v4550
    %v5495 = vpack.c.b16 %v4559, %v4551
    %v5496 = vpack.c.b16 %v4568, %v4560
    %v5497 = vpack.c.b16 %v4569, %v4561
    %v5498 = vpack.c.b16 %v4570, %v4562
    %v5499 = vpack.c.b16 %v4571, %v4563
    %v5500 = vpack.c.b16 %v4572, %v4564
    %v5501 = vpack.c.b16 %v4573, %v4565
    %v5502 = vpack.c.b16 %v4574, %v4566
    %v5503 = vpack.c.b16 %v4575, %v4567
    %v5504 = vpack.c.b16 %v4584, %v4576
    %v5505 = vpack.c.b16 %v4585, %v4577
    %v5506 = vpack.c.b16 %v4586, %v4578
    %v5507 = vpack.c.b16 %v4587, %v4579
    %v5508 = vpack.c.b16 %v4588, %v4580
    %v5509 = vpack.c.b16 %v4589, %v4581
    %v5510 = vpack.c.b16 %v4590, %v4582
    %v5511 = vpack.c.b16 %v4591, %v4583
    %v5512 = vpack.c.b16 %v4600, %v4592
    %v5513 = vpack.c.b16 %v4601, %v4593
    %v5514 = vpack.c.b16 %v4602, %v4594
    %v5515 = vpack.c.b16 %v4603, %v4595
    %v5516 = vpack.c.b16 %v4604, %v4596
    %v5517 = vpack.c.b16 %v4605, %v4597
    %v5518 = vpack.c.b16 %v4606, %v4598
    %v5519 = vpack.c.b16 %v4607, %v4599
    %v5520 = vpack.c.b16 %v4616, %v4608
    %v5521 = vpack.c.b16 %v4617, %v4609
    %v5522 = vpack.c.b16 %v4618, %v4610
    %v5523 = vpack.c.b16 %v4619, %v4611
    %v5524 = vpack.c.b16 %v4620, %v4612
    %v5525 = vpack.c.b16 %v4621, %v4613
    %v5526 = vpack.c.b16 %v4622, %v4614
    %v5527 = vpack.c.b16 %v4623, %v4615
    %v5528 = vpack.c.b16 %v4632, %v4624
    %v5529 = vpack.c.b16 %v4633, %v4625
    %v5530 = vpack.c.b16 %v4634, %v4626
    %v5531 = vpack.c.b16 %v4635, %v4627
    %v5532 = vpack.c.b16 %v4636, %v4628
    %v5533 = vpack.c.b16 %v4637, %v4629
    %v5534 = vpack.c.b16 %v4638, %v4630
    %v5535 = vpack.c.b16 %v4639, %v4631
    %v5536 = vpack.c.b16 %v4648, %v4640
    %v5537 = vpack.c.b16 %v4649, %v4641
    %v5538 = vpack.c.b16 %v4650, %v4642
    %v5539 = vpack.c.b16 %v4651, %v4643
    %v5540 = vpack.c.b16 %v4652, %v4644
    %v5541 = vpack.c.b16 %v4653, %v4645
    %v5542 = vpack.c.b16 %v4654, %v4646
    %v5543 = vpack.c.b16 %v4655, %v4647
    %v5544 = vpack.c.b16 %v4664, %v4656
    %v5545 = vpack.c.b16 %v4665, %v4657
    %v5546 = vpack.c.b16 %v4666, %v4658
    %v5547 = vpack.c.b16 %v4667, %v4659
    %v5548 = vpack.c.b16 %v4668, %v4660
    %v5549 = vpack.c.b16 %v4669, %v4661
    %v5550 = vpack.c.b16 %v4670, %v4662
    %v5551 = vpack.c.b16 %v4671, %v4663
    %v5552 = vpack.c.b16 %v4680, %v4672
    %v5553 = vpack.c.b16 %v4681, %v4673
    %v5554 = vpack.c.b16 %v4682, %v4674
    %v5555 = vpack.c.b16 %v4683, %v4675
    %v5556 = vpack.c.b16 %v4684, %v4676
    %v5557 = vpack.c.b16 %v4685, %v4677
    %v5558 = vpack.c.b16 %v4686, %v4678
    %v5559 = vpack.c.b16 %v4687, %v4679
    %v5560 = vpack.c.b16 %v4696, %v4688
    %v5561 = vpack.c.b16 %v4697, %v4689
    %v5562 = vpack.c.b16 %v4698, %v4690
    %v5563 = vpack.c.b16 %v4699, %v4691
    %v5564 = vpack.c.b16 %v4700, %v4692
    %v5565 = vpack.c.b16 %v4701, %v4693
    %v5566 = vpack.c.b16 %v4702, %v4694
    %v5567 = vpack.c.b16 %v4703, %v4695
    %v5568 = vpack.c.b16 %v4712, %v4704
    %v5569 = vpack.c.b16 %v4713, %v4705
    %v5570 = vpack.c.b16 %v4714, %v4706
    %v5571 = vpack.c.b16 %v4715, %v4707
    %v5572 = vpack.c.b16 %v4716, %v4708
    %v5573 = vpack.c.b16 %v4717, %v4709
    %v5574 = vpack.c.b16 %v4718, %v4710
    %v5575 = vpack.c.b16 %v4719, %v4711
    %v5576 = vpack.c.b16 %v4728, %v4720
    %v5577 = vpack.c.b16 %v4729, %v4721
    %v5578 = vpack.c.b16 %v4730, %v4722
    %v5579 = vpack.c.b16 %v4731, %v4723
    %v5580 = vpack.c.b16 %v4732, %v4724
    %v5581 = vpack.c.b16 %v4733, %v4725
    %v5582 = vpack.c.b16 %v4734, %v4726
    %v5583 = vpack.c.b16 %v4735, %v4727
    %v5584 = vpack.c.b16 %v4744, %v4736
    %v5585 = vpack.c.b16 %v4745, %v4737
    %v5586 = vpack.c.b16 %v4746, %v4738
    %v5587 = vpack.c.b16 %v4747, %v4739
    %v5588 = vpack.c.b16 %v4748, %v4740
    %v5589 = vpack.c.b16 %v4749, %v4741
    %v5590 = vpack.c.b16 %v4750, %v4742
    %v5591 = vpack.c.b16 %v4751, %v4743
    %v5592 = vpack.c.b16 %v4760, %v4752
    %v5593 = vpack.c.b16 %v4761, %v4753
    %v5594 = vpack.c.b16 %v4762, %v4754
    %v5595 = vpack.c.b16 %v4763, %v4755
    %v5596 = vpack.c.b16 %v4764, %v4756
    %v5597 = vpack.c.b16 %v4765, %v4757
    %v5598 = vpack.c.b16 %v4766, %v4758
    %v5599 = vpack.c.b16 %v4767, %v4759
    %v5600 = vpack.c.b16 %v4776, %v4768
    %v5601 = vpack.c.b16 %v4777, %v4769
    %v5602 = vpack.c.b16 %v4778, %v4770
    %v5603 = vpack.c.b16 %v4779, %v4771
    %v5604 = vpack.c.b16 %v4780, %v4772
    %v5605 = vpack.c.b16 %v4781, %v4773
    %v5606 = vpack.c.b16 %v4782, %v4774
    %v5607 = vpack.c.b16 %v4783, %v4775
    %v5608 = vpack.c.b16 %v4792, %v4784
    %v5609 = vpack.c.b16 %v4793, %v4785
    %v5610 = vpack.c.b16 %v4794, %v4786
    %v5611 = vpack.c.b16 %v4795, %v4787
    %v5612 = vpack.c.b16 %v4796, %v4788
    %v5613 = vpack.c.b16 %v4797, %v4789
    %v5614 = vpack.c.b16 %v4798, %v4790
    %v5615 = vpack.c.b16 %v4799, %v4791
    %v5616 = vpack.c.b16 %v4808, %v4800
    %v5617 = vpack.c.b16 %v4809, %v4801
    %v5618 = vpack.c.b16 %v4810, %v4802
    %v5619 = vpack.c.b16 %v4811, %v4803
    %v5620 = vpack.c.b16 %v4812, %v4804
    %v5621 = vpack.c.b16 %v4813, %v4805
    %v5622 = vpack.c.b16 %v4814, %v4806
    %v5623 = vpack.c.b16 %v4815, %v4807
    %v5624 = vpack.c.b16 %v4824, %v4816
    %v5625 = vpack.c.b16 %v4825, %v4817
    %v5626 = vpack.c.b16 %v4826, %v4818
    %v5627 = vpack.c.b16 %v4827, %v4819
    %v5628 = vpack.c.b16 %v4828, %v4820
    %v5629 = vpack.c.b16 %v4829, %v4821
    %v5630 = vpack.c.b16 %v4830, %v4822
    %v5631 = vpack.c.b16 %v4831, %v4823
    %v5632 = vpack.c.b16 %v4840, %v4832
    %v5633 = vpack.c.b16 %v4841, %v4833
    %v5634 = vpack.c.b16 %v4842, %v4834
    %v5635 = vpack.c.b16 %v4843, %v4835
    %v5636 = vpack.c.b16 %v4844, %v4836
    %v5637 = vpack.c.b16 %v4845, %v4837
    %v5638 = vpack.c.b16 %v4846, %v4838
    %v5639 = vpack.c.b16 %v4847, %v4839
    %v5640 = vpack.c.b16 %v4856, %v4848
    %v5641 = vpack.c.b16 %v4857, %v4849
    %v5642 = vpack.c.b16 %v4858, %v4850
    %v5643 = vpack.c.b16 %v4859, %v4851
    %v5644 = vpack.c.b16 %v4860, %v4852
    %v5645 = vpack.c.b16 %v4861, %v4853
    %v5646 = vpack.c.b16 %v4862, %v4854
    %v5647 = vpack.c.b16 %v4863, %v4855
    %v5648 = vpack.c.b16 %v4872, %v4864
    %v5649 = vpack.c.b16 %v4873, %v4865
    %v5650 = vpack.c.b16 %v4874, %v4866
    %v5651 = vpack.c.b16 %v4875, %v4867
    %v5652 = vpack.c.b16 %v4876, %v4868
    %v5653 = vpack.c.b16 %v4877, %v4869
    %v5654 = vpack.c.b16 %v4878, %v4870
    %v5655 = vpack.c.b16 %v4879, %v4871
    %v5656 = vpack.c.b16 %v4888, %v4880
    %v5657 = vpack.c.b16 %v4889, %v4881
    %v5658 = vpack.c.b16 %v4890, %v4882
    %v5659 = vpack.c.b16 %v4891, %v4883
    %v5660 = vpack.c.b16 %v4892, %v4884
    %v5661 = vpack.c.b16 %v4893, %v4885
    %v5662 = vpack.c.b16 %v4894, %v4886
    %v5663 = vpack.c.b16 %v4895, %v4887
    %v5664 = vpack.c.b16 %v4904, %v4896
    %v5665 = vpack.c.b16 %v4905, %v4897
    %v5666 = vpack.c.b16 %v4906, %v4898
    %v5667 = vpack.c.b16 %v4907, %v4899
    %v5668 = vpack.c.b16 %v4908, %v4900
    %v5669 = vpack.c.b16 %v4909, %v4901
    %v5670 = vpack.c.b16 %v4910, %v4902
    %v5671 = vpack.c.b16 %v4911, %v4903
    %v5672 = vpack.c.b16 %v4920, %v4912
    %v5673 = vpack.c.b16 %v4921, %v4913
    %v5674 = vpack.c.b16 %v4922, %v4914
    %v5675 = vpack.c.b16 %v4923, %v4915
    %v5676 = vpack.c.b16 %v4924, %v4916
    %v5677 = vpack.c.b16 %v4925, %v4917
    %v5678 = vpack.c.b16 %v4926, %v4918
    %v5679 = vpack.c.b16 %v4927, %v4919
    %v5680 = vpack.c.b16 %v4936, %v4928
    %v5681 = vpack.c.b16 %v4937, %v4929
    %v5682 = vpack.c.b16 %v4938, %v4930
    %v5683 = vpack.c.b16 %v4939, %v4931
    %v5684 = vpack.c.b16 %v4940, %v4932
    %v5685 = vpack.c.b16 %v4941, %v4933
    %v5686 = vpack.c.b16 %v4942, %v4934
    %v5687 = vpack.c.b16 %v4943, %v4935
    %v5688 = vpack.c.b16 %v4952, %v4944
    %v5689 = vpack.c.b16 %v4953, %v4945
    %v5690 = vpack.c.b16 %v4954, %v4946
    %v5691 = vpack.c.b16 %v4955, %v4947
    %v5692 = vpack.c.b16 %v4956, %v4948
    %v5693 = vpack.c.b16 %v4957, %v4949
    %v5694 = vpack.c.b16 %v4958, %v4950
    %v5695 = vpack.c.b16 %v4959, %v4951
    %v5696 = vpack.c.b16 %v4968, %v4960
    %v5697 = vpack.c.b16 %v4969, %v4961
    %v5698 = vpack.c.b16 %v4970, %v4962
    %v5699 = vpack.c.b16 %v4971, %v4963
    %v5700 = vpack.c.b16 %v4972, %v4964
    %v5701 = vpack.c.b16 %v4973, %v4965
    %v5702 = vpack.c.b16 %v4974, %v4966
    %v5703 = vpack.c.b16 %v4975, %v4967
    %v5704 = vpack.c.b16 %v4984, %v4976
    %v5705 = vpack.c.b16 %v4985, %v4977
    %v5706 = vpack.c.b16 %v4986, %v4978
    %v5707 = vpack.c.b16 %v4987, %v4979
    %v5708 = vpack.c.b16 %v4988, %v4980
    %v5709 = vpack.c.b16 %v4989, %v4981
    %v5710 = vpack.c.b16 %v4990, %v4982
    %v5711 = vpack.c.b16 %v4991, %v4983
    %v5712 = vpack.c.b16 %v5000, %v4992
    %v5713 = vpack.c.b16 %v5001, %v4993
    %v5714 = vpack.c.b16 %v5002, %v4994
    %v5715 = vpack.c.b16 %v5003, %v4995
    %v5716 = vpack.c.b16 %v5004, %v4996
    %v5717 = vpack.c.b16 %v5005, %v4997
    %v5718 = vpack.c.b16 %v5006, %v4998
    %v5719 = vpack.c.b16 %v5007, %v4999
    %v5720 = vpack.c.b16 %v5016, %v5008
    %v5721 = vpack.c.b16 %v5017, %v5009
    %v5722 = vpack.c.b16 %v5018, %v5010
    %v5723 = vpack.c.b16 %v5019, %v5011
    %v5724 = vpack.c.b16 %v5020, %v5012
    %v5725 = vpack.c.b16 %v5021, %v5013
    %v5726 = vpack.c.b16 %v5022, %v5014
    %v5727 = vpack.c.b16 %v5023, %v5015
    %v5728 = vpack.c.b16 %v5032, %v5024
    %v5729 = vpack.c.b16 %v5033, %v5025
    %v5730 = vpack.c.b16 %v5034, %v5026
    %v5731 = vpack.c.b16 %v5035, %v5027
    %v5732 = vpack.c.b16 %v5036, %v5028
    %v5733 = vpack.c.b16 %v5037, %v5029
    %v5734 = vpack.c.b16 %v5038, %v5030
    %v5735 = vpack.c.b16 %v5039, %v5031
    %v5736 = vpack.c.b16 %v5048, %v5040
    %v5737 = vpack.c.b16 %v5049, %v5041
    %v5738 = vpack.c.b16 %v5050, %v5042
    %v5739 = vpack.c.b16 %v5051, %v5043
    %v5740 = vpack.c.b16 %v5052, %v5044
    %v5741 = vpack.c.b16 %v5053, %v5045
    %v5742 = vpack.c.b16 %v5054, %v5046
    %v5743 = vpack.c.b16 %v5055, %v5047
    %v5744 = vpack.c.b16 %v5064, %v5056
    %v5745 = vpack.c.b16 %v5065, %v5057
    %v5746 = vpack.c.b16 %v5066, %v5058
    %v5747 = vpack.c.b16 %v5067, %v5059
    %v5748 = vpack.c.b16 %v5068, %v5060
    %v5749 = vpack.c.b16 %v5069, %v5061
    %v5750 = vpack.c.b16 %v5070, %v5062
    %v5751 = vpack.c.b16 %v5071, %v5063
    %v5752 = vpack.c.b16 %v5080, %v5072
    %v5753 = vpack.c.b16 %v5081, %v5073
    %v5754 = vpack.c.b16 %v5082, %v5074
    %v5755 = vpack.c.b16 %v5083, %v5075
    %v5756 = vpack.c.b16 %v5084, %v5076
    %v5757 = vpack.c.b16 %v5085, %v5077
    %v5758 = vpack.c.b16 %v5086, %v5078
    %v5759 = vpack.c.b16 %v5087, %v5079
    %v5760 = vpack.c.b16 %v5096, %v5088
    %v5761 = vpack.c.b16 %v5097, %v5089
    %v5762 = vpack.c.b16 %v5098, %v5090
    %v5763 = vpack.c.b16 %v5099, %v5091
    %v5764 = vpack.c.b16 %v5100, %v5092
    %v5765 = vpack.c.b16 %v5101, %v5093
    %v5766 = vpack.c.b16 %v5102, %v5094
    %v5767 = vpack.c.b16 %v5103, %v5095
    %v5768 = vpack.c.b16 %v5112, %v5104
    %v5769 = vpack.c.b16 %v5113, %v5105
    %v5770 = vpack.c.b16 %v5114, %v5106
    %v5771 = vpack.c.b16 %v5115, %v5107
    %v5772 = vpack.c.b16 %v5116, %v5108
    %v5773 = vpack.c.b16 %v5117, %v5109
    %v5774 = vpack.c.b16 %v5118, %v5110
    %v5775 = vpack.c.b16 %v5119, %v5111
    %v5776 = vpack.c.b16 %v5128, %v5120
    %v5777 = vpack.c.b16 %v5129, %v5121
    %v5778 = vpack.c.b16 %v5130, %v5122
    %v5779 = vpack.c.b16 %v5131, %v5123
    %v5780 = vpack.c.b16 %v5132, %v5124
    %v5781 = vpack.c.b16 %v5133, %v5125
    %v5782 = vpack.c.b16 %v5134, %v5126
    %v5783 = vpack.c.b16 %v5135, %v5127
    %v5784 = vpack.c.b16 %v5144, %v5136
    %v5785 = vpack.c.b16 %v5145, %v5137
    %v5786 = vpack.c.b16 %v5146, %v5138
    %v5787 = vpack.c.b16 %v5147, %v5139
    %v5788 = vpack.c.b16 %v5148, %v5140
    %v5789 = vpack.c.b16 %v5149, %v5141
    %v5790 = vpack.c.b16 %v5150, %v5142
    %v5791 = vpack.c.b16 %v5151, %v5143
    %v5792 = vpack.c.b16 %v5160, %v5152
    %v5793 = vpack.c.b16 %v5161, %v5153
    %v5794 = vpack.c.b16 %v5162, %v5154
    %v5795 = vpack.c.b16 %v5163, %v5155
    %v5796 = vpack.c.b16 %v5164, %v5156
    %v5797 = vpack.c.b16 %v5165, %v5157
    %v5798 = vpack.c.b16 %v5166, %v5158
    %v5799 = vpack.c.b16 %v5167, %v5159
    %v5800 = vpack.c.b16 %v5176, %v5168
    %v5801 = vpack.c.b16 %v5177, %v5169
    %v5802 = vpack.c.b16 %v5178, %v5170
    %v5803 = vpack.c.b16 %v5179, %v5171
    %v5804 = vpack.c.b16 %v5180, %v5172
    %v5805 = vpack.c.b16 %v5181, %v5173
    %v5806 = vpack.c.b16 %v5182, %v5174
    %v5807 = vpack.c.b16 %v5183, %v5175
    %v5808 = vpack.c.b16 %v5192, %v5184
    %v5809 = vpack.c.b16 %v5193, %v5185
    %v5810 = vpack.c.b16 %v5194, %v5186
    %v5811 = vpack.c.b16 %v5195, %v5187
    %v5812 = vpack.c.b16 %v5196, %v5188
    %v5813 = vpack.c.b16 %v5197, %v5189
    %v5814 = vpack.c.b16 %v5198, %v5190
    %v5815 = vpack.c.b16 %v5199, %v5191
    %v5816 = vpack.c.b16 %v5208, %v5200
    %v5817 = vpack.c.b16 %v5209, %v5201
    %v5818 = vpack.c.b16 %v5210, %v5202
    %v5819 = vpack.c.b16 %v5211, %v5203
    %v5820 = vpack.c.b16 %v5212, %v5204
    %v5821 = vpack.c.b16 %v5213, %v5205
    %v5822 = vpack.c.b16 %v5214, %v5206
    %v5823 = vpack.c.b16 %v5215, %v5207
    %v5824 = vpack.c.b16 %v5224, %v5216
    %v5825 = vpack.c.b16 %v5225, %v5217
    %v5826 = vpack.c.b16 %v5226, %v5218
    %v5827 = vpack.c.b16 %v5227, %v5219
    %v5828 = vpack.c.b16 %v5228, %v5220
    %v5829 = vpack.c.b16 %v5229, %v5221
    %v5830 = vpack.c.b16 %v5230, %v5222
    %v5831 = vpack.c.b16 %v5231, %v5223
    %v5832 = vpack.c.b16 %v5240, %v5232
    %v5833 = vpack.c.b16 %v5241, %v5233
    %v5834 = vpack.c.b16 %v5242, %v5234
    %v5835 = vpack.c.b16 %v5243, %v5235
    %v5836 = vpack.c.b16 %v5244, %v5236
    %v5837 = vpack.c.b16 %v5245, %v5237
    %v5838 = vpack.c.b16 %v5246, %v5238
    %v5839 = vpack.c.b16 %v5247, %v5239
    %v5840 = vpack.c.b16 %v5256, %v5248
    %v5841 = vpack.c.b16 %v5257, %v5249
    %v5842 = vpack.c.b16 %v5258, %v5250
    %v5843 = vpack.c.b16 %v5259, %v5251
    %v5844 = vpack.c.b16 %v5260, %v5252
    %v5845 = vpack.c.b16 %v5261, %v5253
    %v5846 = vpack.c.b16 %v5262, %v5254
    %v5847 = vpack.c.b16 %v5263, %v5255
    %v5848 = vpack.c.b16 %v5272, %v5264
    %v5849 = vpack.c.b16 %v5273, %v5265
    %v5850 = vpack.c.b16 %v5274, %v5266
    %v5851 = vpack.c.b16 %v5275, %v5267
    %v5852 = vpack.c.b16 %v5276, %v5268
    %v5853 = vpack.c.b16 %v5277, %v5269
    %v5854 = vpack.c.b16 %v5278, %v5270
    %v5855 = vpack.c.b16 %v5279, %v5271
    %v5856 = vpack.c.b16 %v5288, %v5280
    %v5857 = vpack.c.b16 %v5289, %v5281
    %v5858 = vpack.c.b16 %v5290, %v5282
    %v5859 = vpack.c.b16 %v5291, %v5283
    %v5860 = vpack.c.b16 %v5292, %v5284
    %v5861 = vpack.c.b16 %v5293, %v5285
    %v5862 = vpack.c.b16 %v5294, %v5286
    %v5863 = vpack.c.b16 %v5295, %v5287
    %v5864 = vpack.c.b16 %v5304, %v5296
    %v5865 = vpack.c.b16 %v5305, %v5297
    %v5866 = vpack.c.b16 %v5306, %v5298
    %v5867 = vpack.c.b16 %v5307, %v5299
    %v5868 = vpack.c.b16 %v5308, %v5300
    %v5869 = vpack.c.b16 %v5309, %v5301
    %v5870 = vpack.c.b16 %v5310, %v5302
    %v5871 = vpack.c.b16 %v5311, %v5303
    %v5872 = vpack.c.b16 %v5320, %v5312
    %v5873 = vpack.c.b16 %v5321, %v5313
    %v5874 = vpack.c.b16 %v5322, %v5314
    %v5875 = vpack.c.b16 %v5323, %v5315
    %v5876 = vpack.c.b16 %v5324, %v5316
    %v5877 = vpack.c.b16 %v5325, %v5317
    %v5878 = vpack.c.b16 %v5326, %v5318
    %v5879 = vpack.c.b16 %v5327, %v5319
    %v5880 = vpack.c.b16 %v5336, %v5328
    %v5881 = vpack.c.b16 %v5337, %v5329
    %v5882 = vpack.c.b16 %v5338, %v5330
    %v5883 = vpack.c.b16 %v5339, %v5331
    %v5884 = vpack.c.b16 %v5340, %v5332
    %v5885 = vpack.c.b16 %v5341, %v5333
    %v5886 = vpack.c.b16 %v5342, %v5334
    %v5887 = vpack.c.b16 %v5343, %v5335
    %v5888 = vpack.c.b16 %v5352, %v5344
    %v5889 = vpack.c.b16 %v5353, %v5345
    %v5890 = vpack.c.b16 %v5354, %v5346
    %v5891 = vpack.c.b16 %v5355, %v5347
    %v5892 = vpack.c.b16 %v5356, %v5348
    %v5893 = vpack.c.b16 %v5357, %v5349
    %v5894 = vpack.c.b16 %v5358, %v5350
    %v5895 = vpack.c.b16 %v5359, %v5351
    %v5896 = vpack.c.b16 %v5368, %v5360
    %v5897 = vpack.c.b16 %v5369, %v5361
    %v5898 = vpack.c.b16 %v5370, %v5362
    %v5899 = vpack.c.b16 %v5371, %v5363
    %v5900 = vpack.c.b16 %v5372, %v5364
    %v5901 = vpack.c.b16 %v5373, %v5365
    %v5902 = vpack.c.b16 %v5374, %v5366
    %v5903 = vpack.c.b16 %v5375, %v5367
    %v5904 = vpack.c.b16 %v5384, %v5376
    %v5905 = vpack.c.b16 %v5385, %v5377
    %v5906 = vpack.c.b16 %v5386, %v5378
    %v5907 = vpack.c.b16 %v5387, %v5379
    %v5908 = vpack.c.b16 %v5388, %v5380
    %v5909 = vpack.c.b16 %v5389, %v5381
    %v5910 = vpack.c.b16 %v5390, %v5382
    %v5911 = vpack.c.b16 %v5391, %v5383
    %v5912 = vpack.c.b16 %v5400, %v5392
    %v5913 = vpack.c.b16 %v5401, %v5393
    %v5914 = vpack.c.b16 %v5402, %v5394
    %v5915 = vpack.c.b16 %v5403, %v5395
    %v5916 = vpack.c.b16 %v5404, %v5396
    %v5917 = vpack.c.b16 %v5405, %v5397
    %v5918 = vpack.c.b16 %v5406, %v5398
    %v5919 = vpack.c.b16 %v5407, %v5399
    %6432 = vmatprep.subr.bf16.mxu0 %v5409
    %6433 = vmatpush1.bf16.msra.mxu0 %v5408
    %6434 = vmatprep.subr.bf16.mxu0 %v5417
    %6435 = vmatpush1.bf16.msra.mxu0 %v5416
    %6436 = vmatprep.subr.bf16.mxu0 %v5425
    %6437 = vmatpush1.bf16.msra.mxu0 %v5424
    %6438 = vmatprep.subr.bf16.mxu0 %v5433
    %6439 = vmatpush1.bf16.msra.mxu0 %v5432
    %6440 = vmatprep.subr.bf16.mxu0 %v5441
    %6441 = vmatpush1.bf16.msra.mxu0 %v5440
    %6442 = vmatprep.subr.bf16.mxu0 %v5449
    %6443 = vmatpush1.bf16.msra.mxu0 %v5448
    %6444 = vmatprep.subr.bf16.mxu0 %v5457
    %6445 = vmatpush1.bf16.msra.mxu0 %v5456
    %6446 = vmatprep.subr.bf16.mxu0 %v5465
    %6447 = vmatpush1.bf16.msra.mxu0 %v5464
    %6448 = vmatprep.subr.bf16.mxu0 %v5473
    %6449 = vmatpush1.bf16.msra.mxu0 %v5472
    %6450 = vmatprep.subr.bf16.mxu0 %v5481
    %6451 = vmatpush1.bf16.msra.mxu0 %v5480
    %6452 = vmatprep.subr.bf16.mxu0 %v5489
    %6453 = vmatpush1.bf16.msra.mxu0 %v5488
    %6454 = vmatprep.subr.bf16.mxu0 %v5497
    %6455 = vmatpush1.bf16.msra.mxu0 %v5496
    %6456 = vmatprep.subr.bf16.mxu0 %v5505
    %6457 = vmatpush1.bf16.msra.mxu0 %v5504
    %6458 = vmatprep.subr.bf16.mxu0 %v5513
    %6459 = vmatpush1.bf16.msra.mxu0 %v5512
    %6460 = vmatprep.subr.bf16.mxu0 %v5521
    %6461 = vmatpush1.bf16.msra.mxu0 %v5520
    %6462 = vmatprep.subr.bf16.mxu0 %v5529
    %6463 = vmatpush1.bf16.msra.mxu0 %v5528
    %6464 = vmatprep.mubr.bf16.mxu0 %v3311
    %6465 = vmatmul.mubr.bf16.gmra.mrb[0].mxu0 %v3310
    %v6466 = vpop.f32.mrb[0].mxu0
    %v6467 = vadd.f32 %v3835, %v6466
    %v6468 = vpop.f32.mrb[0].mxu0
    %v6469 = vadd.f32 %v3839, %v6468
    %v6470 = vpop.f32.mrb[0].mxu0
    %v6471 = vpop.f32.mrb[0].mxu0
    %6472 = vdwg.mxu0
    %6473 = vmatprep.subr.bf16.mxu0 %v5537
    %6474 = vmatpush1.bf16.msra.mxu0 %v5536
    %6475 = vmatprep.subr.bf16.mxu0 %v5545
    %6476 = vmatpush1.bf16.msra.mxu0 %v5544
    %6477 = vmatprep.subr.bf16.mxu0 %v5553
    %6478 = vmatpush1.bf16.msra.mxu0 %v5552
    %6479 = vmatprep.subr.bf16.mxu0 %v5561
    %6480 = vmatpush1.bf16.msra.mxu0 %v5560
    %6481 = vmatprep.subr.bf16.mxu0 %v5569
    %6482 = vmatpush1.bf16.msra.mxu0 %v5568
    %6483 = vmatprep.subr.bf16.mxu0 %v5577
    %6484 = vmatpush1.bf16.msra.mxu0 %v5576
    %6485 = vmatprep.subr.bf16.mxu0 %v5585
    %6486 = vmatpush1.bf16.msra.mxu0 %v5584
    %6487 = vmatprep.subr.bf16.mxu0 %v5593
    %6488 = vmatpush1.bf16.msra.mxu0 %v5592
    %6489 = vmatprep.subr.bf16.mxu0 %v5601
    %6490 = vmatpush1.bf16.msra.mxu0 %v5600
    %6491 = vmatprep.subr.bf16.mxu0 %v5609
    %6492 = vmatpush1.bf16.msra.mxu0 %v5608
    %6493 = vmatprep.subr.bf16.mxu0 %v5617
    %6494 = vmatpush1.bf16.msra.mxu0 %v5616
    %6495 = vmatprep.subr.bf16.mxu0 %v5625
    %6496 = vmatpush1.bf16.msra.mxu0 %v5624
    %6497 = vmatprep.subr.bf16.mxu0 %v5633
    %6498 = vmatpush1.bf16.msra.mxu0 %v5632
    %6499 = vmatprep.subr.bf16.mxu0 %v5641
    %6500 = vmatpush1.bf16.msra.mxu0 %v5640
    %6501 = vmatprep.subr.bf16.mxu0 %v5649
    %6502 = vmatpush1.bf16.msra.mxu0 %v5648
    %6503 = vmatprep.subr.bf16.mxu0 %v5657
    %6504 = vmatpush1.bf16.msra.mxu0 %v5656
    %6505 = vmatprep.mubr.bf16.mxu0 %v3313
    %6506 = vmatmul.mubr.bf16.gmra.mrb[0].mxu0 %v3312
    %v6507 = vpop.f32.mrb[0].mxu0
    %v6508 = vadd.f32 %v6467, %v6507
    %v6509 = vpop.f32.mrb[0].mxu0
    %v6510 = vadd.f32 %v6469, %v6509
    %v6511 = vpop.f32.mrb[0].mxu0
    %v6512 = vpop.f32.mrb[0].mxu0
    %6513 = vdwg.mxu0
    %6514 = vmatprep.subr.bf16.mxu0 %v5665
    %6515 = vmatpush1.bf16.msra.mxu0 %v5664
    %6516 = vmatprep.subr.bf16.mxu0 %v5673
    %6517 = vmatpush1.bf16.msra.mxu0 %v5672
    %6518 = vmatprep.subr.bf16.mxu0 %v5681
    %6519 = vmatpush1.bf16.msra.mxu0 %v5680
    %6520 = vmatprep.subr.bf16.mxu0 %v5689
    %6521 = vmatpush1.bf16.msra.mxu0 %v5688
    %6522 = vmatprep.subr.bf16.mxu0 %v5697
    %6523 = vmatpush1.bf16.msra.mxu0 %v5696
    %6524 = vmatprep.subr.bf16.mxu0 %v5705
    %6525 = vmatpush1.bf16.msra.mxu0 %v5704
    %6526 = vmatprep.subr.bf16.mxu0 %v5713
    %6527 = vmatpush1.bf16.msra.mxu0 %v5712
    %6528 = vmatprep.subr.bf16.mxu0 %v5721
    %6529 = vmatpush1.bf16.msra.mxu0 %v5720
    %6530 = vmatprep.subr.bf16.mxu0 %v5729
    %6531 = vmatpush1.bf16.msra.mxu0 %v5728
    %6532 = vmatprep.subr.bf16.mxu0 %v5737
    %6533 = vmatpush1.bf16.msra.mxu0 %v5736
    %6534 = vmatprep.subr.bf16.mxu0 %v5745
    %6535 = vmatpush1.bf16.msra.mxu0 %v5744
    %6536 = vmatprep.subr.bf16.mxu0 %v5753
    %6537 = vmatpush1.bf16.msra.mxu0 %v5752
    %6538 = vmatprep.subr.bf16.mxu0 %v5761
    %6539 = vmatpush1.bf16.msra.mxu0 %v5760
    %6540 = vmatprep.subr.bf16.mxu0 %v5769
    %6541 = vmatpush1.bf16.msra.mxu0 %v5768
    %6542 = vmatprep.subr.bf16.mxu0 %v5777
    %6543 = vmatpush1.bf16.msra.mxu0 %v5776
    %6544 = vmatprep.subr.bf16.mxu0 %v5785
    %6545 = vmatpush1.bf16.msra.mxu0 %v5784
    %6546 = vmatprep.mubr.bf16.mxu0 %v3315
    %6547 = vmatmul.mubr.bf16.gmra.mrb[0].mxu0 %v3314
    %v6548 = vpop.f32.mrb[0].mxu0
    %v6549 = vadd.f32 %v6508, %v6548
    %v6550 = vpop.f32.mrb[0].mxu0
    %v6551 = vadd.f32 %v6510, %v6550
    %v6552 = vpop.f32.mrb[0].mxu0
    %v6553 = vpop.f32.mrb[0].mxu0
    %6554 = vdwg.mxu0
    %6555 = vmatprep.subr.bf16.mxu0 %v5793
    %6556 = vmatpush1.bf16.msra.mxu0 %v5792
    %6557 = vmatprep.subr.bf16.mxu0 %v5801
    %6558 = vmatpush1.bf16.msra.mxu0 %v5800
    %6559 = vmatprep.subr.bf16.mxu0 %v5809
    %6560 = vmatpush1.bf16.msra.mxu0 %v5808
    %6561 = vmatprep.subr.bf16.mxu0 %v5817
    %6562 = vmatpush1.bf16.msra.mxu0 %v5816
    %6563 = vmatprep.subr.bf16.mxu0 %v5825
    %6564 = vmatpush1.bf16.msra.mxu0 %v5824
    %6565 = vmatprep.subr.bf16.mxu0 %v5833
    %6566 = vmatpush1.bf16.msra.mxu0 %v5832
    %6567 = vmatprep.subr.bf16.mxu0 %v5841
    %6568 = vmatpush1.bf16.msra.mxu0 %v5840
    %6569 = vmatprep.subr.bf16.mxu0 %v5849
    %6570 = vmatpush1.bf16.msra.mxu0 %v5848
    %6571 = vmatprep.subr.bf16.mxu0 %v5857
    %6572 = vmatpush1.bf16.msra.mxu0 %v5856
    %6573 = vmatprep.subr.bf16.mxu0 %v5865
    %6574 = vmatpush1.bf16.msra.mxu0 %v5864
    %6575 = vmatprep.subr.bf16.mxu0 %v5873
    %6576 = vmatpush1.bf16.msra.mxu0 %v5872
    %6577 = vmatprep.subr.bf16.mxu0 %v5881
    %6578 = vmatpush1.bf16.msra.mxu0 %v5880
    %6579 = vmatprep.subr.bf16.mxu0 %v5889
    %6580 = vmatpush1.bf16.msra.mxu0 %v5888
    %6581 = vmatprep.subr.bf16.mxu0 %v5897
    %6582 = vmatpush1.bf16.msra.mxu0 %v5896
    %6583 = vmatprep.subr.bf16.mxu0 %v5905
    %6584 = vmatpush1.bf16.msra.mxu0 %v5904
    %6585 = vmatprep.subr.bf16.mxu0 %v5913
    %6586 = vmatpush1.bf16.msra.mxu0 %v5912
    %6587 = vmatprep.mubr.bf16.mxu0 %v3317
    %6588 = vmatmul.mubr.bf16.gmra.mrb[0].mxu0 %v3316
    %v6589 = vpop.f32.mrb[0].mxu0
    %v6590 = vadd.f32 %v6549, %v6589
    %v6591 = vpop.f32.mrb[0].mxu0
    %v6592 = vadd.f32 %v6551, %v6591
    %v6593 = vpop.f32.mrb[0].mxu0
    %v6594 = vpop.f32.mrb[0].mxu0
    %6595 = vdwg.mxu0
    %6596 = vmatprep.subr.bf16.mxu0 %v5411
    %6597 = vmatpush1.bf16.msra.mxu0 %v5410
    %6598 = vmatprep.subr.bf16.mxu0 %v5419
    %6599 = vmatpush1.bf16.msra.mxu0 %v5418
    %6600 = vmatprep.subr.bf16.mxu0 %v5427
    %6601 = vmatpush1.bf16.msra.mxu0 %v5426
    %6602 = vmatprep.subr.bf16.mxu0 %v5435
    %6603 = vmatpush1.bf16.msra.mxu0 %v5434
    %6604 = vmatprep.subr.bf16.mxu0 %v5443
    %6605 = vmatpush1.bf16.msra.mxu0 %v5442
    %6606 = vmatprep.subr.bf16.mxu0 %v5451
    %6607 = vmatpush1.bf16.msra.mxu0 %v5450
    %6608 = vmatprep.subr.bf16.mxu0 %v5459
    %6609 = vmatpush1.bf16.msra.mxu0 %v5458
    %6610 = vmatprep.subr.bf16.mxu0 %v5467
    %6611 = vmatpush1.bf16.msra.mxu0 %v5466
    %6612 = vmatprep.subr.bf16.mxu0 %v5475
    %6613 = vmatpush1.bf16.msra.mxu0 %v5474
    %6614 = vmatprep.subr.bf16.mxu0 %v5483
    %6615 = vmatpush1.bf16.msra.mxu0 %v5482
    %6616 = vmatprep.subr.bf16.mxu0 %v5491
    %6617 = vmatpush1.bf16.msra.mxu0 %v5490
    %6618 = vmatprep.subr.bf16.mxu0 %v5499
    %6619 = vmatpush1.bf16.msra.mxu0 %v5498
    %6620 = vmatprep.subr.bf16.mxu0 %v5507
    %6621 = vmatpush1.bf16.msra.mxu0 %v5506
    %6622 = vmatprep.subr.bf16.mxu0 %v5515
    %6623 = vmatpush1.bf16.msra.mxu0 %v5514
    %6624 = vmatprep.subr.bf16.mxu0 %v5523
    %6625 = vmatpush1.bf16.msra.mxu0 %v5522
    %6626 = vmatprep.subr.bf16.mxu0 %v5531
    %6627 = vmatpush1.bf16.msra.mxu0 %v5530
    %6628 = vmatprep.mubr.bf16.mxu0 %v3311
    %6629 = vmatmul.mubr.bf16.gmra.mrb[0].mxu0 %v3310
    %v6630 = vpop.f32.mrb[0].mxu0
    %v6631 = vadd.f32 %v3843, %v6630
    %v6632 = vpop.f32.mrb[0].mxu0
    %v6633 = vadd.f32 %v3847, %v6632
    %v6634 = vpop.f32.mrb[0].mxu0
    %v6635 = vpop.f32.mrb[0].mxu0
    %6636 = vdwg.mxu0
    %6637 = vmatprep.subr.bf16.mxu0 %v5539
    %6638 = vmatpush1.bf16.msra.mxu0 %v5538
    %6639 = vmatprep.subr.bf16.mxu0 %v5547
    %6640 = vmatpush1.bf16.msra.mxu0 %v5546
    %6641 = vmatprep.subr.bf16.mxu0 %v5555
    %6642 = vmatpush1.bf16.msra.mxu0 %v5554
    %6643 = vmatprep.subr.bf16.mxu0 %v5563
    %6644 = vmatpush1.bf16.msra.mxu0 %v5562
    %6645 = vmatprep.subr.bf16.mxu0 %v5571
    %6646 = vmatpush1.bf16.msra.mxu0 %v5570
    %6647 = vmatprep.subr.bf16.mxu0 %v5579
    %6648 = vmatpush1.bf16.msra.mxu0 %v5578
    %6649 = vmatprep.subr.bf16.mxu0 %v5587
    %6650 = vmatpush1.bf16.msra.mxu0 %v5586
    %6651 = vmatprep.subr.bf16.mxu0 %v5595
    %6652 = vmatpush1.bf16.msra.mxu0 %v5594
    %6653 = vmatprep.subr.bf16.mxu0 %v5603
    %6654 = vmatpush1.bf16.msra.mxu0 %v5602
    %6655 = vmatprep.subr.bf16.mxu0 %v5611
    %6656 = vmatpush1.bf16.msra.mxu0 %v5610
    %6657 = vmatprep.subr.bf16.mxu0 %v5619
    %6658 = vmatpush1.bf16.msra.mxu0 %v5618
    %6659 = vmatprep.subr.bf16.mxu0 %v5627
    %6660 = vmatpush1.bf16.msra.mxu0 %v5626
    %6661 = vmatprep.subr.bf16.mxu0 %v5635
    %6662 = vmatpush1.bf16.msra.mxu0 %v5634
    %6663 = vmatprep.subr.bf16.mxu0 %v5643
    %6664 = vmatpush1.bf16.msra.mxu0 %v5642
    %6665 = vmatprep.subr.bf16.mxu0 %v5651
    %6666 = vmatpush1.bf16.msra.mxu0 %v5650
    %6667 = vmatprep.subr.bf16.mxu0 %v5659
    %6668 = vmatpush1.bf16.msra.mxu0 %v5658
    %6669 = vmatprep.mubr.bf16.mxu0 %v3313
    %6670 = vmatmul.mubr.bf16.gmra.mrb[0].mxu0 %v3312
    %v6671 = vpop.f32.mrb[0].mxu0
    %v6672 = vadd.f32 %v6631, %v6671
    %v6673 = vpop.f32.mrb[0].mxu0
    %v6674 = vadd.f32 %v6633, %v6673
    %v6675 = vpop.f32.mrb[0].mxu0
    %v6676 = vpop.f32.mrb[0].mxu0
    %6677 = vdwg.mxu0
    %6678 = vmatprep.subr.bf16.mxu0 %v5667
    %6679 = vmatpush1.bf16.msra.mxu0 %v5666
    %6680 = vmatprep.subr.bf16.mxu0 %v5675
    %6681 = vmatpush1.bf16.msra.mxu0 %v5674
    %6682 = vmatprep.subr.bf16.mxu0 %v5683
    %6683 = vmatpush1.bf16.msra.mxu0 %v5682
    %6684 = vmatprep.subr.bf16.mxu0 %v5691
    %6685 = vmatpush1.bf16.msra.mxu0 %v5690
    %6686 = vmatprep.subr.bf16.mxu0 %v5699
    %6687 = vmatpush1.bf16.msra.mxu0 %v5698
    %6688 = vmatprep.subr.bf16.mxu0 %v5707
    %6689 = vmatpush1.bf16.msra.mxu0 %v5706
    %6690 = vmatprep.subr.bf16.mxu0 %v5715
    %6691 = vmatpush1.bf16.msra.mxu0 %v5714
    %6692 = vmatprep.subr.bf16.mxu0 %v5723
    %6693 = vmatpush1.bf16.msra.mxu0 %v5722
    %6694 = vmatprep.subr.bf16.mxu0 %v5731
    %6695 = vmatpush1.bf16.msra.mxu0 %v5730
    %6696 = vmatprep.subr.bf16.mxu0 %v5739
    %6697 = vmatpush1.bf16.msra.mxu0 %v5738
    %6698 = vmatprep.subr.bf16.mxu0 %v5747
    %6699 = vmatpush1.bf16.msra.mxu0 %v5746
    %6700 = vmatprep.subr.bf16.mxu0 %v5755
    %6701 = vmatpush1.bf16.msra.mxu0 %v5754
    %6702 = vmatprep.subr.bf16.mxu0 %v5763
    %6703 = vmatpush1.bf16.msra.mxu0 %v5762
    %6704 = vmatprep.subr.bf16.mxu0 %v5771
    %6705 = vmatpush1.bf16.msra.mxu0 %v5770
    %6706 = vmatprep.subr.bf16.mxu0 %v5779
    %6707 = vmatpush1.bf16.msra.mxu0 %v5778
    %6708 = vmatprep.subr.bf16.mxu0 %v5787
    %6709 = vmatpush1.bf16.msra.mxu0 %v5786
    %6710 = vmatprep.mubr.bf16.mxu0 %v3315
    %6711 = vmatmul.mubr.bf16.gmra.mrb[0].mxu0 %v3314
    %v6712 = vpop.f32.mrb[0].mxu0
    %v6713 = vadd.f32 %v6672, %v6712
    %v6714 = vpop.f32.mrb[0].mxu0
    %v6715 = vadd.f32 %v6674, %v6714
    %v6716 = vpop.f32.mrb[0].mxu0
    %v6717 = vpop.f32.mrb[0].mxu0
    %6718 = vdwg.mxu0
    %6719 = vmatprep.subr.bf16.mxu0 %v5795
    %6720 = vmatpush1.bf16.msra.mxu0 %v5794
    %6721 = vmatprep.subr.bf16.mxu0 %v5803
    %6722 = vmatpush1.bf16.msra.mxu0 %v5802
    %6723 = vmatprep.subr.bf16.mxu0 %v5811
    %6724 = vmatpush1.bf16.msra.mxu0 %v5810
    %6725 = vmatprep.subr.bf16.mxu0 %v5819
    %6726 = vmatpush1.bf16.msra.mxu0 %v5818
    %6727 = vmatprep.subr.bf16.mxu0 %v5827
    %6728 = vmatpush1.bf16.msra.mxu0 %v5826
    %6729 = vmatprep.subr.bf16.mxu0 %v5835
    %6730 = vmatpush1.bf16.msra.mxu0 %v5834
    %6731 = vmatprep.subr.bf16.mxu0 %v5843
    %6732 = vmatpush1.bf16.msra.mxu0 %v5842
    %6733 = vmatprep.subr.bf16.mxu0 %v5851
    %6734 = vmatpush1.bf16.msra.mxu0 %v5850
    %6735 = vmatprep.subr.bf16.mxu0 %v5859
    %6736 = vmatpush1.bf16.msra.mxu0 %v5858
    %6737 = vmatprep.subr.bf16.mxu0 %v5867
    %6738 = vmatpush1.bf16.msra.mxu0 %v5866
    %6739 = vmatprep.subr.bf16.mxu0 %v5875
    %6740 = vmatpush1.bf16.msra.mxu0 %v5874
    %6741 = vmatprep.subr.bf16.mxu0 %v5883
    %6742 = vmatpush1.bf16.msra.mxu0 %v5882
    %6743 = vmatprep.subr.bf16.mxu0 %v5891
    %6744 = vmatpush1.bf16.msra.mxu0 %v5890
    %6745 = vmatprep.subr.bf16.mxu0 %v5899
    %6746 = vmatpush1.bf16.msra.mxu0 %v5898
    %6747 = vmatprep.subr.bf16.mxu0 %v5907
    %6748 = vmatpush1.bf16.msra.mxu0 %v5906
    %6749 = vmatprep.subr.bf16.mxu0 %v5915
    %6750 = vmatpush1.bf16.msra.mxu0 %v5914
    %6751 = vmatprep.mubr.bf16.mxu0 %v3317
    %6752 = vmatmul.mubr.bf16.gmra.mrb[0].mxu0 %v3316
    %v6753 = vpop.f32.mrb[0].mxu0
    %v6754 = vadd.f32 %v6713, %v6753
    %v6755 = vpop.f32.mrb[0].mxu0
    %v6756 = vadd.f32 %v6715, %v6755
    %v6757 = vpop.f32.mrb[0].mxu0
    %v6758 = vpop.f32.mrb[0].mxu0
    %6759 = vdwg.mxu0
    %6760 = vmatprep.subr.bf16.mxu0 %v5413
    %6761 = vmatpush1.bf16.msra.mxu0 %v5412
    %6762 = vmatprep.subr.bf16.mxu0 %v5421
    %6763 = vmatpush1.bf16.msra.mxu0 %v5420
    %6764 = vmatprep.subr.bf16.mxu0 %v5429
    %6765 = vmatpush1.bf16.msra.mxu0 %v5428
    %6766 = vmatprep.subr.bf16.mxu0 %v5437
    %6767 = vmatpush1.bf16.msra.mxu0 %v5436
    %6768 = vmatprep.subr.bf16.mxu0 %v5445
    %6769 = vmatpush1.bf16.msra.mxu0 %v5444
    %6770 = vmatprep.subr.bf16.mxu0 %v5453
    %6771 = vmatpush1.bf16.msra.mxu0 %v5452
    %6772 = vmatprep.subr.bf16.mxu0 %v5461
    %6773 = vmatpush1.bf16.msra.mxu0 %v5460
    %6774 = vmatprep.subr.bf16.mxu0 %v5469
    %6775 = vmatpush1.bf16.msra.mxu0 %v5468
    %6776 = vmatprep.subr.bf16.mxu0 %v5477
    %6777 = vmatpush1.bf16.msra.mxu0 %v5476
    %6778 = vmatprep.subr.bf16.mxu0 %v5485
    %6779 = vmatpush1.bf16.msra.mxu0 %v5484
    %6780 = vmatprep.subr.bf16.mxu0 %v5493
    %6781 = vmatpush1.bf16.msra.mxu0 %v5492
    %6782 = vmatprep.subr.bf16.mxu0 %v5501
    %6783 = vmatpush1.bf16.msra.mxu0 %v5500
    %6784 = vmatprep.subr.bf16.mxu0 %v5509
    %6785 = vmatpush1.bf16.msra.mxu0 %v5508
    %6786 = vmatprep.subr.bf16.mxu0 %v5517
    %6787 = vmatpush1.bf16.msra.mxu0 %v5516
    %6788 = vmatprep.subr.bf16.mxu0 %v5525
    %6789 = vmatpush1.bf16.msra.mxu0 %v5524
    %6790 = vmatprep.subr.bf16.mxu0 %v5533
    %6791 = vmatpush1.bf16.msra.mxu0 %v5532
    %6792 = vmatprep.mubr.bf16.mxu0 %v3311
    %6793 = vmatmul.mubr.bf16.gmra.mrb[0].mxu0 %v3310
    %v6794 = vpop.f32.mrb[0].mxu0
    %v6795 = vadd.f32 %v3851, %v6794
    %v6796 = vpop.f32.mrb[0].mxu0
    %v6797 = vadd.f32 %v3855, %v6796
    %v6798 = vpop.f32.mrb[0].mxu0
    %v6799 = vpop.f32.mrb[0].mxu0
    %6800 = vdwg.mxu0
    %6801 = vmatprep.subr.bf16.mxu0 %v5541
    %6802 = vmatpush1.bf16.msra.mxu0 %v5540
    %6803 = vmatprep.subr.bf16.mxu0 %v5549
    %6804 = vmatpush1.bf16.msra.mxu0 %v5548
    %6805 = vmatprep.subr.bf16.mxu0 %v5557
    %6806 = vmatpush1.bf16.msra.mxu0 %v5556
    %6807 = vmatprep.subr.bf16.mxu0 %v5565
    %6808 = vmatpush1.bf16.msra.mxu0 %v5564
    %6809 = vmatprep.subr.bf16.mxu0 %v5573
    %6810 = vmatpush1.bf16.msra.mxu0 %v5572
    %6811 = vmatprep.subr.bf16.mxu0 %v5581
    %6812 = vmatpush1.bf16.msra.mxu0 %v5580
    %6813 = vmatprep.subr.bf16.mxu0 %v5589
    %6814 = vmatpush1.bf16.msra.mxu0 %v5588
    %6815 = vmatprep.subr.bf16.mxu0 %v5597
    %6816 = vmatpush1.bf16.msra.mxu0 %v5596
    %6817 = vmatprep.subr.bf16.mxu0 %v5605
    %6818 = vmatpush1.bf16.msra.mxu0 %v5604
    %6819 = vmatprep.subr.bf16.mxu0 %v5613
    %6820 = vmatpush1.bf16.msra.mxu0 %v5612
    %6821 = vmatprep.subr.bf16.mxu0 %v5621
    %6822 = vmatpush1.bf16.msra.mxu0 %v5620
    %6823 = vmatprep.subr.bf16.mxu0 %v5629
    %6824 = vmatpush1.bf16.msra.mxu0 %v5628
    %6825 = vmatprep.subr.bf16.mxu0 %v5637
    %6826 = vmatpush1.bf16.msra.mxu0 %v5636
    %6827 = vmatprep.subr.bf16.mxu0 %v5645
    %6828 = vmatpush1.bf16.msra.mxu0 %v5644
    %6829 = vmatprep.subr.bf16.mxu0 %v5653
    %6830 = vmatpush1.bf16.msra.mxu0 %v5652
    %6831 = vmatprep.subr.bf16.mxu0 %v5661
    %6832 = vmatpush1.bf16.msra.mxu0 %v5660
    %6833 = vmatprep.mubr.bf16.mxu0 %v3313
    %6834 = vmatmul.mubr.bf16.gmra.mrb[0].mxu0 %v3312
    %v6835 = vpop.f32.mrb[0].mxu0
    %v6836 = vadd.f32 %v6795, %v6835
    %v6837 = vpop.f32.mrb[0].mxu0
    %v6838 = vadd.f32 %v6797, %v6837
    %v6839 = vpop.f32.mrb[0].mxu0
    %v6840 = vpop.f32.mrb[0].mxu0
    %6841 = vdwg.mxu0
    %6842 = vmatprep.subr.bf16.mxu0 %v5669
    %6843 = vmatpush1.bf16.msra.mxu0 %v5668
    %6844 = vmatprep.subr.bf16.mxu0 %v5677
    %6845 = vmatpush1.bf16.msra.mxu0 %v5676
    %6846 = vmatprep.subr.bf16.mxu0 %v5685
    %6847 = vmatpush1.bf16.msra.mxu0 %v5684
    %6848 = vmatprep.subr.bf16.mxu0 %v5693
    %6849 = vmatpush1.bf16.msra.mxu0 %v5692
    %6850 = vmatprep.subr.bf16.mxu0 %v5701
    %6851 = vmatpush1.bf16.msra.mxu0 %v5700
    %6852 = vmatprep.subr.bf16.mxu0 %v5709
    %6853 = vmatpush1.bf16.msra.mxu0 %v5708
    %6854 = vmatprep.subr.bf16.mxu0 %v5717
    %6855 = vmatpush1.bf16.msra.mxu0 %v5716
    %6856 = vmatprep.subr.bf16.mxu0 %v5725
    %6857 = vmatpush1.bf16.msra.mxu0 %v5724
    %6858 = vmatprep.subr.bf16.mxu0 %v5733
    %6859 = vmatpush1.bf16.msra.mxu0 %v5732
    %6860 = vmatprep.subr.bf16.mxu0 %v5741
    %6861 = vmatpush1.bf16.msra.mxu0 %v5740
    %6862 = vmatprep.subr.bf16.mxu0 %v5749
    %6863 = vmatpush1.bf16.msra.mxu0 %v5748
    %6864 = vmatprep.subr.bf16.mxu0 %v5757
    %6865 = vmatpush1.bf16.msra.mxu0 %v5756
    %6866 = vmatprep.subr.bf16.mxu0 %v5765
    %6867 = vmatpush1.bf16.msra.mxu0 %v5764
    %6868 = vmatprep.subr.bf16.mxu0 %v5773
    %6869 = vmatpush1.bf16.msra.mxu0 %v5772
    %6870 = vmatprep.subr.bf16.mxu0 %v5781
    %6871 = vmatpush1.bf16.msra.mxu0 %v5780
    %6872 = vmatprep.subr.bf16.mxu0 %v5789
    %6873 = vmatpush1.bf16.msra.mxu0 %v5788
    %6874 = vmatprep.mubr.bf16.mxu0 %v3315
    %6875 = vmatmul.mubr.bf16.gmra.mrb[0].mxu0 %v3314
    %v6876 = vpop.f32.mrb[0].mxu0
    %v6877 = vadd.f32 %v6836, %v6876
    %v6878 = vpop.f32.mrb[0].mxu0
    %v6879 = vadd.f32 %v6838, %v6878
    %v6880 = vpop.f32.mrb[0].mxu0
    %v6881 = vpop.f32.mrb[0].mxu0
    %6882 = vdwg.mxu0
    %6883 = vmatprep.subr.bf16.mxu0 %v5797
    %6884 = vmatpush1.bf16.msra.mxu0 %v5796
    %6885 = vmatprep.subr.bf16.mxu0 %v5805
    %6886 = vmatpush1.bf16.msra.mxu0 %v5804
    %6887 = vmatprep.subr.bf16.mxu0 %v5813
    %6888 = vmatpush1.bf16.msra.mxu0 %v5812
    %6889 = vmatprep.subr.bf16.mxu0 %v5821
    %6890 = vmatpush1.bf16.msra.mxu0 %v5820
    %6891 = vmatprep.subr.bf16.mxu0 %v5829
    %6892 = vmatpush1.bf16.msra.mxu0 %v5828
    %6893 = vmatprep.subr.bf16.mxu0 %v5837
    %6894 = vmatpush1.bf16.msra.mxu0 %v5836
    %6895 = vmatprep.subr.bf16.mxu0 %v5845
    %6896 = vmatpush1.bf16.msra.mxu0 %v5844
    %6897 = vmatprep.subr.bf16.mxu0 %v5853
    %6898 = vmatpush1.bf16.msra.mxu0 %v5852
    %6899 = vmatprep.subr.bf16.mxu0 %v5861
    %6900 = vmatpush1.bf16.msra.mxu0 %v5860
    %6901 = vmatprep.subr.bf16.mxu0 %v5869
    %6902 = vmatpush1.bf16.msra.mxu0 %v5868
    %6903 = vmatprep.subr.bf16.mxu0 %v5877
    %6904 = vmatpush1.bf16.msra.mxu0 %v5876
    %6905 = vmatprep.subr.bf16.mxu0 %v5885
    %6906 = vmatpush1.bf16.msra.mxu0 %v5884
    %6907 = vmatprep.subr.bf16.mxu0 %v5893
    %6908 = vmatpush1.bf16.msra.mxu0 %v5892
    %6909 = vmatprep.subr.bf16.mxu0 %v5901
    %6910 = vmatpush1.bf16.msra.mxu0 %v5900
    %6911 = vmatprep.subr.bf16.mxu0 %v5909
    %6912 = vmatpush1.bf16.msra.mxu0 %v5908
    %6913 = vmatprep.subr.bf16.mxu0 %v5917
    %6914 = vmatpush1.bf16.msra.mxu0 %v5916
    %6915 = vmatprep.mubr.bf16.mxu0 %v3317
    %6916 = vmatmul.mubr.bf16.gmra.mrb[0].mxu0 %v3316
    %v6917 = vpop.f32.mrb[0].mxu0
    %v6918 = vadd.f32 %v6877, %v6917
    %v6919 = vpop.f32.mrb[0].mxu0
    %v6920 = vadd.f32 %v6879, %v6919
    %v6921 = vpop.f32.mrb[0].mxu0
    %v6922 = vpop.f32.mrb[0].mxu0
    %6923 = vdwg.mxu0
    %6924 = vmatprep.subr.bf16.mxu0 %v5415
    %6925 = vmatpush1.bf16.msra.mxu0 %v5414
    %6926 = vmatprep.subr.bf16.mxu0 %v5423
    %6927 = vmatpush1.bf16.msra.mxu0 %v5422
    %6928 = vmatprep.subr.bf16.mxu0 %v5431
    %6929 = vmatpush1.bf16.msra.mxu0 %v5430
    %6930 = vmatprep.subr.bf16.mxu0 %v5439
    %6931 = vmatpush1.bf16.msra.mxu0 %v5438
    %6932 = vmatprep.subr.bf16.mxu0 %v5447
    %6933 = vmatpush1.bf16.msra.mxu0 %v5446
    %6934 = vmatprep.subr.bf16.mxu0 %v5455
    %6935 = vmatpush1.bf16.msra.mxu0 %v5454
    %6936 = vmatprep.subr.bf16.mxu0 %v5463
    %6937 = vmatpush1.bf16.msra.mxu0 %v5462
    %6938 = vmatprep.subr.bf16.mxu0 %v5471
    %6939 = vmatpush1.bf16.msra.mxu0 %v5470
    %6940 = vmatprep.subr.bf16.mxu0 %v5479
    %6941 = vmatpush1.bf16.msra.mxu0 %v5478
    %6942 = vmatprep.subr.bf16.mxu0 %v5487
    %6943 = vmatpush1.bf16.msra.mxu0 %v5486
    %6944 = vmatprep.subr.bf16.mxu0 %v5495
    %6945 = vmatpush1.bf16.msra.mxu0 %v5494
    %6946 = vmatprep.subr.bf16.mxu0 %v5503
    %6947 = vmatpush1.bf16.msra.mxu0 %v5502
    %6948 = vmatprep.subr.bf16.mxu0 %v5511
    %6949 = vmatpush1.bf16.msra.mxu0 %v5510
    %6950 = vmatprep.subr.bf16.mxu0 %v5519
    %6951 = vmatpush1.bf16.msra.mxu0 %v5518
    %6952 = vmatprep.subr.bf16.mxu0 %v5527
    %6953 = vmatpush1.bf16.msra.mxu0 %v5526
    %6954 = vmatprep.subr.bf16.mxu0 %v5535
    %6955 = vmatpush1.bf16.msra.mxu0 %v5534
    %6956 = vmatprep.mubr.bf16.mxu0 %v3311
    %6957 = vmatmul.mubr.bf16.gmra.mrb[0].mxu0 %v3310
    %v6958 = vpop.f32.mrb[0].mxu0
    %v6959 = vadd.f32 %v3859, %v6958
    %v6960 = vpop.f32.mrb[0].mxu0
    %v6961 = vadd.f32 %v3863, %v6960
    %v6962 = vpop.f32.mrb[0].mxu0
    %v6963 = vpop.f32.mrb[0].mxu0
    %6964 = vdwg.mxu0
    %6965 = vmatprep.subr.bf16.mxu0 %v5543
    %6966 = vmatpush1.bf16.msra.mxu0 %v5542
    %6967 = vmatprep.subr.bf16.mxu0 %v5551
    %6968 = vmatpush1.bf16.msra.mxu0 %v5550
    %6969 = vmatprep.subr.bf16.mxu0 %v5559
    %6970 = vmatpush1.bf16.msra.mxu0 %v5558
    %6971 = vmatprep.subr.bf16.mxu0 %v5567
    %6972 = vmatpush1.bf16.msra.mxu0 %v5566
    %6973 = vmatprep.subr.bf16.mxu0 %v5575
    %6974 = vmatpush1.bf16.msra.mxu0 %v5574
    %6975 = vmatprep.subr.bf16.mxu0 %v5583
    %6976 = vmatpush1.bf16.msra.mxu0 %v5582
    %6977 = vmatprep.subr.bf16.mxu0 %v5591
    %6978 = vmatpush1.bf16.msra.mxu0 %v5590
    %6979 = vmatprep.subr.bf16.mxu0 %v5599
    %6980 = vmatpush1.bf16.msra.mxu0 %v5598
    %6981 = vmatprep.subr.bf16.mxu0 %v5607
    %6982 = vmatpush1.bf16.msra.mxu0 %v5606
    %6983 = vmatprep.subr.bf16.mxu0 %v5615
    %6984 = vmatpush1.bf16.msra.mxu0 %v5614
    %6985 = vmatprep.subr.bf16.mxu0 %v5623
    %6986 = vmatpush1.bf16.msra.mxu0 %v5622
    %6987 = vmatprep.subr.bf16.mxu0 %v5631
    %6988 = vmatpush1.bf16.msra.mxu0 %v5630
    %6989 = vmatprep.subr.bf16.mxu0 %v5639
    %6990 = vmatpush1.bf16.msra.mxu0 %v5638
    %6991 = vmatprep.subr.bf16.mxu0 %v5647
    %6992 = vmatpush1.bf16.msra.mxu0 %v5646
    %6993 = vmatprep.subr.bf16.mxu0 %v5655
    %6994 = vmatpush1.bf16.msra.mxu0 %v5654
    %6995 = vmatprep.subr.bf16.mxu0 %v5663
    %6996 = vmatpush1.bf16.msra.mxu0 %v5662
    %6997 = vmatprep.mubr.bf16.mxu0 %v3313
    %6998 = vmatmul.mubr.bf16.gmra.mrb[0].mxu0 %v3312
    %v6999 = vpop.f32.mrb[0].mxu0
    %v7000 = vadd.f32 %v6959, %v6999
    %v7001 = vpop.f32.mrb[0].mxu0
    %v7002 = vadd.f32 %v6961, %v7001
    %v7003 = vpop.f32.mrb[0].mxu0
    %v7004 = vpop.f32.mrb[0].mxu0
    %7005 = vdwg.mxu0
    %7006 = vmatprep.subr.bf16.mxu0 %v5671
    %7007 = vmatpush1.bf16.msra.mxu0 %v5670
    %7008 = vmatprep.subr.bf16.mxu0 %v5679
    %7009 = vmatpush1.bf16.msra.mxu0 %v5678
    %7010 = vmatprep.subr.bf16.mxu0 %v5687
    %7011 = vmatpush1.bf16.msra.mxu0 %v5686
    %7012 = vmatprep.subr.bf16.mxu0 %v5695
    %7013 = vmatpush1.bf16.msra.mxu0 %v5694
    %7014 = vmatprep.subr.bf16.mxu0 %v5703
    %7015 = vmatpush1.bf16.msra.mxu0 %v5702
    %7016 = vmatprep.subr.bf16.mxu0 %v5711
    %7017 = vmatpush1.bf16.msra.mxu0 %v5710
    %7018 = vmatprep.subr.bf16.mxu0 %v5719
    %7019 = vmatpush1.bf16.msra.mxu0 %v5718
    %7020 = vmatprep.subr.bf16.mxu0 %v5727
    %7021 = vmatpush1.bf16.msra.mxu0 %v5726
    %7022 = vmatprep.subr.bf16.mxu0 %v5735
    %7023 = vmatpush1.bf16.msra.mxu0 %v5734
    %7024 = vmatprep.subr.bf16.mxu0 %v5743
    %7025 = vmatpush1.bf16.msra.mxu0 %v5742
    %7026 = vmatprep.subr.bf16.mxu0 %v5751
    %7027 = vmatpush1.bf16.msra.mxu0 %v5750
    %7028 = vmatprep.subr.bf16.mxu0 %v5759
    %7029 = vmatpush1.bf16.msra.mxu0 %v5758
    %7030 = vmatprep.subr.bf16.mxu0 %v5767
    %7031 = vmatpush1.bf16.msra.mxu0 %v5766
    %7032 = vmatprep.subr.bf16.mxu0 %v5775
    %7033 = vmatpush1.bf16.msra.mxu0 %v5774
    %7034 = vmatprep.subr.bf16.mxu0 %v5783
    %7035 = vmatpush1.bf16.msra.mxu0 %v5782
    %7036 = vmatprep.subr.bf16.mxu0 %v5791
    %7037 = vmatpush1.bf16.msra.mxu0 %v5790
    %7038 = vmatprep.mubr.bf16.mxu0 %v3315
    %7039 = vmatmul.mubr.bf16.gmra.mrb[0].mxu0 %v3314
    %v7040 = vpop.f32.mrb[0].mxu0
    %v7041 = vadd.f32 %v7000, %v7040
    %v7042 = vpop.f32.mrb[0].mxu0
    %v7043 = vadd.f32 %v7002, %v7042
    %v7044 = vpop.f32.mrb[0].mxu0
    %v7045 = vpop.f32.mrb[0].mxu0
    %7046 = vdwg.mxu0
    %7047 = vmatprep.subr.bf16.mxu0 %v5799
    %7048 = vmatpush1.bf16.msra.mxu0 %v5798
    %7049 = vmatprep.subr.bf16.mxu0 %v5807
    %7050 = vmatpush1.bf16.msra.mxu0 %v5806
    %7051 = vmatprep.subr.bf16.mxu0 %v5815
    %7052 = vmatpush1.bf16.msra.mxu0 %v5814
    %7053 = vmatprep.subr.bf16.mxu0 %v5823
    %7054 = vmatpush1.bf16.msra.mxu0 %v5822
    %7055 = vmatprep.subr.bf16.mxu0 %v5831
    %7056 = vmatpush1.bf16.msra.mxu0 %v5830
    %7057 = vmatprep.subr.bf16.mxu0 %v5839
    %7058 = vmatpush1.bf16.msra.mxu0 %v5838
    %7059 = vmatprep.subr.bf16.mxu0 %v5847
    %7060 = vmatpush1.bf16.msra.mxu0 %v5846
    %7061 = vmatprep.subr.bf16.mxu0 %v5855
    %7062 = vmatpush1.bf16.msra.mxu0 %v5854
    %7063 = vmatprep.subr.bf16.mxu0 %v5863
    %7064 = vmatpush1.bf16.msra.mxu0 %v5862
    %7065 = vmatprep.subr.bf16.mxu0 %v5871
    %7066 = vmatpush1.bf16.msra.mxu0 %v5870
    %7067 = vmatprep.subr.bf16.mxu0 %v5879
    %7068 = vmatpush1.bf16.msra.mxu0 %v5878
    %7069 = vmatprep.subr.bf16.mxu0 %v5887
    %7070 = vmatpush1.bf16.msra.mxu0 %v5886
    %7071 = vmatprep.subr.bf16.mxu0 %v5895
    %7072 = vmatpush1.bf16.msra.mxu0 %v5894
    %7073 = vmatprep.subr.bf16.mxu0 %v5903
    %7074 = vmatpush1.bf16.msra.mxu0 %v5902
    %7075 = vmatprep.subr.bf16.mxu0 %v5911
    %7076 = vmatpush1.bf16.msra.mxu0 %v5910
    %7077 = vmatprep.subr.bf16.mxu0 %v5919
    %7078 = vmatpush1.bf16.msra.mxu0 %v5918
    %7079 = vmatprep.mubr.bf16.mxu0 %v3317
    %7080 = vmatmul.mubr.bf16.gmra.mrb[0].mxu0 %v3316
    %v7081 = vpop.f32.mrb[0].mxu0
    %v7082 = vadd.f32 %v7041, %v7081
    %v7083 = vpop.f32.mrb[0].mxu0
    %v7084 = vadd.f32 %v7043, %v7083
    %v7085 = vpop.f32.mrb[0].mxu0
    %v7086 = vpop.f32.mrb[0].mxu0
    %7087 = vdwg.mxu0
    %v7088 = vmax.f32 %v6590, 0.0
    %v7089 = vmax.f32 %v6592, 0.0
    %v7090 = vmax.f32 %v6754, 0.0
    %v7091 = vmax.f32 %v6756, 0.0
    %v7092 = vmax.f32 %v6918, 0.0
    %v7093 = vmax.f32 %v6920, 0.0
    %v7094 = vmax.f32 %v7082, 0.0
    %v7095 = vmax.f32 %v7084, 0.0
    %v7096 = vpack.c.bf16 %v7088, %v7088
    %v7097 = vpack.c.bf16 %v7089, %v7089
    %v7098 = vpack.c.bf16 %v7090, %v7090
    %v7099 = vpack.c.bf16 %v7091, %v7091
    %v7100 = vpack.c.bf16 %v7092, %v7092
    %v7101 = vpack.c.bf16 %v7093, %v7093
    %v7102 = vpack.c.bf16 %v7094, %v7094
    %v7103 = vpack.c.bf16 %v7095, %v7095
    %v7104 = vld [vmem:[#allocation16] sm:$0xff]
    %v7105 = vld [vmem:[#allocation16 + $0x8] sm:$0xff]
    %v7106 = vld [vmem:[#allocation16 + $0x10] sm:$0xff]
    %v7107 = vld [vmem:[#allocation16 + $0x18] sm:$0xff]
    %v7108 = vld [vmem:[#allocation16 + $0x20] sm:$0xff]
    %v7109 = vld [vmem:[#allocation16 + $0x28] sm:$0xff]
    %v7110 = vld [vmem:[#allocation16 + $0x30] sm:$0xff]
    %v7111 = vld [vmem:[#allocation16 + $0x38] sm:$0xff]
    %v7112 = vld [vmem:[#allocation16 + $0x40] sm:$0xff]
    %v7113 = vld [vmem:[#allocation16 + $0x48] sm:$0xff]
    %v7114 = vld [vmem:[#allocation16 + $0x50] sm:$0xff]
    %v7115 = vld [vmem:[#allocation16 + $0x58] sm:$0xff]
    %v7116 = vld [vmem:[#allocation16 + $0x60] sm:$0xff]
    %v7117 = vld [vmem:[#allocation16 + $0x68] sm:$0xff]
    %v7118 = vld [vmem:[#allocation16 + $0x70] sm:$0xff]
    %v7119 = vld [vmem:[#allocation16 + $0x78] sm:$0xff]
    %v7120 = vld [vmem:[#allocation16 + $0x80] sm:$0xff]
    %v7121 = vld [vmem:[#allocation16 + $0x88] sm:$0xff]
    %v7122 = vld [vmem:[#allocation16 + $0x90] sm:$0xff]
    %v7123 = vld [vmem:[#allocation16 + $0x98] sm:$0xff]
    %v7124 = vld [vmem:[#allocation16 + $0xa0] sm:$0xff]
    %v7125 = vld [vmem:[#allocation16 + $0xa8] sm:$0xff]
    %v7126 = vld [vmem:[#allocation16 + $0xb0] sm:$0xff]
    %v7127 = vld [vmem:[#allocation16 + $0xb8] sm:$0xff]
    %v7128 = vld [vmem:[#allocation16 + $0xc0] sm:$0xff]
    %v7129 = vld [vmem:[#allocation16 + $0xc8] sm:$0xff]
    %v7130 = vld [vmem:[#allocation16 + $0xd0] sm:$0xff]
    %v7131 = vld [vmem:[#allocation16 + $0xd8] sm:$0xff]
    %v7132 = vld [vmem:[#allocation16 + $0xe0] sm:$0xff]
    %v7133 = vld [vmem:[#allocation16 + $0xe8] sm:$0xff]
    %v7134 = vld [vmem:[#allocation16 + $0xf0] sm:$0xff]
    %v7135 = vld [vmem:[#allocation16 + $0xf8] sm:$0xff]
    %v7136 = vld [vmem:[#allocation16 + $0x100] sm:$0xff]
    %v7137 = vld [vmem:[#allocation16 + $0x108] sm:$0xff]
    %v7138 = vld [vmem:[#allocation16 + $0x110] sm:$0xff]
    %v7139 = vld [vmem:[#allocation16 + $0x118] sm:$0xff]
    %v7140 = vld [vmem:[#allocation16 + $0x120] sm:$0xff]
    %v7141 = vld [vmem:[#allocation16 + $0x128] sm:$0xff]
    %v7142 = vld [vmem:[#allocation16 + $0x130] sm:$0xff]
    %v7143 = vld [vmem:[#allocation16 + $0x138] sm:$0xff]
    %v7144 = vld [vmem:[#allocation16 + $0x140] sm:$0xff]
    %v7145 = vld [vmem:[#allocation16 + $0x148] sm:$0xff]
    %v7146 = vld [vmem:[#allocation16 + $0x150] sm:$0xff]
    %v7147 = vld [vmem:[#allocation16 + $0x158] sm:$0xff]
    %v7148 = vld [vmem:[#allocation16 + $0x160] sm:$0xff]
    %v7149 = vld [vmem:[#allocation16 + $0x168] sm:$0xff]
    %v7150 = vld [vmem:[#allocation16 + $0x170] sm:$0xff]
    %v7151 = vld [vmem:[#allocation16 + $0x178] sm:$0xff]
    %v7152 = vld [vmem:[#allocation16 + $0x180] sm:$0xff]
    %v7153 = vld [vmem:[#allocation16 + $0x188] sm:$0xff]
    %v7154 = vld [vmem:[#allocation16 + $0x190] sm:$0xff]
    %v7155 = vld [vmem:[#allocation16 + $0x198] sm:$0xff]
    %v7156 = vld [vmem:[#allocation16 + $0x1a0] sm:$0xff]
    %v7157 = vld [vmem:[#allocation16 + $0x1a8] sm:$0xff]
    %v7158 = vld [vmem:[#allocation16 + $0x1b0] sm:$0xff]
    %v7159 = vld [vmem:[#allocation16 + $0x1b8] sm:$0xff]
    %v7160 = vld [vmem:[#allocation16 + $0x1c0] sm:$0xff]
    %v7161 = vld [vmem:[#allocation16 + $0x1c8] sm:$0xff]
    %v7162 = vld [vmem:[#allocation16 + $0x1d0] sm:$0xff]
    %v7163 = vld [vmem:[#allocation16 + $0x1d8] sm:$0xff]
    %v7164 = vld [vmem:[#allocation16 + $0x1e0] sm:$0xff]
    %v7165 = vld [vmem:[#allocation16 + $0x1e8] sm:$0xff]
    %v7166 = vld [vmem:[#allocation16 + $0x1f0] sm:$0xff]
    %v7167 = vld [vmem:[#allocation16 + $0x1f8] sm:$0xff]
    %v7168 = vld [vmem:[#allocation16 + $0x200] sm:$0xff]
    %v7169 = vld [vmem:[#allocation16 + $0x208] sm:$0xff]
    %v7170 = vld [vmem:[#allocation16 + $0x210] sm:$0xff]
    %v7171 = vld [vmem:[#allocation16 + $0x218] sm:$0xff]
    %v7172 = vld [vmem:[#allocation16 + $0x220] sm:$0xff]
    %v7173 = vld [vmem:[#allocation16 + $0x228] sm:$0xff]
    %v7174 = vld [vmem:[#allocation16 + $0x230] sm:$0xff]
    %v7175 = vld [vmem:[#allocation16 + $0x238] sm:$0xff]
    %v7176 = vld [vmem:[#allocation16 + $0x240] sm:$0xff]
    %v7177 = vld [vmem:[#allocation16 + $0x248] sm:$0xff]
    %v7178 = vld [vmem:[#allocation16 + $0x250] sm:$0xff]
    %v7179 = vld [vmem:[#allocation16 + $0x258] sm:$0xff]
    %v7180 = vld [vmem:[#allocation16 + $0x260] sm:$0xff]
    %v7181 = vld [vmem:[#allocation16 + $0x268] sm:$0xff]
    %v7182 = vld [vmem:[#allocation16 + $0x270] sm:$0xff]
    %v7183 = vld [vmem:[#allocation16 + $0x278] sm:$0xff]
    %v7184 = vld [vmem:[#allocation16 + $0x280] sm:$0xff]
    %v7185 = vld [vmem:[#allocation16 + $0x288] sm:$0xff]
    %v7186 = vld [vmem:[#allocation16 + $0x290] sm:$0xff]
    %v7187 = vld [vmem:[#allocation16 + $0x298] sm:$0xff]
    %v7188 = vld [vmem:[#allocation16 + $0x2a0] sm:$0xff]
    %v7189 = vld [vmem:[#allocation16 + $0x2a8] sm:$0xff]
    %v7190 = vld [vmem:[#allocation16 + $0x2b0] sm:$0xff]
    %v7191 = vld [vmem:[#allocation16 + $0x2b8] sm:$0xff]
    %v7192 = vld [vmem:[#allocation16 + $0x2c0] sm:$0xff]
    %v7193 = vld [vmem:[#allocation16 + $0x2c8] sm:$0xff]
    %v7194 = vld [vmem:[#allocation16 + $0x2d0] sm:$0xff]
    %v7195 = vld [vmem:[#allocation16 + $0x2d8] sm:$0xff]
    %v7196 = vld [vmem:[#allocation16 + $0x2e0] sm:$0xff]
    %v7197 = vld [vmem:[#allocation16 + $0x2e8] sm:$0xff]
    %v7198 = vld [vmem:[#allocation16 + $0x2f0] sm:$0xff]
    %v7199 = vld [vmem:[#allocation16 + $0x2f8] sm:$0xff]
    %v7200 = vld [vmem:[#allocation16 + $0x300] sm:$0xff]
    %v7201 = vld [vmem:[#allocation16 + $0x308] sm:$0xff]
    %v7202 = vld [vmem:[#allocation16 + $0x310] sm:$0xff]
    %v7203 = vld [vmem:[#allocation16 + $0x318] sm:$0xff]
    %v7204 = vld [vmem:[#allocation16 + $0x320] sm:$0xff]
    %v7205 = vld [vmem:[#allocation16 + $0x328] sm:$0xff]
    %v7206 = vld [vmem:[#allocation16 + $0x330] sm:$0xff]
    %v7207 = vld [vmem:[#allocation16 + $0x338] sm:$0xff]
    %v7208 = vld [vmem:[#allocation16 + $0x340] sm:$0xff]
    %v7209 = vld [vmem:[#allocation16 + $0x348] sm:$0xff]
    %v7210 = vld [vmem:[#allocation16 + $0x350] sm:$0xff]
    %v7211 = vld [vmem:[#allocation16 + $0x358] sm:$0xff]
    %v7212 = vld [vmem:[#allocation16 + $0x360] sm:$0xff]
    %v7213 = vld [vmem:[#allocation16 + $0x368] sm:$0xff]
    %v7214 = vld [vmem:[#allocation16 + $0x370] sm:$0xff]
    %v7215 = vld [vmem:[#allocation16 + $0x378] sm:$0xff]
    %v7216 = vld [vmem:[#allocation16 + $0x380] sm:$0xff]
    %v7217 = vld [vmem:[#allocation16 + $0x388] sm:$0xff]
    %v7218 = vld [vmem:[#allocation16 + $0x390] sm:$0xff]
    %v7219 = vld [vmem:[#allocation16 + $0x398] sm:$0xff]
    %v7220 = vld [vmem:[#allocation16 + $0x3a0] sm:$0xff]
    %v7221 = vld [vmem:[#allocation16 + $0x3a8] sm:$0xff]
    %v7222 = vld [vmem:[#allocation16 + $0x3b0] sm:$0xff]
    %v7223 = vld [vmem:[#allocation16 + $0x3b8] sm:$0xff]
    %v7224 = vld [vmem:[#allocation16 + $0x3c0] sm:$0xff]
    %v7225 = vld [vmem:[#allocation16 + $0x3c8] sm:$0xff]
    %v7226 = vld [vmem:[#allocation16 + $0x3d0] sm:$0xff]
    %v7227 = vld [vmem:[#allocation16 + $0x3d8] sm:$0xff]
    %v7228 = vld [vmem:[#allocation16 + $0x3e0] sm:$0xff]
    %v7229 = vld [vmem:[#allocation16 + $0x3e8] sm:$0xff]
    %v7230 = vld [vmem:[#allocation16 + $0x3f0] sm:$0xff]
    %v7231 = vld [vmem:[#allocation16 + $0x3f8] sm:$0xff]
    %v7232 = vld [vmem:[#allocation16 + $0x400] sm:$0xff]
    %v7233 = vld [vmem:[#allocation16 + $0x408] sm:$0xff]
    %v7234 = vld [vmem:[#allocation16 + $0x410] sm:$0xff]
    %v7235 = vld [vmem:[#allocation16 + $0x418] sm:$0xff]
    %v7236 = vld [vmem:[#allocation16 + $0x420] sm:$0xff]
    %v7237 = vld [vmem:[#allocation16 + $0x428] sm:$0xff]
    %v7238 = vld [vmem:[#allocation16 + $0x430] sm:$0xff]
    %v7239 = vld [vmem:[#allocation16 + $0x438] sm:$0xff]
    %v7240 = vld [vmem:[#allocation16 + $0x440] sm:$0xff]
    %v7241 = vld [vmem:[#allocation16 + $0x448] sm:$0xff]
    %v7242 = vld [vmem:[#allocation16 + $0x450] sm:$0xff]
    %v7243 = vld [vmem:[#allocation16 + $0x458] sm:$0xff]
    %v7244 = vld [vmem:[#allocation16 + $0x460] sm:$0xff]
    %v7245 = vld [vmem:[#allocation16 + $0x468] sm:$0xff]
    %v7246 = vld [vmem:[#allocation16 + $0x470] sm:$0xff]
    %v7247 = vld [vmem:[#allocation16 + $0x478] sm:$0xff]
    %v7248 = vld [vmem:[#allocation16 + $0x480] sm:$0xff]
    %v7249 = vld [vmem:[#allocation16 + $0x488] sm:$0xff]
    %v7250 = vld [vmem:[#allocation16 + $0x490] sm:$0xff]
    %v7251 = vld [vmem:[#allocation16 + $0x498] sm:$0xff]
    %v7252 = vld [vmem:[#allocation16 + $0x4a0] sm:$0xff]
    %v7253 = vld [vmem:[#allocation16 + $0x4a8] sm:$0xff]
    %v7254 = vld [vmem:[#allocation16 + $0x4b0] sm:$0xff]
    %v7255 = vld [vmem:[#allocation16 + $0x4b8] sm:$0xff]
    %v7256 = vld [vmem:[#allocation16 + $0x4c0] sm:$0xff]
    %v7257 = vld [vmem:[#allocation16 + $0x4c8] sm:$0xff]
    %v7258 = vld [vmem:[#allocation16 + $0x4d0] sm:$0xff]
    %v7259 = vld [vmem:[#allocation16 + $0x4d8] sm:$0xff]
    %v7260 = vld [vmem:[#allocation16 + $0x4e0] sm:$0xff]
    %v7261 = vld [vmem:[#allocation16 + $0x4e8] sm:$0xff]
    %v7262 = vld [vmem:[#allocation16 + $0x4f0] sm:$0xff]
    %v7263 = vld [vmem:[#allocation16 + $0x4f8] sm:$0xff]
    %v7264 = vld [vmem:[#allocation16 + $0x500] sm:$0xff]
    %v7265 = vld [vmem:[#allocation16 + $0x508] sm:$0xff]
    %v7266 = vld [vmem:[#allocation16 + $0x510] sm:$0xff]
    %v7267 = vld [vmem:[#allocation16 + $0x518] sm:$0xff]
    %v7268 = vld [vmem:[#allocation16 + $0x520] sm:$0xff]
    %v7269 = vld [vmem:[#allocation16 + $0x528] sm:$0xff]
    %v7270 = vld [vmem:[#allocation16 + $0x530] sm:$0xff]
    %v7271 = vld [vmem:[#allocation16 + $0x538] sm:$0xff]
    %v7272 = vld [vmem:[#allocation16 + $0x540] sm:$0xff]
    %v7273 = vld [vmem:[#allocation16 + $0x548] sm:$0xff]
    %v7274 = vld [vmem:[#allocation16 + $0x550] sm:$0xff]
    %v7275 = vld [vmem:[#allocation16 + $0x558] sm:$0xff]
    %v7276 = vld [vmem:[#allocation16 + $0x560] sm:$0xff]
    %v7277 = vld [vmem:[#allocation16 + $0x568] sm:$0xff]
    %v7278 = vld [vmem:[#allocation16 + $0x570] sm:$0xff]
    %v7279 = vld [vmem:[#allocation16 + $0x578] sm:$0xff]
    %v7280 = vld [vmem:[#allocation16 + $0x580] sm:$0xff]
    %v7281 = vld [vmem:[#allocation16 + $0x588] sm:$0xff]
    %v7282 = vld [vmem:[#allocation16 + $0x590] sm:$0xff]
    %v7283 = vld [vmem:[#allocation16 + $0x598] sm:$0xff]
    %v7284 = vld [vmem:[#allocation16 + $0x5a0] sm:$0xff]
    %v7285 = vld [vmem:[#allocation16 + $0x5a8] sm:$0xff]
    %v7286 = vld [vmem:[#allocation16 + $0x5b0] sm:$0xff]
    %v7287 = vld [vmem:[#allocation16 + $0x5b8] sm:$0xff]
    %v7288 = vld [vmem:[#allocation16 + $0x5c0] sm:$0xff]
    %v7289 = vld [vmem:[#allocation16 + $0x5c8] sm:$0xff]
    %v7290 = vld [vmem:[#allocation16 + $0x5d0] sm:$0xff]
    %v7291 = vld [vmem:[#allocation16 + $0x5d8] sm:$0xff]
    %v7292 = vld [vmem:[#allocation16 + $0x5e0] sm:$0xff]
    %v7293 = vld [vmem:[#allocation16 + $0x5e8] sm:$0xff]
    %v7294 = vld [vmem:[#allocation16 + $0x5f0] sm:$0xff]
    %v7295 = vld [vmem:[#allocation16 + $0x5f8] sm:$0xff]
    %v7296 = vld [vmem:[#allocation16 + $0x600] sm:$0xff]
    %v7297 = vld [vmem:[#allocation16 + $0x608] sm:$0xff]
    %v7298 = vld [vmem:[#allocation16 + $0x610] sm:$0xff]
    %v7299 = vld [vmem:[#allocation16 + $0x618] sm:$0xff]
    %v7300 = vld [vmem:[#allocation16 + $0x620] sm:$0xff]
    %v7301 = vld [vmem:[#allocation16 + $0x628] sm:$0xff]
    %v7302 = vld [vmem:[#allocation16 + $0x630] sm:$0xff]
    %v7303 = vld [vmem:[#allocation16 + $0x638] sm:$0xff]
    %v7304 = vld [vmem:[#allocation16 + $0x640] sm:$0xff]
    %v7305 = vld [vmem:[#allocation16 + $0x648] sm:$0xff]
    %v7306 = vld [vmem:[#allocation16 + $0x650] sm:$0xff]
    %v7307 = vld [vmem:[#allocation16 + $0x658] sm:$0xff]
    %v7308 = vld [vmem:[#allocation16 + $0x660] sm:$0xff]
    %v7309 = vld [vmem:[#allocation16 + $0x668] sm:$0xff]
    %v7310 = vld [vmem:[#allocation16 + $0x670] sm:$0xff]
    %v7311 = vld [vmem:[#allocation16 + $0x678] sm:$0xff]
    %v7312 = vld [vmem:[#allocation16 + $0x680] sm:$0xff]
    %v7313 = vld [vmem:[#allocation16 + $0x688] sm:$0xff]
    %v7314 = vld [vmem:[#allocation16 + $0x690] sm:$0xff]
    %v7315 = vld [vmem:[#allocation16 + $0x698] sm:$0xff]
    %v7316 = vld [vmem:[#allocation16 + $0x6a0] sm:$0xff]
    %v7317 = vld [vmem:[#allocation16 + $0x6a8] sm:$0xff]
    %v7318 = vld [vmem:[#allocation16 + $0x6b0] sm:$0xff]
    %v7319 = vld [vmem:[#allocation16 + $0x6b8] sm:$0xff]
    %v7320 = vld [vmem:[#allocation16 + $0x6c0] sm:$0xff]
    %v7321 = vld [vmem:[#allocation16 + $0x6c8] sm:$0xff]
    %v7322 = vld [vmem:[#allocation16 + $0x6d0] sm:$0xff]
    %v7323 = vld [vmem:[#allocation16 + $0x6d8] sm:$0xff]
    %v7324 = vld [vmem:[#allocation16 + $0x6e0] sm:$0xff]
    %v7325 = vld [vmem:[#allocation16 + $0x6e8] sm:$0xff]
    %v7326 = vld [vmem:[#allocation16 + $0x6f0] sm:$0xff]
    %v7327 = vld [vmem:[#allocation16 + $0x6f8] sm:$0xff]
    %v7328 = vld [vmem:[#allocation16 + $0x700] sm:$0xff]
    %v7329 = vld [vmem:[#allocation16 + $0x708] sm:$0xff]
    %v7330 = vld [vmem:[#allocation16 + $0x710] sm:$0xff]
    %v7331 = vld [vmem:[#allocation16 + $0x718] sm:$0xff]
    %v7332 = vld [vmem:[#allocation16 + $0x720] sm:$0xff]
    %v7333 = vld [vmem:[#allocation16 + $0x728] sm:$0xff]
    %v7334 = vld [vmem:[#allocation16 + $0x730] sm:$0xff]
    %v7335 = vld [vmem:[#allocation16 + $0x738] sm:$0xff]
    %v7336 = vld [vmem:[#allocation16 + $0x740] sm:$0xff]
    %v7337 = vld [vmem:[#allocation16 + $0x748] sm:$0xff]
    %v7338 = vld [vmem:[#allocation16 + $0x750] sm:$0xff]
    %v7339 = vld [vmem:[#allocation16 + $0x758] sm:$0xff]
    %v7340 = vld [vmem:[#allocation16 + $0x760] sm:$0xff]
    %v7341 = vld [vmem:[#allocation16 + $0x768] sm:$0xff]
    %v7342 = vld [vmem:[#allocation16 + $0x770] sm:$0xff]
    %v7343 = vld [vmem:[#allocation16 + $0x778] sm:$0xff]
    %v7344 = vld [vmem:[#allocation16 + $0x780] sm:$0xff]
    %v7345 = vld [vmem:[#allocation16 + $0x788] sm:$0xff]
    %v7346 = vld [vmem:[#allocation16 + $0x790] sm:$0xff]
    %v7347 = vld [vmem:[#allocation16 + $0x798] sm:$0xff]
    %v7348 = vld [vmem:[#allocation16 + $0x7a0] sm:$0xff]
    %v7349 = vld [vmem:[#allocation16 + $0x7a8] sm:$0xff]
    %v7350 = vld [vmem:[#allocation16 + $0x7b0] sm:$0xff]
    %v7351 = vld [vmem:[#allocation16 + $0x7b8] sm:$0xff]
    %v7352 = vld [vmem:[#allocation16 + $0x7c0] sm:$0xff]
    %v7353 = vld [vmem:[#allocation16 + $0x7c8] sm:$0xff]
    %v7354 = vld [vmem:[#allocation16 + $0x7d0] sm:$0xff]
    %v7355 = vld [vmem:[#allocation16 + $0x7d8] sm:$0xff]
    %v7356 = vld [vmem:[#allocation16 + $0x7e0] sm:$0xff]
    %v7357 = vld [vmem:[#allocation16 + $0x7e8] sm:$0xff]
    %v7358 = vld [vmem:[#allocation16 + $0x7f0] sm:$0xff]
    %v7359 = vld [vmem:[#allocation16 + $0x7f8] sm:$0xff]
    %v7360 = vld [vmem:[#allocation17] sm:$0xf]
    %v7362 = vlaneseq
    %v7363 = vshrl.u32 %v7362, 7
    %v7364 = vsub.s32 0, %v7363
    %v7365 = vrot.slane %v7360, %v7364
    %v7366 = vlaneseq
    %v7367 = vshrl.u32 %v7366, 7
    %v7368 = vsub.s32 1, %v7367
    %v7369 = vrot.slane %v7360, %v7368
    %v7370 = vlaneseq
    %v7371 = vshrl.u32 %v7370, 7
    %v7372 = vsub.s32 2, %v7371
    %v7373 = vrot.slane %v7360, %v7372
    %v7374 = vlaneseq
    %v7375 = vshrl.u32 %v7374, 7
    %v7376 = vsub.s32 3, %v7375
    %v7377 = vrot.slane %v7360, %v7376
    %v7638 = vunpack.c.l.b16 %v7104
    %v7639 = vunpack.c.h.b16 %v7104
    %v7640 = vunpack.c.l.b16 %v7105
    %v7641 = vunpack.c.h.b16 %v7105
    %v7642 = vunpack.c.l.b16 %v7106
    %v7643 = vunpack.c.h.b16 %v7106
    %v7644 = vunpack.c.l.b16 %v7107
    %v7645 = vunpack.c.h.b16 %v7107
    %v7646 = vunpack.c.l.b16 %v7108
    %v7647 = vunpack.c.h.b16 %v7108
    %v7648 = vunpack.c.l.b16 %v7109
    %v7649 = vunpack.c.h.b16 %v7109
    %v7650 = vunpack.c.l.b16 %v7110
    %v7651 = vunpack.c.h.b16 %v7110
    %v7652 = vunpack.c.l.b16 %v7111
    %v7653 = vunpack.c.h.b16 %v7111
    %v7654 = vunpack.c.l.b16 %v7112
    %v7655 = vunpack.c.h.b16 %v7112
    %v7656 = vunpack.c.l.b16 %v7113
    %v7657 = vunpack.c.h.b16 %v7113
    %v7658 = vunpack.c.l.b16 %v7114
    %v7659 = vunpack.c.h.b16 %v7114
    %v7660 = vunpack.c.l.b16 %v7115
    %v7661 = vunpack.c.h.b16 %v7115
    %v7662 = vunpack.c.l.b16 %v7116
    %v7663 = vunpack.c.h.b16 %v7116
    %v7664 = vunpack.c.l.b16 %v7117
    %v7665 = vunpack.c.h.b16 %v7117
    %v7666 = vunpack.c.l.b16 %v7118
    %v7667 = vunpack.c.h.b16 %v7118
    %v7668 = vunpack.c.l.b16 %v7119
    %v7669 = vunpack.c.h.b16 %v7119
    %v7670 = vunpack.c.l.b16 %v7120
    %v7671 = vunpack.c.h.b16 %v7120
    %v7672 = vunpack.c.l.b16 %v7121
    %v7673 = vunpack.c.h.b16 %v7121
    %v7674 = vunpack.c.l.b16 %v7122
    %v7675 = vunpack.c.h.b16 %v7122
    %v7676 = vunpack.c.l.b16 %v7123
    %v7677 = vunpack.c.h.b16 %v7123
    %v7678 = vunpack.c.l.b16 %v7124
    %v7679 = vunpack.c.h.b16 %v7124
    %v7680 = vunpack.c.l.b16 %v7125
    %v7681 = vunpack.c.h.b16 %v7125
    %v7682 = vunpack.c.l.b16 %v7126
    %v7683 = vunpack.c.h.b16 %v7126
    %v7684 = vunpack.c.l.b16 %v7127
    %v7685 = vunpack.c.h.b16 %v7127
    %v7686 = vunpack.c.l.b16 %v7128
    %v7687 = vunpack.c.h.b16 %v7128
    %v7688 = vunpack.c.l.b16 %v7129
    %v7689 = vunpack.c.h.b16 %v7129
    %v7690 = vunpack.c.l.b16 %v7130
    %v7691 = vunpack.c.h.b16 %v7130
    %v7692 = vunpack.c.l.b16 %v7131
    %v7693 = vunpack.c.h.b16 %v7131
    %v7694 = vunpack.c.l.b16 %v7132
    %v7695 = vunpack.c.h.b16 %v7132
    %v7696 = vunpack.c.l.b16 %v7133
    %v7697 = vunpack.c.h.b16 %v7133
    %v7698 = vunpack.c.l.b16 %v7134
    %v7699 = vunpack.c.h.b16 %v7134
    %v7700 = vunpack.c.l.b16 %v7135
    %v7701 = vunpack.c.h.b16 %v7135
    %v7702 = vunpack.c.l.b16 %v7136
    %v7703 = vunpack.c.h.b16 %v7136
    %v7704 = vunpack.c.l.b16 %v7137
    %v7705 = vunpack.c.h.b16 %v7137
    %v7706 = vunpack.c.l.b16 %v7138
    %v7707 = vunpack.c.h.b16 %v7138
    %v7708 = vunpack.c.l.b16 %v7139
    %v7709 = vunpack.c.h.b16 %v7139
    %v7710 = vunpack.c.l.b16 %v7140
    %v7711 = vunpack.c.h.b16 %v7140
    %v7712 = vunpack.c.l.b16 %v7141
    %v7713 = vunpack.c.h.b16 %v7141
    %v7714 = vunpack.c.l.b16 %v7142
    %v7715 = vunpack.c.h.b16 %v7142
    %v7716 = vunpack.c.l.b16 %v7143
    %v7717 = vunpack.c.h.b16 %v7143
    %v7718 = vunpack.c.l.b16 %v7144
    %v7719 = vunpack.c.h.b16 %v7144
    %v7720 = vunpack.c.l.b16 %v7145
    %v7721 = vunpack.c.h.b16 %v7145
    %v7722 = vunpack.c.l.b16 %v7146
    %v7723 = vunpack.c.h.b16 %v7146
    %v7724 = vunpack.c.l.b16 %v7147
    %v7725 = vunpack.c.h.b16 %v7147
    %v7726 = vunpack.c.l.b16 %v7148
    %v7727 = vunpack.c.h.b16 %v7148
    %v7728 = vunpack.c.l.b16 %v7149
    %v7729 = vunpack.c.h.b16 %v7149
    %v7730 = vunpack.c.l.b16 %v7150
    %v7731 = vunpack.c.h.b16 %v7150
    %v7732 = vunpack.c.l.b16 %v7151
    %v7733 = vunpack.c.h.b16 %v7151
    %v7734 = vunpack.c.l.b16 %v7152
    %v7735 = vunpack.c.h.b16 %v7152
    %v7736 = vunpack.c.l.b16 %v7153
    %v7737 = vunpack.c.h.b16 %v7153
    %v7738 = vunpack.c.l.b16 %v7154
    %v7739 = vunpack.c.h.b16 %v7154
    %v7740 = vunpack.c.l.b16 %v7155
    %v7741 = vunpack.c.h.b16 %v7155
    %v7742 = vunpack.c.l.b16 %v7156
    %v7743 = vunpack.c.h.b16 %v7156
    %v7744 = vunpack.c.l.b16 %v7157
    %v7745 = vunpack.c.h.b16 %v7157
    %v7746 = vunpack.c.l.b16 %v7158
    %v7747 = vunpack.c.h.b16 %v7158
    %v7748 = vunpack.c.l.b16 %v7159
    %v7749 = vunpack.c.h.b16 %v7159
    %v7750 = vunpack.c.l.b16 %v7160
    %v7751 = vunpack.c.h.b16 %v7160
    %v7752 = vunpack.c.l.b16 %v7161
    %v7753 = vunpack.c.h.b16 %v7161
    %v7754 = vunpack.c.l.b16 %v7162
    %v7755 = vunpack.c.h.b16 %v7162
    %v7756 = vunpack.c.l.b16 %v7163
    %v7757 = vunpack.c.h.b16 %v7163
    %v7758 = vunpack.c.l.b16 %v7164
    %v7759 = vunpack.c.h.b16 %v7164
    %v7760 = vunpack.c.l.b16 %v7165
    %v7761 = vunpack.c.h.b16 %v7165
    %v7762 = vunpack.c.l.b16 %v7166
    %v7763 = vunpack.c.h.b16 %v7166
    %v7764 = vunpack.c.l.b16 %v7167
    %v7765 = vunpack.c.h.b16 %v7167
    %v7766 = vunpack.c.l.b16 %v7168
    %v7767 = vunpack.c.h.b16 %v7168
    %v7768 = vunpack.c.l.b16 %v7169
    %v7769 = vunpack.c.h.b16 %v7169
    %v7770 = vunpack.c.l.b16 %v7170
    %v7771 = vunpack.c.h.b16 %v7170
    %v7772 = vunpack.c.l.b16 %v7171
    %v7773 = vunpack.c.h.b16 %v7171
    %v7774 = vunpack.c.l.b16 %v7172
    %v7775 = vunpack.c.h.b16 %v7172
    %v7776 = vunpack.c.l.b16 %v7173
    %v7777 = vunpack.c.h.b16 %v7173
    %v7778 = vunpack.c.l.b16 %v7174
    %v7779 = vunpack.c.h.b16 %v7174
    %v7780 = vunpack.c.l.b16 %v7175
    %v7781 = vunpack.c.h.b16 %v7175
    %v7782 = vunpack.c.l.b16 %v7176
    %v7783 = vunpack.c.h.b16 %v7176
    %v7784 = vunpack.c.l.b16 %v7177
    %v7785 = vunpack.c.h.b16 %v7177
    %v7786 = vunpack.c.l.b16 %v7178
    %v7787 = vunpack.c.h.b16 %v7178
    %v7788 = vunpack.c.l.b16 %v7179
    %v7789 = vunpack.c.h.b16 %v7179
    %v7790 = vunpack.c.l.b16 %v7180
    %v7791 = vunpack.c.h.b16 %v7180
    %v7792 = vunpack.c.l.b16 %v7181
    %v7793 = vunpack.c.h.b16 %v7181
    %v7794 = vunpack.c.l.b16 %v7182
    %v7795 = vunpack.c.h.b16 %v7182
    %v7796 = vunpack.c.l.b16 %v7183
    %v7797 = vunpack.c.h.b16 %v7183
    %v7798 = vunpack.c.l.b16 %v7184
    %v7799 = vunpack.c.h.b16 %v7184
    %v7800 = vunpack.c.l.b16 %v7185
    %v7801 = vunpack.c.h.b16 %v7185
    %v7802 = vunpack.c.l.b16 %v7186
    %v7803 = vunpack.c.h.b16 %v7186
    %v7804 = vunpack.c.l.b16 %v7187
    %v7805 = vunpack.c.h.b16 %v7187
    %v7806 = vunpack.c.l.b16 %v7188
    %v7807 = vunpack.c.h.b16 %v7188
    %v7808 = vunpack.c.l.b16 %v7189
    %v7809 = vunpack.c.h.b16 %v7189
    %v7810 = vunpack.c.l.b16 %v7190
    %v7811 = vunpack.c.h.b16 %v7190
    %v7812 = vunpack.c.l.b16 %v7191
    %v7813 = vunpack.c.h.b16 %v7191
    %v7814 = vunpack.c.l.b16 %v7192
    %v7815 = vunpack.c.h.b16 %v7192
    %v7816 = vunpack.c.l.b16 %v7193
    %v7817 = vunpack.c.h.b16 %v7193
    %v7818 = vunpack.c.l.b16 %v7194
    %v7819 = vunpack.c.h.b16 %v7194
    %v7820 = vunpack.c.l.b16 %v7195
    %v7821 = vunpack.c.h.b16 %v7195
    %v7822 = vunpack.c.l.b16 %v7196
    %v7823 = vunpack.c.h.b16 %v7196
    %v7824 = vunpack.c.l.b16 %v7197
    %v7825 = vunpack.c.h.b16 %v7197
    %v7826 = vunpack.c.l.b16 %v7198
    %v7827 = vunpack.c.h.b16 %v7198
    %v7828 = vunpack.c.l.b16 %v7199
    %v7829 = vunpack.c.h.b16 %v7199
    %v7830 = vunpack.c.l.b16 %v7200
    %v7831 = vunpack.c.h.b16 %v7200
    %v7832 = vunpack.c.l.b16 %v7201
    %v7833 = vunpack.c.h.b16 %v7201
    %v7834 = vunpack.c.l.b16 %v7202
    %v7835 = vunpack.c.h.b16 %v7202
    %v7836 = vunpack.c.l.b16 %v7203
    %v7837 = vunpack.c.h.b16 %v7203
    %v7838 = vunpack.c.l.b16 %v7204
    %v7839 = vunpack.c.h.b16 %v7204
    %v7840 = vunpack.c.l.b16 %v7205
    %v7841 = vunpack.c.h.b16 %v7205
    %v7842 = vunpack.c.l.b16 %v7206
    %v7843 = vunpack.c.h.b16 %v7206
    %v7844 = vunpack.c.l.b16 %v7207
    %v7845 = vunpack.c.h.b16 %v7207
    %v7846 = vunpack.c.l.b16 %v7208
    %v7847 = vunpack.c.h.b16 %v7208
    %v7848 = vunpack.c.l.b16 %v7209
    %v7849 = vunpack.c.h.b16 %v7209
    %v7850 = vunpack.c.l.b16 %v7210
    %v7851 = vunpack.c.h.b16 %v7210
    %v7852 = vunpack.c.l.b16 %v7211
    %v7853 = vunpack.c.h.b16 %v7211
    %v7854 = vunpack.c.l.b16 %v7212
    %v7855 = vunpack.c.h.b16 %v7212
    %v7856 = vunpack.c.l.b16 %v7213
    %v7857 = vunpack.c.h.b16 %v7213
    %v7858 = vunpack.c.l.b16 %v7214
    %v7859 = vunpack.c.h.b16 %v7214
    %v7860 = vunpack.c.l.b16 %v7215
    %v7861 = vunpack.c.h.b16 %v7215
    %v7862 = vunpack.c.l.b16 %v7216
    %v7863 = vunpack.c.h.b16 %v7216
    %v7864 = vunpack.c.l.b16 %v7217
    %v7865 = vunpack.c.h.b16 %v7217
    %v7866 = vunpack.c.l.b16 %v7218
    %v7867 = vunpack.c.h.b16 %v7218
    %v7868 = vunpack.c.l.b16 %v7219
    %v7869 = vunpack.c.h.b16 %v7219
    %v7870 = vunpack.c.l.b16 %v7220
    %v7871 = vunpack.c.h.b16 %v7220
    %v7872 = vunpack.c.l.b16 %v7221
    %v7873 = vunpack.c.h.b16 %v7221
    %v7874 = vunpack.c.l.b16 %v7222
    %v7875 = vunpack.c.h.b16 %v7222
    %v7876 = vunpack.c.l.b16 %v7223
    %v7877 = vunpack.c.h.b16 %v7223
    %v7878 = vunpack.c.l.b16 %v7224
    %v7879 = vunpack.c.h.b16 %v7224
    %v7880 = vunpack.c.l.b16 %v7225
    %v7881 = vunpack.c.h.b16 %v7225
    %v7882 = vunpack.c.l.b16 %v7226
    %v7883 = vunpack.c.h.b16 %v7226
    %v7884 = vunpack.c.l.b16 %v7227
    %v7885 = vunpack.c.h.b16 %v7227
    %v7886 = vunpack.c.l.b16 %v7228
    %v7887 = vunpack.c.h.b16 %v7228
    %v7888 = vunpack.c.l.b16 %v7229
    %v7889 = vunpack.c.h.b16 %v7229
    %v7890 = vunpack.c.l.b16 %v7230
    %v7891 = vunpack.c.h.b16 %v7230
    %v7892 = vunpack.c.l.b16 %v7231
    %v7893 = vunpack.c.h.b16 %v7231
    %v7894 = vunpack.c.l.b16 %v7232
    %v7895 = vunpack.c.h.b16 %v7232
    %v7896 = vunpack.c.l.b16 %v7233
    %v7897 = vunpack.c.h.b16 %v7233
    %v7898 = vunpack.c.l.b16 %v7234
    %v7899 = vunpack.c.h.b16 %v7234
    %v7900 = vunpack.c.l.b16 %v7235
    %v7901 = vunpack.c.h.b16 %v7235
    %v7902 = vunpack.c.l.b16 %v7236
    %v7903 = vunpack.c.h.b16 %v7236
    %v7904 = vunpack.c.l.b16 %v7237
    %v7905 = vunpack.c.h.b16 %v7237
    %v7906 = vunpack.c.l.b16 %v7238
    %v7907 = vunpack.c.h.b16 %v7238
    %v7908 = vunpack.c.l.b16 %v7239
    %v7909 = vunpack.c.h.b16 %v7239
    %v7910 = vunpack.c.l.b16 %v7240
    %v7911 = vunpack.c.h.b16 %v7240
    %v7912 = vunpack.c.l.b16 %v7241
    %v7913 = vunpack.c.h.b16 %v7241
    %v7914 = vunpack.c.l.b16 %v7242
    %v7915 = vunpack.c.h.b16 %v7242
    %v7916 = vunpack.c.l.b16 %v7243
    %v7917 = vunpack.c.h.b16 %v7243
    %v7918 = vunpack.c.l.b16 %v7244
    %v7919 = vunpack.c.h.b16 %v7244
    %v7920 = vunpack.c.l.b16 %v7245
    %v7921 = vunpack.c.h.b16 %v7245
    %v7922 = vunpack.c.l.b16 %v7246
    %v7923 = vunpack.c.h.b16 %v7246
    %v7924 = vunpack.c.l.b16 %v7247
    %v7925 = vunpack.c.h.b16 %v7247
    %v7926 = vunpack.c.l.b16 %v7248
    %v7927 = vunpack.c.h.b16 %v7248
    %v7928 = vunpack.c.l.b16 %v7249
    %v7929 = vunpack.c.h.b16 %v7249
    %v7930 = vunpack.c.l.b16 %v7250
    %v7931 = vunpack.c.h.b16 %v7250
    %v7932 = vunpack.c.l.b16 %v7251
    %v7933 = vunpack.c.h.b16 %v7251
    %v7934 = vunpack.c.l.b16 %v7252
    %v7935 = vunpack.c.h.b16 %v7252
    %v7936 = vunpack.c.l.b16 %v7253
    %v7937 = vunpack.c.h.b16 %v7253
    %v7938 = vunpack.c.l.b16 %v7254
    %v7939 = vunpack.c.h.b16 %v7254
    %v7940 = vunpack.c.l.b16 %v7255
    %v7941 = vunpack.c.h.b16 %v7255
    %v7942 = vunpack.c.l.b16 %v7256
    %v7943 = vunpack.c.h.b16 %v7256
    %v7944 = vunpack.c.l.b16 %v7257
    %v7945 = vunpack.c.h.b16 %v7257
    %v7946 = vunpack.c.l.b16 %v7258
    %v7947 = vunpack.c.h.b16 %v7258
    %v7948 = vunpack.c.l.b16 %v7259
    %v7949 = vunpack.c.h.b16 %v7259
    %v7950 = vunpack.c.l.b16 %v7260
    %v7951 = vunpack.c.h.b16 %v7260
    %v7952 = vunpack.c.l.b16 %v7261
    %v7953 = vunpack.c.h.b16 %v7261
    %v7954 = vunpack.c.l.b16 %v7262
    %v7955 = vunpack.c.h.b16 %v7262
    %v7956 = vunpack.c.l.b16 %v7263
    %v7957 = vunpack.c.h.b16 %v7263
    %v7958 = vunpack.c.l.b16 %v7264
    %v7959 = vunpack.c.h.b16 %v7264
    %v7960 = vunpack.c.l.b16 %v7265
    %v7961 = vunpack.c.h.b16 %v7265
    %v7962 = vunpack.c.l.b16 %v7266
    %v7963 = vunpack.c.h.b16 %v7266
    %v7964 = vunpack.c.l.b16 %v7267
    %v7965 = vunpack.c.h.b16 %v7267
    %v7966 = vunpack.c.l.b16 %v7268
    %v7967 = vunpack.c.h.b16 %v7268
    %v7968 = vunpack.c.l.b16 %v7269
    %v7969 = vunpack.c.h.b16 %v7269
    %v7970 = vunpack.c.l.b16 %v7270
    %v7971 = vunpack.c.h.b16 %v7270
    %v7972 = vunpack.c.l.b16 %v7271
    %v7973 = vunpack.c.h.b16 %v7271
    %v7974 = vunpack.c.l.b16 %v7272
    %v7975 = vunpack.c.h.b16 %v7272
    %v7976 = vunpack.c.l.b16 %v7273
    %v7977 = vunpack.c.h.b16 %v7273
    %v7978 = vunpack.c.l.b16 %v7274
    %v7979 = vunpack.c.h.b16 %v7274
    %v7980 = vunpack.c.l.b16 %v7275
    %v7981 = vunpack.c.h.b16 %v7275
    %v7982 = vunpack.c.l.b16 %v7276
    %v7983 = vunpack.c.h.b16 %v7276
    %v7984 = vunpack.c.l.b16 %v7277
    %v7985 = vunpack.c.h.b16 %v7277
    %v7986 = vunpack.c.l.b16 %v7278
    %v7987 = vunpack.c.h.b16 %v7278
    %v7988 = vunpack.c.l.b16 %v7279
    %v7989 = vunpack.c.h.b16 %v7279
    %v7990 = vunpack.c.l.b16 %v7280
    %v7991 = vunpack.c.h.b16 %v7280
    %v7992 = vunpack.c.l.b16 %v7281
    %v7993 = vunpack.c.h.b16 %v7281
    %v7994 = vunpack.c.l.b16 %v7282
    %v7995 = vunpack.c.h.b16 %v7282
    %v7996 = vunpack.c.l.b16 %v7283
    %v7997 = vunpack.c.h.b16 %v7283
    %v7998 = vunpack.c.l.b16 %v7284
    %v7999 = vunpack.c.h.b16 %v7284
    %v8000 = vunpack.c.l.b16 %v7285
    %v8001 = vunpack.c.h.b16 %v7285
    %v8002 = vunpack.c.l.b16 %v7286
    %v8003 = vunpack.c.h.b16 %v7286
    %v8004 = vunpack.c.l.b16 %v7287
    %v8005 = vunpack.c.h.b16 %v7287
    %v8006 = vunpack.c.l.b16 %v7288
    %v8007 = vunpack.c.h.b16 %v7288
    %v8008 = vunpack.c.l.b16 %v7289
    %v8009 = vunpack.c.h.b16 %v7289
    %v8010 = vunpack.c.l.b16 %v7290
    %v8011 = vunpack.c.h.b16 %v7290
    %v8012 = vunpack.c.l.b16 %v7291
    %v8013 = vunpack.c.h.b16 %v7291
    %v8014 = vunpack.c.l.b16 %v7292
    %v8015 = vunpack.c.h.b16 %v7292
    %v8016 = vunpack.c.l.b16 %v7293
    %v8017 = vunpack.c.h.b16 %v7293
    %v8018 = vunpack.c.l.b16 %v7294
    %v8019 = vunpack.c.h.b16 %v7294
    %v8020 = vunpack.c.l.b16 %v7295
    %v8021 = vunpack.c.h.b16 %v7295
    %v8022 = vunpack.c.l.b16 %v7296
    %v8023 = vunpack.c.h.b16 %v7296
    %v8024 = vunpack.c.l.b16 %v7297
    %v8025 = vunpack.c.h.b16 %v7297
    %v8026 = vunpack.c.l.b16 %v7298
    %v8027 = vunpack.c.h.b16 %v7298
    %v8028 = vunpack.c.l.b16 %v7299
    %v8029 = vunpack.c.h.b16 %v7299
    %v8030 = vunpack.c.l.b16 %v7300
    %v8031 = vunpack.c.h.b16 %v7300
    %v8032 = vunpack.c.l.b16 %v7301
    %v8033 = vunpack.c.h.b16 %v7301
    %v8034 = vunpack.c.l.b16 %v7302
    %v8035 = vunpack.c.h.b16 %v7302
    %v8036 = vunpack.c.l.b16 %v7303
    %v8037 = vunpack.c.h.b16 %v7303
    %v8038 = vunpack.c.l.b16 %v7304
    %v8039 = vunpack.c.h.b16 %v7304
    %v8040 = vunpack.c.l.b16 %v7305
    %v8041 = vunpack.c.h.b16 %v7305
    %v8042 = vunpack.c.l.b16 %v7306
    %v8043 = vunpack.c.h.b16 %v7306
    %v8044 = vunpack.c.l.b16 %v7307
    %v8045 = vunpack.c.h.b16 %v7307
    %v8046 = vunpack.c.l.b16 %v7308
    %v8047 = vunpack.c.h.b16 %v7308
    %v8048 = vunpack.c.l.b16 %v7309
    %v8049 = vunpack.c.h.b16 %v7309
    %v8050 = vunpack.c.l.b16 %v7310
    %v8051 = vunpack.c.h.b16 %v7310
    %v8052 = vunpack.c.l.b16 %v7311
    %v8053 = vunpack.c.h.b16 %v7311
    %v8054 = vunpack.c.l.b16 %v7312
    %v8055 = vunpack.c.h.b16 %v7312
    %v8056 = vunpack.c.l.b16 %v7313
    %v8057 = vunpack.c.h.b16 %v7313
    %v8058 = vunpack.c.l.b16 %v7314
    %v8059 = vunpack.c.h.b16 %v7314
    %v8060 = vunpack.c.l.b16 %v7315
    %v8061 = vunpack.c.h.b16 %v7315
    %v8062 = vunpack.c.l.b16 %v7316
    %v8063 = vunpack.c.h.b16 %v7316
    %v8064 = vunpack.c.l.b16 %v7317
    %v8065 = vunpack.c.h.b16 %v7317
    %v8066 = vunpack.c.l.b16 %v7318
    %v8067 = vunpack.c.h.b16 %v7318
    %v8068 = vunpack.c.l.b16 %v7319
    %v8069 = vunpack.c.h.b16 %v7319
    %v8070 = vunpack.c.l.b16 %v7320
    %v8071 = vunpack.c.h.b16 %v7320
    %v8072 = vunpack.c.l.b16 %v7321
    %v8073 = vunpack.c.h.b16 %v7321
    %v8074 = vunpack.c.l.b16 %v7322
    %v8075 = vunpack.c.h.b16 %v7322
    %v8076 = vunpack.c.l.b16 %v7323
    %v8077 = vunpack.c.h.b16 %v7323
    %v8078 = vunpack.c.l.b16 %v7324
    %v8079 = vunpack.c.h.b16 %v7324
    %v8080 = vunpack.c.l.b16 %v7325
    %v8081 = vunpack.c.h.b16 %v7325
    %v8082 = vunpack.c.l.b16 %v7326
    %v8083 = vunpack.c.h.b16 %v7326
    %v8084 = vunpack.c.l.b16 %v7327
    %v8085 = vunpack.c.h.b16 %v7327
    %v8086 = vunpack.c.l.b16 %v7328
    %v8087 = vunpack.c.h.b16 %v7328
    %v8088 = vunpack.c.l.b16 %v7329
    %v8089 = vunpack.c.h.b16 %v7329
    %v8090 = vunpack.c.l.b16 %v7330
    %v8091 = vunpack.c.h.b16 %v7330
    %v8092 = vunpack.c.l.b16 %v7331
    %v8093 = vunpack.c.h.b16 %v7331
    %v8094 = vunpack.c.l.b16 %v7332
    %v8095 = vunpack.c.h.b16 %v7332
    %v8096 = vunpack.c.l.b16 %v7333
    %v8097 = vunpack.c.h.b16 %v7333
    %v8098 = vunpack.c.l.b16 %v7334
    %v8099 = vunpack.c.h.b16 %v7334
    %v8100 = vunpack.c.l.b16 %v7335
    %v8101 = vunpack.c.h.b16 %v7335
    %v8102 = vunpack.c.l.b16 %v7336
    %v8103 = vunpack.c.h.b16 %v7336
    %v8104 = vunpack.c.l.b16 %v7337
    %v8105 = vunpack.c.h.b16 %v7337
    %v8106 = vunpack.c.l.b16 %v7338
    %v8107 = vunpack.c.h.b16 %v7338
    %v8108 = vunpack.c.l.b16 %v7339
    %v8109 = vunpack.c.h.b16 %v7339
    %v8110 = vunpack.c.l.b16 %v7340
    %v8111 = vunpack.c.h.b16 %v7340
    %v8112 = vunpack.c.l.b16 %v7341
    %v8113 = vunpack.c.h.b16 %v7341
    %v8114 = vunpack.c.l.b16 %v7342
    %v8115 = vunpack.c.h.b16 %v7342
    %v8116 = vunpack.c.l.b16 %v7343
    %v8117 = vunpack.c.h.b16 %v7343
    %v8118 = vunpack.c.l.b16 %v7344
    %v8119 = vunpack.c.h.b16 %v7344
    %v8120 = vunpack.c.l.b16 %v7345
    %v8121 = vunpack.c.h.b16 %v7345
    %v8122 = vunpack.c.l.b16 %v7346
    %v8123 = vunpack.c.h.b16 %v7346
    %v8124 = vunpack.c.l.b16 %v7347
    %v8125 = vunpack.c.h.b16 %v7347
    %v8126 = vunpack.c.l.b16 %v7348
    %v8127 = vunpack.c.h.b16 %v7348
    %v8128 = vunpack.c.l.b16 %v7349
    %v8129 = vunpack.c.h.b16 %v7349
    %v8130 = vunpack.c.l.b16 %v7350
    %v8131 = vunpack.c.h.b16 %v7350
    %v8132 = vunpack.c.l.b16 %v7351
    %v8133 = vunpack.c.h.b16 %v7351
    %v8134 = vunpack.c.l.b16 %v7352
    %v8135 = vunpack.c.h.b16 %v7352
    %v8136 = vunpack.c.l.b16 %v7353
    %v8137 = vunpack.c.h.b16 %v7353
    %v8138 = vunpack.c.l.b16 %v7354
    %v8139 = vunpack.c.h.b16 %v7354
    %v8140 = vunpack.c.l.b16 %v7355
    %v8141 = vunpack.c.h.b16 %v7355
    %v8142 = vunpack.c.l.b16 %v7356
    %v8143 = vunpack.c.h.b16 %v7356
    %v8144 = vunpack.c.l.b16 %v7357
    %v8145 = vunpack.c.h.b16 %v7357
    %v8146 = vunpack.c.l.b16 %v7358
    %v8147 = vunpack.c.h.b16 %v7358
    %v8148 = vunpack.c.l.b16 %v7359
    %v8149 = vunpack.c.h.b16 %v7359
    %v8150 = vpack.c.b16 %v7642, %v7638
    %v8151 = vpack.c.b16 %v7643, %v7639
    %v8152 = vpack.c.b16 %v7644, %v7640
    %v8153 = vpack.c.b16 %v7645, %v7641
    %v8154 = vpack.c.b16 %v7650, %v7646
    %v8155 = vpack.c.b16 %v7651, %v7647
    %v8156 = vpack.c.b16 %v7652, %v7648
    %v8157 = vpack.c.b16 %v7653, %v7649
    %v8158 = vpack.c.b16 %v7658, %v7654
    %v8159 = vpack.c.b16 %v7659, %v7655
    %v8160 = vpack.c.b16 %v7660, %v7656
    %v8161 = vpack.c.b16 %v7661, %v7657
    %v8162 = vpack.c.b16 %v7666, %v7662
    %v8163 = vpack.c.b16 %v7667, %v7663
    %v8164 = vpack.c.b16 %v7668, %v7664
    %v8165 = vpack.c.b16 %v7669, %v7665
    %v8166 = vpack.c.b16 %v7674, %v7670
    %v8167 = vpack.c.b16 %v7675, %v7671
    %v8168 = vpack.c.b16 %v7676, %v7672
    %v8169 = vpack.c.b16 %v7677, %v7673
    %v8170 = vpack.c.b16 %v7682, %v7678
    %v8171 = vpack.c.b16 %v7683, %v7679
    %v8172 = vpack.c.b16 %v7684, %v7680
    %v8173 = vpack.c.b16 %v7685, %v7681
    %v8174 = vpack.c.b16 %v7690, %v7686
    %v8175 = vpack.c.b16 %v7691, %v7687
    %v8176 = vpack.c.b16 %v7692, %v7688
    %v8177 = vpack.c.b16 %v7693, %v7689
    %v8178 = vpack.c.b16 %v7698, %v7694
    %v8179 = vpack.c.b16 %v7699, %v7695
    %v8180 = vpack.c.b16 %v7700, %v7696
    %v8181 = vpack.c.b16 %v7701, %v7697
    %v8182 = vpack.c.b16 %v7706, %v7702
    %v8183 = vpack.c.b16 %v7707, %v7703
    %v8184 = vpack.c.b16 %v7708, %v7704
    %v8185 = vpack.c.b16 %v7709, %v7705
    %v8186 = vpack.c.b16 %v7714, %v7710
    %v8187 = vpack.c.b16 %v7715, %v7711
    %v8188 = vpack.c.b16 %v7716, %v7712
    %v8189 = vpack.c.b16 %v7717, %v7713
    %v8190 = vpack.c.b16 %v7722, %v7718
    %v8191 = vpack.c.b16 %v7723, %v7719
    %v8192 = vpack.c.b16 %v7724, %v7720
    %v8193 = vpack.c.b16 %v7725, %v7721
    %v8194 = vpack.c.b16 %v7730, %v7726
    %v8195 = vpack.c.b16 %v7731, %v7727
    %v8196 = vpack.c.b16 %v7732, %v7728
    %v8197 = vpack.c.b16 %v7733, %v7729
    %v8198 = vpack.c.b16 %v7738, %v7734
    %v8199 = vpack.c.b16 %v7739, %v7735
    %v8200 = vpack.c.b16 %v7740, %v7736
    %v8201 = vpack.c.b16 %v7741, %v7737
    %v8202 = vpack.c.b16 %v7746, %v7742
    %v8203 = vpack.c.b16 %v7747, %v7743
    %v8204 = vpack.c.b16 %v7748, %v7744
    %v8205 = vpack.c.b16 %v7749, %v7745
    %v8206 = vpack.c.b16 %v7754, %v7750
    %v8207 = vpack.c.b16 %v7755, %v7751
    %v8208 = vpack.c.b16 %v7756, %v7752
    %v8209 = vpack.c.b16 %v7757, %v7753
    %v8210 = vpack.c.b16 %v7762, %v7758
    %v8211 = vpack.c.b16 %v7763, %v7759
    %v8212 = vpack.c.b16 %v7764, %v7760
    %v8213 = vpack.c.b16 %v7765, %v7761
    %v8214 = vpack.c.b16 %v7770, %v7766
    %v8215 = vpack.c.b16 %v7771, %v7767
    %v8216 = vpack.c.b16 %v7772, %v7768
    %v8217 = vpack.c.b16 %v7773, %v7769
    %v8218 = vpack.c.b16 %v7778, %v7774
    %v8219 = vpack.c.b16 %v7779, %v7775
    %v8220 = vpack.c.b16 %v7780, %v7776
    %v8221 = vpack.c.b16 %v7781, %v7777
    %v8222 = vpack.c.b16 %v7786, %v7782
    %v8223 = vpack.c.b16 %v7787, %v7783
    %v8224 = vpack.c.b16 %v7788, %v7784
    %v8225 = vpack.c.b16 %v7789, %v7785
    %v8226 = vpack.c.b16 %v7794, %v7790
    %v8227 = vpack.c.b16 %v7795, %v7791
    %v8228 = vpack.c.b16 %v7796, %v7792
    %v8229 = vpack.c.b16 %v7797, %v7793
    %v8230 = vpack.c.b16 %v7802, %v7798
    %v8231 = vpack.c.b16 %v7803, %v7799
    %v8232 = vpack.c.b16 %v7804, %v7800
    %v8233 = vpack.c.b16 %v7805, %v7801
    %v8234 = vpack.c.b16 %v7810, %v7806
    %v8235 = vpack.c.b16 %v7811, %v7807
    %v8236 = vpack.c.b16 %v7812, %v7808
    %v8237 = vpack.c.b16 %v7813, %v7809
    %v8238 = vpack.c.b16 %v7818, %v7814
    %v8239 = vpack.c.b16 %v7819, %v7815
    %v8240 = vpack.c.b16 %v7820, %v7816
    %v8241 = vpack.c.b16 %v7821, %v7817
    %v8242 = vpack.c.b16 %v7826, %v7822
    %v8243 = vpack.c.b16 %v7827, %v7823
    %v8244 = vpack.c.b16 %v7828, %v7824
    %v8245 = vpack.c.b16 %v7829, %v7825
    %v8246 = vpack.c.b16 %v7834, %v7830
    %v8247 = vpack.c.b16 %v7835, %v7831
    %v8248 = vpack.c.b16 %v7836, %v7832
    %v8249 = vpack.c.b16 %v7837, %v7833
    %v8250 = vpack.c.b16 %v7842, %v7838
    %v8251 = vpack.c.b16 %v7843, %v7839
    %v8252 = vpack.c.b16 %v7844, %v7840
    %v8253 = vpack.c.b16 %v7845, %v7841
    %v8254 = vpack.c.b16 %v7850, %v7846
    %v8255 = vpack.c.b16 %v7851, %v7847
    %v8256 = vpack.c.b16 %v7852, %v7848
    %v8257 = vpack.c.b16 %v7853, %v7849
    %v8258 = vpack.c.b16 %v7858, %v7854
    %v8259 = vpack.c.b16 %v7859, %v7855
    %v8260 = vpack.c.b16 %v7860, %v7856
    %v8261 = vpack.c.b16 %v7861, %v7857
    %v8262 = vpack.c.b16 %v7866, %v7862
    %v8263 = vpack.c.b16 %v7867, %v7863
    %v8264 = vpack.c.b16 %v7868, %v7864
    %v8265 = vpack.c.b16 %v7869, %v7865
    %v8266 = vpack.c.b16 %v7874, %v7870
    %v8267 = vpack.c.b16 %v7875, %v7871
    %v8268 = vpack.c.b16 %v7876, %v7872
    %v8269 = vpack.c.b16 %v7877, %v7873
    %v8270 = vpack.c.b16 %v7882, %v7878
    %v8271 = vpack.c.b16 %v7883, %v7879
    %v8272 = vpack.c.b16 %v7884, %v7880
    %v8273 = vpack.c.b16 %v7885, %v7881
    %v8274 = vpack.c.b16 %v7890, %v7886
    %v8275 = vpack.c.b16 %v7891, %v7887
    %v8276 = vpack.c.b16 %v7892, %v7888
    %v8277 = vpack.c.b16 %v7893, %v7889
    %v8278 = vpack.c.b16 %v7898, %v7894
    %v8279 = vpack.c.b16 %v7899, %v7895
    %v8280 = vpack.c.b16 %v7900, %v7896
    %v8281 = vpack.c.b16 %v7901, %v7897
    %v8282 = vpack.c.b16 %v7906, %v7902
    %v8283 = vpack.c.b16 %v7907, %v7903
    %v8284 = vpack.c.b16 %v7908, %v7904
    %v8285 = vpack.c.b16 %v7909, %v7905
    %v8286 = vpack.c.b16 %v7914, %v7910
    %v8287 = vpack.c.b16 %v7915, %v7911
    %v8288 = vpack.c.b16 %v7916, %v7912
    %v8289 = vpack.c.b16 %v7917, %v7913
    %v8290 = vpack.c.b16 %v7922, %v7918
    %v8291 = vpack.c.b16 %v7923, %v7919
    %v8292 = vpack.c.b16 %v7924, %v7920
    %v8293 = vpack.c.b16 %v7925, %v7921
    %v8294 = vpack.c.b16 %v7930, %v7926
    %v8295 = vpack.c.b16 %v7931, %v7927
    %v8296 = vpack.c.b16 %v7932, %v7928
    %v8297 = vpack.c.b16 %v7933, %v7929
    %v8298 = vpack.c.b16 %v7938, %v7934
    %v8299 = vpack.c.b16 %v7939, %v7935
    %v8300 = vpack.c.b16 %v7940, %v7936
    %v8301 = vpack.c.b16 %v7941, %v7937
    %v8302 = vpack.c.b16 %v7946, %v7942
    %v8303 = vpack.c.b16 %v7947, %v7943
    %v8304 = vpack.c.b16 %v7948, %v7944
    %v8305 = vpack.c.b16 %v7949, %v7945
    %v8306 = vpack.c.b16 %v7954, %v7950
    %v8307 = vpack.c.b16 %v7955, %v7951
    %v8308 = vpack.c.b16 %v7956, %v7952
    %v8309 = vpack.c.b16 %v7957, %v7953
    %v8310 = vpack.c.b16 %v7962, %v7958
    %v8311 = vpack.c.b16 %v7963, %v7959
    %v8312 = vpack.c.b16 %v7964, %v7960
    %v8313 = vpack.c.b16 %v7965, %v7961
    %v8314 = vpack.c.b16 %v7970, %v7966
    %v8315 = vpack.c.b16 %v7971, %v7967
    %v8316 = vpack.c.b16 %v7972, %v7968
    %v8317 = vpack.c.b16 %v7973, %v7969
    %v8318 = vpack.c.b16 %v7978, %v7974
    %v8319 = vpack.c.b16 %v7979, %v7975
    %v8320 = vpack.c.b16 %v7980, %v7976
    %v8321 = vpack.c.b16 %v7981, %v7977
    %v8322 = vpack.c.b16 %v7986, %v7982
    %v8323 = vpack.c.b16 %v7987, %v7983
    %v8324 = vpack.c.b16 %v7988, %v7984
    %v8325 = vpack.c.b16 %v7989, %v7985
    %v8326 = vpack.c.b16 %v7994, %v7990
    %v8327 = vpack.c.b16 %v7995, %v7991
    %v8328 = vpack.c.b16 %v7996, %v7992
    %v8329 = vpack.c.b16 %v7997, %v7993
    %v8330 = vpack.c.b16 %v8002, %v7998
    %v8331 = vpack.c.b16 %v8003, %v7999
    %v8332 = vpack.c.b16 %v8004, %v8000
    %v8333 = vpack.c.b16 %v8005, %v8001
    %v8334 = vpack.c.b16 %v8010, %v8006
    %v8335 = vpack.c.b16 %v8011, %v8007
    %v8336 = vpack.c.b16 %v8012, %v8008
    %v8337 = vpack.c.b16 %v8013, %v8009
    %v8338 = vpack.c.b16 %v8018, %v8014
    %v8339 = vpack.c.b16 %v8019, %v8015
    %v8340 = vpack.c.b16 %v8020, %v8016
    %v8341 = vpack.c.b16 %v8021, %v8017
    %v8342 = vpack.c.b16 %v8026, %v8022
    %v8343 = vpack.c.b16 %v8027, %v8023
    %v8344 = vpack.c.b16 %v8028, %v8024
    %v8345 = vpack.c.b16 %v8029, %v8025
    %v8346 = vpack.c.b16 %v8034, %v8030
    %v8347 = vpack.c.b16 %v8035, %v8031
    %v8348 = vpack.c.b16 %v8036, %v8032
    %v8349 = vpack.c.b16 %v8037, %v8033
    %v8350 = vpack.c.b16 %v8042, %v8038
    %v8351 = vpack.c.b16 %v8043, %v8039
    %v8352 = vpack.c.b16 %v8044, %v8040
    %v8353 = vpack.c.b16 %v8045, %v8041
    %v8354 = vpack.c.b16 %v8050, %v8046
    %v8355 = vpack.c.b16 %v8051, %v8047
    %v8356 = vpack.c.b16 %v8052, %v8048
    %v8357 = vpack.c.b16 %v8053, %v8049
    %v8358 = vpack.c.b16 %v8058, %v8054
    %v8359 = vpack.c.b16 %v8059, %v8055
    %v8360 = vpack.c.b16 %v8060, %v8056
    %v8361 = vpack.c.b16 %v8061, %v8057
    %v8362 = vpack.c.b16 %v8066, %v8062
    %v8363 = vpack.c.b16 %v8067, %v8063
    %v8364 = vpack.c.b16 %v8068, %v8064
    %v8365 = vpack.c.b16 %v8069, %v8065
    %v8366 = vpack.c.b16 %v8074, %v8070
    %v8367 = vpack.c.b16 %v8075, %v8071
    %v8368 = vpack.c.b16 %v8076, %v8072
    %v8369 = vpack.c.b16 %v8077, %v8073
    %v8370 = vpack.c.b16 %v8082, %v8078
    %v8371 = vpack.c.b16 %v8083, %v8079
    %v8372 = vpack.c.b16 %v8084, %v8080
    %v8373 = vpack.c.b16 %v8085, %v8081
    %v8374 = vpack.c.b16 %v8090, %v8086
    %v8375 = vpack.c.b16 %v8091, %v8087
    %v8376 = vpack.c.b16 %v8092, %v8088
    %v8377 = vpack.c.b16 %v8093, %v8089
    %v8378 = vpack.c.b16 %v8098, %v8094
    %v8379 = vpack.c.b16 %v8099, %v8095
    %v8380 = vpack.c.b16 %v8100, %v8096
    %v8381 = vpack.c.b16 %v8101, %v8097
    %v8382 = vpack.c.b16 %v8106, %v8102
    %v8383 = vpack.c.b16 %v8107, %v8103
    %v8384 = vpack.c.b16 %v8108, %v8104
    %v8385 = vpack.c.b16 %v8109, %v8105
    %v8386 = vpack.c.b16 %v8114, %v8110
    %v8387 = vpack.c.b16 %v8115, %v8111
    %v8388 = vpack.c.b16 %v8116, %v8112
    %v8389 = vpack.c.b16 %v8117, %v8113
    %v8390 = vpack.c.b16 %v8122, %v8118
    %v8391 = vpack.c.b16 %v8123, %v8119
    %v8392 = vpack.c.b16 %v8124, %v8120
    %v8393 = vpack.c.b16 %v8125, %v8121
    %v8394 = vpack.c.b16 %v8130, %v8126
    %v8395 = vpack.c.b16 %v8131, %v8127
    %v8396 = vpack.c.b16 %v8132, %v8128
    %v8397 = vpack.c.b16 %v8133, %v8129
    %v8398 = vpack.c.b16 %v8138, %v8134
    %v8399 = vpack.c.b16 %v8139, %v8135
    %v8400 = vpack.c.b16 %v8140, %v8136
    %v8401 = vpack.c.b16 %v8141, %v8137
    %v8402 = vpack.c.b16 %v8146, %v8142
    %v8403 = vpack.c.b16 %v8147, %v8143
    %v8404 = vpack.c.b16 %v8148, %v8144
    %v8405 = vpack.c.b16 %v8149, %v8145
    %8662 = vmatprep.subr.bf16.mxu0 %v8151
    %8663 = vmatpush1.bf16.msra.mxu0 %v8150
    %8664 = vmatprep.subr.bf16.mxu0 %v8155
    %8665 = vmatpush1.bf16.msra.mxu0 %v8154
    %8666 = vmatprep.subr.bf16.mxu0 %v8159
    %8667 = vmatpush1.bf16.msra.mxu0 %v8158
    %8668 = vmatprep.subr.bf16.mxu0 %v8163
    %8669 = vmatpush1.bf16.msra.mxu0 %v8162
    %8670 = vmatprep.subr.bf16.mxu0 %v8167
    %8671 = vmatpush1.bf16.msra.mxu0 %v8166
    %8672 = vmatprep.subr.bf16.mxu0 %v8171
    %8673 = vmatpush1.bf16.msra.mxu0 %v8170
    %8674 = vmatprep.subr.bf16.mxu0 %v8175
    %8675 = vmatpush1.bf16.msra.mxu0 %v8174
    %8676 = vmatprep.subr.bf16.mxu0 %v8179
    %8677 = vmatpush1.bf16.msra.mxu0 %v8178
    %8678 = vmatprep.subr.bf16.mxu0 %v8183
    %8679 = vmatpush1.bf16.msra.mxu0 %v8182
    %8680 = vmatprep.subr.bf16.mxu0 %v8187
    %8681 = vmatpush1.bf16.msra.mxu0 %v8186
    %8682 = vmatprep.subr.bf16.mxu0 %v8191
    %8683 = vmatpush1.bf16.msra.mxu0 %v8190
    %8684 = vmatprep.subr.bf16.mxu0 %v8195
    %8685 = vmatpush1.bf16.msra.mxu0 %v8194
    %8686 = vmatprep.subr.bf16.mxu0 %v8199
    %8687 = vmatpush1.bf16.msra.mxu0 %v8198
    %8688 = vmatprep.subr.bf16.mxu0 %v8203
    %8689 = vmatpush1.bf16.msra.mxu0 %v8202
    %8690 = vmatprep.subr.bf16.mxu0 %v8207
    %8691 = vmatpush1.bf16.msra.mxu0 %v8206
    %8692 = vmatprep.subr.bf16.mxu0 %v8211
    %8693 = vmatpush1.bf16.msra.mxu0 %v8210
    %8694 = vmatprep.mubr.bf16.mxu0 %v7097
    %8695 = vmatmul.mubr.bf16.gmra.mrb[0].mxu0 %v7096
    %v8696 = vpop.f32.mrb[0].mxu0
    %v8697 = vadd.f32 %v7365, %v8696
    %v8698 = vpop.f32.mrb[0].mxu0
    %v8699 = vadd.f32 %v7369, %v8698
    %v8700 = vpop.f32.mrb[0].mxu0
    %v8701 = vpop.f32.mrb[0].mxu0
    %8702 = vdwg.mxu0
    %8703 = vmatprep.subr.bf16.mxu0 %v8215
    %8704 = vmatpush1.bf16.msra.mxu0 %v8214
    %8705 = vmatprep.subr.bf16.mxu0 %v8219
    %8706 = vmatpush1.bf16.msra.mxu0 %v8218
    %8707 = vmatprep.subr.bf16.mxu0 %v8223
    %8708 = vmatpush1.bf16.msra.mxu0 %v8222
    %8709 = vmatprep.subr.bf16.mxu0 %v8227
    %8710 = vmatpush1.bf16.msra.mxu0 %v8226
    %8711 = vmatprep.subr.bf16.mxu0 %v8231
    %8712 = vmatpush1.bf16.msra.mxu0 %v8230
    %8713 = vmatprep.subr.bf16.mxu0 %v8235
    %8714 = vmatpush1.bf16.msra.mxu0 %v8234
    %8715 = vmatprep.subr.bf16.mxu0 %v8239
    %8716 = vmatpush1.bf16.msra.mxu0 %v8238
    %8717 = vmatprep.subr.bf16.mxu0 %v8243
    %8718 = vmatpush1.bf16.msra.mxu0 %v8242
    %8719 = vmatprep.subr.bf16.mxu0 %v8247
    %8720 = vmatpush1.bf16.msra.mxu0 %v8246
    %8721 = vmatprep.subr.bf16.mxu0 %v8251
    %8722 = vmatpush1.bf16.msra.mxu0 %v8250
    %8723 = vmatprep.subr.bf16.mxu0 %v8255
    %8724 = vmatpush1.bf16.msra.mxu0 %v8254
    %8725 = vmatprep.subr.bf16.mxu0 %v8259
    %8726 = vmatpush1.bf16.msra.mxu0 %v8258
    %8727 = vmatprep.subr.bf16.mxu0 %v8263
    %8728 = vmatpush1.bf16.msra.mxu0 %v8262
    %8729 = vmatprep.subr.bf16.mxu0 %v8267
    %8730 = vmatpush1.bf16.msra.mxu0 %v8266
    %8731 = vmatprep.subr.bf16.mxu0 %v8271
    %8732 = vmatpush1.bf16.msra.mxu0 %v8270
    %8733 = vmatprep.subr.bf16.mxu0 %v8275
    %8734 = vmatpush1.bf16.msra.mxu0 %v8274
    %8735 = vmatprep.mubr.bf16.mxu0 %v7099
    %8736 = vmatmul.mubr.bf16.gmra.mrb[0].mxu0 %v7098
    %v8737 = vpop.f32.mrb[0].mxu0
    %v8738 = vadd.f32 %v8697, %v8737
    %v8739 = vpop.f32.mrb[0].mxu0
    %v8740 = vadd.f32 %v8699, %v8739
    %v8741 = vpop.f32.mrb[0].mxu0
    %v8742 = vpop.f32.mrb[0].mxu0
    %8743 = vdwg.mxu0
    %8744 = vmatprep.subr.bf16.mxu0 %v8279
    %8745 = vmatpush1.bf16.msra.mxu0 %v8278
    %8746 = vmatprep.subr.bf16.mxu0 %v8283
    %8747 = vmatpush1.bf16.msra.mxu0 %v8282
    %8748 = vmatprep.subr.bf16.mxu0 %v8287
    %8749 = vmatpush1.bf16.msra.mxu0 %v8286
    %8750 = vmatprep.subr.bf16.mxu0 %v8291
    %8751 = vmatpush1.bf16.msra.mxu0 %v8290
    %8752 = vmatprep.subr.bf16.mxu0 %v8295
    %8753 = vmatpush1.bf16.msra.mxu0 %v8294
    %8754 = vmatprep.subr.bf16.mxu0 %v8299
    %8755 = vmatpush1.bf16.msra.mxu0 %v8298
    %8756 = vmatprep.subr.bf16.mxu0 %v8303
    %8757 = vmatpush1.bf16.msra.mxu0 %v8302
    %8758 = vmatprep.subr.bf16.mxu0 %v8307
    %8759 = vmatpush1.bf16.msra.mxu0 %v8306
    %8760 = vmatprep.subr.bf16.mxu0 %v8311
    %8761 = vmatpush1.bf16.msra.mxu0 %v8310
    %8762 = vmatprep.subr.bf16.mxu0 %v8315
    %8763 = vmatpush1.bf16.msra.mxu0 %v8314
    %8764 = vmatprep.subr.bf16.mxu0 %v8319
    %8765 = vmatpush1.bf16.msra.mxu0 %v8318
    %8766 = vmatprep.subr.bf16.mxu0 %v8323
    %8767 = vmatpush1.bf16.msra.mxu0 %v8322
    %8768 = vmatprep.subr.bf16.mxu0 %v8327
    %8769 = vmatpush1.bf16.msra.mxu0 %v8326
    %8770 = vmatprep.subr.bf16.mxu0 %v8331
    %8771 = vmatpush1.bf16.msra.mxu0 %v8330
    %8772 = vmatprep.subr.bf16.mxu0 %v8335
    %8773 = vmatpush1.bf16.msra.mxu0 %v8334
    %8774 = vmatprep.subr.bf16.mxu0 %v8339
    %8775 = vmatpush1.bf16.msra.mxu0 %v8338
    %8776 = vmatprep.mubr.bf16.mxu0 %v7101
    %8777 = vmatmul.mubr.bf16.gmra.mrb[0].mxu0 %v7100
    %v8778 = vpop.f32.mrb[0].mxu0
    %v8779 = vadd.f32 %v8738, %v8778
    %v8780 = vpop.f32.mrb[0].mxu0
    %v8781 = vadd.f32 %v8740, %v8780
    %v8782 = vpop.f32.mrb[0].mxu0
    %v8783 = vpop.f32.mrb[0].mxu0
    %8784 = vdwg.mxu0
    %8785 = vmatprep.subr.bf16.mxu0 %v8343
    %8786 = vmatpush1.bf16.msra.mxu0 %v8342
    %8787 = vmatprep.subr.bf16.mxu0 %v8347
    %8788 = vmatpush1.bf16.msra.mxu0 %v8346
    %8789 = vmatprep.subr.bf16.mxu0 %v8351
    %8790 = vmatpush1.bf16.msra.mxu0 %v8350
    %8791 = vmatprep.subr.bf16.mxu0 %v8355
    %8792 = vmatpush1.bf16.msra.mxu0 %v8354
    %8793 = vmatprep.subr.bf16.mxu0 %v8359
    %8794 = vmatpush1.bf16.msra.mxu0 %v8358
    %8795 = vmatprep.subr.bf16.mxu0 %v8363
    %8796 = vmatpush1.bf16.msra.mxu0 %v8362
    %8797 = vmatprep.subr.bf16.mxu0 %v8367
    %8798 = vmatpush1.bf16.msra.mxu0 %v8366
    %8799 = vmatprep.subr.bf16.mxu0 %v8371
    %8800 = vmatpush1.bf16.msra.mxu0 %v8370
    %8801 = vmatprep.subr.bf16.mxu0 %v8375
    %8802 = vmatpush1.bf16.msra.mxu0 %v8374
    %8803 = vmatprep.subr.bf16.mxu0 %v8379
    %8804 = vmatpush1.bf16.msra.mxu0 %v8378
    %8805 = vmatprep.subr.bf16.mxu0 %v8383
    %8806 = vmatpush1.bf16.msra.mxu0 %v8382
    %8807 = vmatprep.subr.bf16.mxu0 %v8387
    %8808 = vmatpush1.bf16.msra.mxu0 %v8386
    %8809 = vmatprep.subr.bf16.mxu0 %v8391
    %8810 = vmatpush1.bf16.msra.mxu0 %v8390
    %8811 = vmatprep.subr.bf16.mxu0 %v8395
    %8812 = vmatpush1.bf16.msra.mxu0 %v8394
    %8813 = vmatprep.subr.bf16.mxu0 %v8399
    %8814 = vmatpush1.bf16.msra.mxu0 %v8398
    %8815 = vmatprep.subr.bf16.mxu0 %v8403
    %8816 = vmatpush1.bf16.msra.mxu0 %v8402
    %8817 = vmatprep.mubr.bf16.mxu0 %v7103
    %8818 = vmatmul.mubr.bf16.gmra.mrb[0].mxu0 %v7102
    %v8819 = vpop.f32.mrb[0].mxu0
    %v8820 = vadd.f32 %v8779, %v8819
    %v8821 = vpop.f32.mrb[0].mxu0
    %v8822 = vadd.f32 %v8781, %v8821
    %v8823 = vpop.f32.mrb[0].mxu0
    %v8824 = vpop.f32.mrb[0].mxu0
    %8825 = vdwg.mxu0
    %8826 = vmatprep.subr.bf16.mxu0 %v8153
    %8827 = vmatpush1.bf16.msra.mxu0 %v8152
    %8828 = vmatprep.subr.bf16.mxu0 %v8157
    %8829 = vmatpush1.bf16.msra.mxu0 %v8156
    %8830 = vmatprep.subr.bf16.mxu0 %v8161
    %8831 = vmatpush1.bf16.msra.mxu0 %v8160
    %8832 = vmatprep.subr.bf16.mxu0 %v8165
    %8833 = vmatpush1.bf16.msra.mxu0 %v8164
    %8834 = vmatprep.subr.bf16.mxu0 %v8169
    %8835 = vmatpush1.bf16.msra.mxu0 %v8168
    %8836 = vmatprep.subr.bf16.mxu0 %v8173
    %8837 = vmatpush1.bf16.msra.mxu0 %v8172
    %8838 = vmatprep.subr.bf16.mxu0 %v8177
    %8839 = vmatpush1.bf16.msra.mxu0 %v8176
    %8840 = vmatprep.subr.bf16.mxu0 %v8181
    %8841 = vmatpush1.bf16.msra.mxu0 %v8180
    %8842 = vmatprep.subr.bf16.mxu0 %v8185
    %8843 = vmatpush1.bf16.msra.mxu0 %v8184
    %8844 = vmatprep.subr.bf16.mxu0 %v8189
    %8845 = vmatpush1.bf16.msra.mxu0 %v8188
    %8846 = vmatprep.subr.bf16.mxu0 %v8193
    %8847 = vmatpush1.bf16.msra.mxu0 %v8192
    %8848 = vmatprep.subr.bf16.mxu0 %v8197
    %8849 = vmatpush1.bf16.msra.mxu0 %v8196
    %8850 = vmatprep.subr.bf16.mxu0 %v8201
    %8851 = vmatpush1.bf16.msra.mxu0 %v8200
    %8852 = vmatprep.subr.bf16.mxu0 %v8205
    %8853 = vmatpush1.bf16.msra.mxu0 %v8204
    %8854 = vmatprep.subr.bf16.mxu0 %v8209
    %8855 = vmatpush1.bf16.msra.mxu0 %v8208
    %8856 = vmatprep.subr.bf16.mxu0 %v8213
    %8857 = vmatpush1.bf16.msra.mxu0 %v8212
    %8858 = vmatprep.mubr.bf16.mxu0 %v7097
    %8859 = vmatmul.mubr.bf16.gmra.mrb[0].mxu0 %v7096
    %v8860 = vpop.f32.mrb[0].mxu0
    %v8861 = vadd.f32 %v7373, %v8860
    %v8862 = vpop.f32.mrb[0].mxu0
    %v8863 = vadd.f32 %v7377, %v8862
    %v8864 = vpop.f32.mrb[0].mxu0
    %v8865 = vpop.f32.mrb[0].mxu0
    %8866 = vdwg.mxu0
    %8867 = vmatprep.subr.bf16.mxu0 %v8217
    %8868 = vmatpush1.bf16.msra.mxu0 %v8216
    %8869 = vmatprep.subr.bf16.mxu0 %v8221
    %8870 = vmatpush1.bf16.msra.mxu0 %v8220
    %8871 = vmatprep.subr.bf16.mxu0 %v8225
    %8872 = vmatpush1.bf16.msra.mxu0 %v8224
    %8873 = vmatprep.subr.bf16.mxu0 %v8229
    %8874 = vmatpush1.bf16.msra.mxu0 %v8228
    %8875 = vmatprep.subr.bf16.mxu0 %v8233
    %8876 = vmatpush1.bf16.msra.mxu0 %v8232
    %8877 = vmatprep.subr.bf16.mxu0 %v8237
    %8878 = vmatpush1.bf16.msra.mxu0 %v8236
    %8879 = vmatprep.subr.bf16.mxu0 %v8241
    %8880 = vmatpush1.bf16.msra.mxu0 %v8240
    %8881 = vmatprep.subr.bf16.mxu0 %v8245
    %8882 = vmatpush1.bf16.msra.mxu0 %v8244
    %8883 = vmatprep.subr.bf16.mxu0 %v8249
    %8884 = vmatpush1.bf16.msra.mxu0 %v8248
    %8885 = vmatprep.subr.bf16.mxu0 %v8253
    %8886 = vmatpush1.bf16.msra.mxu0 %v8252
    %8887 = vmatprep.subr.bf16.mxu0 %v8257
    %8888 = vmatpush1.bf16.msra.mxu0 %v8256
    %8889 = vmatprep.subr.bf16.mxu0 %v8261
    %8890 = vmatpush1.bf16.msra.mxu0 %v8260
    %8891 = vmatprep.subr.bf16.mxu0 %v8265
    %8892 = vmatpush1.bf16.msra.mxu0 %v8264
    %8893 = vmatprep.subr.bf16.mxu0 %v8269
    %8894 = vmatpush1.bf16.msra.mxu0 %v8268
    %8895 = vmatprep.subr.bf16.mxu0 %v8273
    %8896 = vmatpush1.bf16.msra.mxu0 %v8272
    %8897 = vmatprep.subr.bf16.mxu0 %v8277
    %8898 = vmatpush1.bf16.msra.mxu0 %v8276
    %8899 = vmatprep.mubr.bf16.mxu0 %v7099
    %8900 = vmatmul.mubr.bf16.gmra.mrb[0].mxu0 %v7098
    %v8901 = vpop.f32.mrb[0].mxu0
    %v8902 = vadd.f32 %v8861, %v8901
    %v8903 = vpop.f32.mrb[0].mxu0
    %v8904 = vadd.f32 %v8863, %v8903
    %v8905 = vpop.f32.mrb[0].mxu0
    %v8906 = vpop.f32.mrb[0].mxu0
    %8907 = vdwg.mxu0
    %8908 = vmatprep.subr.bf16.mxu0 %v8281
    %8909 = vmatpush1.bf16.msra.mxu0 %v8280
    %8910 = vmatprep.subr.bf16.mxu0 %v8285
    %8911 = vmatpush1.bf16.msra.mxu0 %v8284
    %8912 = vmatprep.subr.bf16.mxu0 %v8289
    %8913 = vmatpush1.bf16.msra.mxu0 %v8288
    %8914 = vmatprep.subr.bf16.mxu0 %v8293
    %8915 = vmatpush1.bf16.msra.mxu0 %v8292
    %8916 = vmatprep.subr.bf16.mxu0 %v8297
    %8917 = vmatpush1.bf16.msra.mxu0 %v8296
    %8918 = vmatprep.subr.bf16.mxu0 %v8301
    %8919 = vmatpush1.bf16.msra.mxu0 %v8300
    %8920 = vmatprep.subr.bf16.mxu0 %v8305
    %8921 = vmatpush1.bf16.msra.mxu0 %v8304
    %8922 = vmatprep.subr.bf16.mxu0 %v8309
    %8923 = vmatpush1.bf16.msra.mxu0 %v8308
    %8924 = vmatprep.subr.bf16.mxu0 %v8313
    %8925 = vmatpush1.bf16.msra.mxu0 %v8312
    %8926 = vmatprep.subr.bf16.mxu0 %v8317
    %8927 = vmatpush1.bf16.msra.mxu0 %v8316
    %8928 = vmatprep.subr.bf16.mxu0 %v8321
    %8929 = vmatpush1.bf16.msra.mxu0 %v8320
    %8930 = vmatprep.subr.bf16.mxu0 %v8325
    %8931 = vmatpush1.bf16.msra.mxu0 %v8324
    %8932 = vmatprep.subr.bf16.mxu0 %v8329
    %8933 = vmatpush1.bf16.msra.mxu0 %v8328
    %8934 = vmatprep.subr.bf16.mxu0 %v8333
    %8935 = vmatpush1.bf16.msra.mxu0 %v8332
    %8936 = vmatprep.subr.bf16.mxu0 %v8337
    %8937 = vmatpush1.bf16.msra.mxu0 %v8336
    %8938 = vmatprep.subr.bf16.mxu0 %v8341
    %8939 = vmatpush1.bf16.msra.mxu0 %v8340
    %8940 = vmatprep.mubr.bf16.mxu0 %v7101
    %8941 = vmatmul.mubr.bf16.gmra.mrb[0].mxu0 %v7100
    %v8942 = vpop.f32.mrb[0].mxu0
    %v8943 = vadd.f32 %v8902, %v8942
    %v8944 = vpop.f32.mrb[0].mxu0
    %v8945 = vadd.f32 %v8904, %v8944
    %v8946 = vpop.f32.mrb[0].mxu0
    %v8947 = vpop.f32.mrb[0].mxu0
    %8948 = vdwg.mxu0
    %8949 = vmatprep.subr.bf16.mxu0 %v8345
    %8950 = vmatpush1.bf16.msra.mxu0 %v8344
    %8951 = vmatprep.subr.bf16.mxu0 %v8349
    %8952 = vmatpush1.bf16.msra.mxu0 %v8348
    %8953 = vmatprep.subr.bf16.mxu0 %v8353
    %8954 = vmatpush1.bf16.msra.mxu0 %v8352
    %8955 = vmatprep.subr.bf16.mxu0 %v8357
    %8956 = vmatpush1.bf16.msra.mxu0 %v8356
    %8957 = vmatprep.subr.bf16.mxu0 %v8361
    %8958 = vmatpush1.bf16.msra.mxu0 %v8360
    %8959 = vmatprep.subr.bf16.mxu0 %v8365
    %8960 = vmatpush1.bf16.msra.mxu0 %v8364
    %8961 = vmatprep.subr.bf16.mxu0 %v8369
    %8962 = vmatpush1.bf16.msra.mxu0 %v8368
    %8963 = vmatprep.subr.bf16.mxu0 %v8373
    %8964 = vmatpush1.bf16.msra.mxu0 %v8372
    %8965 = vmatprep.subr.bf16.mxu0 %v8377
    %8966 = vmatpush1.bf16.msra.mxu0 %v8376
    %8967 = vmatprep.subr.bf16.mxu0 %v8381
    %8968 = vmatpush1.bf16.msra.mxu0 %v8380
    %8969 = vmatprep.subr.bf16.mxu0 %v8385
    %8970 = vmatpush1.bf16.msra.mxu0 %v8384
    %8971 = vmatprep.subr.bf16.mxu0 %v8389
    %8972 = vmatpush1.bf16.msra.mxu0 %v8388
    %8973 = vmatprep.subr.bf16.mxu0 %v8393
    %8974 = vmatpush1.bf16.msra.mxu0 %v8392
    %8975 = vmatprep.subr.bf16.mxu0 %v8397
    %8976 = vmatpush1.bf16.msra.mxu0 %v8396
    %8977 = vmatprep.subr.bf16.mxu0 %v8401
    %8978 = vmatpush1.bf16.msra.mxu0 %v8400
    %8979 = vmatprep.subr.bf16.mxu0 %v8405
    %8980 = vmatpush1.bf16.msra.mxu0 %v8404
    %8981 = vmatprep.mubr.bf16.mxu0 %v7103
    %8982 = vmatmul.mubr.bf16.gmra.mrb[0].mxu0 %v7102
    %v8983 = vpop.f32.mrb[0].mxu0
    %v8984 = vadd.f32 %v8943, %v8983
    %v8985 = vpop.f32.mrb[0].mxu0
    %v8986 = vadd.f32 %v8945, %v8985
    %v8987 = vpop.f32.mrb[0].mxu0
    %v8988 = vpop.f32.mrb[0].mxu0
    %8989 = vdwg.mxu0
    %v8990 = vmax.f32 %v8820, 0.0
    %v8991 = vmax.f32 %v8822, 0.0
    %v8992 = vmax.f32 %v8984, 0.0
    %v8993 = vmax.f32 %v8986, 0.0
    %v8994 = vpack.c.bf16 %v8990, %v8990
    %v8995 = vpack.c.bf16 %v8991, %v8991
    %v8996 = vpack.c.bf16 %v8992, %v8992
    %v8997 = vpack.c.bf16 %v8993, %v8993
    %v8998 = vld [vmem:[#allocation19] sm:$0xff]
    %v8999 = vld [vmem:[#allocation19 + $0x8] sm:$0xff]
    %v9000 = vld [vmem:[#allocation19 + $0x10] sm:$0xff]
    %v9001 = vld [vmem:[#allocation19 + $0x18] sm:$0xff]
    %v9002 = vld [vmem:[#allocation19 + $0x20] sm:$0xff]
    %v9003 = vld [vmem:[#allocation19 + $0x28] sm:$0xff]
    %v9004 = vld [vmem:[#allocation19 + $0x30] sm:$0xff]
    %v9005 = vld [vmem:[#allocation19 + $0x38] sm:$0xff]
    %v9006 = vld [vmem:[#allocation19 + $0x40] sm:$0xff]
    %v9007 = vld [vmem:[#allocation19 + $0x48] sm:$0xff]
    %v9008 = vld [vmem:[#allocation19 + $0x50] sm:$0xff]
    %v9009 = vld [vmem:[#allocation19 + $0x58] sm:$0xff]
    %v9010 = vld [vmem:[#allocation19 + $0x60] sm:$0xff]
    %v9011 = vld [vmem:[#allocation19 + $0x68] sm:$0xff]
    %v9012 = vld [vmem:[#allocation19 + $0x70] sm:$0xff]
    %v9013 = vld [vmem:[#allocation19 + $0x78] sm:$0xff]
    %v9014 = vld [vmem:[#allocation19 + $0x80] sm:$0xff]
    %v9015 = vld [vmem:[#allocation19 + $0x88] sm:$0xff]
    %v9016 = vld [vmem:[#allocation19 + $0x90] sm:$0xff]
    %v9017 = vld [vmem:[#allocation19 + $0x98] sm:$0xff]
    %v9018 = vld [vmem:[#allocation19 + $0xa0] sm:$0xff]
    %v9019 = vld [vmem:[#allocation19 + $0xa8] sm:$0xff]
    %v9020 = vld [vmem:[#allocation19 + $0xb0] sm:$0xff]
    %v9021 = vld [vmem:[#allocation19 + $0xb8] sm:$0xff]
    %v9022 = vld [vmem:[#allocation19 + $0xc0] sm:$0xff]
    %v9023 = vld [vmem:[#allocation19 + $0xc8] sm:$0xff]
    %v9024 = vld [vmem:[#allocation19 + $0xd0] sm:$0xff]
    %v9025 = vld [vmem:[#allocation19 + $0xd8] sm:$0xff]
    %v9026 = vld [vmem:[#allocation19 + $0xe0] sm:$0xff]
    %v9027 = vld [vmem:[#allocation19 + $0xe8] sm:$0xff]
    %v9028 = vld [vmem:[#allocation19 + $0xf0] sm:$0xff]
    %v9029 = vld [vmem:[#allocation19 + $0xf8] sm:$0xff]
    %v9030 = vld [vmem:[#allocation19 + $0x100] sm:$0xff]
    %v9031 = vld [vmem:[#allocation19 + $0x108] sm:$0xff]
    %v9032 = vld [vmem:[#allocation19 + $0x110] sm:$0xff]
    %v9033 = vld [vmem:[#allocation19 + $0x118] sm:$0xff]
    %v9034 = vld [vmem:[#allocation19 + $0x120] sm:$0xff]
    %v9035 = vld [vmem:[#allocation19 + $0x128] sm:$0xff]
    %v9036 = vld [vmem:[#allocation19 + $0x130] sm:$0xff]
    %v9037 = vld [vmem:[#allocation19 + $0x138] sm:$0xff]
    %v9038 = vld [vmem:[#allocation19 + $0x140] sm:$0xff]
    %v9039 = vld [vmem:[#allocation19 + $0x148] sm:$0xff]
    %v9040 = vld [vmem:[#allocation19 + $0x150] sm:$0xff]
    %v9041 = vld [vmem:[#allocation19 + $0x158] sm:$0xff]
    %v9042 = vld [vmem:[#allocation19 + $0x160] sm:$0xff]
    %v9043 = vld [vmem:[#allocation19 + $0x168] sm:$0xff]
    %v9044 = vld [vmem:[#allocation19 + $0x170] sm:$0xff]
    %v9045 = vld [vmem:[#allocation19 + $0x178] sm:$0xff]
    %v9046 = vld [vmem:[#allocation19 + $0x180] sm:$0xff]
    %v9047 = vld [vmem:[#allocation19 + $0x188] sm:$0xff]
    %v9048 = vld [vmem:[#allocation19 + $0x190] sm:$0xff]
    %v9049 = vld [vmem:[#allocation19 + $0x198] sm:$0xff]
    %v9050 = vld [vmem:[#allocation19 + $0x1a0] sm:$0xff]
    %v9051 = vld [vmem:[#allocation19 + $0x1a8] sm:$0xff]
    %v9052 = vld [vmem:[#allocation19 + $0x1b0] sm:$0xff]
    %v9053 = vld [vmem:[#allocation19 + $0x1b8] sm:$0xff]
    %v9054 = vld [vmem:[#allocation19 + $0x1c0] sm:$0xff]
    %v9055 = vld [vmem:[#allocation19 + $0x1c8] sm:$0xff]
    %v9056 = vld [vmem:[#allocation19 + $0x1d0] sm:$0xff]
    %v9057 = vld [vmem:[#allocation19 + $0x1d8] sm:$0xff]
    %v9058 = vld [vmem:[#allocation19 + $0x1e0] sm:$0xff]
    %v9059 = vld [vmem:[#allocation19 + $0x1e8] sm:$0xff]
    %v9060 = vld [vmem:[#allocation19 + $0x1f0] sm:$0xff]
    %v9061 = vld [vmem:[#allocation19 + $0x1f8] sm:$0xff]
    %v9062 = vld [vmem:[#allocation20] sm:$0x3]
    %v9064 = vlaneseq
    %v9065 = vshrl.u32 %v9064, 7
    %v9066 = vsub.s32 0, %v9065
    %v9067 = vrot.slane %v9062, %v9066
    %v9068 = vlaneseq
    %v9069 = vshrl.u32 %v9068, 7
    %v9070 = vsub.s32 1, %v9069
    %v9071 = vrot.slane %v9062, %v9070
    %v9138 = vunpack.c.l.b16 %v8998
    %v9139 = vunpack.c.h.b16 %v8998
    %v9140 = vunpack.c.l.b16 %v8999
    %v9141 = vunpack.c.h.b16 %v8999
    %v9142 = vunpack.c.l.b16 %v9000
    %v9143 = vunpack.c.h.b16 %v9000
    %v9144 = vunpack.c.l.b16 %v9001
    %v9145 = vunpack.c.h.b16 %v9001
    %v9146 = vunpack.c.l.b16 %v9002
    %v9147 = vunpack.c.h.b16 %v9002
    %v9148 = vunpack.c.l.b16 %v9003
    %v9149 = vunpack.c.h.b16 %v9003
    %v9150 = vunpack.c.l.b16 %v9004
    %v9151 = vunpack.c.h.b16 %v9004
    %v9152 = vunpack.c.l.b16 %v9005
    %v9153 = vunpack.c.h.b16 %v9005
    %v9154 = vunpack.c.l.b16 %v9006
    %v9155 = vunpack.c.h.b16 %v9006
    %v9156 = vunpack.c.l.b16 %v9007
    %v9157 = vunpack.c.h.b16 %v9007
    %v9158 = vunpack.c.l.b16 %v9008
    %v9159 = vunpack.c.h.b16 %v9008
    %v9160 = vunpack.c.l.b16 %v9009
    %v9161 = vunpack.c.h.b16 %v9009
    %v9162 = vunpack.c.l.b16 %v9010
    %v9163 = vunpack.c.h.b16 %v9010
    %v9164 = vunpack.c.l.b16 %v9011
    %v9165 = vunpack.c.h.b16 %v9011
    %v9166 = vunpack.c.l.b16 %v9012
    %v9167 = vunpack.c.h.b16 %v9012
    %v9168 = vunpack.c.l.b16 %v9013
    %v9169 = vunpack.c.h.b16 %v9013
    %v9170 = vunpack.c.l.b16 %v9014
    %v9171 = vunpack.c.h.b16 %v9014
    %v9172 = vunpack.c.l.b16 %v9015
    %v9173 = vunpack.c.h.b16 %v9015
    %v9174 = vunpack.c.l.b16 %v9016
    %v9175 = vunpack.c.h.b16 %v9016
    %v9176 = vunpack.c.l.b16 %v9017
    %v9177 = vunpack.c.h.b16 %v9017
    %v9178 = vunpack.c.l.b16 %v9018
    %v9179 = vunpack.c.h.b16 %v9018
    %v9180 = vunpack.c.l.b16 %v9019
    %v9181 = vunpack.c.h.b16 %v9019
    %v9182 = vunpack.c.l.b16 %v9020
    %v9183 = vunpack.c.h.b16 %v9020
    %v9184 = vunpack.c.l.b16 %v9021
    %v9185 = vunpack.c.h.b16 %v9021
    %v9186 = vunpack.c.l.b16 %v9022
    %v9187 = vunpack.c.h.b16 %v9022
    %v9188 = vunpack.c.l.b16 %v9023
    %v9189 = vunpack.c.h.b16 %v9023
    %v9190 = vunpack.c.l.b16 %v9024
    %v9191 = vunpack.c.h.b16 %v9024
    %v9192 = vunpack.c.l.b16 %v9025
    %v9193 = vunpack.c.h.b16 %v9025
    %v9194 = vunpack.c.l.b16 %v9026
    %v9195 = vunpack.c.h.b16 %v9026
    %v9196 = vunpack.c.l.b16 %v9027
    %v9197 = vunpack.c.h.b16 %v9027
    %v9198 = vunpack.c.l.b16 %v9028
    %v9199 = vunpack.c.h.b16 %v9028
    %v9200 = vunpack.c.l.b16 %v9029
    %v9201 = vunpack.c.h.b16 %v9029
    %v9202 = vunpack.c.l.b16 %v9030
    %v9203 = vunpack.c.h.b16 %v9030
    %v9204 = vunpack.c.l.b16 %v9031
    %v9205 = vunpack.c.h.b16 %v9031
    %v9206 = vunpack.c.l.b16 %v9032
    %v9207 = vunpack.c.h.b16 %v9032
    %v9208 = vunpack.c.l.b16 %v9033
    %v9209 = vunpack.c.h.b16 %v9033
    %v9210 = vunpack.c.l.b16 %v9034
    %v9211 = vunpack.c.h.b16 %v9034
    %v9212 = vunpack.c.l.b16 %v9035
    %v9213 = vunpack.c.h.b16 %v9035
    %v9214 = vunpack.c.l.b16 %v9036
    %v9215 = vunpack.c.h.b16 %v9036
    %v9216 = vunpack.c.l.b16 %v9037
    %v9217 = vunpack.c.h.b16 %v9037
    %v9218 = vunpack.c.l.b16 %v9038
    %v9219 = vunpack.c.h.b16 %v9038
    %v9220 = vunpack.c.l.b16 %v9039
    %v9221 = vunpack.c.h.b16 %v9039
    %v9222 = vunpack.c.l.b16 %v9040
    %v9223 = vunpack.c.h.b16 %v9040
    %v9224 = vunpack.c.l.b16 %v9041
    %v9225 = vunpack.c.h.b16 %v9041
    %v9226 = vunpack.c.l.b16 %v9042
    %v9227 = vunpack.c.h.b16 %v9042
    %v9228 = vunpack.c.l.b16 %v9043
    %v9229 = vunpack.c.h.b16 %v9043
    %v9230 = vunpack.c.l.b16 %v9044
    %v9231 = vunpack.c.h.b16 %v9044
    %v9232 = vunpack.c.l.b16 %v9045
    %v9233 = vunpack.c.h.b16 %v9045
    %v9234 = vunpack.c.l.b16 %v9046
    %v9235 = vunpack.c.h.b16 %v9046
    %v9236 = vunpack.c.l.b16 %v9047
    %v9237 = vunpack.c.h.b16 %v9047
    %v9238 = vunpack.c.l.b16 %v9048
    %v9239 = vunpack.c.h.b16 %v9048
    %v9240 = vunpack.c.l.b16 %v9049
    %v9241 = vunpack.c.h.b16 %v9049
    %v9242 = vunpack.c.l.b16 %v9050
    %v9243 = vunpack.c.h.b16 %v9050
    %v9244 = vunpack.c.l.b16 %v9051
    %v9245 = vunpack.c.h.b16 %v9051
    %v9246 = vunpack.c.l.b16 %v9052
    %v9247 = vunpack.c.h.b16 %v9052
    %v9248 = vunpack.c.l.b16 %v9053
    %v9249 = vunpack.c.h.b16 %v9053
    %v9250 = vunpack.c.l.b16 %v9054
    %v9251 = vunpack.c.h.b16 %v9054
    %v9252 = vunpack.c.l.b16 %v9055
    %v9253 = vunpack.c.h.b16 %v9055
    %v9254 = vunpack.c.l.b16 %v9056
    %v9255 = vunpack.c.h.b16 %v9056
    %v9256 = vunpack.c.l.b16 %v9057
    %v9257 = vunpack.c.h.b16 %v9057
    %v9258 = vunpack.c.l.b16 %v9058
    %v9259 = vunpack.c.h.b16 %v9058
    %v9260 = vunpack.c.l.b16 %v9059
    %v9261 = vunpack.c.h.b16 %v9059
    %v9262 = vunpack.c.l.b16 %v9060
    %v9263 = vunpack.c.h.b16 %v9060
    %v9264 = vunpack.c.l.b16 %v9061
    %v9265 = vunpack.c.h.b16 %v9061
    %v9266 = vpack.c.b16 %v9140, %v9138
    %v9267 = vpack.c.b16 %v9141, %v9139
    %v9268 = vpack.c.b16 %v9144, %v9142
    %v9269 = vpack.c.b16 %v9145, %v9143
    %v9270 = vpack.c.b16 %v9148, %v9146
    %v9271 = vpack.c.b16 %v9149, %v9147
    %v9272 = vpack.c.b16 %v9152, %v9150
    %v9273 = vpack.c.b16 %v9153, %v9151
    %v9274 = vpack.c.b16 %v9156, %v9154
    %v9275 = vpack.c.b16 %v9157, %v9155
    %v9276 = vpack.c.b16 %v9160, %v9158
    %v9277 = vpack.c.b16 %v9161, %v9159
    %v9278 = vpack.c.b16 %v9164, %v9162
    %v9279 = vpack.c.b16 %v9165, %v9163
    %v9280 = vpack.c.b16 %v9168, %v9166
    %v9281 = vpack.c.b16 %v9169, %v9167
    %v9282 = vpack.c.b16 %v9172, %v9170
    %v9283 = vpack.c.b16 %v9173, %v9171
    %v9284 = vpack.c.b16 %v9176, %v9174
    %v9285 = vpack.c.b16 %v9177, %v9175
    %v9286 = vpack.c.b16 %v9180, %v9178
    %v9287 = vpack.c.b16 %v9181, %v9179
    %v9288 = vpack.c.b16 %v9184, %v9182
    %v9289 = vpack.c.b16 %v9185, %v9183
    %v9290 = vpack.c.b16 %v9188, %v9186
    %v9291 = vpack.c.b16 %v9189, %v9187
    %v9292 = vpack.c.b16 %v9192, %v9190
    %v9293 = vpack.c.b16 %v9193, %v9191
    %v9294 = vpack.c.b16 %v9196, %v9194
    %v9295 = vpack.c.b16 %v9197, %v9195
    %v9296 = vpack.c.b16 %v9200, %v9198
    %v9297 = vpack.c.b16 %v9201, %v9199
    %v9298 = vpack.c.b16 %v9204, %v9202
    %v9299 = vpack.c.b16 %v9205, %v9203
    %v9300 = vpack.c.b16 %v9208, %v9206
    %v9301 = vpack.c.b16 %v9209, %v9207
    %v9302 = vpack.c.b16 %v9212, %v9210
    %v9303 = vpack.c.b16 %v9213, %v9211
    %v9304 = vpack.c.b16 %v9216, %v9214
    %v9305 = vpack.c.b16 %v9217, %v9215
    %v9306 = vpack.c.b16 %v9220, %v9218
    %v9307 = vpack.c.b16 %v9221, %v9219
    %v9308 = vpack.c.b16 %v9224, %v9222
    %v9309 = vpack.c.b16 %v9225, %v9223
    %v9310 = vpack.c.b16 %v9228, %v9226
    %v9311 = vpack.c.b16 %v9229, %v9227
    %v9312 = vpack.c.b16 %v9232, %v9230
    %v9313 = vpack.c.b16 %v9233, %v9231
    %v9314 = vpack.c.b16 %v9236, %v9234
    %v9315 = vpack.c.b16 %v9237, %v9235
    %v9316 = vpack.c.b16 %v9240, %v9238
    %v9317 = vpack.c.b16 %v9241, %v9239
    %v9318 = vpack.c.b16 %v9244, %v9242
    %v9319 = vpack.c.b16 %v9245, %v9243
    %v9320 = vpack.c.b16 %v9248, %v9246
    %v9321 = vpack.c.b16 %v9249, %v9247
    %v9322 = vpack.c.b16 %v9252, %v9250
    %v9323 = vpack.c.b16 %v9253, %v9251
    %v9324 = vpack.c.b16 %v9256, %v9254
    %v9325 = vpack.c.b16 %v9257, %v9255
    %v9326 = vpack.c.b16 %v9260, %v9258
    %v9327 = vpack.c.b16 %v9261, %v9259
    %v9328 = vpack.c.b16 %v9264, %v9262
    %v9329 = vpack.c.b16 %v9265, %v9263
    %9394 = vmatprep.subr.bf16.mxu0 %v9267
    %9395 = vmatpush1.bf16.msra.mxu0 %v9266
    %9396 = vmatprep.subr.bf16.mxu0 %v9269
    %9397 = vmatpush1.bf16.msra.mxu0 %v9268
    %9398 = vmatprep.subr.bf16.mxu0 %v9271
    %9399 = vmatpush1.bf16.msra.mxu0 %v9270
    %9400 = vmatprep.subr.bf16.mxu0 %v9273
    %9401 = vmatpush1.bf16.msra.mxu0 %v9272
    %9402 = vmatprep.subr.bf16.mxu0 %v9275
    %9403 = vmatpush1.bf16.msra.mxu0 %v9274
    %9404 = vmatprep.subr.bf16.mxu0 %v9277
    %9405 = vmatpush1.bf16.msra.mxu0 %v9276
    %9406 = vmatprep.subr.bf16.mxu0 %v9279
    %9407 = vmatpush1.bf16.msra.mxu0 %v9278
    %9408 = vmatprep.subr.bf16.mxu0 %v9281
    %9409 = vmatpush1.bf16.msra.mxu0 %v9280
    %9410 = vmatprep.subr.bf16.mxu0 %v9283
    %9411 = vmatpush1.bf16.msra.mxu0 %v9282
    %9412 = vmatprep.subr.bf16.mxu0 %v9285
    %9413 = vmatpush1.bf16.msra.mxu0 %v9284
    %9414 = vmatprep.subr.bf16.mxu0 %v9287
    %9415 = vmatpush1.bf16.msra.mxu0 %v9286
    %9416 = vmatprep.subr.bf16.mxu0 %v9289
    %9417 = vmatpush1.bf16.msra.mxu0 %v9288
    %9418 = vmatprep.subr.bf16.mxu0 %v9291
    %9419 = vmatpush1.bf16.msra.mxu0 %v9290
    %9420 = vmatprep.subr.bf16.mxu0 %v9293
    %9421 = vmatpush1.bf16.msra.mxu0 %v9292
    %9422 = vmatprep.subr.bf16.mxu0 %v9295
    %9423 = vmatpush1.bf16.msra.mxu0 %v9294
    %9424 = vmatprep.subr.bf16.mxu0 %v9297
    %9425 = vmatpush1.bf16.msra.mxu0 %v9296
    %9426 = vmatprep.mubr.bf16.mxu0 %v8995
    %9427 = vmatmul.mubr.bf16.gmra.mrb[0].mxu0 %v8994
    %v9428 = vpop.f32.mrb[0].mxu0
    %v9429 = vadd.f32 %v9067, %v9428
    %v9430 = vpop.f32.mrb[0].mxu0
    %v9431 = vadd.f32 %v9071, %v9430
    %v9432 = vpop.f32.mrb[0].mxu0
    %v9433 = vpop.f32.mrb[0].mxu0
    %9434 = vdwg.mxu0
    %9435 = vmatprep.subr.bf16.mxu0 %v9299
    %9436 = vmatpush1.bf16.msra.mxu0 %v9298
    %9437 = vmatprep.subr.bf16.mxu0 %v9301
    %9438 = vmatpush1.bf16.msra.mxu0 %v9300
    %9439 = vmatprep.subr.bf16.mxu0 %v9303
    %9440 = vmatpush1.bf16.msra.mxu0 %v9302
    %9441 = vmatprep.subr.bf16.mxu0 %v9305
    %9442 = vmatpush1.bf16.msra.mxu0 %v9304
    %9443 = vmatprep.subr.bf16.mxu0 %v9307
    %9444 = vmatpush1.bf16.msra.mxu0 %v9306
    %9445 = vmatprep.subr.bf16.mxu0 %v9309
    %9446 = vmatpush1.bf16.msra.mxu0 %v9308
    %9447 = vmatprep.subr.bf16.mxu0 %v9311
    %9448 = vmatpush1.bf16.msra.mxu0 %v9310
    %9449 = vmatprep.subr.bf16.mxu0 %v9313
    %9450 = vmatpush1.bf16.msra.mxu0 %v9312
    %9451 = vmatprep.subr.bf16.mxu0 %v9315
    %9452 = vmatpush1.bf16.msra.mxu0 %v9314
    %9453 = vmatprep.subr.bf16.mxu0 %v9317
    %9454 = vmatpush1.bf16.msra.mxu0 %v9316
    %9455 = vmatprep.subr.bf16.mxu0 %v9319
    %9456 = vmatpush1.bf16.msra.mxu0 %v9318
    %9457 = vmatprep.subr.bf16.mxu0 %v9321
    %9458 = vmatpush1.bf16.msra.mxu0 %v9320
    %9459 = vmatprep.subr.bf16.mxu0 %v9323
    %9460 = vmatpush1.bf16.msra.mxu0 %v9322
    %9461 = vmatprep.subr.bf16.mxu0 %v9325
    %9462 = vmatpush1.bf16.msra.mxu0 %v9324
    %9463 = vmatprep.subr.bf16.mxu0 %v9327
    %9464 = vmatpush1.bf16.msra.mxu0 %v9326
    %9465 = vmatprep.subr.bf16.mxu0 %v9329
    %9466 = vmatpush1.bf16.msra.mxu0 %v9328
    %9467 = vmatprep.mubr.bf16.mxu0 %v8997
    %9468 = vmatmul.mubr.bf16.gmra.mrb[0].mxu0 %v8996
    %v9469 = vpop.f32.mrb[0].mxu0
    %v9470 = vadd.f32 %v9429, %v9469
    %v9471 = vpop.f32.mrb[0].mxu0
    %v9472 = vadd.f32 %v9431, %v9471
    %v9473 = vpop.f32.mrb[0].mxu0
    %v9474 = vpop.f32.mrb[0].mxu0
    %9475 = vdwg.mxu0
    %v9476 = vmax.f32 %v9470, 0.0
    %v9477 = vmax.f32 %v9472, 0.0
    %v9478 = vpack.c.bf16 %v9476, %v9476
    %v9479 = vpack.c.bf16 %v9477, %v9477
    %v9480 = vld [vmem:[#allocation22] sm:$0xf]
    %v9481 = vld [vmem:[#allocation22 + $0x4] sm:$0xf]
    %v9482 = vld [vmem:[#allocation22 + $0x8] sm:$0xf]
    %v9483 = vld [vmem:[#allocation22 + $0xc] sm:$0xf]
    %v9484 = vld [vmem:[#allocation22 + $0x10] sm:$0xf]
    %v9485 = vld [vmem:[#allocation22 + $0x14] sm:$0xf]
    %v9486 = vld [vmem:[#allocation22 + $0x18] sm:$0xf]
    %v9487 = vld [vmem:[#allocation22 + $0x1c] sm:$0xf]
    %v9488 = vld [vmem:[#allocation22 + $0x20] sm:$0xf]
    %v9489 = vld [vmem:[#allocation22 + $0x24] sm:$0xf]
    %v9490 = vld [vmem:[#allocation22 + $0x28] sm:$0xf]
    %v9491 = vld [vmem:[#allocation22 + $0x2c] sm:$0xf]
    %v9492 = vld [vmem:[#allocation22 + $0x30] sm:$0xf]
    %v9493 = vld [vmem:[#allocation22 + $0x34] sm:$0xf]
    %v9494 = vld [vmem:[#allocation22 + $0x38] sm:$0xf]
    %v9495 = vld [vmem:[#allocation22 + $0x3c] sm:$0xf]
    %v9496 = vld [vmem:[#allocation22 + $0x40] sm:$0xf]
    %v9497 = vld [vmem:[#allocation22 + $0x44] sm:$0xf]
    %v9498 = vld [vmem:[#allocation22 + $0x48] sm:$0xf]
    %v9499 = vld [vmem:[#allocation22 + $0x4c] sm:$0xf]
    %v9500 = vld [vmem:[#allocation22 + $0x50] sm:$0xf]
    %v9501 = vld [vmem:[#allocation22 + $0x54] sm:$0xf]
    %v9502 = vld [vmem:[#allocation22 + $0x58] sm:$0xf]
    %v9503 = vld [vmem:[#allocation22 + $0x5c] sm:$0xf]
    %v9504 = vld [vmem:[#allocation22 + $0x60] sm:$0xf]
    %v9505 = vld [vmem:[#allocation22 + $0x64] sm:$0xf]
    %v9506 = vld [vmem:[#allocation22 + $0x68] sm:$0xf]
    %v9507 = vld [vmem:[#allocation22 + $0x6c] sm:$0xf]
    %v9508 = vld [vmem:[#allocation22 + $0x70] sm:$0xf]
    %v9509 = vld [vmem:[#allocation22 + $0x74] sm:$0xf]
    %v9510 = vld [vmem:[#allocation22 + $0x78] sm:$0xf]
    %v9511 = vld [vmem:[#allocation22 + $0x7c] sm:$0xf]
    %v9512 = vld [vmem:[#allocation23] sm:$0x1]
    %v9514 = vlaneseq
    %v9515 = vshrl.u32 %v9514, 7
    %v9516 = vsub.s32 0, %v9515
    %v9517 = vrot.slane %v9512, %v9516
    %v9551 = vunpack.c.l.b16 %v9480
    %v9552 = vunpack.c.l.b16 %v9481
    %v9553 = vunpack.c.l.b16 %v9482
    %v9554 = vunpack.c.l.b16 %v9483
    %v9555 = vunpack.c.l.b16 %v9484
    %v9556 = vunpack.c.l.b16 %v9485
    %v9557 = vunpack.c.l.b16 %v9486
    %v9558 = vunpack.c.l.b16 %v9487
    %v9559 = vunpack.c.l.b16 %v9488
    %v9560 = vunpack.c.l.b16 %v9489
    %v9561 = vunpack.c.l.b16 %v9490
    %v9562 = vunpack.c.l.b16 %v9491
    %v9563 = vunpack.c.l.b16 %v9492
    %v9564 = vunpack.c.l.b16 %v9493
    %v9565 = vunpack.c.l.b16 %v9494
    %v9566 = vunpack.c.l.b16 %v9495
    %v9567 = vunpack.c.l.b16 %v9496
    %v9568 = vunpack.c.l.b16 %v9497
    %v9569 = vunpack.c.l.b16 %v9498
    %v9570 = vunpack.c.l.b16 %v9499
    %v9571 = vunpack.c.l.b16 %v9500
    %v9572 = vunpack.c.l.b16 %v9501
    %v9573 = vunpack.c.l.b16 %v9502
    %v9574 = vunpack.c.l.b16 %v9503
    %v9575 = vunpack.c.l.b16 %v9504
    %v9576 = vunpack.c.l.b16 %v9505
    %v9577 = vunpack.c.l.b16 %v9506
    %v9578 = vunpack.c.l.b16 %v9507
    %v9579 = vunpack.c.l.b16 %v9508
    %v9580 = vunpack.c.l.b16 %v9509
    %v9581 = vunpack.c.l.b16 %v9510
    %v9582 = vunpack.c.l.b16 %v9511
    %v9583 = vpack.c.b16 %v9552, %v9551
    %v9584 = vpack.c.b16 %v9554, %v9553
    %v9585 = vpack.c.b16 %v9556, %v9555
    %v9586 = vpack.c.b16 %v9558, %v9557
    %v9587 = vpack.c.b16 %v9560, %v9559
    %v9588 = vpack.c.b16 %v9562, %v9561
    %v9589 = vpack.c.b16 %v9564, %v9563
    %v9590 = vpack.c.b16 %v9566, %v9565
    %v9591 = vpack.c.b16 %v9568, %v9567
    %v9592 = vpack.c.b16 %v9570, %v9569
    %v9593 = vpack.c.b16 %v9572, %v9571
    %v9594 = vpack.c.b16 %v9574, %v9573
    %v9595 = vpack.c.b16 %v9576, %v9575
    %v9596 = vpack.c.b16 %v9578, %v9577
    %v9597 = vpack.c.b16 %v9580, %v9579
    %v9598 = vpack.c.b16 %v9582, %v9581
    %9615 = vmatprep.subr.bf16.mxu0 0
    %9616 = vmatpush1.bf16.msra.mxu0 %v9583
    %9617 = vmatprep.subr.bf16.mxu0 0
    %9618 = vmatpush1.bf16.msra.mxu0 %v9584
    %9619 = vmatprep.subr.bf16.mxu0 0
    %9620 = vmatpush1.bf16.msra.mxu0 %v9585
    %9621 = vmatprep.subr.bf16.mxu0 0
    %9622 = vmatpush1.bf16.msra.mxu0 %v9586
    %9623 = vmatprep.subr.bf16.mxu0 0
    %9624 = vmatpush1.bf16.msra.mxu0 %v9587
    %9625 = vmatprep.subr.bf16.mxu0 0
    %9626 = vmatpush1.bf16.msra.mxu0 %v9588
    %9627 = vmatprep.subr.bf16.mxu0 0
    %9628 = vmatpush1.bf16.msra.mxu0 %v9589
    %9629 = vmatprep.subr.bf16.mxu0 0
    %9630 = vmatpush1.bf16.msra.mxu0 %v9590
    %9631 = vmatprep.subr.bf16.mxu0 0
    %9632 = vmatpush1.bf16.msra.mxu0 %v9591
    %9633 = vmatprep.subr.bf16.mxu0 0
    %9634 = vmatpush1.bf16.msra.mxu0 %v9592
    %9635 = vmatprep.subr.bf16.mxu0 0
    %9636 = vmatpush1.bf16.msra.mxu0 %v9593
    %9637 = vmatprep.subr.bf16.mxu0 0
    %9638 = vmatpush1.bf16.msra.mxu0 %v9594
    %9639 = vmatprep.subr.bf16.mxu0 0
    %9640 = vmatpush1.bf16.msra.mxu0 %v9595
    %9641 = vmatprep.subr.bf16.mxu0 0
    %9642 = vmatpush1.bf16.msra.mxu0 %v9596
    %9643 = vmatprep.subr.bf16.mxu0 0
    %9644 = vmatpush1.bf16.msra.mxu0 %v9597
    %9645 = vmatprep.subr.bf16.mxu0 0
    %9646 = vmatpush1.bf16.msra.mxu0 %v9598
    %9647 = vmatprep.mubr.bf16.mxu0 %v9479
    %9648 = vmatmul.mubr.bf16.gmra.mrb[0].mxu0 %v9478
    %v9649 = vpop.f32.mrb[0].mxu0
    %v9650 = vadd.f32 %v9517, %v9649
    %v9651 = vpop.f32.mrb[0].mxu0
    %v9652 = vpop.f32.mrb[0].mxu0
    %v9653 = vpop.f32.mrb[0].mxu0
    %9654 = vdwg.mxu0
    %9655 = vst [vmem:[#allocation25] sm:$0x3] %v9650
    // Predicated region
    $region118: #{adaptative_net_forward.1} parent=1 // pred_check
      _
    $region119: #{adaptative_net_forward.1} parent=1 // pred_check_branch
      %9657 = sbr.rel (0) target = $region121
    $region120: #{adaptative_net_forward.1} parent=1 // pred_region
      %s9659 = ssub.s32 32, 32
      %9660 = vsyncadd [#allocation4], %s9659
      %s9662 = sshll.u32 [#allocation25], 4
      %s9663 = int_to_ptr.vmem [resolvable:$true] %s9662
      %9665 = dma.vmem_to_hbm [thread:$0]  %s9663, 32, %s15, [#allocation4]
    $region121: #{adaptative_net_forward.1} parent=1 // pred_fallthru
      _
    // Predicated region
    $region122: #{adaptative_net_forward.1} parent=1 // pred_check
      _
    $region123: #{adaptative_net_forward.1} parent=1 // pred_check_branch
      %9667 = sbr.rel (0) target = $region125
    $region124: #{adaptative_net_forward.1} parent=1 // pred_region
      %9668 = dma.done [#allocation4], 32
    $region125: #{adaptative_net_forward.1} parent=1 // pred_fallthru
      _
    %9669 = vsyncpa [#allocation3], 1
    %9670 = vsyncpa [#allocation6], 1
    %9671 = vsyncpa [#allocation9], 1
    %9672 = vsyncpa [#allocation12], 1
    %9673 = vsyncpa [#allocation15], 1
    %9674 = vsyncpa [#allocation18], 1
    %9675 = vsyncpa [#allocation21], 1
    %9676 = vsyncpa [#allocation24], 1
    %9677 = vsyncpa [#allocation4], 1

</llo_original>
